<compile_context>
chip_gen: v5e
topology: v5e:2x2
jax: 0.10.0
libtpu: 0.0.40
codegen_flags: <defaults>
</compile_context>

<pallas_src>
import functools

import jax
import jax.numpy as jnp
from jax.experimental import pallas as pl
from jax.experimental.pallas import tpu as pltpu

EPS = 1e-6


def _rmsnorm_f32(x, w):
    ms = jnp.mean(x * x, axis=-1, keepdims=True)
    return x * jax.lax.rsqrt(ms + EPS) * w


def transformer_block_kernel(x_ref, n1_ref, wq_ref, bq_ref, wk_ref, bk_ref,
                             wv_ref, bv_ref, wo_ref, bo_ref, n2_ref,
                             w1_ref, b1_ref, w2_ref, b2_ref, o_ref,
                             k_scratch, v_scratch,
                             *, num_heads, q_tile, batched_heads):
    f32, bf16 = jnp.float32, jnp.bfloat16
    S, D = x_ref.shape[1], x_ref.shape[2]
    H = num_heads
    hd = D // H
    tq = q_tile
    scale = 1.0 / (hd ** 0.5)
    q_idx = pl.program_id(1)
    n1 = n1_ref[0].astype(f32)

    # ---- K/V for the whole sequence: computed once per batch element (q == 0),
    #      cached in bf16 VMEM scratch and reused for every query tile. ----
    @pl.when(q_idx == 0)
    def _():
        xn_kv = _rmsnorm_f32(x_ref[0].astype(f32), n1).astype(bf16)
        k = jnp.dot(xn_kv, wk_ref[...], preferred_element_type=f32) + bk_ref[0]
        v = jnp.dot(xn_kv, wv_ref[...], preferred_element_type=f32) + bv_ref[0]
        k_scratch[...] = k.astype(bf16)
        v_scratch[...] = v.astype(bf16)

    # ---- Query tile: sliced in-kernel from the resident full-sequence block. ----
    row0 = q_idx * tq
    if tq % 8 == 0:
        row0 = pl.multiple_of(row0, 8)
    x_q = x_ref[0, pl.ds(row0, tq), :].astype(f32)                       # (tq, D)
    xn_q = _rmsnorm_f32(x_q, n1).astype(bf16)
    q = jnp.dot(xn_q, wq_ref[...], preferred_element_type=f32) + bq_ref[0]
    qs = (q * scale).astype(bf16)

    if batched_heads:
        q3 = qs.reshape(tq, H, hd)
        k3 = k_scratch[...].reshape(S, H, hd)
        v3 = v_scratch[...].reshape(S, H, hd)
        s = jnp.einsum('qhd,khd->hqk', q3, k3, preferred_element_type=f32)
        s = s - jnp.max(s, axis=-1, keepdims=True)
        p = jnp.exp(s)
        p = p * pl.reciprocal(jnp.sum(p, axis=-1, keepdims=True), approx=True)
        ctx = jnp.einsum('hqk,khd->hqd', p.astype(bf16), v3,
                         preferred_element_type=f32)                     # (H, tq, hd)
        ctx2 = jnp.transpose(ctx, (1, 0, 2)).reshape(tq, D).astype(bf16)  # (tq, D)
    else:
        # Conservative fallback: static per-head loop, plain 2-D matmuls only.
        ks = k_scratch[...]
        vs = v_scratch[...]
        head_outs = []
        for h in range(H):
            qh = qs[:, h * hd:(h + 1) * hd]
            kh = ks[:, h * hd:(h + 1) * hd]
            vh = vs[:, h * hd:(h + 1) * hd]
            sh = jax.lax.dot_general(qh, kh, (((1,), (1,)), ((), ())),
                                     preferred_element_type=f32)         # (tq, S)
            sh = sh - jnp.max(sh, axis=-1, keepdims=True)
            ph = jnp.exp(sh)
            ph = ph * pl.reciprocal(jnp.sum(ph, axis=-1, keepdims=True), approx=True)
            head_outs.append(jnp.dot(ph.astype(bf16), vh, preferred_element_type=f32))
        ctx2 = jnp.concatenate(head_outs, axis=-1).astype(bf16)          # (tq, D)

    # ---- Single full-contraction output projection + residual 1. ----
    attn_out = jnp.dot(ctx2, wo_ref[...], preferred_element_type=f32) + bo_ref[0]
    x1 = x_q + attn_out

    # ---- RMSNorm 2 + FFN: Linear(D,4D) -> SiLU -> Linear(4D,D) + residual 2. ----
    xn2 = _rmsnorm_f32(x1, n2_ref[0].astype(f32)).astype(bf16)
    h1 = jnp.dot(xn2, w1_ref[...], preferred_element_type=f32) + b1_ref[0]
    h1 = (h1 * jax.nn.sigmoid(h1)).astype(bf16)                          # SiLU
    ffn_out = jnp.dot(h1, w2_ref[...], preferred_element_type=f32) + b2_ref[0]

    o_ref[0] = (x1 + ffn_out).astype(o_ref.dtype)


def _choose_q_tile(S):
    """Query tile: whole sequence up to 256 rows (no pointless tiny tiles),
    otherwise the largest power-of-two divisor <= 256."""
    if S <= 256:
        return S
    for t in (256, 128, 64, 32, 16, 8):
        if S % t == 0:
            return t
    return S


def _vmem_capacity_bytes():
    try:
        return int(pltpu.get_tpu_info().vmem_capacity_bytes)
    except Exception:
        return 128 << 20


def transformer_block(x, params, num_heads, *, q_tile=None,
                      batched_heads=True, single_buffer_weights=None):
    B, S, D = x.shape
    Dh = 4 * D
    assert D % num_heads == 0
    tq = q_tile if q_tile is not None else _choose_q_tile(S)
    assert S % tq == 0
    nq = S // tq

    vmem_cap = _vmem_capacity_bytes()
    if single_buffer_weights is None:
        # v7x-class (64 MiB VMEM): single-buffer the grid-invariant weights.
        # v5e/v6e (128 MiB): default double buffering hides the first weight DMA.
        single_buffer_weights = vmem_cap <= (64 << 20)

    (n1, wq, bq, wk, bk, wv, bv, wo, bo, n2, w1, b1, w2, b2) = params
    bf16, f32 = jnp.bfloat16, jnp.float32
    # bf16 weights for MXU-native matmuls (f32 accumulation in-kernel);
    # biases / norm scales stay f32 and are added after accumulation.
    wq, wk, wv, wo = (w.astype(bf16) for w in (wq, wk, wv, wo))
    w1, w2 = w1.astype(bf16), w2.astype(bf16)
    n1, n2 = n1.astype(f32), n2.astype(f32)
    bq, bk, bv, bo, b1, b2 = (b.astype(f32) for b in (bq, bk, bv, bo, b1, b2))

    def wspec(shape):
        zero = (0,) * len(shape)
        if single_buffer_weights:
            return pl.BlockSpec(shape, lambda b, q: zero,
                                pipeline_mode=pl.Buffered(1))
        return pl.BlockSpec(shape, lambda b, q: zero)

    in_specs = [
        # x: full sequence per batch element; index is constant along q so the
        # block stays resident (one DMA per batch element), and the query tile
        # is sliced from it inside the kernel.
        pl.BlockSpec((1, S, D), lambda b, q: (b, 0, 0)),
        wspec((1, D)),                                       # norm1
        wspec((D, D)), wspec((1, D)),                        # Wq, bq
        wspec((D, D)), wspec((1, D)),                        # Wk, bk
        wspec((D, D)), wspec((1, D)),                        # Wv, bv
        wspec((D, D)), wspec((1, D)),                        # Wo, bo
        wspec((1, D)),                                       # norm2
        wspec((D, Dh)), wspec((1, Dh)),                      # FFN W1, b1
        wspec((Dh, D)), wspec((1, D)),                       # FFN W2, b2
    ]

    # Advisory cost estimate (K/V computed once per batch, not per q-tile).
    H = num_heads
    attn_flops = 4 * B * S * S * D                 # scores + PV
    proj_flops = 8 * B * S * D * D                 # Q, K, V, Wo
    ffn_flops = 4 * B * S * D * Dh
    transcendentals = B * H * S * S + B * S * Dh
    param_bytes = 2 * (4 * D * D + 2 * D * Dh) + 4 * (7 * D + Dh)
    bytes_accessed = int(2 * B * S * D * x.dtype.itemsize + param_bytes)
    cost = pl.CostEstimate(flops=int(attn_flops + proj_flops + ffn_flops),
                           transcendentals=int(transcendentals),
                           bytes_accessed=bytes_accessed)

    # Generation-aware VMEM request sized to the actual footprint, capped well
    # below the physical capacity so compiler scratch / spills still fit.
    weight_buf = param_bytes * (1 if single_buffer_weights else 2)
    act_bytes = (2 * S * D * 4            # double-buffered x block (f32)
                 + 2 * tq * D * 4         # double-buffered output block
                 + 2 * S * D * 2          # K/V bf16 scratch
                 + 3 * S * D * 4          # transient xn_kv / K / V f32
                 + 2 * H * tq * S * 4     # scores / probs
                 + 8 * tq * D * 4 + tq * Dh * 4)
    need = int(weight_buf + act_bytes + (4 << 20))
    if vmem_cap <= (64 << 20):                       # v7x-class
        hard_cap = int(vmem_cap * 0.72)
    else:                                            # v5e / v6e (128 MiB)
        hard_cap = min(96 << 20, int(vmem_cap * 0.75))
    vmem_limit = int(min(max(need, 32 << 20), hard_cap))

    kernel = functools.partial(transformer_block_kernel, num_heads=num_heads,
                               q_tile=tq, batched_heads=batched_heads)
    call = pl.pallas_call(
        kernel,
        out_shape=jax.ShapeDtypeStruct((B, S, D), x.dtype),
        grid=(B, nq),
        in_specs=in_specs,
        out_specs=pl.BlockSpec((1, tq, D), lambda b, q: (b, q, 0)),
        scratch_shapes=[pltpu.VMEM((S, D), bf16),    # K cache (per batch element)
                        pltpu.VMEM((S, D), bf16)],   # V cache
        # q axis is 'arbitrary' (K/V scratch carried across q-tiles); batch is
        # 'parallel' for megacore sharding.
        # TODO(synk): if B == 1 on a multi-TC part, compute K/V in a separate
        #             preceding pallas_call so q can stay 'parallel'.
        compiler_params=pltpu.CompilerParams(
            dimension_semantics=("parallel", "arbitrary"),
            vmem_limit_bytes=vmem_limit),
        cost_estimate=cost,
    )
    return call(x, n1, wq, bq, wk, bk, wv, bv, wo, bo, n2, w1, b1, w2, b2)


def run_transformer_block(x, params, num_heads):
    """Prefer batched heads + generation-tuned buffering; fall back if this
    backend's Mosaic lowering rejects the batched dot_general / Buffered(1)."""
    configs = (
        dict(batched_heads=True, single_buffer_weights=None),    # auto per chip
        dict(batched_heads=True, single_buffer_weights=False),
        dict(batched_heads=False, single_buffer_weights=False),
    )
    last_err = None
    for cfg in configs:
        try:
            out = transformer_block(x, params, num_heads, **cfg)
            return jax.block_until_ready(out)
        except Exception as e:      # lowering not supported on this generation
            last_err = e
    raise last_err


def reference(x, params, num_heads):
    """Pure-JAX f32 reference of the same forward pass (for correctness check)."""
    (n1, wq, bq, wk, bk, wv, bv, wo, bo, n2, w1, b1, w2, b2) = params
    B, S, D = x.shape
    hd = D // num_heads
    xf = x.astype(jnp.float32)

    def rmsnorm(z, w):
        return z * jax.lax.rsqrt(jnp.mean(z * z, -1, keepdims=True) + EPS) * w[0]

    xn = rmsnorm(xf, n1)
    q = (xn @ wq + bq[0]).reshape(B, S, num_heads, hd)
    k = (xn @ wk + bk[0]).reshape(B, S, num_heads, hd)
    v = (xn @ wv + bv[0]).reshape(B, S, num_heads, hd)
    s = jnp.einsum('bqhd,bkhd->bhqk', q, k) / jnp.sqrt(hd)
    p = jax.nn.softmax(s, axis=-1)
    a = jnp.einsum('bhqk,bkhd->bqhd', p, v).reshape(B, S, D)
    x1 = xf + a @ wo + bo[0]
    xn2 = rmsnorm(x1, n2)
    h = xn2 @ w1 + b1[0]
    h = h * jax.nn.sigmoid(h)
    return (x1 + h @ w2 + b2[0]).astype(x.dtype)


def init_params(key, D, dtype=jnp.float32):
    Dh = 4 * D
    ks = jax.random.split(key, 12)
    s = 0.02
    n1 = jnp.ones((1, D), dtype)
    n2 = jnp.ones((1, D), dtype)
    wq = s * jax.random.normal(ks[0], (D, D), dtype)
    wk = s * jax.random.normal(ks[1], (D, D), dtype)
    wv = s * jax.random.normal(ks[2], (D, D), dtype)
    wo = s * jax.random.normal(ks[3], (D, D), dtype)
    bq = s * jax.random.normal(ks[4], (1, D), dtype)
    bk = s * jax.random.normal(ks[5], (1, D), dtype)
    bv = s * jax.random.normal(ks[6], (1, D), dtype)
    bo = s * jax.random.normal(ks[7], (1, D), dtype)
    w1 = s * jax.random.normal(ks[8], (D, Dh), dtype)
    b1 = s * jax.random.normal(ks[9], (1, Dh), dtype)
    w2 = s * jax.random.normal(ks[10], (Dh, D), dtype)
    b2 = s * jax.random.normal(ks[11], (1, D), dtype)
    return (n1, wq, bq, wk, bk, wv, bv, wo, bo, n2, w1, b1, w2, b2)


if __name__ == "__main__":
    B, S, D, H = 2, 16, 128, 8        # batch, seq, model dim, heads (head_dim = 16)
    root = jax.random.PRNGKey(0)
    kx, kp = jax.random.split(root)
    x = jax.random.normal(kx, (B, S, D), jnp.float32)
    params = init_params(kp, D)

    out = run_transformer_block(x, params, H)

    ref = reference(x, params, H)
    assert out.shape == (B, S, D)
    # bf16 matmul operands (f32 accumulation) => slightly looser tolerance vs f32 ref.
    assert jnp.allclose(out, ref, atol=2e-2, rtol=2e-2), \
        f"Pallas kernel mismatch vs reference (max err {jnp.max(jnp.abs(out - ref))})"
    print("KERNEL_OK")
</pallas_src>

<mosaic_0001>
module attributes {stable_mosaic.version = 11 : i64} {
  func.func @transformer_block_kernel(%arg0: i32, %arg1: i32, %arg2: memref<1x16x128xf32, #tpu.memory_space<vmem>>, %arg3: memref<1x128xf32, #tpu.memory_space<vmem>>, %arg4: memref<128x128xbf16, #tpu.memory_space<vmem>>, %arg5: memref<1x128xf32, #tpu.memory_space<vmem>>, %arg6: memref<128x128xbf16, #tpu.memory_space<vmem>>, %arg7: memref<1x128xf32, #tpu.memory_space<vmem>>, %arg8: memref<128x128xbf16, #tpu.memory_space<vmem>>, %arg9: memref<1x128xf32, #tpu.memory_space<vmem>>, %arg10: memref<128x128xbf16, #tpu.memory_space<vmem>>, %arg11: memref<1x128xf32, #tpu.memory_space<vmem>>, %arg12: memref<1x128xf32, #tpu.memory_space<vmem>>, %arg13: memref<128x512xbf16, #tpu.memory_space<vmem>>, %arg14: memref<1x512xf32, #tpu.memory_space<vmem>>, %arg15: memref<512x128xbf16, #tpu.memory_space<vmem>>, %arg16: memref<1x128xf32, #tpu.memory_space<vmem>>, %arg17: memref<1x16x128xf32, #tpu.memory_space<vmem>>, %arg18: memref<16x128xbf16, #tpu.memory_space<vmem>>, %arg19: memref<16x128xbf16, #tpu.memory_space<vmem>>) attributes {dimension_semantics = [#tpu.dimension_semantics<parallel>, #tpu.dimension_semantics<arbitrary>], iteration_bounds = array<i64: 2, 1>, scalar_prefetch = 0 : i64, scratch_operands = 2 : i64, tpu.core_type = #tpu.core_type<tc>, window_params = [{transform_indices = @transform_0, window_bounds = array<i64: 1, 16, 128>}, {pipeline_mode = #tpu.pipeline_mode<synchronous>, transform_indices = @transform_1, window_bounds = array<i64: 1, 128>}, {pipeline_mode = #tpu.pipeline_mode<synchronous>, transform_indices = @transform_2, window_bounds = array<i64: 128, 128>}, {pipeline_mode = #tpu.pipeline_mode<synchronous>, transform_indices = @transform_3, window_bounds = array<i64: 1, 128>}, {pipeline_mode = #tpu.pipeline_mode<synchronous>, transform_indices = @transform_4, window_bounds = array<i64: 128, 128>}, {pipeline_mode = #tpu.pipeline_mode<synchronous>, transform_indices = @transform_5, window_bounds = array<i64: 1, 128>}, {pipeline_mode = #tpu.pipeline_mode<synchronous>, transform_indices = @transform_6, window_bounds = array<i64: 128, 128>}, {pipeline_mode = #tpu.pipeline_mode<synchronous>, transform_indices = @transform_7, window_bounds = array<i64: 1, 128>}, {pipeline_mode = #tpu.pipeline_mode<synchronous>, transform_indices = @transform_8, window_bounds = array<i64: 128, 128>}, {pipeline_mode = #tpu.pipeline_mode<synchronous>, transform_indices = @transform_9, window_bounds = array<i64: 1, 128>}, {pipeline_mode = #tpu.pipeline_mode<synchronous>, transform_indices = @transform_10, window_bounds = array<i64: 1, 128>}, {pipeline_mode = #tpu.pipeline_mode<synchronous>, transform_indices = @transform_11, window_bounds = array<i64: 128, 512>}, {pipeline_mode = #tpu.pipeline_mode<synchronous>, transform_indices = @transform_12, window_bounds = array<i64: 1, 512>}, {pipeline_mode = #tpu.pipeline_mode<synchronous>, transform_indices = @transform_13, window_bounds = array<i64: 512, 128>}, {pipeline_mode = #tpu.pipeline_mode<synchronous>, transform_indices = @transform_14, window_bounds = array<i64: 1, 128>}, {transform_indices = @transform_15, window_bounds = array<i64: 1, 16, 128>}]} {
    %c0 = arith.constant 0 : index
    %c0_0 = arith.constant 0 : index
    %0 = vector.load %arg3[%c0, %c0_0] : memref<1x128xf32, #tpu.memory_space<vmem>>, vector<1x128xf32>
    %1 = vector.shape_cast %0 : vector<1x128xf32> to vector<128xf32>
    %c0_i32 = arith.constant 0 : i32
    %2 = arith.cmpi eq, %arg1, %c0_i32 : i32
    %3 = arith.extui %2 : i1 to i32
    %c0_i32_1 = arith.constant 0 : i32
    %4 = arith.cmpi ne, %3, %c0_i32_1 : i32
    scf.if %4 {
      %c0_44 = arith.constant 0 : index
      %c0_45 = arith.constant 0 : index
      %c0_46 = arith.constant 0 : index
      %104 = vector.load %arg2[%c0_44, %c0_45, %c0_46] : memref<1x16x128xf32, #tpu.memory_space<vmem>>, vector<1x16x128xf32>
      %105 = vector.shape_cast %104 : vector<1x16x128xf32> to vector<16x128xf32>
      %106 = arith.mulf %105, %105 : vector<16x128xf32>
      %cst_47 = arith.constant dense<0.000000e+00> : vector<16xf32>
      %107 = vector.multi_reduction <add>, %106, %cst_47 [1] : vector<16x128xf32> to vector<16xf32>
      %108 = vector.shape_cast %107 : vector<16xf32> to vector<16x1xf32>
      %cst_48 = arith.constant 1.280000e+02 : f32
      %109 = vector.broadcast %cst_48 : f32 to vector<16x1xf32>
      %110 = arith.divf %108, %109 : vector<16x1xf32>
      %cst_49 = arith.constant 9.99999997E-7 : f32
      %111 = vector.broadcast %cst_49 : f32 to vector<16x1xf32>
      %112 = arith.addf %110, %111 : vector<16x1xf32>
      %113 = math.rsqrt %112 : vector<16x1xf32>
      %114 = vector.broadcast %113 : vector<16x1xf32> to vector<16x128xf32>
      %115 = arith.mulf %105, %114 : vector<16x128xf32>
      %116 = vector.shape_cast %1 : vector<128xf32> to vector<1x128xf32>
      %117 = vector.broadcast %116 : vector<1x128xf32> to vector<16x128xf32>
      %118 = arith.mulf %115, %117 : vector<16x128xf32>
      %119 = arith.truncf %118 : vector<16x128xf32> to vector<16x128xbf16>
      %c0_50 = arith.constant 0 : index
      %c0_51 = arith.constant 0 : index
      %120 = vector.load %arg6[%c0_50, %c0_51] : memref<128x128xbf16, #tpu.memory_space<vmem>>, vector<128x128xbf16>
      %cst_52 = arith.constant dense<0.000000e+00> : vector<16x128xf32>
      %121 = tpu.matmul %119, %120, %cst_52 {dimension_numbers = #tpu.dot_dimension_numbers<[1], [0], [0], [1], [0, 0, 1, 1], [], []>} : vector<16x128xbf16>, vector<128x128xbf16>, vector<16x128xf32> -> vector<16x128xf32>
      %c0_53 = arith.constant 0 : index
      %c0_54 = arith.constant 0 : index
      %122 = vector.load %arg7[%c0_53, %c0_54] : memref<1x128xf32, #tpu.memory_space<vmem>>, vector<1x128xf32>
      %123 = vector.shape_cast %122 : vector<1x128xf32> to vector<128xf32>
      %124 = vector.shape_cast %123 : vector<128xf32> to vector<1x128xf32>
      %125 = vector.broadcast %124 : vector<1x128xf32> to vector<16x128xf32>
      %126 = arith.addf %121, %125 : vector<16x128xf32>
      %c0_55 = arith.constant 0 : index
      %c0_56 = arith.constant 0 : index
      %127 = vector.load %arg8[%c0_55, %c0_56] : memref<128x128xbf16, #tpu.memory_space<vmem>>, vector<128x128xbf16>
      %cst_57 = arith.constant dense<0.000000e+00> : vector<16x128xf32>
      %128 = tpu.matmul %119, %127, %cst_57 {dimension_numbers = #tpu.dot_dimension_numbers<[1], [0], [0], [1], [0, 0, 1, 1], [], []>} : vector<16x128xbf16>, vector<128x128xbf16>, vector<16x128xf32> -> vector<16x128xf32>
      %c0_58 = arith.constant 0 : index
      %c0_59 = arith.constant 0 : index
      %129 = vector.load %arg9[%c0_58, %c0_59] : memref<1x128xf32, #tpu.memory_space<vmem>>, vector<1x128xf32>
      %130 = vector.shape_cast %129 : vector<1x128xf32> to vector<128xf32>
      %131 = vector.shape_cast %130 : vector<128xf32> to vector<1x128xf32>
      %132 = vector.broadcast %131 : vector<1x128xf32> to vector<16x128xf32>
      %133 = arith.addf %128, %132 : vector<16x128xf32>
      %134 = arith.truncf %126 : vector<16x128xf32> to vector<16x128xbf16>
      %c0_60 = arith.constant 0 : index
      %c0_61 = arith.constant 0 : index
      %135 = vector.load %arg18[%c0_60, %c0_61] : memref<16x128xbf16, #tpu.memory_space<vmem>>, vector<16x128xbf16>
      tpu.vector_store %arg18[%c0_60, %c0_61], %134 {strides = array<i32>} : memref<16x128xbf16, #tpu.memory_space<vmem>>, vector<16x128xbf16>,
      %136 = arith.truncf %133 : vector<16x128xf32> to vector<16x128xbf16>
      %c0_62 = arith.constant 0 : index
      %c0_63 = arith.constant 0 : index
      %137 = vector.load %arg19[%c0_62, %c0_63] : memref<16x128xbf16, #tpu.memory_space<vmem>>, vector<16x128xbf16>
      tpu.vector_store %arg19[%c0_62, %c0_63], %136 {strides = array<i32>} : memref<16x128xbf16, #tpu.memory_space<vmem>>, vector<16x128xbf16>,
    } else {
    }
    %c16_i32 = arith.constant 16 : i32
    %5 = arith.muli %arg1, %c16_i32 : i32
    %6 = tpu.assume_multiple %5, 8 : i32
    %c0_2 = arith.constant 0 : index
    %7 = arith.index_cast %6 : i32 to index
    %c0_3 = arith.constant 0 : index
    %8 = vector.load %arg2[%c0_2, %7, %c0_3] : memref<1x16x128xf32, #tpu.memory_space<vmem>>, vector<1x16x128xf32>
    %9 = vector.shape_cast %8 : vector<1x16x128xf32> to vector<16x128xf32>
    %10 = arith.mulf %9, %9 : vector<16x128xf32>
    %cst = arith.constant dense<0.000000e+00> : vector<16xf32>
    %11 = vector.multi_reduction <add>, %10, %cst [1] : vector<16x128xf32> to vector<16xf32>
    %12 = vector.shape_cast %11 : vector<16xf32> to vector<16x1xf32>
    %cst_4 = arith.constant 1.280000e+02 : f32
    %13 = vector.broadcast %cst_4 : f32 to vector<16x1xf32>
    %14 = arith.divf %12, %13 : vector<16x1xf32>
    %cst_5 = arith.constant 9.99999997E-7 : f32
    %15 = vector.broadcast %cst_5 : f32 to vector<16x1xf32>
    %16 = arith.addf %14, %15 : vector<16x1xf32>
    %17 = math.rsqrt %16 : vector<16x1xf32>
    %18 = vector.broadcast %17 : vector<16x1xf32> to vector<16x128xf32>
    %19 = arith.mulf %9, %18 : vector<16x128xf32>
    %20 = vector.shape_cast %1 : vector<128xf32> to vector<1x128xf32>
    %21 = vector.broadcast %20 : vector<1x128xf32> to vector<16x128xf32>
    %22 = arith.mulf %19, %21 : vector<16x128xf32>
    %23 = arith.truncf %22 : vector<16x128xf32> to vector<16x128xbf16>
    %c0_6 = arith.constant 0 : index
    %c0_7 = arith.constant 0 : index
    %24 = vector.load %arg4[%c0_6, %c0_7] : memref<128x128xbf16, #tpu.memory_space<vmem>>, vector<128x128xbf16>
    %cst_8 = arith.constant dense<0.000000e+00> : vector<16x128xf32>
    %25 = tpu.matmul %23, %24, %cst_8 {dimension_numbers = #tpu.dot_dimension_numbers<[1], [0], [0], [1], [0, 0, 1, 1], [], []>} : vector<16x128xbf16>, vector<128x128xbf16>, vector<16x128xf32> -> vector<16x128xf32>
    %c0_9 = arith.constant 0 : index
    %c0_10 = arith.constant 0 : index
    %26 = vector.load %arg5[%c0_9, %c0_10] : memref<1x128xf32, #tpu.memory_space<vmem>>, vector<1x128xf32>
    %27 = vector.shape_cast %26 : vector<1x128xf32> to vector<128xf32>
    %28 = vector.shape_cast %27 : vector<128xf32> to vector<1x128xf32>
    %29 = vector.broadcast %28 : vector<1x128xf32> to vector<16x128xf32>
    %30 = arith.addf %25, %29 : vector<16x128xf32>
    %cst_11 = arith.constant 2.500000e-01 : f32
    %31 = vector.broadcast %cst_11 : f32 to vector<16x128xf32>
    %32 = arith.mulf %30, %31 : vector<16x128xf32>
    %33 = arith.truncf %32 : vector<16x128xf32> to vector<16x128xbf16>
    %34 = vector.shape_cast %33 : vector<16x128xbf16> to vector<16x8x16xbf16>
    %c0_12 = arith.constant 0 : index
    %c0_13 = arith.constant 0 : index
    %35 = vector.load %arg18[%c0_12, %c0_13] : memref<16x128xbf16, #tpu.memory_space<vmem>>, vector<16x128xbf16>
    %36 = vector.shape_cast %35 : vector<16x128xbf16> to vector<16x8x16xbf16>
    %c0_14 = arith.constant 0 : index
    %c0_15 = arith.constant 0 : index
    %37 = vector.load %arg19[%c0_14, %c0_15] : memref<16x128xbf16, #tpu.memory_space<vmem>>, vector<16x128xbf16>
    %38 = vector.shape_cast %37 : vector<16x128xbf16> to vector<16x8x16xbf16>
    "tpu.trace_start"() <{level = 10 : i32, message = "qhd,khd->hqk"}> : () -> ()
    %cst_16 = arith.constant dense<0.000000e+00> : vector<8x16x16xf32>
    %39 = tpu.matmul %34, %36, %cst_16 {dimension_numbers = #tpu.dot_dimension_numbers<[2], [2], [0], [0], [0, 1, 0, 0, 1, 0], [1], [1]>} : vector<16x8x16xbf16>, vector<16x8x16xbf16>, vector<8x16x16xf32> -> vector<8x16x16xf32>
    "tpu.trace_stop"() : () -> ()
    %cst_17 = arith.constant dense<0xFF800000> : vector<8x16xf32>
    %40 = vector.multi_reduction <maximumf>, %39, %cst_17 [2] : vector<8x16x16xf32> to vector<8x16xf32>
    %41 = vector.shape_cast %40 : vector<8x16xf32> to vector<8x16x1xf32>
    %42 = vector.broadcast %41 : vector<8x16x1xf32> to vector<8x16x16xf32>
    %43 = arith.subf %39, %42 : vector<8x16x16xf32>
    %44 = math.exp %43 : vector<8x16x16xf32>
    %cst_18 = arith.constant dense<0.000000e+00> : vector<8x16xf32>
    %45 = vector.multi_reduction <add>, %44, %cst_18 [2] : vector<8x16x16xf32> to vector<8x16xf32>
    %46 = vector.shape_cast %45 : vector<8x16xf32> to vector<8x16x1xf32>
    %47 = tpu.reciprocal %46 {approx = true} : vector<8x16x1xf32> -> vector<8x16x1xf32>
    %48 = vector.broadcast %47 : vector<8x16x1xf32> to vector<8x16x16xf32>
    %49 = arith.mulf %44, %48 : vector<8x16x16xf32>
    %50 = arith.truncf %49 : vector<8x16x16xf32> to vector<8x16x16xbf16>
    "tpu.trace_start"() <{level = 10 : i32, message = "hqk,khd->hqd"}> : () -> ()
    %cst_19 = arith.constant dense<0.000000e+00> : vector<8x16x16xf32>
    %51 = tpu.matmul %50, %38, %cst_19 {dimension_numbers = #tpu.dot_dimension_numbers<[2], [0], [1], [2], [0, 0, 0, 1, 1, 2], [0], [1]>} : vector<8x16x16xbf16>, vector<16x8x16xbf16>, vector<8x16x16xf32> -> vector<8x16x16xf32>
    "tpu.trace_stop"() : () -> ()
    %52 = tpu.transpose %51, [1, 0, 2] : vector<8x16x16xf32> -> vector<16x8x16xf32>
    %53 = vector.shape_cast %52 : vector<16x8x16xf32> to vector<16x128xf32>
    %54 = arith.truncf %53 : vector<16x128xf32> to vector<16x128xbf16>
    %c0_20 = arith.constant 0 : index
    %c0_21 = arith.constant 0 : index
    %55 = vector.load %arg10[%c0_20, %c0_21] : memref<128x128xbf16, #tpu.memory_space<vmem>>, vector<128x128xbf16>
    %cst_22 = arith.constant dense<0.000000e+00> : vector<16x128xf32>
    %56 = tpu.matmul %54, %55, %cst_22 {dimension_numbers = #tpu.dot_dimension_numbers<[1], [0], [0], [1], [0, 0, 1, 1], [], []>} : vector<16x128xbf16>, vector<128x128xbf16>, vector<16x128xf32> -> vector<16x128xf32>
    %c0_23 = arith.constant 0 : index
    %c0_24 = arith.constant 0 : index
    %57 = vector.load %arg11[%c0_23, %c0_24] : memref<1x128xf32, #tpu.memory_space<vmem>>, vector<1x128xf32>
    %58 = vector.shape_cast %57 : vector<1x128xf32> to vector<128xf32>
    %59 = vector.shape_cast %58 : vector<128xf32> to vector<1x128xf32>
    %60 = vector.broadcast %59 : vector<1x128xf32> to vector<16x128xf32>
    %61 = arith.addf %56, %60 : vector<16x128xf32>
    %62 = arith.addf %9, %61 : vector<16x128xf32>
    %c0_25 = arith.constant 0 : index
    %c0_26 = arith.constant 0 : index
    %63 = vector.load %arg12[%c0_25, %c0_26] : memref<1x128xf32, #tpu.memory_space<vmem>>, vector<1x128xf32>
    %64 = vector.shape_cast %63 : vector<1x128xf32> to vector<128xf32>
    %65 = arith.mulf %62, %62 : vector<16x128xf32>
    %cst_27 = arith.constant dense<0.000000e+00> : vector<16xf32>
    %66 = vector.multi_reduction <add>, %65, %cst_27 [1] : vector<16x128xf32> to vector<16xf32>
    %67 = vector.shape_cast %66 : vector<16xf32> to vector<16x1xf32>
    %cst_28 = arith.constant 1.280000e+02 : f32
    %68 = vector.broadcast %cst_28 : f32 to vector<16x1xf32>
    %69 = arith.divf %67, %68 : vector<16x1xf32>
    %cst_29 = arith.constant 9.99999997E-7 : f32
    %70 = vector.broadcast %cst_29 : f32 to vector<16x1xf32>
    %71 = arith.addf %69, %70 : vector<16x1xf32>
    %72 = math.rsqrt %71 : vector<16x1xf32>
    %73 = vector.broadcast %72 : vector<16x1xf32> to vector<16x128xf32>
    %74 = arith.mulf %62, %73 : vector<16x128xf32>
    %75 = vector.shape_cast %64 : vector<128xf32> to vector<1x128xf32>
    %76 = vector.broadcast %75 : vector<1x128xf32> to vector<16x128xf32>
    %77 = arith.mulf %74, %76 : vector<16x128xf32>
    %78 = arith.truncf %77 : vector<16x128xf32> to vector<16x128xbf16>
    %c0_30 = arith.constant 0 : index
    %c0_31 = arith.constant 0 : index
    %79 = vector.load %arg13[%c0_30, %c0_31] : memref<128x512xbf16, #tpu.memory_space<vmem>>, vector<128x512xbf16>
    %cst_32 = arith.constant dense<0.000000e+00> : vector<16x512xf32>
    %80 = tpu.matmul %78, %79, %cst_32 {dimension_numbers = #tpu.dot_dimension_numbers<[1], [0], [0], [1], [0, 0, 1, 1], [], []>} : vector<16x128xbf16>, vector<128x512xbf16>, vector<16x512xf32> -> vector<16x512xf32>
    %c0_33 = arith.constant 0 : index
    %c0_34 = arith.constant 0 : index
    %81 = vector.load %arg14[%c0_33, %c0_34] : memref<1x512xf32, #tpu.memory_space<vmem>>, vector<1x512xf32>
    %82 = vector.shape_cast %81 : vector<1x512xf32> to vector<512xf32>
    %83 = vector.shape_cast %82 : vector<512xf32> to vector<1x512xf32>
    %84 = vector.broadcast %83 : vector<1x512xf32> to vector<16x512xf32>
    %85 = arith.addf %80, %84 : vector<16x512xf32>
    %86 = arith.negf %85 : vector<16x512xf32>
    %87 = math.exp %86 : vector<16x512xf32>
    %cst_35 = arith.constant 1.000000e+00 : f32
    %88 = vector.broadcast %cst_35 : f32 to vector<16x512xf32>
    %89 = arith.addf %88, %87 : vector<16x512xf32>
    %90 = arith.divf %88, %89 : vector<16x512xf32>
    %91 = arith.mulf %85, %90 : vector<16x512xf32>
    %92 = arith.truncf %91 : vector<16x512xf32> to vector<16x512xbf16>
    %c0_36 = arith.constant 0 : index
    %c0_37 = arith.constant 0 : index
    %93 = vector.load %arg15[%c0_36, %c0_37] : memref<512x128xbf16, #tpu.memory_space<vmem>>, vector<512x128xbf16>
    %cst_38 = arith.constant dense<0.000000e+00> : vector<16x128xf32>
    %94 = tpu.matmul %92, %93, %cst_38 {dimension_numbers = #tpu.dot_dimension_numbers<[1], [0], [0], [1], [0, 0, 1, 1], [], []>} : vector<16x512xbf16>, vector<512x128xbf16>, vector<16x128xf32> -> vector<16x128xf32>
    %c0_39 = arith.constant 0 : index
    %c0_40 = arith.constant 0 : index
    %95 = vector.load %arg16[%c0_39, %c0_40] : memref<1x128xf32, #tpu.memory_space<vmem>>, vector<1x128xf32>
    %96 = vector.shape_cast %95 : vector<1x128xf32> to vector<128xf32>
    %97 = vector.shape_cast %96 : vector<128xf32> to vector<1x128xf32>
    %98 = vector.broadcast %97 : vector<1x128xf32> to vector<16x128xf32>
    %99 = arith.addf %94, %98 : vector<16x128xf32>
    %100 = arith.addf %62, %99 : vector<16x128xf32>
    %c0_41 = arith.constant 0 : index
    %c0_42 = arith.constant 0 : index
    %c0_43 = arith.constant 0 : index
    %101 = vector.load %arg17[%c0_41, %c0_42, %c0_43] : memref<1x16x128xf32, #tpu.memory_space<vmem>>, vector<1x16x128xf32>
    %102 = vector.shape_cast %101 : vector<1x16x128xf32> to vector<16x128xf32>
    %103 = vector.shape_cast %100 : vector<16x128xf32> to vector<1x16x128xf32>
    tpu.vector_store %arg17[%c0_41, %c0_42, %c0_43], %103 {strides = array<i32>} : memref<1x16x128xf32, #tpu.memory_space<vmem>>, vector<1x16x128xf32>,
    return
  }
  func.func @transform_0(%arg0: i32, %arg1: i32) -> (i32, i32, i32) {
    %c0_i32 = arith.constant 0 : i32
    %c0_i32_0 = arith.constant 0 : i32
    %c0_i32_1 = arith.constant 0 : i32
    return %arg0, %c0_i32, %c0_i32_0 : i32, i32, i32
  }
  func.func @transform_1(%arg0: i32, %arg1: i32) -> (i32, i32) {
    %c0_i32 = arith.constant 0 : i32
    %c0_i32_0 = arith.constant 0 : i32
    %c0_i32_1 = arith.constant 0 : i32
    return %c0_i32, %c0_i32_0 : i32, i32
  }
  func.func @transform_2(%arg0: i32, %arg1: i32) -> (i32, i32) {
    %c0_i32 = arith.constant 0 : i32
    %c0_i32_0 = arith.constant 0 : i32
    %c0_i32_1 = arith.constant 0 : i32
    return %c0_i32, %c0_i32_0 : i32, i32
  }
  func.func @transform_3(%arg0: i32, %arg1: i32) -> (i32, i32) {
    %c0_i32 = arith.constant 0 : i32
    %c0_i32_0 = arith.constant 0 : i32
    %c0_i32_1 = arith.constant 0 : i32
    return %c0_i32, %c0_i32_0 : i32, i32
  }
  func.func @transform_4(%arg0: i32, %arg1: i32) -> (i32, i32) {
    %c0_i32 = arith.constant 0 : i32
    %c0_i32_0 = arith.constant 0 : i32
    %c0_i32_1 = arith.constant 0 : i32
    return %c0_i32, %c0_i32_0 : i32, i32
  }
  func.func @transform_5(%arg0: i32, %arg1: i32) -> (i32, i32) {
    %c0_i32 = arith.constant 0 : i32
    %c0_i32_0 = arith.constant 0 : i32
    %c0_i32_1 = arith.constant 0 : i32
    return %c0_i32, %c0_i32_0 : i32, i32
  }
  func.func @transform_6(%arg0: i32, %arg1: i32) -> (i32, i32) {
    %c0_i32 = arith.constant 0 : i32
    %c0_i32_0 = arith.constant 0 : i32
    %c0_i32_1 = arith.constant 0 : i32
    return %c0_i32, %c0_i32_0 : i32, i32
  }
  func.func @transform_7(%arg0: i32, %arg1: i32) -> (i32, i32) {
    %c0_i32 = arith.constant 0 : i32
    %c0_i32_0 = arith.constant 0 : i32
    %c0_i32_1 = arith.constant 0 : i32
    return %c0_i32, %c0_i32_0 : i32, i32
  }
  func.func @transform_8(%arg0: i32, %arg1: i32) -> (i32, i32) {
    %c0_i32 = arith.constant 0 : i32
    %c0_i32_0 = arith.constant 0 : i32
    %c0_i32_1 = arith.constant 0 : i32
    return %c0_i32, %c0_i32_0 : i32, i32
  }
  func.func @transform_9(%arg0: i32, %arg1: i32) -> (i32, i32) {
    %c0_i32 = arith.constant 0 : i32
    %c0_i32_0 = arith.constant 0 : i32
    %c0_i32_1 = arith.constant 0 : i32
    return %c0_i32, %c0_i32_0 : i32, i32
  }
  func.func @transform_10(%arg0: i32, %arg1: i32) -> (i32, i32) {
    %c0_i32 = arith.constant 0 : i32
    %c0_i32_0 = arith.constant 0 : i32
    %c0_i32_1 = arith.constant 0 : i32
    return %c0_i32, %c0_i32_0 : i32, i32
  }
  func.func @transform_11(%arg0: i32, %arg1: i32) -> (i32, i32) {
    %c0_i32 = arith.constant 0 : i32
    %c0_i32_0 = arith.constant 0 : i32
    %c0_i32_1 = arith.constant 0 : i32
    return %c0_i32, %c0_i32_0 : i32, i32
  }
  func.func @transform_12(%arg0: i32, %arg1: i32) -> (i32, i32) {
    %c0_i32 = arith.constant 0 : i32
    %c0_i32_0 = arith.constant 0 : i32
    %c0_i32_1 = arith.constant 0 : i32
    return %c0_i32, %c0_i32_0 : i32, i32
  }
  func.func @transform_13(%arg0: i32, %arg1: i32) -> (i32, i32) {
    %c0_i32 = arith.constant 0 : i32
    %c0_i32_0 = arith.constant 0 : i32
    %c0_i32_1 = arith.constant 0 : i32
    return %c0_i32, %c0_i32_0 : i32, i32
  }
  func.func @transform_14(%arg0: i32, %arg1: i32) -> (i32, i32) {
    %c0_i32 = arith.constant 0 : i32
    %c0_i32_0 = arith.constant 0 : i32
    %c0_i32_1 = arith.constant 0 : i32
    return %c0_i32, %c0_i32_0 : i32, i32
  }
  func.func @transform_15(%arg0: i32, %arg1: i32) -> (i32, i32, i32) {
    %c0_i32 = arith.constant 0 : i32
    %c0_i32_0 = arith.constant 0 : i32
    return %arg0, %arg1, %c0_i32 : i32, i32, i32
  }
}

module attributes {stable_mosaic.version = 11 : i64} {
  func.func @transformer_block_kernel(%arg0: i32, %arg1: i32, %arg2: memref<1x16x128xf32, #tpu.memory_space<vmem>>, %arg3: memref<1x128xf32, #tpu.memory_space<vmem>>, %arg4: memref<128x128xbf16, #tpu.memory_space<vmem>>, %arg5: memref<1x128xf32, #tpu.memory_space<vmem>>, %arg6: memref<128x128xbf16, #tpu.memory_space<vmem>>, %arg7: memref<1x128xf32, #tpu.memory_space<vmem>>, %arg8: memref<128x128xbf16, #tpu.memory_space<vmem>>, %arg9: memref<1x128xf32, #tpu.memory_space<vmem>>, %arg10: memref<128x128xbf16, #tpu.memory_space<vmem>>, %arg11: memref<1x128xf32, #tpu.memory_space<vmem>>, %arg12: memref<1x128xf32, #tpu.memory_space<vmem>>, %arg13: memref<128x512xbf16, #tpu.memory_space<vmem>>, %arg14: memref<1x512xf32, #tpu.memory_space<vmem>>, %arg15: memref<512x128xbf16, #tpu.memory_space<vmem>>, %arg16: memref<1x128xf32, #tpu.memory_space<vmem>>, %arg17: memref<1x16x128xf32, #tpu.memory_space<vmem>>, %arg18: memref<16x128xbf16, #tpu.memory_space<vmem>>, %arg19: memref<16x128xbf16, #tpu.memory_space<vmem>>) attributes {dimension_semantics = [#tpu.dimension_semantics<parallel>, #tpu.dimension_semantics<arbitrary>], iteration_bounds = array<i64: 2, 1>, scalar_prefetch = 0 : i64, scratch_operands = 2 : i64, tpu.core_type = #tpu.core_type<tc>, window_params = [{transform_indices = @transform_0, window_bounds = array<i64: 1, 16, 128>}, {pipeline_mode = #tpu.pipeline_mode<synchronous>, transform_indices = @transform_1, window_bounds = array<i64: 1, 128>}, {pipeline_mode = #tpu.pipeline_mode<synchronous>, transform_indices = @transform_2, window_bounds = array<i64: 128, 128>}, {pipeline_mode = #tpu.pipeline_mode<synchronous>, transform_indices = @transform_3, window_bounds = array<i64: 1, 128>}, {pipeline_mode = #tpu.pipeline_mode<synchronous>, transform_indices = @transform_4, window_bounds = array<i64: 128, 128>}, {pipeline_mode = #tpu.pipeline_mode<synchronous>, transform_indices = @transform_5, window_bounds = array<i64: 1, 128>}, {pipeline_mode = #tpu.pipeline_mode<synchronous>, transform_indices = @transform_6, window_bounds = array<i64: 128, 128>}, {pipeline_mode = #tpu.pipeline_mode<synchronous>, transform_indices = @transform_7, window_bounds = array<i64: 1, 128>}, {pipeline_mode = #tpu.pipeline_mode<synchronous>, transform_indices = @transform_8, window_bounds = array<i64: 128, 128>}, {pipeline_mode = #tpu.pipeline_mode<synchronous>, transform_indices = @transform_9, window_bounds = array<i64: 1, 128>}, {pipeline_mode = #tpu.pipeline_mode<synchronous>, transform_indices = @transform_10, window_bounds = array<i64: 1, 128>}, {pipeline_mode = #tpu.pipeline_mode<synchronous>, transform_indices = @transform_11, window_bounds = array<i64: 128, 512>}, {pipeline_mode = #tpu.pipeline_mode<synchronous>, transform_indices = @transform_12, window_bounds = array<i64: 1, 512>}, {pipeline_mode = #tpu.pipeline_mode<synchronous>, transform_indices = @transform_13, window_bounds = array<i64: 512, 128>}, {pipeline_mode = #tpu.pipeline_mode<synchronous>, transform_indices = @transform_14, window_bounds = array<i64: 1, 128>}, {transform_indices = @transform_15, window_bounds = array<i64: 1, 16, 128>}]} {
    %c0 = arith.constant 0 : index
    %c0_0 = arith.constant 0 : index
    %0 = vector.load %arg3[%c0, %c0_0] : memref<1x128xf32, #tpu.memory_space<vmem>>, vector<1x128xf32>
    %1 = vector.shape_cast %0 : vector<1x128xf32> to vector<128xf32>
    %c0_i32 = arith.constant 0 : i32
    %2 = arith.cmpi eq, %arg1, %c0_i32 : i32
    %3 = arith.extui %2 : i1 to i32
    %c0_i32_1 = arith.constant 0 : i32
    %4 = arith.cmpi ne, %3, %c0_i32_1 : i32
    scf.if %4 {
      %c0_44 = arith.constant 0 : index
      %c0_45 = arith.constant 0 : index
      %c0_46 = arith.constant 0 : index
      %104 = vector.load %arg2[%c0_44, %c0_45, %c0_46] : memref<1x16x128xf32, #tpu.memory_space<vmem>>, vector<1x16x128xf32>
      %105 = vector.shape_cast %104 : vector<1x16x128xf32> to vector<16x128xf32>
      %106 = arith.mulf %105, %105 : vector<16x128xf32>
      %cst_47 = arith.constant dense<0.000000e+00> : vector<16xf32>
      %107 = vector.multi_reduction <add>, %106, %cst_47 [1] : vector<16x128xf32> to vector<16xf32>
      %108 = vector.shape_cast %107 : vector<16xf32> to vector<16x1xf32>
      %cst_48 = arith.constant 1.280000e+02 : f32
      %109 = vector.broadcast %cst_48 : f32 to vector<16x1xf32>
      %110 = arith.divf %108, %109 : vector<16x1xf32>
      %cst_49 = arith.constant 9.99999997E-7 : f32
      %111 = vector.broadcast %cst_49 : f32 to vector<16x1xf32>
      %112 = arith.addf %110, %111 : vector<16x1xf32>
      %113 = math.rsqrt %112 : vector<16x1xf32>
      %114 = vector.broadcast %113 : vector<16x1xf32> to vector<16x128xf32>
      %115 = arith.mulf %105, %114 : vector<16x128xf32>
      %116 = vector.shape_cast %1 : vector<128xf32> to vector<1x128xf32>
      %117 = vector.broadcast %116 : vector<1x128xf32> to vector<16x128xf32>
      %118 = arith.mulf %115, %117 : vector<16x128xf32>
      %119 = arith.truncf %118 : vector<16x128xf32> to vector<16x128xbf16>
      %c0_50 = arith.constant 0 : index
      %c0_51 = arith.constant 0 : index
      %120 = vector.load %arg6[%c0_50, %c0_51] : memref<128x128xbf16, #tpu.memory_space<vmem>>, vector<128x128xbf16>
      %cst_52 = arith.constant dense<0.000000e+00> : vector<16x128xf32>
      %121 = tpu.matmul %119, %120, %cst_52 {dimension_numbers = #tpu.dot_dimension_numbers<[1], [0], [0], [1], [0, 0, 1, 1], [], []>} : vector<16x128xbf16>, vector<128x128xbf16>, vector<16x128xf32> -> vector<16x128xf32>
      %c0_53 = arith.constant 0 : index
      %c0_54 = arith.constant 0 : index
      %122 = vector.load %arg7[%c0_53, %c0_54] : memref<1x128xf32, #tpu.memory_space<vmem>>, vector<1x128xf32>
      %123 = vector.shape_cast %122 : vector<1x128xf32> to vector<128xf32>
      %124 = vector.shape_cast %123 : vector<128xf32> to vector<1x128xf32>
      %125 = vector.broadcast %124 : vector<1x128xf32> to vector<16x128xf32>
      %126 = arith.addf %121, %125 : vector<16x128xf32>
      %c0_55 = arith.constant 0 : index
      %c0_56 = arith.constant 0 : index
      %127 = vector.load %arg8[%c0_55, %c0_56] : memref<128x128xbf16, #tpu.memory_space<vmem>>, vector<128x128xbf16>
      %cst_57 = arith.constant dense<0.000000e+00> : vector<16x128xf32>
      %128 = tpu.matmul %119, %127, %cst_57 {dimension_numbers = #tpu.dot_dimension_numbers<[1], [0], [0], [1], [0, 0, 1, 1], [], []>} : vector<16x128xbf16>, vector<128x128xbf16>, vector<16x128xf32> -> vector<16x128xf32>
      %c0_58 = arith.constant 0 : index
      %c0_59 = arith.constant 0 : index
      %129 = vector.load %arg9[%c0_58, %c0_59] : memref<1x128xf32, #tpu.memory_space<vmem>>, vector<1x128xf32>
      %130 = vector.shape_cast %129 : vector<1x128xf32> to vector<128xf32>
      %131 = vector.shape_cast %130 : vector<128xf32> to vector<1x128xf32>
      %132 = vector.broadcast %131 : vector<1x128xf32> to vector<16x128xf32>
      %133 = arith.addf %128, %132 : vector<16x128xf32>
      %134 = arith.truncf %126 : vector<16x128xf32> to vector<16x128xbf16>
      %c0_60 = arith.constant 0 : index
      %c0_61 = arith.constant 0 : index
      %135 = vector.load %arg18[%c0_60, %c0_61] : memref<16x128xbf16, #tpu.memory_space<vmem>>, vector<16x128xbf16>
      tpu.vector_store %arg18[%c0_60, %c0_61], %134 {strides = array<i32>} : memref<16x128xbf16, #tpu.memory_space<vmem>>, vector<16x128xbf16>,
      %136 = arith.truncf %133 : vector<16x128xf32> to vector<16x128xbf16>
      %c0_62 = arith.constant 0 : index
      %c0_63 = arith.constant 0 : index
      %137 = vector.load %arg19[%c0_62, %c0_63] : memref<16x128xbf16, #tpu.memory_space<vmem>>, vector<16x128xbf16>
      tpu.vector_store %arg19[%c0_62, %c0_63], %136 {strides = array<i32>} : memref<16x128xbf16, #tpu.memory_space<vmem>>, vector<16x128xbf16>,
    } else {
    }
    %c16_i32 = arith.constant 16 : i32
    %5 = arith.muli %arg1, %c16_i32 : i32
    %6 = tpu.assume_multiple %5, 8 : i32
    %c0_2 = arith.constant 0 : index
    %7 = arith.index_cast %6 : i32 to index
    %c0_3 = arith.constant 0 : index
    %8 = vector.load %arg2[%c0_2, %7, %c0_3] : memref<1x16x128xf32, #tpu.memory_space<vmem>>, vector<1x16x128xf32>
    %9 = vector.shape_cast %8 : vector<1x16x128xf32> to vector<16x128xf32>
    %10 = arith.mulf %9, %9 : vector<16x128xf32>
    %cst = arith.constant dense<0.000000e+00> : vector<16xf32>
    %11 = vector.multi_reduction <add>, %10, %cst [1] : vector<16x128xf32> to vector<16xf32>
    %12 = vector.shape_cast %11 : vector<16xf32> to vector<16x1xf32>
    %cst_4 = arith.constant 1.280000e+02 : f32
    %13 = vector.broadcast %cst_4 : f32 to vector<16x1xf32>
    %14 = arith.divf %12, %13 : vector<16x1xf32>
    %cst_5 = arith.constant 9.99999997E-7 : f32
    %15 = vector.broadcast %cst_5 : f32 to vector<16x1xf32>
    %16 = arith.addf %14, %15 : vector<16x1xf32>
    %17 = math.rsqrt %16 : vector<16x1xf32>
    %18 = vector.broadcast %17 : vector<16x1xf32> to vector<16x128xf32>
    %19 = arith.mulf %9, %18 : vector<16x128xf32>
    %20 = vector.shape_cast %1 : vector<128xf32> to vector<1x128xf32>
    %21 = vector.broadcast %20 : vector<1x128xf32> to vector<16x128xf32>
    %22 = arith.mulf %19, %21 : vector<16x128xf32>
    %23 = arith.truncf %22 : vector<16x128xf32> to vector<16x128xbf16>
    %c0_6 = arith.constant 0 : index
    %c0_7 = arith.constant 0 : index
    %24 = vector.load %arg4[%c0_6, %c0_7] : memref<128x128xbf16, #tpu.memory_space<vmem>>, vector<128x128xbf16>
    %cst_8 = arith.constant dense<0.000000e+00> : vector<16x128xf32>
    %25 = tpu.matmul %23, %24, %cst_8 {dimension_numbers = #tpu.dot_dimension_numbers<[1], [0], [0], [1], [0, 0, 1, 1], [], []>} : vector<16x128xbf16>, vector<128x128xbf16>, vector<16x128xf32> -> vector<16x128xf32>
    %c0_9 = arith.constant 0 : index
    %c0_10 = arith.constant 0 : index
    %26 = vector.load %arg5[%c0_9, %c0_10] : memref<1x128xf32, #tpu.memory_space<vmem>>, vector<1x128xf32>
    %27 = vector.shape_cast %26 : vector<1x128xf32> to vector<128xf32>
    %28 = vector.shape_cast %27 : vector<128xf32> to vector<1x128xf32>
    %29 = vector.broadcast %28 : vector<1x128xf32> to vector<16x128xf32>
    %30 = arith.addf %25, %29 : vector<16x128xf32>
    %cst_11 = arith.constant 2.500000e-01 : f32
    %31 = vector.broadcast %cst_11 : f32 to vector<16x128xf32>
    %32 = arith.mulf %30, %31 : vector<16x128xf32>
    %33 = arith.truncf %32 : vector<16x128xf32> to vector<16x128xbf16>
    %34 = vector.shape_cast %33 : vector<16x128xbf16> to vector<16x8x16xbf16>
    %c0_12 = arith.constant 0 : index
    %c0_13 = arith.constant 0 : index
    %35 = vector.load %arg18[%c0_12, %c0_13] : memref<16x128xbf16, #tpu.memory_space<vmem>>, vector<16x128xbf16>
    %36 = vector.shape_cast %35 : vector<16x128xbf16> to vector<16x8x16xbf16>
    %c0_14 = arith.constant 0 : index
    %c0_15 = arith.constant 0 : index
    %37 = vector.load %arg19[%c0_14, %c0_15] : memref<16x128xbf16, #tpu.memory_space<vmem>>, vector<16x128xbf16>
    %38 = vector.shape_cast %37 : vector<16x128xbf16> to vector<16x8x16xbf16>
    "tpu.trace_start"() <{level = 10 : i32, message = "qhd,khd->hqk"}> : () -> ()
    %cst_16 = arith.constant dense<0.000000e+00> : vector<8x16x16xf32>
    %39 = tpu.matmul %34, %36, %cst_16 {dimension_numbers = #tpu.dot_dimension_numbers<[2], [2], [0], [0], [0, 1, 0, 0, 1, 0], [1], [1]>} : vector<16x8x16xbf16>, vector<16x8x16xbf16>, vector<8x16x16xf32> -> vector<8x16x16xf32>
    "tpu.trace_stop"() : () -> ()
    %cst_17 = arith.constant dense<0xFF800000> : vector<8x16xf32>
    %40 = vector.multi_reduction <maximumf>, %39, %cst_17 [2] : vector<8x16x16xf32> to vector<8x16xf32>
    %41 = vector.shape_cast %40 : vector<8x16xf32> to vector<8x16x1xf32>
    %42 = vector.broadcast %41 : vector<8x16x1xf32> to vector<8x16x16xf32>
    %43 = arith.subf %39, %42 : vector<8x16x16xf32>
    %44 = math.exp %43 : vector<8x16x16xf32>
    %cst_18 = arith.constant dense<0.000000e+00> : vector<8x16xf32>
    %45 = vector.multi_reduction <add>, %44, %cst_18 [2] : vector<8x16x16xf32> to vector<8x16xf32>
    %46 = vector.shape_cast %45 : vector<8x16xf32> to vector<8x16x1xf32>
    %47 = tpu.reciprocal %46 {approx = true} : vector<8x16x1xf32> -> vector<8x16x1xf32>
    %48 = vector.broadcast %47 : vector<8x16x1xf32> to vector<8x16x16xf32>
    %49 = arith.mulf %44, %48 : vector<8x16x16xf32>
    %50 = arith.truncf %49 : vector<8x16x16xf32> to vector<8x16x16xbf16>
    "tpu.trace_start"() <{level = 10 : i32, message = "hqk,khd->hqd"}> : () -> ()
    %cst_19 = arith.constant dense<0.000000e+00> : vector<8x16x16xf32>
    %51 = tpu.matmul %50, %38, %cst_19 {dimension_numbers = #tpu.dot_dimension_numbers<[2], [0], [1], [2], [0, 0, 0, 1, 1, 2], [0], [1]>} : vector<8x16x16xbf16>, vector<16x8x16xbf16>, vector<8x16x16xf32> -> vector<8x16x16xf32>
    "tpu.trace_stop"() : () -> ()
    %52 = tpu.transpose %51, [1, 0, 2] : vector<8x16x16xf32> -> vector<16x8x16xf32>
    %53 = vector.shape_cast %52 : vector<16x8x16xf32> to vector<16x128xf32>
    %54 = arith.truncf %53 : vector<16x128xf32> to vector<16x128xbf16>
    %c0_20 = arith.constant 0 : index
    %c0_21 = arith.constant 0 : index
    %55 = vector.load %arg10[%c0_20, %c0_21] : memref<128x128xbf16, #tpu.memory_space<vmem>>, vector<128x128xbf16>
    %cst_22 = arith.constant dense<0.000000e+00> : vector<16x128xf32>
    %56 = tpu.matmul %54, %55, %cst_22 {dimension_numbers = #tpu.dot_dimension_numbers<[1], [0], [0], [1], [0, 0, 1, 1], [], []>} : vector<16x128xbf16>, vector<128x128xbf16>, vector<16x128xf32> -> vector<16x128xf32>
    %c0_23 = arith.constant 0 : index
    %c0_24 = arith.constant 0 : index
    %57 = vector.load %arg11[%c0_23, %c0_24] : memref<1x128xf32, #tpu.memory_space<vmem>>, vector<1x128xf32>
    %58 = vector.shape_cast %57 : vector<1x128xf32> to vector<128xf32>
    %59 = vector.shape_cast %58 : vector<128xf32> to vector<1x128xf32>
    %60 = vector.broadcast %59 : vector<1x128xf32> to vector<16x128xf32>
    %61 = arith.addf %56, %60 : vector<16x128xf32>
    %62 = arith.addf %9, %61 : vector<16x128xf32>
    %c0_25 = arith.constant 0 : index
    %c0_26 = arith.constant 0 : index
    %63 = vector.load %arg12[%c0_25, %c0_26] : memref<1x128xf32, #tpu.memory_space<vmem>>, vector<1x128xf32>
    %64 = vector.shape_cast %63 : vector<1x128xf32> to vector<128xf32>
    %65 = arith.mulf %62, %62 : vector<16x128xf32>
    %cst_27 = arith.constant dense<0.000000e+00> : vector<16xf32>
    %66 = vector.multi_reduction <add>, %65, %cst_27 [1] : vector<16x128xf32> to vector<16xf32>
    %67 = vector.shape_cast %66 : vector<16xf32> to vector<16x1xf32>
    %cst_28 = arith.constant 1.280000e+02 : f32
    %68 = vector.broadcast %cst_28 : f32 to vector<16x1xf32>
    %69 = arith.divf %67, %68 : vector<16x1xf32>
    %cst_29 = arith.constant 9.99999997E-7 : f32
    %70 = vector.broadcast %cst_29 : f32 to vector<16x1xf32>
    %71 = arith.addf %69, %70 : vector<16x1xf32>
    %72 = math.rsqrt %71 : vector<16x1xf32>
    %73 = vector.broadcast %72 : vector<16x1xf32> to vector<16x128xf32>
    %74 = arith.mulf %62, %73 : vector<16x128xf32>
    %75 = vector.shape_cast %64 : vector<128xf32> to vector<1x128xf32>
    %76 = vector.broadcast %75 : vector<1x128xf32> to vector<16x128xf32>
    %77 = arith.mulf %74, %76 : vector<16x128xf32>
    %78 = arith.truncf %77 : vector<16x128xf32> to vector<16x128xbf16>
    %c0_30 = arith.constant 0 : index
    %c0_31 = arith.constant 0 : index
    %79 = vector.load %arg13[%c0_30, %c0_31] : memref<128x512xbf16, #tpu.memory_space<vmem>>, vector<128x512xbf16>
    %cst_32 = arith.constant dense<0.000000e+00> : vector<16x512xf32>
    %80 = tpu.matmul %78, %79, %cst_32 {dimension_numbers = #tpu.dot_dimension_numbers<[1], [0], [0], [1], [0, 0, 1, 1], [], []>} : vector<16x128xbf16>, vector<128x512xbf16>, vector<16x512xf32> -> vector<16x512xf32>
    %c0_33 = arith.constant 0 : index
    %c0_34 = arith.constant 0 : index
    %81 = vector.load %arg14[%c0_33, %c0_34] : memref<1x512xf32, #tpu.memory_space<vmem>>, vector<1x512xf32>
    %82 = vector.shape_cast %81 : vector<1x512xf32> to vector<512xf32>
    %83 = vector.shape_cast %82 : vector<512xf32> to vector<1x512xf32>
    %84 = vector.broadcast %83 : vector<1x512xf32> to vector<16x512xf32>
    %85 = arith.addf %80, %84 : vector<16x512xf32>
    %86 = arith.negf %85 : vector<16x512xf32>
    %87 = math.exp %86 : vector<16x512xf32>
    %cst_35 = arith.constant 1.000000e+00 : f32
    %88 = vector.broadcast %cst_35 : f32 to vector<16x512xf32>
    %89 = arith.addf %88, %87 : vector<16x512xf32>
    %90 = arith.divf %88, %89 : vector<16x512xf32>
    %91 = arith.mulf %85, %90 : vector<16x512xf32>
    %92 = arith.truncf %91 : vector<16x512xf32> to vector<16x512xbf16>
    %c0_36 = arith.constant 0 : index
    %c0_37 = arith.constant 0 : index
    %93 = vector.load %arg15[%c0_36, %c0_37] : memref<512x128xbf16, #tpu.memory_space<vmem>>, vector<512x128xbf16>
    %cst_38 = arith.constant dense<0.000000e+00> : vector<16x128xf32>
    %94 = tpu.matmul %92, %93, %cst_38 {dimension_numbers = #tpu.dot_dimension_numbers<[1], [0], [0], [1], [0, 0, 1, 1], [], []>} : vector<16x512xbf16>, vector<512x128xbf16>, vector<16x128xf32> -> vector<16x128xf32>
    %c0_39 = arith.constant 0 : index
    %c0_40 = arith.constant 0 : index
    %95 = vector.load %arg16[%c0_39, %c0_40] : memref<1x128xf32, #tpu.memory_space<vmem>>, vector<1x128xf32>
    %96 = vector.shape_cast %95 : vector<1x128xf32> to vector<128xf32>
    %97 = vector.shape_cast %96 : vector<128xf32> to vector<1x128xf32>
    %98 = vector.broadcast %97 : vector<1x128xf32> to vector<16x128xf32>
    %99 = arith.addf %94, %98 : vector<16x128xf32>
    %100 = arith.addf %62, %99 : vector<16x128xf32>
    %c0_41 = arith.constant 0 : index
    %c0_42 = arith.constant 0 : index
    %c0_43 = arith.constant 0 : index
    %101 = vector.load %arg17[%c0_41, %c0_42, %c0_43] : memref<1x16x128xf32, #tpu.memory_space<vmem>>, vector<1x16x128xf32>
    %102 = vector.shape_cast %101 : vector<1x16x128xf32> to vector<16x128xf32>
    %103 = vector.shape_cast %100 : vector<16x128xf32> to vector<1x16x128xf32>
    tpu.vector_store %arg17[%c0_41, %c0_42, %c0_43], %103 {strides = array<i32>} : memref<1x16x128xf32, #tpu.memory_space<vmem>>, vector<1x16x128xf32>,
    return
  }
  func.func @transform_0(%arg0: i32, %arg1: i32) -> (i32, i32, i32) {
    %c0_i32 = arith.constant 0 : i32
    %c0_i32_0 = arith.constant 0 : i32
    %c0_i32_1 = arith.constant 0 : i32
    return %arg0, %c0_i32, %c0_i32_0 : i32, i32, i32
  }
  func.func @transform_1(%arg0: i32, %arg1: i32) -> (i32, i32) {
    %c0_i32 = arith.constant 0 : i32
    %c0_i32_0 = arith.constant 0 : i32
    %c0_i32_1 = arith.constant 0 : i32
    return %c0_i32, %c0_i32_0 : i32, i32
  }
  func.func @transform_2(%arg0: i32, %arg1: i32) -> (i32, i32) {
    %c0_i32 = arith.constant 0 : i32
    %c0_i32_0 = arith.constant 0 : i32
    %c0_i32_1 = arith.constant 0 : i32
    return %c0_i32, %c0_i32_0 : i32, i32
  }
  func.func @transform_3(%arg0: i32, %arg1: i32) -> (i32, i32) {
    %c0_i32 = arith.constant 0 : i32
    %c0_i32_0 = arith.constant 0 : i32
    %c0_i32_1 = arith.constant 0 : i32
    return %c0_i32, %c0_i32_0 : i32, i32
  }
  func.func @transform_4(%arg0: i32, %arg1: i32) -> (i32, i32) {
    %c0_i32 = arith.constant 0 : i32
    %c0_i32_0 = arith.constant 0 : i32
    %c0_i32_1 = arith.constant 0 : i32
    return %c0_i32, %c0_i32_0 : i32, i32
  }
  func.func @transform_5(%arg0: i32, %arg1: i32) -> (i32, i32) {
    %c0_i32 = arith.constant 0 : i32
    %c0_i32_0 = arith.constant 0 : i32
    %c0_i32_1 = arith.constant 0 : i32
    return %c0_i32, %c0_i32_0 : i32, i32
  }
  func.func @transform_6(%arg0: i32, %arg1: i32) -> (i32, i32) {
    %c0_i32 = arith.constant 0 : i32
    %c0_i32_0 = arith.constant 0 : i32
    %c0_i32_1 = arith.constant 0 : i32
    return %c0_i32, %c0_i32_0 : i32, i32
  }
  func.func @transform_7(%arg0: i32, %arg1: i32) -> (i32, i32) {
    %c0_i32 = arith.constant 0 : i32
    %c0_i32_0 = arith.constant 0 : i32
    %c0_i32_1 = arith.constant 0 : i32
    return %c0_i32, %c0_i32_0 : i32, i32
  }
  func.func @transform_8(%arg0: i32, %arg1: i32) -> (i32, i32) {
    %c0_i32 = arith.constant 0 : i32
    %c0_i32_0 = arith.constant 0 : i32
    %c0_i32_1 = arith.constant 0 : i32
    return %c0_i32, %c0_i32_0 : i32, i32
  }
  func.func @transform_9(%arg0: i32, %arg1: i32) -> (i32, i32) {
    %c0_i32 = arith.constant 0 : i32
    %c0_i32_0 = arith.constant 0 : i32
    %c0_i32_1 = arith.constant 0 : i32
    return %c0_i32, %c0_i32_0 : i32, i32
  }
  func.func @transform_10(%arg0: i32, %arg1: i32) -> (i32, i32) {
    %c0_i32 = arith.constant 0 : i32
    %c0_i32_0 = arith.constant 0 : i32
    %c0_i32_1 = arith.constant 0 : i32
    return %c0_i32, %c0_i32_0 : i32, i32
  }
  func.func @transform_11(%arg0: i32, %arg1: i32) -> (i32, i32) {
    %c0_i32 = arith.constant 0 : i32
    %c0_i32_0 = arith.constant 0 : i32
    %c0_i32_1 = arith.constant 0 : i32
    return %c0_i32, %c0_i32_0 : i32, i32
  }
  func.func @transform_12(%arg0: i32, %arg1: i32) -> (i32, i32) {
    %c0_i32 = arith.constant 0 : i32
    %c0_i32_0 = arith.constant 0 : i32
    %c0_i32_1 = arith.constant 0 : i32
    return %c0_i32, %c0_i32_0 : i32, i32
  }
  func.func @transform_13(%arg0: i32, %arg1: i32) -> (i32, i32) {
    %c0_i32 = arith.constant 0 : i32
    %c0_i32_0 = arith.constant 0 : i32
    %c0_i32_1 = arith.constant 0 : i32
    return %c0_i32, %c0_i32_0 : i32, i32
  }
  func.func @transform_14(%arg0: i32, %arg1: i32) -> (i32, i32) {
    %c0_i32 = arith.constant 0 : i32
    %c0_i32_0 = arith.constant 0 : i32
    %c0_i32_1 = arith.constant 0 : i32
    return %c0_i32, %c0_i32_0 : i32, i32
  }
  func.func @transform_15(%arg0: i32, %arg1: i32) -> (i32, i32, i32) {
    %c0_i32 = arith.constant 0 : i32
    %c0_i32_0 = arith.constant 0 : i32
    return %arg0, %arg1, %c0_i32 : i32, i32, i32
  }
}

module attributes {stable_mosaic.version = 11 : i64} {
  func.func @transformer_block_kernel(%arg0: i32, %arg1: i32, %arg2: memref<1x16x128xf32, #tpu.memory_space<vmem>>, %arg3: memref<1x128xf32, #tpu.memory_space<vmem>>, %arg4: memref<128x128xbf16, #tpu.memory_space<vmem>>, %arg5: memref<1x128xf32, #tpu.memory_space<vmem>>, %arg6: memref<128x128xbf16, #tpu.memory_space<vmem>>, %arg7: memref<1x128xf32, #tpu.memory_space<vmem>>, %arg8: memref<128x128xbf16, #tpu.memory_space<vmem>>, %arg9: memref<1x128xf32, #tpu.memory_space<vmem>>, %arg10: memref<128x128xbf16, #tpu.memory_space<vmem>>, %arg11: memref<1x128xf32, #tpu.memory_space<vmem>>, %arg12: memref<1x128xf32, #tpu.memory_space<vmem>>, %arg13: memref<128x512xbf16, #tpu.memory_space<vmem>>, %arg14: memref<1x512xf32, #tpu.memory_space<vmem>>, %arg15: memref<512x128xbf16, #tpu.memory_space<vmem>>, %arg16: memref<1x128xf32, #tpu.memory_space<vmem>>, %arg17: memref<1x16x128xf32, #tpu.memory_space<vmem>>, %arg18: memref<16x128xbf16, #tpu.memory_space<vmem>>, %arg19: memref<16x128xbf16, #tpu.memory_space<vmem>>) attributes {dimension_semantics = [#tpu.dimension_semantics<parallel>, #tpu.dimension_semantics<arbitrary>], iteration_bounds = array<i64: 2, 1>, scalar_prefetch = 0 : i64, scratch_operands = 2 : i64, tpu.core_type = #tpu.core_type<tc>, window_params = [{transform_indices = @transform_0, window_bounds = array<i64: 1, 16, 128>}, {pipeline_mode = #tpu.pipeline_mode<synchronous>, transform_indices = @transform_1, window_bounds = array<i64: 1, 128>}, {pipeline_mode = #tpu.pipeline_mode<synchronous>, transform_indices = @transform_2, window_bounds = array<i64: 128, 128>}, {pipeline_mode = #tpu.pipeline_mode<synchronous>, transform_indices = @transform_3, window_bounds = array<i64: 1, 128>}, {pipeline_mode = #tpu.pipeline_mode<synchronous>, transform_indices = @transform_4, window_bounds = array<i64: 128, 128>}, {pipeline_mode = #tpu.pipeline_mode<synchronous>, transform_indices = @transform_5, window_bounds = array<i64: 1, 128>}, {pipeline_mode = #tpu.pipeline_mode<synchronous>, transform_indices = @transform_6, window_bounds = array<i64: 128, 128>}, {pipeline_mode = #tpu.pipeline_mode<synchronous>, transform_indices = @transform_7, window_bounds = array<i64: 1, 128>}, {pipeline_mode = #tpu.pipeline_mode<synchronous>, transform_indices = @transform_8, window_bounds = array<i64: 128, 128>}, {pipeline_mode = #tpu.pipeline_mode<synchronous>, transform_indices = @transform_9, window_bounds = array<i64: 1, 128>}, {pipeline_mode = #tpu.pipeline_mode<synchronous>, transform_indices = @transform_10, window_bounds = array<i64: 1, 128>}, {pipeline_mode = #tpu.pipeline_mode<synchronous>, transform_indices = @transform_11, window_bounds = array<i64: 128, 512>}, {pipeline_mode = #tpu.pipeline_mode<synchronous>, transform_indices = @transform_12, window_bounds = array<i64: 1, 512>}, {pipeline_mode = #tpu.pipeline_mode<synchronous>, transform_indices = @transform_13, window_bounds = array<i64: 512, 128>}, {pipeline_mode = #tpu.pipeline_mode<synchronous>, transform_indices = @transform_14, window_bounds = array<i64: 1, 128>}, {transform_indices = @transform_15, window_bounds = array<i64: 1, 16, 128>}]} {
    %c0 = arith.constant 0 : index
    %c0_0 = arith.constant 0 : index
    %0 = vector.load %arg3[%c0, %c0_0] : memref<1x128xf32, #tpu.memory_space<vmem>>, vector<1x128xf32>
    %1 = vector.shape_cast %0 : vector<1x128xf32> to vector<128xf32>
    %c0_i32 = arith.constant 0 : i32
    %2 = arith.cmpi eq, %arg1, %c0_i32 : i32
    %3 = arith.extui %2 : i1 to i32
    %c0_i32_1 = arith.constant 0 : i32
    %4 = arith.cmpi ne, %3, %c0_i32_1 : i32
    scf.if %4 {
      %c0_72 = arith.constant 0 : index
      %c0_73 = arith.constant 0 : index
      %c0_74 = arith.constant 0 : index
      %215 = vector.load %arg2[%c0_72, %c0_73, %c0_74] : memref<1x16x128xf32, #tpu.memory_space<vmem>>, vector<1x16x128xf32>
      %216 = vector.shape_cast %215 : vector<1x16x128xf32> to vector<16x128xf32>
      %217 = arith.mulf %216, %216 : vector<16x128xf32>
      %cst_75 = arith.constant dense<0.000000e+00> : vector<16xf32>
      %218 = vector.multi_reduction <add>, %217, %cst_75 [1] : vector<16x128xf32> to vector<16xf32>
      %219 = vector.shape_cast %218 : vector<16xf32> to vector<16x1xf32>
      %cst_76 = arith.constant 1.280000e+02 : f32
      %220 = vector.broadcast %cst_76 : f32 to vector<16x1xf32>
      %221 = arith.divf %219, %220 : vector<16x1xf32>
      %cst_77 = arith.constant 9.99999997E-7 : f32
      %222 = vector.broadcast %cst_77 : f32 to vector<16x1xf32>
      %223 = arith.addf %221, %222 : vector<16x1xf32>
      %224 = math.rsqrt %223 : vector<16x1xf32>
      %225 = vector.broadcast %224 : vector<16x1xf32> to vector<16x128xf32>
      %226 = arith.mulf %216, %225 : vector<16x128xf32>
      %227 = vector.shape_cast %1 : vector<128xf32> to vector<1x128xf32>
      %228 = vector.broadcast %227 : vector<1x128xf32> to vector<16x128xf32>
      %229 = arith.mulf %226, %228 : vector<16x128xf32>
      %230 = arith.truncf %229 : vector<16x128xf32> to vector<16x128xbf16>
      %c0_78 = arith.constant 0 : index
      %c0_79 = arith.constant 0 : index
      %231 = vector.load %arg6[%c0_78, %c0_79] : memref<128x128xbf16, #tpu.memory_space<vmem>>, vector<128x128xbf16>
      %cst_80 = arith.constant dense<0.000000e+00> : vector<16x128xf32>
      %232 = tpu.matmul %230, %231, %cst_80 {dimension_numbers = #tpu.dot_dimension_numbers<[1], [0], [0], [1], [0, 0, 1, 1], [], []>} : vector<16x128xbf16>, vector<128x128xbf16>, vector<16x128xf32> -> vector<16x128xf32>
      %c0_81 = arith.constant 0 : index
      %c0_82 = arith.constant 0 : index
      %233 = vector.load %arg7[%c0_81, %c0_82] : memref<1x128xf32, #tpu.memory_space<vmem>>, vector<1x128xf32>
      %234 = vector.shape_cast %233 : vector<1x128xf32> to vector<128xf32>
      %235 = vector.shape_cast %234 : vector<128xf32> to vector<1x128xf32>
      %236 = vector.broadcast %235 : vector<1x128xf32> to vector<16x128xf32>
      %237 = arith.addf %232, %236 : vector<16x128xf32>
      %c0_83 = arith.constant 0 : index
      %c0_84 = arith.constant 0 : index
      %238 = vector.load %arg8[%c0_83, %c0_84] : memref<128x128xbf16, #tpu.memory_space<vmem>>, vector<128x128xbf16>
      %cst_85 = arith.constant dense<0.000000e+00> : vector<16x128xf32>
      %239 = tpu.matmul %230, %238, %cst_85 {dimension_numbers = #tpu.dot_dimension_numbers<[1], [0], [0], [1], [0, 0, 1, 1], [], []>} : vector<16x128xbf16>, vector<128x128xbf16>, vector<16x128xf32> -> vector<16x128xf32>
      %c0_86 = arith.constant 0 : index
      %c0_87 = arith.constant 0 : index
      %240 = vector.load %arg9[%c0_86, %c0_87] : memref<1x128xf32, #tpu.memory_space<vmem>>, vector<1x128xf32>
      %241 = vector.shape_cast %240 : vector<1x128xf32> to vector<128xf32>
      %242 = vector.shape_cast %241 : vector<128xf32> to vector<1x128xf32>
      %243 = vector.broadcast %242 : vector<1x128xf32> to vector<16x128xf32>
      %244 = arith.addf %239, %243 : vector<16x128xf32>
      %245 = arith.truncf %237 : vector<16x128xf32> to vector<16x128xbf16>
      %c0_88 = arith.constant 0 : index
      %c0_89 = arith.constant 0 : index
      %246 = vector.load %arg18[%c0_88, %c0_89] : memref<16x128xbf16, #tpu.memory_space<vmem>>, vector<16x128xbf16>
      tpu.vector_store %arg18[%c0_88, %c0_89], %245 {strides = array<i32>} : memref<16x128xbf16, #tpu.memory_space<vmem>>, vector<16x128xbf16>,
      %247 = arith.truncf %244 : vector<16x128xf32> to vector<16x128xbf16>
      %c0_90 = arith.constant 0 : index
      %c0_91 = arith.constant 0 : index
      %248 = vector.load %arg19[%c0_90, %c0_91] : memref<16x128xbf16, #tpu.memory_space<vmem>>, vector<16x128xbf16>
      tpu.vector_store %arg19[%c0_90, %c0_91], %247 {strides = array<i32>} : memref<16x128xbf16, #tpu.memory_space<vmem>>, vector<16x128xbf16>,
    } else {
    }
    %c16_i32 = arith.constant 16 : i32
    %5 = arith.muli %arg1, %c16_i32 : i32
    %6 = tpu.assume_multiple %5, 8 : i32
    %c0_2 = arith.constant 0 : index
    %7 = arith.index_cast %6 : i32 to index
    %c0_3 = arith.constant 0 : index
    %8 = vector.load %arg2[%c0_2, %7, %c0_3] : memref<1x16x128xf32, #tpu.memory_space<vmem>>, vector<1x16x128xf32>
    %9 = vector.shape_cast %8 : vector<1x16x128xf32> to vector<16x128xf32>
    %10 = arith.mulf %9, %9 : vector<16x128xf32>
    %cst = arith.constant dense<0.000000e+00> : vector<16xf32>
    %11 = vector.multi_reduction <add>, %10, %cst [1] : vector<16x128xf32> to vector<16xf32>
    %12 = vector.shape_cast %11 : vector<16xf32> to vector<16x1xf32>
    %cst_4 = arith.constant 1.280000e+02 : f32
    %13 = vector.broadcast %cst_4 : f32 to vector<16x1xf32>
    %14 = arith.divf %12, %13 : vector<16x1xf32>
    %cst_5 = arith.constant 9.99999997E-7 : f32
    %15 = vector.broadcast %cst_5 : f32 to vector<16x1xf32>
    %16 = arith.addf %14, %15 : vector<16x1xf32>
    %17 = math.rsqrt %16 : vector<16x1xf32>
    %18 = vector.broadcast %17 : vector<16x1xf32> to vector<16x128xf32>
    %19 = arith.mulf %9, %18 : vector<16x128xf32>
    %20 = vector.shape_cast %1 : vector<128xf32> to vector<1x128xf32>
    %21 = vector.broadcast %20 : vector<1x128xf32> to vector<16x128xf32>
    %22 = arith.mulf %19, %21 : vector<16x128xf32>
    %23 = arith.truncf %22 : vector<16x128xf32> to vector<16x128xbf16>
    %c0_6 = arith.constant 0 : index
    %c0_7 = arith.constant 0 : index
    %24 = vector.load %arg4[%c0_6, %c0_7] : memref<128x128xbf16, #tpu.memory_space<vmem>>, vector<128x128xbf16>
    %cst_8 = arith.constant dense<0.000000e+00> : vector<16x128xf32>
    %25 = tpu.matmul %23, %24, %cst_8 {dimension_numbers = #tpu.dot_dimension_numbers<[1], [0], [0], [1], [0, 0, 1, 1], [], []>} : vector<16x128xbf16>, vector<128x128xbf16>, vector<16x128xf32> -> vector<16x128xf32>
    %c0_9 = arith.constant 0 : index
    %c0_10 = arith.constant 0 : index
    %26 = vector.load %arg5[%c0_9, %c0_10] : memref<1x128xf32, #tpu.memory_space<vmem>>, vector<1x128xf32>
    %27 = vector.shape_cast %26 : vector<1x128xf32> to vector<128xf32>
    %28 = vector.shape_cast %27 : vector<128xf32> to vector<1x128xf32>
    %29 = vector.broadcast %28 : vector<1x128xf32> to vector<16x128xf32>
    %30 = arith.addf %25, %29 : vector<16x128xf32>
    %cst_11 = arith.constant 2.500000e-01 : f32
    %31 = vector.broadcast %cst_11 : f32 to vector<16x128xf32>
    %32 = arith.mulf %30, %31 : vector<16x128xf32>
    %33 = arith.truncf %32 : vector<16x128xf32> to vector<16x128xbf16>
    %c0_12 = arith.constant 0 : index
    %c0_13 = arith.constant 0 : index
    %34 = vector.load %arg18[%c0_12, %c0_13] : memref<16x128xbf16, #tpu.memory_space<vmem>>, vector<16x128xbf16>
    %c0_14 = arith.constant 0 : index
    %c0_15 = arith.constant 0 : index
    %35 = vector.load %arg19[%c0_14, %c0_15] : memref<16x128xbf16, #tpu.memory_space<vmem>>, vector<16x128xbf16>
    %36 = vector.extract_strided_slice %33 {offsets = [0, 0], sizes = [16, 16], strides = [1, 1]} : vector<16x128xbf16> to vector<16x16xbf16>
    %37 = vector.extract_strided_slice %34 {offsets = [0, 0], sizes = [16, 16], strides = [1, 1]} : vector<16x128xbf16> to vector<16x16xbf16>
    %38 = vector.extract_strided_slice %35 {offsets = [0, 0], sizes = [16, 16], strides = [1, 1]} : vector<16x128xbf16> to vector<16x16xbf16>
    %cst_16 = arith.constant dense<0.000000e+00> : vector<16x16xf32>
    %39 = tpu.matmul %36, %37, %cst_16 {dimension_numbers = #tpu.dot_dimension_numbers<[1], [1], [0], [0], [0, 0, 1, 0], [], []>} : vector<16x16xbf16>, vector<16x16xbf16>, vector<16x16xf32> -> vector<16x16xf32>
    %cst_17 = arith.constant dense<0xFF800000> : vector<16xf32>
    %40 = vector.multi_reduction <maximumf>, %39, %cst_17 [1] : vector<16x16xf32> to vector<16xf32>
    %41 = vector.shape_cast %40 : vector<16xf32> to vector<16x1xf32>
    %42 = vector.broadcast %41 : vector<16x1xf32> to vector<16x16xf32>
    %43 = arith.subf %39, %42 : vector<16x16xf32>
    %44 = math.exp %43 : vector<16x16xf32>
    %cst_18 = arith.constant dense<0.000000e+00> : vector<16xf32>
    %45 = vector.multi_reduction <add>, %44, %cst_18 [1] : vector<16x16xf32> to vector<16xf32>
    %46 = vector.shape_cast %45 : vector<16xf32> to vector<16x1xf32>
    %47 = tpu.reciprocal %46 {approx = true} : vector<16x1xf32> -> vector<16x1xf32>
    %48 = vector.broadcast %47 : vector<16x1xf32> to vector<16x16xf32>
    %49 = arith.mulf %44, %48 : vector<16x16xf32>
    %50 = arith.truncf %49 : vector<16x16xf32> to vector<16x16xbf16>
    %cst_19 = arith.constant dense<0.000000e+00> : vector<16x16xf32>
    %51 = tpu.matmul %50, %38, %cst_19 {dimension_numbers = #tpu.dot_dimension_numbers<[1], [0], [0], [1], [0, 0, 1, 1], [], []>} : vector<16x16xbf16>, vector<16x16xbf16>, vector<16x16xf32> -> vector<16x16xf32>
    %52 = vector.extract_strided_slice %33 {offsets = [0, 16], sizes = [16, 16], strides = [1, 1]} : vector<16x128xbf16> to vector<16x16xbf16>
    %53 = vector.extract_strided_slice %34 {offsets = [0, 16], sizes = [16, 16], strides = [1, 1]} : vector<16x128xbf16> to vector<16x16xbf16>
    %54 = vector.extract_strided_slice %35 {offsets = [0, 16], sizes = [16, 16], strides = [1, 1]} : vector<16x128xbf16> to vector<16x16xbf16>
    %cst_20 = arith.constant dense<0.000000e+00> : vector<16x16xf32>
    %55 = tpu.matmul %52, %53, %cst_20 {dimension_numbers = #tpu.dot_dimension_numbers<[1], [1], [0], [0], [0, 0, 1, 0], [], []>} : vector<16x16xbf16>, vector<16x16xbf16>, vector<16x16xf32> -> vector<16x16xf32>
    %cst_21 = arith.constant dense<0xFF800000> : vector<16xf32>
    %56 = vector.multi_reduction <maximumf>, %55, %cst_21 [1] : vector<16x16xf32> to vector<16xf32>
    %57 = vector.shape_cast %56 : vector<16xf32> to vector<16x1xf32>
    %58 = vector.broadcast %57 : vector<16x1xf32> to vector<16x16xf32>
    %59 = arith.subf %55, %58 : vector<16x16xf32>
    %60 = math.exp %59 : vector<16x16xf32>
    %cst_22 = arith.constant dense<0.000000e+00> : vector<16xf32>
    %61 = vector.multi_reduction <add>, %60, %cst_22 [1] : vector<16x16xf32> to vector<16xf32>
    %62 = vector.shape_cast %61 : vector<16xf32> to vector<16x1xf32>
    %63 = tpu.reciprocal %62 {approx = true} : vector<16x1xf32> -> vector<16x1xf32>
    %64 = vector.broadcast %63 : vector<16x1xf32> to vector<16x16xf32>
    %65 = arith.mulf %60, %64 : vector<16x16xf32>
    %66 = arith.truncf %65 : vector<16x16xf32> to vector<16x16xbf16>
    %cst_23 = arith.constant dense<0.000000e+00> : vector<16x16xf32>
    %67 = tpu.matmul %66, %54, %cst_23 {dimension_numbers = #tpu.dot_dimension_numbers<[1], [0], [0], [1], [0, 0, 1, 1], [], []>} : vector<16x16xbf16>, vector<16x16xbf16>, vector<16x16xf32> -> vector<16x16xf32>
    %68 = vector.extract_strided_slice %33 {offsets = [0, 32], sizes = [16, 16], strides = [1, 1]} : vector<16x128xbf16> to vector<16x16xbf16>
    %69 = vector.extract_strided_slice %34 {offsets = [0, 32], sizes = [16, 16], strides = [1, 1]} : vector<16x128xbf16> to vector<16x16xbf16>
    %70 = vector.extract_strided_slice %35 {offsets = [0, 32], sizes = [16, 16], strides = [1, 1]} : vector<16x128xbf16> to vector<16x16xbf16>
    %cst_24 = arith.constant dense<0.000000e+00> : vector<16x16xf32>
    %71 = tpu.matmul %68, %69, %cst_24 {dimension_numbers = #tpu.dot_dimension_numbers<[1], [1], [0], [0], [0, 0, 1, 0], [], []>} : vector<16x16xbf16>, vector<16x16xbf16>, vector<16x16xf32> -> vector<16x16xf32>
    %cst_25 = arith.constant dense<0xFF800000> : vector<16xf32>
    %72 = vector.multi_reduction <maximumf>, %71, %cst_25 [1] : vector<16x16xf32> to vector<16xf32>
    %73 = vector.shape_cast %72 : vector<16xf32> to vector<16x1xf32>
    %74 = vector.broadcast %73 : vector<16x1xf32> to vector<16x16xf32>
    %75 = arith.subf %71, %74 : vector<16x16xf32>
    %76 = math.exp %75 : vector<16x16xf32>
    %cst_26 = arith.constant dense<0.000000e+00> : vector<16xf32>
    %77 = vector.multi_reduction <add>, %76, %cst_26 [1] : vector<16x16xf32> to vector<16xf32>
    %78 = vector.shape_cast %77 : vector<16xf32> to vector<16x1xf32>
    %79 = tpu.reciprocal %78 {approx = true} : vector<16x1xf32> -> vector<16x1xf32>
    %80 = vector.broadcast %79 : vector<16x1xf32> to vector<16x16xf32>
    %81 = arith.mulf %76, %80 : vector<16x16xf32>
    %82 = arith.truncf %81 : vector<16x16xf32> to vector<16x16xbf16>
    %cst_27 = arith.constant dense<0.000000e+00> : vector<16x16xf32>
    %83 = tpu.matmul %82, %70, %cst_27 {dimension_numbers = #tpu.dot_dimension_numbers<[1], [0], [0], [1], [0, 0, 1, 1], [], []>} : vector<16x16xbf16>, vector<16x16xbf16>, vector<16x16xf32> -> vector<16x16xf32>
    %84 = vector.extract_strided_slice %33 {offsets = [0, 48], sizes = [16, 16], strides = [1, 1]} : vector<16x128xbf16> to vector<16x16xbf16>
    %85 = vector.extract_strided_slice %34 {offsets = [0, 48], sizes = [16, 16], strides = [1, 1]} : vector<16x128xbf16> to vector<16x16xbf16>
    %86 = vector.extract_strided_slice %35 {offsets = [0, 48], sizes = [16, 16], strides = [1, 1]} : vector<16x128xbf16> to vector<16x16xbf16>
    %cst_28 = arith.constant dense<0.000000e+00> : vector<16x16xf32>
    %87 = tpu.matmul %84, %85, %cst_28 {dimension_numbers = #tpu.dot_dimension_numbers<[1], [1], [0], [0], [0, 0, 1, 0], [], []>} : vector<16x16xbf16>, vector<16x16xbf16>, vector<16x16xf32> -> vector<16x16xf32>
    %cst_29 = arith.constant dense<0xFF800000> : vector<16xf32>
    %88 = vector.multi_reduction <maximumf>, %87, %cst_29 [1] : vector<16x16xf32> to vector<16xf32>
    %89 = vector.shape_cast %88 : vector<16xf32> to vector<16x1xf32>
    %90 = vector.broadcast %89 : vector<16x1xf32> to vector<16x16xf32>
    %91 = arith.subf %87, %90 : vector<16x16xf32>
    %92 = math.exp %91 : vector<16x16xf32>
    %cst_30 = arith.constant dense<0.000000e+00> : vector<16xf32>
    %93 = vector.multi_reduction <add>, %92, %cst_30 [1] : vector<16x16xf32> to vector<16xf32>
    %94 = vector.shape_cast %93 : vector<16xf32> to vector<16x1xf32>
    %95 = tpu.reciprocal %94 {approx = true} : vector<16x1xf32> -> vector<16x1xf32>
    %96 = vector.broadcast %95 : vector<16x1xf32> to vector<16x16xf32>
    %97 = arith.mulf %92, %96 : vector<16x16xf32>
    %98 = arith.truncf %97 : vector<16x16xf32> to vector<16x16xbf16>
    %cst_31 = arith.constant dense<0.000000e+00> : vector<16x16xf32>
    %99 = tpu.matmul %98, %86, %cst_31 {dimension_numbers = #tpu.dot_dimension_numbers<[1], [0], [0], [1], [0, 0, 1, 1], [], []>} : vector<16x16xbf16>, vector<16x16xbf16>, vector<16x16xf32> -> vector<16x16xf32>
    %100 = vector.extract_strided_slice %33 {offsets = [0, 64], sizes = [16, 16], strides = [1, 1]} : vector<16x128xbf16> to vector<16x16xbf16>
    %101 = vector.extract_strided_slice %34 {offsets = [0, 64], sizes = [16, 16], strides = [1, 1]} : vector<16x128xbf16> to vector<16x16xbf16>
    %102 = vector.extract_strided_slice %35 {offsets = [0, 64], sizes = [16, 16], strides = [1, 1]} : vector<16x128xbf16> to vector<16x16xbf16>
    %cst_32 = arith.constant dense<0.000000e+00> : vector<16x16xf32>
    %103 = tpu.matmul %100, %101, %cst_32 {dimension_numbers = #tpu.dot_dimension_numbers<[1], [1], [0], [0], [0, 0, 1, 0], [], []>} : vector<16x16xbf16>, vector<16x16xbf16>, vector<16x16xf32> -> vector<16x16xf32>
    %cst_33 = arith.constant dense<0xFF800000> : vector<16xf32>
    %104 = vector.multi_reduction <maximumf>, %103, %cst_33 [1] : vector<16x16xf32> to vector<16xf32>
    %105 = vector.shape_cast %104 : vector<16xf32> to vector<16x1xf32>
    %106 = vector.broadcast %105 : vector<16x1xf32> to vector<16x16xf32>
    %107 = arith.subf %103, %106 : vector<16x16xf32>
    %108 = math.exp %107 : vector<16x16xf32>
    %cst_34 = arith.constant dense<0.000000e+00> : vector<16xf32>
    %109 = vector.multi_reduction <add>, %108, %cst_34 [1] : vector<16x16xf32> to vector<16xf32>
    %110 = vector.shape_cast %109 : vector<16xf32> to vector<16x1xf32>
    %111 = tpu.reciprocal %110 {approx = true} : vector<16x1xf32> -> vector<16x1xf32>
    %112 = vector.broadcast %111 : vector<16x1xf32> to vector<16x16xf32>
    %113 = arith.mulf %108, %112 : vector<16x16xf32>
    %114 = arith.truncf %113 : vector<16x16xf32> to vector<16x16xbf16>
    %cst_35 = arith.constant dense<0.000000e+00> : vector<16x16xf32>
    %115 = tpu.matmul %114, %102, %cst_35 {dimension_numbers = #tpu.dot_dimension_numbers<[1], [0], [0], [1], [0, 0, 1, 1], [], []>} : vector<16x16xbf16>, vector<16x16xbf16>, vector<16x16xf32> -> vector<16x16xf32>
    %116 = vector.extract_strided_slice %33 {offsets = [0, 80], sizes = [16, 16], strides = [1, 1]} : vector<16x128xbf16> to vector<16x16xbf16>
    %117 = vector.extract_strided_slice %34 {offsets = [0, 80], sizes = [16, 16], strides = [1, 1]} : vector<16x128xbf16> to vector<16x16xbf16>
    %118 = vector.extract_strided_slice %35 {offsets = [0, 80], sizes = [16, 16], strides = [1, 1]} : vector<16x128xbf16> to vector<16x16xbf16>
    %cst_36 = arith.constant dense<0.000000e+00> : vector<16x16xf32>
    %119 = tpu.matmul %116, %117, %cst_36 {dimension_numbers = #tpu.dot_dimension_numbers<[1], [1], [0], [0], [0, 0, 1, 0], [], []>} : vector<16x16xbf16>, vector<16x16xbf16>, vector<16x16xf32> -> vector<16x16xf32>
    %cst_37 = arith.constant dense<0xFF800000> : vector<16xf32>
    %120 = vector.multi_reduction <maximumf>, %119, %cst_37 [1] : vector<16x16xf32> to vector<16xf32>
    %121 = vector.shape_cast %120 : vector<16xf32> to vector<16x1xf32>
    %122 = vector.broadcast %121 : vector<16x1xf32> to vector<16x16xf32>
    %123 = arith.subf %119, %122 : vector<16x16xf32>
    %124 = math.exp %123 : vector<16x16xf32>
    %cst_38 = arith.constant dense<0.000000e+00> : vector<16xf32>
    %125 = vector.multi_reduction <add>, %124, %cst_38 [1] : vector<16x16xf32> to vector<16xf32>
    %126 = vector.shape_cast %125 : vector<16xf32> to vector<16x1xf32>
    %127 = tpu.reciprocal %126 {approx = true} : vector<16x1xf32> -> vector<16x1xf32>
    %128 = vector.broadcast %127 : vector<16x1xf32> to vector<16x16xf32>
    %129 = arith.mulf %124, %128 : vector<16x16xf32>
    %130 = arith.truncf %129 : vector<16x16xf32> to vector<16x16xbf16>
    %cst_39 = arith.constant dense<0.000000e+00> : vector<16x16xf32>
    %131 = tpu.matmul %130, %118, %cst_39 {dimension_numbers = #tpu.dot_dimension_numbers<[1], [0], [0], [1], [0, 0, 1, 1], [], []>} : vector<16x16xbf16>, vector<16x16xbf16>, vector<16x16xf32> -> vector<16x16xf32>
    %132 = vector.extract_strided_slice %33 {offsets = [0, 96], sizes = [16, 16], strides = [1, 1]} : vector<16x128xbf16> to vector<16x16xbf16>
    %133 = vector.extract_strided_slice %34 {offsets = [0, 96], sizes = [16, 16], strides = [1, 1]} : vector<16x128xbf16> to vector<16x16xbf16>
    %134 = vector.extract_strided_slice %35 {offsets = [0, 96], sizes = [16, 16], strides = [1, 1]} : vector<16x128xbf16> to vector<16x16xbf16>
    %cst_40 = arith.constant dense<0.000000e+00> : vector<16x16xf32>
    %135 = tpu.matmul %132, %133, %cst_40 {dimension_numbers = #tpu.dot_dimension_numbers<[1], [1], [0], [0], [0, 0, 1, 0], [], []>} : vector<16x16xbf16>, vector<16x16xbf16>, vector<16x16xf32> -> vector<16x16xf32>
    %cst_41 = arith.constant dense<0xFF800000> : vector<16xf32>
    %136 = vector.multi_reduction <maximumf>, %135, %cst_41 [1] : vector<16x16xf32> to vector<16xf32>
    %137 = vector.shape_cast %136 : vector<16xf32> to vector<16x1xf32>
    %138 = vector.broadcast %137 : vector<16x1xf32> to vector<16x16xf32>
    %139 = arith.subf %135, %138 : vector<16x16xf32>
    %140 = math.exp %139 : vector<16x16xf32>
    %cst_42 = arith.constant dense<0.000000e+00> : vector<16xf32>
    %141 = vector.multi_reduction <add>, %140, %cst_42 [1] : vector<16x16xf32> to vector<16xf32>
    %142 = vector.shape_cast %141 : vector<16xf32> to vector<16x1xf32>
    %143 = tpu.reciprocal %142 {approx = true} : vector<16x1xf32> -> vector<16x1xf32>
    %144 = vector.broadcast %143 : vector<16x1xf32> to vector<16x16xf32>
    %145 = arith.mulf %140, %144 : vector<16x16xf32>
    %146 = arith.truncf %145 : vector<16x16xf32> to vector<16x16xbf16>
    %cst_43 = arith.constant dense<0.000000e+00> : vector<16x16xf32>
    %147 = tpu.matmul %146, %134, %cst_43 {dimension_numbers = #tpu.dot_dimension_numbers<[1], [0], [0], [1], [0, 0, 1, 1], [], []>} : vector<16x16xbf16>, vector<16x16xbf16>, vector<16x16xf32> -> vector<16x16xf32>
    %148 = vector.extract_strided_slice %33 {offsets = [0, 112], sizes = [16, 16], strides = [1, 1]} : vector<16x128xbf16> to vector<16x16xbf16>
    %149 = vector.extract_strided_slice %34 {offsets = [0, 112], sizes = [16, 16], strides = [1, 1]} : vector<16x128xbf16> to vector<16x16xbf16>
    %150 = vector.extract_strided_slice %35 {offsets = [0, 112], sizes = [16, 16], strides = [1, 1]} : vector<16x128xbf16> to vector<16x16xbf16>
    %cst_44 = arith.constant dense<0.000000e+00> : vector<16x16xf32>
    %151 = tpu.matmul %148, %149, %cst_44 {dimension_numbers = #tpu.dot_dimension_numbers<[1], [1], [0], [0], [0, 0, 1, 0], [], []>} : vector<16x16xbf16>, vector<16x16xbf16>, vector<16x16xf32> -> vector<16x16xf32>
    %cst_45 = arith.constant dense<0xFF800000> : vector<16xf32>
    %152 = vector.multi_reduction <maximumf>, %151, %cst_45 [1] : vector<16x16xf32> to vector<16xf32>
    %153 = vector.shape_cast %152 : vector<16xf32> to vector<16x1xf32>
    %154 = vector.broadcast %153 : vector<16x1xf32> to vector<16x16xf32>
    %155 = arith.subf %151, %154 : vector<16x16xf32>
    %156 = math.exp %155 : vector<16x16xf32>
    %cst_46 = arith.constant dense<0.000000e+00> : vector<16xf32>
    %157 = vector.multi_reduction <add>, %156, %cst_46 [1] : vector<16x16xf32> to vector<16xf32>
    %158 = vector.shape_cast %157 : vector<16xf32> to vector<16x1xf32>
    %159 = tpu.reciprocal %158 {approx = true} : vector<16x1xf32> -> vector<16x1xf32>
    %160 = vector.broadcast %159 : vector<16x1xf32> to vector<16x16xf32>
    %161 = arith.mulf %156, %160 : vector<16x16xf32>
    %162 = arith.truncf %161 : vector<16x16xf32> to vector<16x16xbf16>
    %cst_47 = arith.constant dense<0.000000e+00> : vector<16x16xf32>
    %163 = tpu.matmul %162, %150, %cst_47 {dimension_numbers = #tpu.dot_dimension_numbers<[1], [0], [0], [1], [0, 0, 1, 1], [], []>} : vector<16x16xbf16>, vector<16x16xbf16>, vector<16x16xf32> -> vector<16x16xf32>
    %164 = tpu.concatenate %51, %67, %83, %99, %115, %131, %147, %163 in 1 : vector<16x16xf32>, vector<16x16xf32>, vector<16x16xf32>, vector<16x16xf32>, vector<16x16xf32>, vector<16x16xf32>, vector<16x16xf32>, vector<16x16xf32> -> vector<16x128xf32>
    %165 = arith.truncf %164 : vector<16x128xf32> to vector<16x128xbf16>
    %c0_48 = arith.constant 0 : index
    %c0_49 = arith.constant 0 : index
    %166 = vector.load %arg10[%c0_48, %c0_49] : memref<128x128xbf16, #tpu.memory_space<vmem>>, vector<128x128xbf16>
    %cst_50 = arith.constant dense<0.000000e+00> : vector<16x128xf32>
    %167 = tpu.matmul %165, %166, %cst_50 {dimension_numbers = #tpu.dot_dimension_numbers<[1], [0], [0], [1], [0, 0, 1, 1], [], []>} : vector<16x128xbf16>, vector<128x128xbf16>, vector<16x128xf32> -> vector<16x128xf32>
    %c0_51 = arith.constant 0 : index
    %c0_52 = arith.constant 0 : index
    %168 = vector.load %arg11[%c0_51, %c0_52] : memref<1x128xf32, #tpu.memory_space<vmem>>, vector<1x128xf32>
    %169 = vector.shape_cast %168 : vector<1x128xf32> to vector<128xf32>
    %170 = vector.shape_cast %169 : vector<128xf32> to vector<1x128xf32>
    %171 = vector.broadcast %170 : vector<1x128xf32> to vector<16x128xf32>
    %172 = arith.addf %167, %171 : vector<16x128xf32>
    %173 = arith.addf %9, %172 : vector<16x128xf32>
    %c0_53 = arith.constant 0 : index
    %c0_54 = arith.constant 0 : index
    %174 = vector.load %arg12[%c0_53, %c0_54] : memref<1x128xf32, #tpu.memory_space<vmem>>, vector<1x128xf32>
    %175 = vector.shape_cast %174 : vector<1x128xf32> to vector<128xf32>
    %176 = arith.mulf %173, %173 : vector<16x128xf32>
    %cst_55 = arith.constant dense<0.000000e+00> : vector<16xf32>
    %177 = vector.multi_reduction <add>, %176, %cst_55 [1] : vector<16x128xf32> to vector<16xf32>
    %178 = vector.shape_cast %177 : vector<16xf32> to vector<16x1xf32>
    %cst_56 = arith.constant 1.280000e+02 : f32
    %179 = vector.broadcast %cst_56 : f32 to vector<16x1xf32>
    %180 = arith.divf %178, %179 : vector<16x1xf32>
    %cst_57 = arith.constant 9.99999997E-7 : f32
    %181 = vector.broadcast %cst_57 : f32 to vector<16x1xf32>
    %182 = arith.addf %180, %181 : vector<16x1xf32>
    %183 = math.rsqrt %182 : vector<16x1xf32>
    %184 = vector.broadcast %183 : vector<16x1xf32> to vector<16x128xf32>
    %185 = arith.mulf %173, %184 : vector<16x128xf32>
    %186 = vector.shape_cast %175 : vector<128xf32> to vector<1x128xf32>
    %187 = vector.broadcast %186 : vector<1x128xf32> to vector<16x128xf32>
    %188 = arith.mulf %185, %187 : vector<16x128xf32>
    %189 = arith.truncf %188 : vector<16x128xf32> to vector<16x128xbf16>
    %c0_58 = arith.constant 0 : index
    %c0_59 = arith.constant 0 : index
    %190 = vector.load %arg13[%c0_58, %c0_59] : memref<128x512xbf16, #tpu.memory_space<vmem>>, vector<128x512xbf16>
    %cst_60 = arith.constant dense<0.000000e+00> : vector<16x512xf32>
    %191 = tpu.matmul %189, %190, %cst_60 {dimension_numbers = #tpu.dot_dimension_numbers<[1], [0], [0], [1], [0, 0, 1, 1], [], []>} : vector<16x128xbf16>, vector<128x512xbf16>, vector<16x512xf32> -> vector<16x512xf32>
    %c0_61 = arith.constant 0 : index
    %c0_62 = arith.constant 0 : index
    %192 = vector.load %arg14[%c0_61, %c0_62] : memref<1x512xf32, #tpu.memory_space<vmem>>, vector<1x512xf32>
    %193 = vector.shape_cast %192 : vector<1x512xf32> to vector<512xf32>
    %194 = vector.shape_cast %193 : vector<512xf32> to vector<1x512xf32>
    %195 = vector.broadcast %194 : vector<1x512xf32> to vector<16x512xf32>
    %196 = arith.addf %191, %195 : vector<16x512xf32>
    %197 = arith.negf %196 : vector<16x512xf32>
    %198 = math.exp %197 : vector<16x512xf32>
    %cst_63 = arith.constant 1.000000e+00 : f32
    %199 = vector.broadcast %cst_63 : f32 to vector<16x512xf32>
    %200 = arith.addf %199, %198 : vector<16x512xf32>
    %201 = arith.divf %199, %200 : vector<16x512xf32>
    %202 = arith.mulf %196, %201 : vector<16x512xf32>
    %203 = arith.truncf %202 : vector<16x512xf32> to vector<16x512xbf16>
    %c0_64 = arith.constant 0 : index
    %c0_65 = arith.constant 0 : index
    %204 = vector.load %arg15[%c0_64, %c0_65] : memref<512x128xbf16, #tpu.memory_space<vmem>>, vector<512x128xbf16>
    %cst_66 = arith.constant dense<0.000000e+00> : vector<16x128xf32>
    %205 = tpu.matmul %203, %204, %cst_66 {dimension_numbers = #tpu.dot_dimension_numbers<[1], [0], [0], [1], [0, 0, 1, 1], [], []>} : vector<16x512xbf16>, vector<512x128xbf16>, vector<16x128xf32> -> vector<16x128xf32>
    %c0_67 = arith.constant 0 : index
    %c0_68 = arith.constant 0 : index
    %206 = vector.load %arg16[%c0_67, %c0_68] : memref<1x128xf32, #tpu.memory_space<vmem>>, vector<1x128xf32>
    %207 = vector.shape_cast %206 : vector<1x128xf32> to vector<128xf32>
    %208 = vector.shape_cast %207 : vector<128xf32> to vector<1x128xf32>
    %209 = vector.broadcast %208 : vector<1x128xf32> to vector<16x128xf32>
    %210 = arith.addf %205, %209 : vector<16x128xf32>
    %211 = arith.addf %173, %210 : vector<16x128xf32>
    %c0_69 = arith.constant 0 : index
    %c0_70 = arith.constant 0 : index
    %c0_71 = arith.constant 0 : index
    %212 = vector.load %arg17[%c0_69, %c0_70, %c0_71] : memref<1x16x128xf32, #tpu.memory_space<vmem>>, vector<1x16x128xf32>
    %213 = vector.shape_cast %212 : vector<1x16x128xf32> to vector<16x128xf32>
    %214 = vector.shape_cast %211 : vector<16x128xf32> to vector<1x16x128xf32>
    tpu.vector_store %arg17[%c0_69, %c0_70, %c0_71], %214 {strides = array<i32>} : memref<1x16x128xf32, #tpu.memory_space<vmem>>, vector<1x16x128xf32>,
    return
  }
  func.func @transform_0(%arg0: i32, %arg1: i32) -> (i32, i32, i32) {
    %c0_i32 = arith.constant 0 : i32
    %c0_i32_0 = arith.constant 0 : i32
    %c0_i32_1 = arith.constant 0 : i32
    return %arg0, %c0_i32, %c0_i32_0 : i32, i32, i32
  }
  func.func @transform_1(%arg0: i32, %arg1: i32) -> (i32, i32) {
    %c0_i32 = arith.constant 0 : i32
    %c0_i32_0 = arith.constant 0 : i32
    %c0_i32_1 = arith.constant 0 : i32
    return %c0_i32, %c0_i32_0 : i32, i32
  }
  func.func @transform_2(%arg0: i32, %arg1: i32) -> (i32, i32) {
    %c0_i32 = arith.constant 0 : i32
    %c0_i32_0 = arith.constant 0 : i32
    %c0_i32_1 = arith.constant 0 : i32
    return %c0_i32, %c0_i32_0 : i32, i32
  }
  func.func @transform_3(%arg0: i32, %arg1: i32) -> (i32, i32) {
    %c0_i32 = arith.constant 0 : i32
    %c0_i32_0 = arith.constant 0 : i32
    %c0_i32_1 = arith.constant 0 : i32
    return %c0_i32, %c0_i32_0 : i32, i32
  }
  func.func @transform_4(%arg0: i32, %arg1: i32) -> (i32, i32) {
    %c0_i32 = arith.constant 0 : i32
    %c0_i32_0 = arith.constant 0 : i32
    %c0_i32_1 = arith.constant 0 : i32
    return %c0_i32, %c0_i32_0 : i32, i32
  }
  func.func @transform_5(%arg0: i32, %arg1: i32) -> (i32, i32) {
    %c0_i32 = arith.constant 0 : i32
    %c0_i32_0 = arith.constant 0 : i32
    %c0_i32_1 = arith.constant 0 : i32
    return %c0_i32, %c0_i32_0 : i32, i32
  }
  func.func @transform_6(%arg0: i32, %arg1: i32) -> (i32, i32) {
    %c0_i32 = arith.constant 0 : i32
    %c0_i32_0 = arith.constant 0 : i32
    %c0_i32_1 = arith.constant 0 : i32
    return %c0_i32, %c0_i32_0 : i32, i32
  }
  func.func @transform_7(%arg0: i32, %arg1: i32) -> (i32, i32) {
    %c0_i32 = arith.constant 0 : i32
    %c0_i32_0 = arith.constant 0 : i32
    %c0_i32_1 = arith.constant 0 : i32
    return %c0_i32, %c0_i32_0 : i32, i32
  }
  func.func @transform_8(%arg0: i32, %arg1: i32) -> (i32, i32) {
    %c0_i32 = arith.constant 0 : i32
    %c0_i32_0 = arith.constant 0 : i32
    %c0_i32_1 = arith.constant 0 : i32
    return %c0_i32, %c0_i32_0 : i32, i32
  }
  func.func @transform_9(%arg0: i32, %arg1: i32) -> (i32, i32) {
    %c0_i32 = arith.constant 0 : i32
    %c0_i32_0 = arith.constant 0 : i32
    %c0_i32_1 = arith.constant 0 : i32
    return %c0_i32, %c0_i32_0 : i32, i32
  }
  func.func @transform_10(%arg0: i32, %arg1: i32) -> (i32, i32) {
    %c0_i32 = arith.constant 0 : i32
    %c0_i32_0 = arith.constant 0 : i32
    %c0_i32_1 = arith.constant 0 : i32
    return %c0_i32, %c0_i32_0 : i32, i32
  }
  func.func @transform_11(%arg0: i32, %arg1: i32) -> (i32, i32) {
    %c0_i32 = arith.constant 0 : i32
    %c0_i32_0 = arith.constant 0 : i32
    %c0_i32_1 = arith.constant 0 : i32
    return %c0_i32, %c0_i32_0 : i32, i32
  }
  func.func @transform_12(%arg0: i32, %arg1: i32) -> (i32, i32) {
    %c0_i32 = arith.constant 0 : i32
    %c0_i32_0 = arith.constant 0 : i32
    %c0_i32_1 = arith.constant 0 : i32
    return %c0_i32, %c0_i32_0 : i32, i32
  }
  func.func @transform_13(%arg0: i32, %arg1: i32) -> (i32, i32) {
    %c0_i32 = arith.constant 0 : i32
    %c0_i32_0 = arith.constant 0 : i32
    %c0_i32_1 = arith.constant 0 : i32
    return %c0_i32, %c0_i32_0 : i32, i32
  }
  func.func @transform_14(%arg0: i32, %arg1: i32) -> (i32, i32) {
    %c0_i32 = arith.constant 0 : i32
    %c0_i32_0 = arith.constant 0 : i32
    %c0_i32_1 = arith.constant 0 : i32
    return %c0_i32, %c0_i32_0 : i32, i32
  }
  func.func @transform_15(%arg0: i32, %arg1: i32) -> (i32, i32, i32) {
    %c0_i32 = arith.constant 0 : i32
    %c0_i32_0 = arith.constant 0 : i32
    return %arg0, %arg1, %c0_i32 : i32, i32, i32
  }
}

</mosaic_0001>

<llo_original>
// kernel: tpu_custom_call.1
$region0: #{tpu_custom_call.1}
  #allocation0 [shape = 'u32[]', space=smem, size = 0x4, offset = 0x4, fixed_abs, tag = 'smem constant byte address 0x4 - core index']
  #allocation1 [shape = 'u32[72,128]{1,0:T(1,128)}', space=vmem, size = 0x9000, scoped, tag = 'internal scratch']
  #allocation2 [shape = 'bf16[16,128]{1,0:T(8,128)(2,1)}', space=vmem, size = 0x1000, scoped, tag = 'scratch operand']
  #allocation3 [shape = 'bf16[16,128]{1,0:T(8,128)(2,1)}', space=vmem, size = 0x1000, scoped, tag = 'scratch operand']
  %s0 = inlined_call_operand.hbm [shape: f32[2,16,128], index: 0, kind: input, shape index: {}]
  %s1 = inlined_call_operand.hbm [shape: f32[1,128], index: 1, kind: input, shape index: {}]
  %s2 = inlined_call_operand.hbm [shape: bf16[128,128], index: 2, kind: input, shape index: {}]
  %s3 = inlined_call_operand.vmem [shape: f32[1,128], index: 3, kind: input, shape index: {}]
  %s4 = inlined_call_operand.hbm [shape: bf16[128,128], index: 4, kind: input, shape index: {}]
  %s5 = inlined_call_operand.vmem [shape: f32[1,128], index: 5, kind: input, shape index: {}]
  %s6 = inlined_call_operand.hbm [shape: bf16[128,128], index: 6, kind: input, shape index: {}]
  %s7 = inlined_call_operand.vmem [shape: f32[1,128], index: 7, kind: input, shape index: {}]
  %s8 = inlined_call_operand.hbm [shape: bf16[128,128], index: 8, kind: input, shape index: {}]
  %s9 = inlined_call_operand.vmem [shape: f32[1,128], index: 9, kind: input, shape index: {}]
  %s10 = inlined_call_operand.vmem [shape: f32[1,128], index: 10, kind: input, shape index: {}]
  %s11 = inlined_call_operand.hbm [shape: bf16[128,512], index: 11, kind: input, shape index: {}]
  %s12 = inlined_call_operand.vmem [shape: f32[1,512], index: 12, kind: input, shape index: {}]
  %s13 = inlined_call_operand.hbm [shape: bf16[512,128], index: 13, kind: input, shape index: {}]
  %s14 = inlined_call_operand.vmem [shape: f32[1,128], index: 14, kind: input, shape index: {}]
  %s15 = inlined_call_operand.hbm [shape: f32[2,16,128], index: 15, kind: output, shape index: {}]
  %s16 = sld [smem:[#allocation0]]
  $region129: #{tpu_custom_call.1} parent=0
    _
  %s18 = ssub.s32 1, %s16
  %s19 = scalar_select 0, %s18, %s16
  $region1: #{tpu_custom_call.1} parent=0
    #allocation4 [shape = 'u8[16384]{0}', space=vmem, size = 0x4000, scoped, tag = 'input window, operand 0']
    #allocation5 [shape = 's32[2]{0}', space=sflag, size = 0x8, scoped, tag = 'scoped memory for tpu_custom_call.1']
    #allocation6 [shape = 's32[2]{0}', space=sflag, size = 0x8, scoped, tag = 'scoped memory for tpu_custom_call.1']
    #allocation7 [shape = 'u8[512]{0}', space=vmem, size = 0x400, scoped, tag = 'input window, operand 1, single buffered']
    #allocation8 [shape = 's32[1]{0}', space=sflag, size = 0x4, scoped, tag = 'scoped memory for tpu_custom_call.1']
    #allocation9 [shape = 'u8[32768]{0}', space=vmem, size = 0x8000, scoped, tag = 'input window, operand 2, single buffered']
    #allocation10 [shape = 'u8[32768]{0}', space=vmem, size = 0x8000, scoped, tag = 'input window, operand 4, single buffered']
    #allocation11 [shape = 's32[1]{0}', space=sflag, size = 0x4, scoped, tag = 'scoped memory for tpu_custom_call.1']
    #allocation12 [shape = 'u8[32768]{0}', space=vmem, size = 0x8000, scoped, tag = 'input window, operand 6, single buffered']
    #allocation13 [shape = 'u8[32768]{0}', space=vmem, size = 0x8000, scoped, tag = 'input window, operand 8, single buffered']
    #allocation14 [shape = 's32[1]{0}', space=sflag, size = 0x4, scoped, tag = 'scoped memory for tpu_custom_call.1']
    #allocation15 [shape = 'u8[131072]{0}', space=vmem, size = 0x20000, scoped, tag = 'input window, operand 11, single buffered']
    #allocation16 [shape = 'u8[131072]{0}', space=vmem, size = 0x20000, scoped, tag = 'input window, operand 13, single buffered']
    #allocation17 [shape = 's32[1]{0}', space=sflag, size = 0x4, scoped, tag = 'scoped memory for tpu_custom_call.1']
    #allocation18 [shape = 'u8[16384]{0}', space=vmem, size = 0x4000, scoped, tag = 'output window, operand 0']
    %20 = vsyncpa [#allocation5], 0
    %s21 = scalar_lea.sflag [#allocation5], 1
    %22 = vsyncpa %s21, 0
    %23 = vsyncpa [#allocation8], 0
    %24 = vsyncpa [#allocation11], 0
    %25 = vsyncpa [#allocation14], 0
    %26 = vsyncpa [#allocation17], 0
    %27 = vsyncpa [#allocation6], 0
    %s28 = scalar_lea.sflag [#allocation6], 1
    %29 = vsyncpa %s28, 0
    loop: start=0, step=1, limit=4
    $region2: #{tpu_custom_call.1} parent=1 // loop_pre_header
      _
    $region3: #{tpu_custom_call.1} parent=1 // loop_header
      %s31 = sphi 0, %s35
      %p32 = scmp.ge.s32.totalorder %s31, 4
      %s38 = sphi 0, %s50
      %s39 = sphi 0, %s46
      %s40 = sphi 0, %s38
      %s41 = sphi 0, %s39
      %s42 = sphi 0, %s40
      %s43 = sphi 0, %s41
      %s53 = sphi 0, %s55
      %s56 = sphi 0, %s53
      %s57 = sphi 0, %s56
      %s73 = sphi 0, %s57
      %s77 = sphi 0, %s77
      %s79 = sphi 0, %s77
      %s80 = sphi 0, %s79
      %s94 = sphi 0, %s80
      %s98 = sphi 0, %s98
      %s100 = sphi 0, %s98
      %s101 = sphi 0, %s100
      %s115 = sphi 0, %s101
      %s119 = sphi 0, %s119
      %s121 = sphi 0, %s119
      %s122 = sphi 0, %s121
      %s136 = sphi 0, %s122
      %s140 = sphi 0, %s140
      %s142 = sphi 0, %s140
      %s143 = sphi 0, %s142
      %s157 = sphi 0, %s143
      %s161 = sphi 0, %s161
      %s163 = sphi 0, %s161
      %s164 = sphi 0, %s163
      %s178 = sphi 0, %s164
      %s182 = sphi 0, %s182
      %s184 = sphi 0, %s182
      %s185 = sphi 0, %s184
      %s199 = sphi 0, %s185
      %s203 = sphi 0, %s203
      %s205 = sphi 0, %s203
      %s206 = sphi 0, %s205
      %s220 = sphi 0, %s206
      %s224 = sphi 0, %s224
      %s226 = sphi 0, %s224
      %s227 = sphi 0, %s226
      %s241 = sphi 0, %s227
      %s245 = sphi 0, %s245
      %s247 = sphi 0, %s245
      %s248 = sphi 0, %s247
      %s262 = sphi 0, %s248
      %s266 = sphi 0, %s266
      %s268 = sphi 0, %s266
      %s269 = sphi 0, %s268
      %s283 = sphi 0, %s269
      %s287 = sphi 0, %s287
      %s289 = sphi 0, %s287
      %s290 = sphi 0, %s289
      %s304 = sphi 0, %s290
      %s308 = sphi 0, %s308
      %s310 = sphi 0, %s308
      %s311 = sphi 0, %s310
      %s325 = sphi 0, %s311
      %s329 = sphi 0, %s329
      %s331 = sphi 0, %s329
      %s332 = sphi 0, %s331
      %s346 = sphi 0, %s332
      %s350 = sphi 0, %s350
      %s352 = sphi 0, %s350
      %s353 = sphi 0, %s352
      %s367 = sphi 0, %s353
      %s375 = sphi 0, %s377
      %s378 = sphi 0, %s375
      %s379 = sphi 0, %s378
      %s395 = sphi 0, %s379
    $region4: #{tpu_custom_call.1} parent=1 // loop_header_branch
      %34 = sbr.rel (%p32) target = $region8
    $region5: #{tpu_custom_call.1} parent=1 // loop_body
      %s36 = ssub.s32 %s31, 1
      %s37 = ssub.s32 %s31, 2
      %s44 = sadd.s32 1, %s39
      %p45 = scmp.ge.s32.totalorder %s44, 1
      %s46 = scalar_select %p45, 0, %s44
      %s47 = sadd.s32 1, %s38
      %s48 = scalar_select %p45, %s47, %s38
      %p49 = scmp.ge.s32.totalorder %s48, 2
      %s50 = scalar_select %p49, 0, %s48
      %s51 = ssub.s32 %s38, %s50
      %p52 = scmp.eq.s32.totalorder %s51, 0
      %s54 = sadd.s32 %s53, 1
      %s55 = scalar_select %p52, %s53, %s54
      %p58 = pneg %p52
      %p59 = scmp.eq.s32.totalorder %s31, 1
      %p60 = por %p58, %p59
      %p61 = scmp.ne.s32.totalorder %s53, %s56
      %p62 = scmp.eq.s32.totalorder %s31, 0
      %p63 = por %p61, %p62
      %p64 = scmp.ne.s32.totalorder %s53, %s56
      %p65 = scmp.eq.s32.totalorder %s36, 1
      %p66 = por %p64, %p65
      %p67 = scmp.ne.s32.totalorder %s56, %s57
      %p68 = scmp.eq.s32.totalorder %s36, 0
      %p69 = por %p67, %p68
      %p70 = scmp.ne.s32.totalorder %s56, %s57
      %p71 = scmp.eq.s32.totalorder %s37, 1
      %p72 = por %p70, %p71
      %p74 = scmp.ne.s32.totalorder %s57, %s73
      %p75 = scmp.eq.s32.totalorder %s37, 0
      %p76 = por %p74, %p75
      %s78 = sadd.s32 %s77, 1
      %p81 = scmp.eq.s32.totalorder %s31, 1
      %p82 = scmp.ne.s32.totalorder %s77, %s79
      %p83 = scmp.eq.s32.totalorder %s31, 0
      %p84 = por %p82, %p83
      %p85 = scmp.ne.s32.totalorder %s77, %s79
      %p86 = scmp.eq.s32.totalorder %s36, 1
      %p87 = por %p85, %p86
      %p88 = scmp.ne.s32.totalorder %s79, %s80
      %p89 = scmp.eq.s32.totalorder %s36, 0
      %p90 = por %p88, %p89
      %p91 = scmp.ne.s32.totalorder %s79, %s80
      %p92 = scmp.eq.s32.totalorder %s37, 1
      %p93 = por %p91, %p92
      %p95 = scmp.ne.s32.totalorder %s80, %s94
      %p96 = scmp.eq.s32.totalorder %s37, 0
      %p97 = por %p95, %p96
      %s99 = sadd.s32 %s98, 1
      %p102 = scmp.eq.s32.totalorder %s31, 1
      %p103 = scmp.ne.s32.totalorder %s98, %s100
      %p104 = scmp.eq.s32.totalorder %s31, 0
      %p105 = por %p103, %p104
      %p106 = scmp.ne.s32.totalorder %s98, %s100
      %p107 = scmp.eq.s32.totalorder %s36, 1
      %p108 = por %p106, %p107
      %p109 = scmp.ne.s32.totalorder %s100, %s101
      %p110 = scmp.eq.s32.totalorder %s36, 0
      %p111 = por %p109, %p110
      %p112 = scmp.ne.s32.totalorder %s100, %s101
      %p113 = scmp.eq.s32.totalorder %s37, 1
      %p114 = por %p112, %p113
      %p116 = scmp.ne.s32.totalorder %s101, %s115
      %p117 = scmp.eq.s32.totalorder %s37, 0
      %p118 = por %p116, %p117
      %s120 = sadd.s32 %s119, 1
      %p123 = scmp.eq.s32.totalorder %s31, 1
      %p124 = scmp.ne.s32.totalorder %s119, %s121
      %p125 = scmp.eq.s32.totalorder %s31, 0
      %p126 = por %p124, %p125
      %p127 = scmp.ne.s32.totalorder %s119, %s121
      %p128 = scmp.eq.s32.totalorder %s36, 1
      %p129 = por %p127, %p128
      %p130 = scmp.ne.s32.totalorder %s121, %s122
      %p131 = scmp.eq.s32.totalorder %s36, 0
      %p132 = por %p130, %p131
      %p133 = scmp.ne.s32.totalorder %s121, %s122
      %p134 = scmp.eq.s32.totalorder %s37, 1
      %p135 = por %p133, %p134
      %p137 = scmp.ne.s32.totalorder %s122, %s136
      %p138 = scmp.eq.s32.totalorder %s37, 0
      %p139 = por %p137, %p138
      %s141 = sadd.s32 %s140, 1
      %p144 = scmp.eq.s32.totalorder %s31, 1
      %p145 = scmp.ne.s32.totalorder %s140, %s142
      %p146 = scmp.eq.s32.totalorder %s31, 0
      %p147 = por %p145, %p146
      %p148 = scmp.ne.s32.totalorder %s140, %s142
      %p149 = scmp.eq.s32.totalorder %s36, 1
      %p150 = por %p148, %p149
      %p151 = scmp.ne.s32.totalorder %s142, %s143
      %p152 = scmp.eq.s32.totalorder %s36, 0
      %p153 = por %p151, %p152
      %p154 = scmp.ne.s32.totalorder %s142, %s143
      %p155 = scmp.eq.s32.totalorder %s37, 1
      %p156 = por %p154, %p155
      %p158 = scmp.ne.s32.totalorder %s143, %s157
      %p159 = scmp.eq.s32.totalorder %s37, 0
      %p160 = por %p158, %p159
      %s162 = sadd.s32 %s161, 1
      %p165 = scmp.eq.s32.totalorder %s31, 1
      %p166 = scmp.ne.s32.totalorder %s161, %s163
      %p167 = scmp.eq.s32.totalorder %s31, 0
      %p168 = por %p166, %p167
      %p169 = scmp.ne.s32.totalorder %s161, %s163
      %p170 = scmp.eq.s32.totalorder %s36, 1
      %p171 = por %p169, %p170
      %p172 = scmp.ne.s32.totalorder %s163, %s164
      %p173 = scmp.eq.s32.totalorder %s36, 0
      %p174 = por %p172, %p173
      %p175 = scmp.ne.s32.totalorder %s163, %s164
      %p176 = scmp.eq.s32.totalorder %s37, 1
      %p177 = por %p175, %p176
      %p179 = scmp.ne.s32.totalorder %s164, %s178
      %p180 = scmp.eq.s32.totalorder %s37, 0
      %p181 = por %p179, %p180
      %s183 = sadd.s32 %s182, 1
      %p186 = scmp.eq.s32.totalorder %s31, 1
      %p187 = scmp.ne.s32.totalorder %s182, %s184
      %p188 = scmp.eq.s32.totalorder %s31, 0
      %p189 = por %p187, %p188
      %p190 = scmp.ne.s32.totalorder %s182, %s184
      %p191 = scmp.eq.s32.totalorder %s36, 1
      %p192 = por %p190, %p191
      %p193 = scmp.ne.s32.totalorder %s184, %s185
      %p194 = scmp.eq.s32.totalorder %s36, 0
      %p195 = por %p193, %p194
      %p196 = scmp.ne.s32.totalorder %s184, %s185
      %p197 = scmp.eq.s32.totalorder %s37, 1
      %p198 = por %p196, %p197
      %p200 = scmp.ne.s32.totalorder %s185, %s199
      %p201 = scmp.eq.s32.totalorder %s37, 0
      %p202 = por %p200, %p201
      %s204 = sadd.s32 %s203, 1
      %p207 = scmp.eq.s32.totalorder %s31, 1
      %p208 = scmp.ne.s32.totalorder %s203, %s205
      %p209 = scmp.eq.s32.totalorder %s31, 0
      %p210 = por %p208, %p209
      %p211 = scmp.ne.s32.totalorder %s203, %s205
      %p212 = scmp.eq.s32.totalorder %s36, 1
      %p213 = por %p211, %p212
      %p214 = scmp.ne.s32.totalorder %s205, %s206
      %p215 = scmp.eq.s32.totalorder %s36, 0
      %p216 = por %p214, %p215
      %p217 = scmp.ne.s32.totalorder %s205, %s206
      %p218 = scmp.eq.s32.totalorder %s37, 1
      %p219 = por %p217, %p218
      %p221 = scmp.ne.s32.totalorder %s206, %s220
      %p222 = scmp.eq.s32.totalorder %s37, 0
      %p223 = por %p221, %p222
      %s225 = sadd.s32 %s224, 1
      %p228 = scmp.eq.s32.totalorder %s31, 1
      %p229 = scmp.ne.s32.totalorder %s224, %s226
      %p230 = scmp.eq.s32.totalorder %s31, 0
      %p231 = por %p229, %p230
      %p232 = scmp.ne.s32.totalorder %s224, %s226
      %p233 = scmp.eq.s32.totalorder %s36, 1
      %p234 = por %p232, %p233
      %p235 = scmp.ne.s32.totalorder %s226, %s227
      %p236 = scmp.eq.s32.totalorder %s36, 0
      %p237 = por %p235, %p236
      %p238 = scmp.ne.s32.totalorder %s226, %s227
      %p239 = scmp.eq.s32.totalorder %s37, 1
      %p240 = por %p238, %p239
      %p242 = scmp.ne.s32.totalorder %s227, %s241
      %p243 = scmp.eq.s32.totalorder %s37, 0
      %p244 = por %p242, %p243
      %s246 = sadd.s32 %s245, 1
      %p249 = scmp.eq.s32.totalorder %s31, 1
      %p250 = scmp.ne.s32.totalorder %s245, %s247
      %p251 = scmp.eq.s32.totalorder %s31, 0
      %p252 = por %p250, %p251
      %p253 = scmp.ne.s32.totalorder %s245, %s247
      %p254 = scmp.eq.s32.totalorder %s36, 1
      %p255 = por %p253, %p254
      %p256 = scmp.ne.s32.totalorder %s247, %s248
      %p257 = scmp.eq.s32.totalorder %s36, 0
      %p258 = por %p256, %p257
      %p259 = scmp.ne.s32.totalorder %s247, %s248
      %p260 = scmp.eq.s32.totalorder %s37, 1
      %p261 = por %p259, %p260
      %p263 = scmp.ne.s32.totalorder %s248, %s262
      %p264 = scmp.eq.s32.totalorder %s37, 0
      %p265 = por %p263, %p264
      %s267 = sadd.s32 %s266, 1
      %p270 = scmp.eq.s32.totalorder %s31, 1
      %p271 = scmp.ne.s32.totalorder %s266, %s268
      %p272 = scmp.eq.s32.totalorder %s31, 0
      %p273 = por %p271, %p272
      %p274 = scmp.ne.s32.totalorder %s266, %s268
      %p275 = scmp.eq.s32.totalorder %s36, 1
      %p276 = por %p274, %p275
      %p277 = scmp.ne.s32.totalorder %s268, %s269
      %p278 = scmp.eq.s32.totalorder %s36, 0
      %p279 = por %p277, %p278
      %p280 = scmp.ne.s32.totalorder %s268, %s269
      %p281 = scmp.eq.s32.totalorder %s37, 1
      %p282 = por %p280, %p281
      %p284 = scmp.ne.s32.totalorder %s269, %s283
      %p285 = scmp.eq.s32.totalorder %s37, 0
      %p286 = por %p284, %p285
      %s288 = sadd.s32 %s287, 1
      %p291 = scmp.eq.s32.totalorder %s31, 1
      %p292 = scmp.ne.s32.totalorder %s287, %s289
      %p293 = scmp.eq.s32.totalorder %s31, 0
      %p294 = por %p292, %p293
      %p295 = scmp.ne.s32.totalorder %s287, %s289
      %p296 = scmp.eq.s32.totalorder %s36, 1
      %p297 = por %p295, %p296
      %p298 = scmp.ne.s32.totalorder %s289, %s290
      %p299 = scmp.eq.s32.totalorder %s36, 0
      %p300 = por %p298, %p299
      %p301 = scmp.ne.s32.totalorder %s289, %s290
      %p302 = scmp.eq.s32.totalorder %s37, 1
      %p303 = por %p301, %p302
      %p305 = scmp.ne.s32.totalorder %s290, %s304
      %p306 = scmp.eq.s32.totalorder %s37, 0
      %p307 = por %p305, %p306
      %s309 = sadd.s32 %s308, 1
      %p312 = scmp.eq.s32.totalorder %s31, 1
      %p313 = scmp.ne.s32.totalorder %s308, %s310
      %p314 = scmp.eq.s32.totalorder %s31, 0
      %p315 = por %p313, %p314
      %p316 = scmp.ne.s32.totalorder %s308, %s310
      %p317 = scmp.eq.s32.totalorder %s36, 1
      %p318 = por %p316, %p317
      %p319 = scmp.ne.s32.totalorder %s310, %s311
      %p320 = scmp.eq.s32.totalorder %s36, 0
      %p321 = por %p319, %p320
      %p322 = scmp.ne.s32.totalorder %s310, %s311
      %p323 = scmp.eq.s32.totalorder %s37, 1
      %p324 = por %p322, %p323
      %p326 = scmp.ne.s32.totalorder %s311, %s325
      %p327 = scmp.eq.s32.totalorder %s37, 0
      %p328 = por %p326, %p327
      %s330 = sadd.s32 %s329, 1
      %p333 = scmp.eq.s32.totalorder %s31, 1
      %p334 = scmp.ne.s32.totalorder %s329, %s331
      %p335 = scmp.eq.s32.totalorder %s31, 0
      %p336 = por %p334, %p335
      %p337 = scmp.ne.s32.totalorder %s329, %s331
      %p338 = scmp.eq.s32.totalorder %s36, 1
      %p339 = por %p337, %p338
      %p340 = scmp.ne.s32.totalorder %s331, %s332
      %p341 = scmp.eq.s32.totalorder %s36, 0
      %p342 = por %p340, %p341
      %p343 = scmp.ne.s32.totalorder %s331, %s332
      %p344 = scmp.eq.s32.totalorder %s37, 1
      %p345 = por %p343, %p344
      %p347 = scmp.ne.s32.totalorder %s332, %s346
      %p348 = scmp.eq.s32.totalorder %s37, 0
      %p349 = por %p347, %p348
      %s351 = sadd.s32 %s350, 1
      %p354 = scmp.eq.s32.totalorder %s31, 1
      %p355 = scmp.ne.s32.totalorder %s350, %s352
      %p356 = scmp.eq.s32.totalorder %s31, 0
      %p357 = por %p355, %p356
      %p358 = scmp.ne.s32.totalorder %s350, %s352
      %p359 = scmp.eq.s32.totalorder %s36, 1
      %p360 = por %p358, %p359
      %p361 = scmp.ne.s32.totalorder %s352, %s353
      %p362 = scmp.eq.s32.totalorder %s36, 0
      %p363 = por %p361, %p362
      %p364 = scmp.ne.s32.totalorder %s352, %s353
      %p365 = scmp.eq.s32.totalorder %s37, 1
      %p366 = por %p364, %p365
      %p368 = scmp.ne.s32.totalorder %s353, %s367
      %p369 = scmp.eq.s32.totalorder %s37, 0
      %p370 = por %p368, %p369
      %s371 = ssub.s32 %s38, %s50
      %s372 = ssub.s32 %s39, %s46
      %s373 = sor.u32 %s371, %s372
      %p374 = scmp.eq.s32.totalorder %s373, 0
      %s376 = sadd.s32 %s375, 1
      %s377 = scalar_select %p374, %s375, %s376
      %p380 = pneg %p374
      %p381 = scmp.eq.s32.totalorder %s31, 1
      %p382 = por %p380, %p381
      %p383 = scmp.ne.s32.totalorder %s375, %s378
      %p384 = scmp.eq.s32.totalorder %s31, 0
      %p385 = por %p383, %p384
      %p386 = scmp.ne.s32.totalorder %s375, %s378
      %p387 = scmp.eq.s32.totalorder %s36, 1
      %p388 = por %p386, %p387
      %p389 = scmp.ne.s32.totalorder %s378, %s379
      %p390 = scmp.eq.s32.totalorder %s36, 0
      %p391 = por %p389, %p390
      %p392 = scmp.ne.s32.totalorder %s378, %s379
      %p393 = scmp.eq.s32.totalorder %s37, 1
      %p394 = por %p392, %p393
      %p396 = scmp.ne.s32.totalorder %s379, %s395
      %p397 = scmp.eq.s32.totalorder %s37, 0
      %p398 = por %p396, %p397
      %p399 = scmp.le.s32.totalorder 1, %s31
      %p400 = scmp.lt.s32.totalorder %s31, 3
      %p401 = pnand %p399, %p400
      %p402 = pneg %p401
      // Predicated region
      $region9: #{tpu_custom_call.1} parent=5 // pred_check
        _
      $region10: #{tpu_custom_call.1} parent=5 // pred_check_branch
        %404 = sbr.rel (%p401) target = $region12
      $region11: #{tpu_custom_call.1} parent=5 // pred_region
        %s405 = ssub.s32 %s31, 1
        // Predicated region
        $region13: #{tpu_custom_call.1} parent=11 // pred_check
          %p406 = pneg %p90
        $region14: #{tpu_custom_call.1} parent=11 // pred_check_branch
          %408 = sbr.rel (%p406) target = $region16
        $region15: #{tpu_custom_call.1} parent=11 // pred_region
          %410 = vsyncadd [#allocation8], 0
          %s412 = sshll.u32 %s1, 4
          %s413 = int_to_ptr.hbm [resolvable:$true] %s412
          %s414 = sshll.u32 [#allocation7], 4
          %s415 = int_to_ptr.vmem [resolvable:$true] %s414
          %417 = dma.hbm_to_vmem [thread:$0]  %s413, 16, %s415, [#allocation8]
        $region16: #{tpu_custom_call.1} parent=11 // pred_fallthru
          _
        // Predicated region
        $region17: #{tpu_custom_call.1} parent=11 // pred_check
          %p418 = pneg %p111
        $region18: #{tpu_custom_call.1} parent=11 // pred_check_branch
          %420 = sbr.rel (%p418) target = $region20
        $region19: #{tpu_custom_call.1} parent=11 // pred_region
          %422 = vsyncadd [#allocation8], 0
          %s423 = sshll.u32 %s2, 4
          %s424 = int_to_ptr.hbm [resolvable:$true] %s423
          %s425 = sshll.u32 [#allocation9], 4
          %s426 = int_to_ptr.vmem [resolvable:$true] %s425
          %431 = dma.hbm_to_vmem [thread:$0]  %s424, 1024, %s426, [#allocation8], 64, 64, 4
        $region20: #{tpu_custom_call.1} parent=11 // pred_fallthru
          _
        // Predicated region
        $region21: #{tpu_custom_call.1} parent=11 // pred_check
          %p432 = pneg %p132
        $region22: #{tpu_custom_call.1} parent=11 // pred_check_branch
          %434 = sbr.rel (%p432) target = $region24
        $region23: #{tpu_custom_call.1} parent=11 // pred_region
          _
        $region24: #{tpu_custom_call.1} parent=11 // pred_fallthru
          _
        // Predicated region
        $region25: #{tpu_custom_call.1} parent=11 // pred_check
          %p435 = pneg %p153
        $region26: #{tpu_custom_call.1} parent=11 // pred_check_branch
          %437 = sbr.rel (%p435) target = $region28
        $region27: #{tpu_custom_call.1} parent=11 // pred_region
          %439 = vsyncadd [#allocation11], 0
          %s440 = sshll.u32 %s4, 4
          %s441 = int_to_ptr.hbm [resolvable:$true] %s440
          %s442 = sshll.u32 [#allocation10], 4
          %s443 = int_to_ptr.vmem [resolvable:$true] %s442
          %448 = dma.hbm_to_vmem [thread:$0]  %s441, 1024, %s443, [#allocation11], 64, 64, 4
        $region28: #{tpu_custom_call.1} parent=11 // pred_fallthru
          _
        // Predicated region
        $region29: #{tpu_custom_call.1} parent=11 // pred_check
          %p449 = pneg %p174
        $region30: #{tpu_custom_call.1} parent=11 // pred_check_branch
          %451 = sbr.rel (%p449) target = $region32
        $region31: #{tpu_custom_call.1} parent=11 // pred_region
          _
        $region32: #{tpu_custom_call.1} parent=11 // pred_fallthru
          _
        // Predicated region
        $region33: #{tpu_custom_call.1} parent=11 // pred_check
          %p452 = pneg %p195
        $region34: #{tpu_custom_call.1} parent=11 // pred_check_branch
          %454 = sbr.rel (%p452) target = $region36
        $region35: #{tpu_custom_call.1} parent=11 // pred_region
          %456 = vsyncadd [#allocation11], 0
          %s457 = sshll.u32 %s6, 4
          %s458 = int_to_ptr.hbm [resolvable:$true] %s457
          %s459 = sshll.u32 [#allocation12], 4
          %s460 = int_to_ptr.vmem [resolvable:$true] %s459
          %465 = dma.hbm_to_vmem [thread:$0]  %s458, 1024, %s460, [#allocation11], 64, 64, 4
        $region36: #{tpu_custom_call.1} parent=11 // pred_fallthru
          _
        // Predicated region
        $region37: #{tpu_custom_call.1} parent=11 // pred_check
          %p466 = pneg %p216
        $region38: #{tpu_custom_call.1} parent=11 // pred_check_branch
          %468 = sbr.rel (%p466) target = $region40
        $region39: #{tpu_custom_call.1} parent=11 // pred_region
          _
        $region40: #{tpu_custom_call.1} parent=11 // pred_fallthru
          _
        // Predicated region
        $region41: #{tpu_custom_call.1} parent=11 // pred_check
          %p469 = pneg %p237
        $region42: #{tpu_custom_call.1} parent=11 // pred_check_branch
          %471 = sbr.rel (%p469) target = $region44
        $region43: #{tpu_custom_call.1} parent=11 // pred_region
          %473 = vsyncadd [#allocation14], 0
          %s474 = sshll.u32 %s8, 4
          %s475 = int_to_ptr.hbm [resolvable:$true] %s474
          %s476 = sshll.u32 [#allocation13], 4
          %s477 = int_to_ptr.vmem [resolvable:$true] %s476
          %482 = dma.hbm_to_vmem [thread:$0]  %s475, 1024, %s477, [#allocation14], 64, 64, 4
        $region44: #{tpu_custom_call.1} parent=11 // pred_fallthru
          _
        // Predicated region
        $region45: #{tpu_custom_call.1} parent=11 // pred_check
          %p483 = pneg %p258
        $region46: #{tpu_custom_call.1} parent=11 // pred_check_branch
          %485 = sbr.rel (%p483) target = $region48
        $region47: #{tpu_custom_call.1} parent=11 // pred_region
          _
        $region48: #{tpu_custom_call.1} parent=11 // pred_fallthru
          _
        // Predicated region
        $region49: #{tpu_custom_call.1} parent=11 // pred_check
          %p486 = pneg %p279
        $region50: #{tpu_custom_call.1} parent=11 // pred_check_branch
          %488 = sbr.rel (%p486) target = $region52
        $region51: #{tpu_custom_call.1} parent=11 // pred_region
          _
        $region52: #{tpu_custom_call.1} parent=11 // pred_fallthru
          _
        // Predicated region
        $region53: #{tpu_custom_call.1} parent=11 // pred_check
          %p489 = pneg %p300
        $region54: #{tpu_custom_call.1} parent=11 // pred_check_branch
          %491 = sbr.rel (%p489) target = $region56
        $region55: #{tpu_custom_call.1} parent=11 // pred_region
          %493 = vsyncadd [#allocation14], 0
          %s494 = sshll.u32 %s11, 4
          %s495 = int_to_ptr.hbm [resolvable:$true] %s494
          %s496 = sshll.u32 [#allocation15], 4
          %s497 = int_to_ptr.vmem [resolvable:$true] %s496
          %502 = dma.hbm_to_vmem [thread:$0]  %s495, 4096, %s497, [#allocation14], 256, 256, 16
        $region56: #{tpu_custom_call.1} parent=11 // pred_fallthru
          _
        // Predicated region
        $region57: #{tpu_custom_call.1} parent=11 // pred_check
          %p503 = pneg %p321
        $region58: #{tpu_custom_call.1} parent=11 // pred_check_branch
          %505 = sbr.rel (%p503) target = $region60
        $region59: #{tpu_custom_call.1} parent=11 // pred_region
          _
        $region60: #{tpu_custom_call.1} parent=11 // pred_fallthru
          _
        // Predicated region
        $region61: #{tpu_custom_call.1} parent=11 // pred_check
          %p506 = pneg %p342
        $region62: #{tpu_custom_call.1} parent=11 // pred_check_branch
          %508 = sbr.rel (%p506) target = $region64
        $region63: #{tpu_custom_call.1} parent=11 // pred_region
          %510 = vsyncadd [#allocation17], 0
          %s511 = sshll.u32 %s13, 4
          %s512 = int_to_ptr.hbm [resolvable:$true] %s511
          %s513 = sshll.u32 [#allocation16], 4
          %s514 = int_to_ptr.vmem [resolvable:$true] %s513
          %519 = dma.hbm_to_vmem [thread:$0]  %s512, 4096, %s514, [#allocation17], 64, 64, 4
        $region64: #{tpu_custom_call.1} parent=11 // pred_fallthru
          _
        // Predicated region
        $region65: #{tpu_custom_call.1} parent=11 // pred_check
          %p520 = pneg %p363
        $region66: #{tpu_custom_call.1} parent=11 // pred_check_branch
          %522 = sbr.rel (%p520) target = $region68
        $region67: #{tpu_custom_call.1} parent=11 // pred_region
          _
        $region68: #{tpu_custom_call.1} parent=11 // pred_fallthru
          _
      $region12: #{tpu_custom_call.1} parent=5 // pred_fallthru
        _
      %p523 = scmp.lt.s32.totalorder %s31, 2
      // Predicated region
      $region69: #{tpu_custom_call.1} parent=5 // pred_check
        %p524 = pneg %p523
      $region70: #{tpu_custom_call.1} parent=5 // pred_check_branch
        %526 = sbr.rel (%p524) target = $region72
      $region71: #{tpu_custom_call.1} parent=5 // pred_region
        // Predicated region
        $region73: #{tpu_custom_call.1} parent=71 // pred_check
          %p527 = pneg %p63
        $region74: #{tpu_custom_call.1} parent=71 // pred_check_branch
          %529 = sbr.rel (%p527) target = $region76
        $region75: #{tpu_custom_call.1} parent=71 // pred_region
          %s530 = sand.u32 %s53, 1
          %s531 = scalar_lea.sflag [#allocation5], %s530
          %s532 = sand.u32 %s53, 1
          %s533 = smul.addr %s532, 16
          %s534 = scalar_lea.vmem [#allocation4], %s533
          %536 = vsyncadd %s531, 0
          %s537 = smul.addr %s38, 2
          %s538 = smul.addr %s537, 8
          %s539 = scalar_lea.hbm %s0, %s538
          %s540 = sshll.u32 %s539, 4
          %s541 = int_to_ptr.hbm [resolvable:$true] %s540
          %s542 = sshll.u32 %s534, 4
          %s543 = int_to_ptr.vmem [resolvable:$true] %s542
          %548 = dma.hbm_to_vmem [thread:$0]  %s541, 256, %s543, %s531, 128, 128, 8
        $region76: #{tpu_custom_call.1} parent=71 // pred_fallthru
          _
      $region72: #{tpu_custom_call.1} parent=5 // pred_fallthru
        _
      %p549 = scmp.le.s32.totalorder 1, %s31
      %p550 = scmp.lt.s32.totalorder %s31, 3
      %p551 = pnand %p549, %p550
      %p552 = pneg %p551
      // Predicated region
      $region77: #{tpu_custom_call.1} parent=5 // pred_check
        _
      $region78: #{tpu_custom_call.1} parent=5 // pred_check_branch
        %554 = sbr.rel (%p551) target = $region80
      $region79: #{tpu_custom_call.1} parent=5 // pred_region
        %s555 = ssub.s32 %s31, 1
        %s556 = sand.u32 %s56, 1
        %s557 = scalar_lea.sflag [#allocation5], %s556
        %s558 = sand.u32 %s56, 1
        %s559 = smul.addr %s558, 16
        %s560 = scalar_lea.vmem [#allocation4], %s559
        // Predicated region
        $region81: #{tpu_custom_call.1} parent=79 // pred_check
          %p561 = pneg %p69
        $region82: #{tpu_custom_call.1} parent=79 // pred_check_branch
          %563 = sbr.rel (%p561) target = $region84
        $region83: #{tpu_custom_call.1} parent=79 // pred_region
          %565 = dma.done %s557, 256
        $region84: #{tpu_custom_call.1} parent=79 // pred_fallthru
          _
        // Predicated region
        $region85: #{tpu_custom_call.1} parent=79 // pred_check
          %p566 = pneg %p90
        $region86: #{tpu_custom_call.1} parent=79 // pred_check_branch
          %568 = sbr.rel (%p566) target = $region88
        $region87: #{tpu_custom_call.1} parent=79 // pred_region
          %570 = dma.done [#allocation8], 16
        $region88: #{tpu_custom_call.1} parent=79 // pred_fallthru
          _
        // Predicated region
        $region89: #{tpu_custom_call.1} parent=79 // pred_check
          %p571 = pneg %p111
        $region90: #{tpu_custom_call.1} parent=79 // pred_check_branch
          %573 = sbr.rel (%p571) target = $region92
        $region91: #{tpu_custom_call.1} parent=79 // pred_region
          %575 = dma.done [#allocation8], 1024
        $region92: #{tpu_custom_call.1} parent=79 // pred_fallthru
          _
        // Predicated region
        $region93: #{tpu_custom_call.1} parent=79 // pred_check
          %p576 = pneg %p153
        $region94: #{tpu_custom_call.1} parent=79 // pred_check_branch
          %578 = sbr.rel (%p576) target = $region96
        $region95: #{tpu_custom_call.1} parent=79 // pred_region
          %580 = dma.done [#allocation11], 1024
        $region96: #{tpu_custom_call.1} parent=79 // pred_fallthru
          _
        // Predicated region
        $region97: #{tpu_custom_call.1} parent=79 // pred_check
          %p581 = pneg %p195
        $region98: #{tpu_custom_call.1} parent=79 // pred_check_branch
          %583 = sbr.rel (%p581) target = $region100
        $region99: #{tpu_custom_call.1} parent=79 // pred_region
          %585 = dma.done [#allocation11], 1024
        $region100: #{tpu_custom_call.1} parent=79 // pred_fallthru
          _
        // Predicated region
        $region101: #{tpu_custom_call.1} parent=79 // pred_check
          %p586 = pneg %p237
        $region102: #{tpu_custom_call.1} parent=79 // pred_check_branch
          %588 = sbr.rel (%p586) target = $region104
        $region103: #{tpu_custom_call.1} parent=79 // pred_region
          %590 = dma.done [#allocation14], 1024
        $region104: #{tpu_custom_call.1} parent=79 // pred_fallthru
          _
        // Predicated region
        $region105: #{tpu_custom_call.1} parent=79 // pred_check
          %p591 = pneg %p300
        $region106: #{tpu_custom_call.1} parent=79 // pred_check_branch
          %593 = sbr.rel (%p591) target = $region108
        $region107: #{tpu_custom_call.1} parent=79 // pred_region
          %595 = dma.done [#allocation14], 4096
        $region108: #{tpu_custom_call.1} parent=79 // pred_fallthru
          _
        // Predicated region
        $region109: #{tpu_custom_call.1} parent=79 // pred_check
          %p596 = pneg %p342
        $region110: #{tpu_custom_call.1} parent=79 // pred_check_branch
          %598 = sbr.rel (%p596) target = $region112
        $region111: #{tpu_custom_call.1} parent=79 // pred_region
          %600 = dma.done [#allocation17], 4096
        $region112: #{tpu_custom_call.1} parent=79 // pred_fallthru
          _
        %s601 = sand.u32 %s56, 1
        %s602 = scalar_lea.sflag [#allocation5], %s601
        %s603 = sand.u32 %s56, 1
        %s604 = smul.addr %s603, 16
        %s605 = scalar_lea.vmem [#allocation4], %s604
        %p606 = pneg %p69
        %p607 = pneg %p66
        %p608 = pneg %p90
        %p609 = pneg %p87
        %p610 = pneg %p111
        %p611 = pneg %p108
        %p612 = pneg %p132
        %p613 = pneg %p129
        %p614 = pneg %p153
        %p615 = pneg %p150
        %p616 = pneg %p174
        %p617 = pneg %p171
        %p618 = pneg %p195
        %p619 = pneg %p192
        %p620 = pneg %p216
        %p621 = pneg %p213
        %p622 = pneg %p237
        %p623 = pneg %p234
        %p624 = pneg %p258
        %p625 = pneg %p255
        %p626 = pneg %p279
        %p627 = pneg %p276
        %p628 = pneg %p300
        %p629 = pneg %p297
        %p630 = pneg %p321
        %p631 = pneg %p318
        %p632 = pneg %p342
        %p633 = pneg %p339
        %p634 = pneg %p363
        %p635 = pneg %p360
        %p636 = pneg %p391
        %p637 = pneg %p388
        %s638 = sand.u32 %s378, 1
        %s639 = scalar_lea.sflag [#allocation6], %s638
        %s640 = sand.u32 %s378, 1
        %s641 = smul.addr %s640, 16
        %s642 = scalar_lea.vmem [#allocation18], %s641
        %s643 = smul.u32 2, %s41
        %v645 = vld [vmem:[#allocation7] sm:$0x1]
        %p646 = scmp.eq.s32.totalorder %s41, 0
        // Predicated region
        $region113: #{tpu_custom_call.1} parent=79 // pred_check
          %p647 = pneg %p646
        $region114: #{tpu_custom_call.1} parent=79 // pred_check_branch
          %649 = sbr.rel (%p647) target = $region116
        $region115: #{tpu_custom_call.1} parent=79 // pred_region
          %v650 = vld [vmem:[%s560] sm:$0xff]
          %v651 = vld [vmem:[%s560 + $0x8] sm:$0xff]
          %v652 = vmul.f32 %v650, %v650
          %v653 = vmul.f32 %v651, %v651
          %654 = vadd.xlane.f32.xlu0 %v652
          %v655 = vpop.xlane.xlu0 %654
          %656 = vadd.xlane.f32.xlu0 %v653
          %v657 = vpop.xlane.xlu0 %656
          %v658 = vrcp.pop 128.0
          %v659 = vmul.f32 128.0, %v658
          %v660 = vsub.f32 1.0, %v659
          %v661 = vmul.f32 %v658, %v660
          %v662 = vadd.f32 %v658, %v661
          %vm663 = vweird.f32 %v658
          %v664 = vsel %vm663, %v658, %v662
          %v665 = vmul.f32 %v655, %v664
          %v666 = vmul.f32 %v657, %v664
          %v667 = vadd.f32 %v665, 1e-06
          %v668 = vadd.f32 %v666, 1e-06
          %v669 = vrsqrt.pop %v667
          %v670 = vmul.f32 %v669, %v667
          %v671 = vmul.f32 %v670, %v669
          %v672 = vmul.f32 0.5, %v671
          %v673 = vsub.f32 1.5, %v672
          %v674 = vmul.f32 %v669, %v673
          %vm675 = vweird.f32 %v667
          %vm676 = vweird.f32 %v669
          %vm677 = vmor %vm675, %vm676
          %v678 = vsel %vm677, %v669, %v674
          %v679 = vrsqrt.pop %v668
          %v680 = vmul.f32 %v679, %v668
          %v681 = vmul.f32 %v680, %v679
          %v682 = vmul.f32 0.5, %v681
          %v683 = vsub.f32 1.5, %v682
          %v684 = vmul.f32 %v679, %v683
          %vm685 = vweird.f32 %v668
          %vm686 = vweird.f32 %v679
          %vm687 = vmor %vm685, %vm686
          %v688 = vsel %vm687, %v679, %v684
          %v689 = vmul.f32 %v650, %v678
          %v690 = vmul.f32 %v651, %v688
          %v692 = vperm.slane %v645, 0
          %v694 = vmul.f32 %v689, %v692
          %v695 = vmul.f32 %v690, %v692
          %v696 = vpack.c.bf16 %v695, %v694
          %v697 = vld [vmem:[#allocation10] sm:$0xf]
          %v698 = vld [vmem:[#allocation10 + $0x4] sm:$0xf]
          %v699 = vld [vmem:[#allocation10 + $0x8] sm:$0xf]
          %v700 = vld [vmem:[#allocation10 + $0xc] sm:$0xf]
          %v701 = vld [vmem:[#allocation10 + $0x10] sm:$0xf]
          %v702 = vld [vmem:[#allocation10 + $0x14] sm:$0xf]
          %v703 = vld [vmem:[#allocation10 + $0x18] sm:$0xf]
          %v704 = vld [vmem:[#allocation10 + $0x1c] sm:$0xf]
          %v705 = vld [vmem:[#allocation10 + $0x20] sm:$0xf]
          %v706 = vld [vmem:[#allocation10 + $0x24] sm:$0xf]
          %v707 = vld [vmem:[#allocation10 + $0x28] sm:$0xf]
          %v708 = vld [vmem:[#allocation10 + $0x2c] sm:$0xf]
          %v709 = vld [vmem:[#allocation10 + $0x30] sm:$0xf]
          %v710 = vld [vmem:[#allocation10 + $0x34] sm:$0xf]
          %v711 = vld [vmem:[#allocation10 + $0x38] sm:$0xf]
          %v712 = vld [vmem:[#allocation10 + $0x3c] sm:$0xf]
          %v713 = vld [vmem:[%s5] sm:$0x1]
          %v715 = vperm.slane %v713, 0
          %v733 = vunpack.c.l.b16 %v697
          %v734 = vunpack.c.l.b16 %v698
          %v735 = vunpack.c.l.b16 %v699
          %v736 = vunpack.c.l.b16 %v700
          %v737 = vunpack.c.l.b16 %v701
          %v738 = vunpack.c.l.b16 %v702
          %v739 = vunpack.c.l.b16 %v703
          %v740 = vunpack.c.l.b16 %v704
          %v741 = vunpack.c.l.b16 %v705
          %v742 = vunpack.c.l.b16 %v706
          %v743 = vunpack.c.l.b16 %v707
          %v744 = vunpack.c.l.b16 %v708
          %v745 = vunpack.c.l.b16 %v709
          %v746 = vunpack.c.l.b16 %v710
          %v747 = vunpack.c.l.b16 %v711
          %v748 = vunpack.c.l.b16 %v712
          %v749 = vpack.c.b16 %v734, %v733
          %v750 = vpack.c.b16 %v736, %v735
          %v751 = vpack.c.b16 %v738, %v737
          %v752 = vpack.c.b16 %v740, %v739
          %v753 = vpack.c.b16 %v742, %v741
          %v754 = vpack.c.b16 %v744, %v743
          %v755 = vpack.c.b16 %v746, %v745
          %v756 = vpack.c.b16 %v748, %v747
          %765 = vmatpush.bf16.msra.mxu0 %v756
          %766 = vmatpush.bf16.msra.mxu0 %v755
          %767 = vmatpush.bf16.msra.mxu0 %v754
          %768 = vmatpush.bf16.msra.mxu0 %v753
          %769 = vmatpush.bf16.msra.mxu0 %v752
          %770 = vmatpush.bf16.msra.mxu0 %v751
          %771 = vmatpush.bf16.msra.mxu0 %v750
          %772 = vmatpush.bf16.msra.mxu0 %v749
          %773 = vmatmul.bf16.gmra.mxu0 %v696
          %v774 = vpop.f32.mrf.mxu0
          %v775 = vadd.f32 %v715, %v774
          %v776 = vpop.f32.mrf.mxu0
          %v777 = vadd.f32 %v715, %v776
          %778 = vdwg.mxu0
          %v779 = vld [vmem:[#allocation12] sm:$0xf]
          %v780 = vld [vmem:[#allocation12 + $0x4] sm:$0xf]
          %v781 = vld [vmem:[#allocation12 + $0x8] sm:$0xf]
          %v782 = vld [vmem:[#allocation12 + $0xc] sm:$0xf]
          %v783 = vld [vmem:[#allocation12 + $0x10] sm:$0xf]
          %v784 = vld [vmem:[#allocation12 + $0x14] sm:$0xf]
          %v785 = vld [vmem:[#allocation12 + $0x18] sm:$0xf]
          %v786 = vld [vmem:[#allocation12 + $0x1c] sm:$0xf]
          %v787 = vld [vmem:[#allocation12 + $0x20] sm:$0xf]
          %v788 = vld [vmem:[#allocation12 + $0x24] sm:$0xf]
          %v789 = vld [vmem:[#allocation12 + $0x28] sm:$0xf]
          %v790 = vld [vmem:[#allocation12 + $0x2c] sm:$0xf]
          %v791 = vld [vmem:[#allocation12 + $0x30] sm:$0xf]
          %v792 = vld [vmem:[#allocation12 + $0x34] sm:$0xf]
          %v793 = vld [vmem:[#allocation12 + $0x38] sm:$0xf]
          %v794 = vld [vmem:[#allocation12 + $0x3c] sm:$0xf]
          %v795 = vld [vmem:[%s7] sm:$0x1]
          %v797 = vperm.slane %v795, 0
          %v815 = vunpack.c.l.b16 %v779
          %v816 = vunpack.c.l.b16 %v780
          %v817 = vunpack.c.l.b16 %v781
          %v818 = vunpack.c.l.b16 %v782
          %v819 = vunpack.c.l.b16 %v783
          %v820 = vunpack.c.l.b16 %v784
          %v821 = vunpack.c.l.b16 %v785
          %v822 = vunpack.c.l.b16 %v786
          %v823 = vunpack.c.l.b16 %v787
          %v824 = vunpack.c.l.b16 %v788
          %v825 = vunpack.c.l.b16 %v789
          %v826 = vunpack.c.l.b16 %v790
          %v827 = vunpack.c.l.b16 %v791
          %v828 = vunpack.c.l.b16 %v792
          %v829 = vunpack.c.l.b16 %v793
          %v830 = vunpack.c.l.b16 %v794
          %v831 = vpack.c.b16 %v816, %v815
          %v832 = vpack.c.b16 %v818, %v817
          %v833 = vpack.c.b16 %v820, %v819
          %v834 = vpack.c.b16 %v822, %v821
          %v835 = vpack.c.b16 %v824, %v823
          %v836 = vpack.c.b16 %v826, %v825
          %v837 = vpack.c.b16 %v828, %v827
          %v838 = vpack.c.b16 %v830, %v829
          %847 = vmatpush.bf16.msra.mxu0 %v838
          %848 = vmatpush.bf16.msra.mxu0 %v837
          %849 = vmatpush.bf16.msra.mxu0 %v836
          %850 = vmatpush.bf16.msra.mxu0 %v835
          %851 = vmatpush.bf16.msra.mxu0 %v834
          %852 = vmatpush.bf16.msra.mxu0 %v833
          %853 = vmatpush.bf16.msra.mxu0 %v832
          %854 = vmatpush.bf16.msra.mxu0 %v831
          %855 = vmatmul.bf16.gmra.mxu0 %v696
          %v856 = vpop.f32.mrf.mxu0
          %v857 = vadd.f32 %v797, %v856
          %v858 = vpop.f32.mrf.mxu0
          %v859 = vadd.f32 %v797, %v858
          %860 = vdwg.mxu0
          %v861 = vpack.c.bf16 %v775, %v775
          %v862 = vpack.c.bf16 %v777, %v777
          %863 = vst [vmem:[#allocation2] sm:$0xf] %v861
          %864 = vst [vmem:[#allocation2 + $0x4] sm:$0xf] %v862
          %v865 = vpack.c.bf16 %v857, %v857
          %v866 = vpack.c.bf16 %v859, %v859
          %867 = vst [vmem:[#allocation3] sm:$0xf] %v865
          %868 = vst [vmem:[#allocation3 + $0x4] sm:$0xf] %v866
        $region116: #{tpu_custom_call.1} parent=79 // pred_fallthru
          _
        %s869 = smul.u32 %s41, 16
        %s870 = scalar_lea.vmem %s560, %s869 [#allocation4]
        %v871 = vld [vmem:[%s870] sm:$0xff]
        %v872 = vld [vmem:[%s870 + $0x8] sm:$0xff]
        %v873 = vmul.f32 %v871, %v871
        %v874 = vmul.f32 %v872, %v872
        %875 = vadd.xlane.f32.xlu0 %v873
        %v876 = vpop.xlane.xlu0 %875
        %877 = vadd.xlane.f32.xlu0 %v874
        %v878 = vpop.xlane.xlu0 %877
        %v879 = vrcp.pop 128.0
        %v880 = vmul.f32 128.0, %v879
        %v881 = vsub.f32 1.0, %v880
        %v882 = vmul.f32 %v879, %v881
        %v883 = vadd.f32 %v879, %v882
        %vm884 = vweird.f32 %v879
        %v885 = vsel %vm884, %v879, %v883
        %v886 = vmul.f32 %v876, %v885
        %v887 = vmul.f32 %v878, %v885
        %v888 = vadd.f32 %v886, 1e-06
        %v889 = vadd.f32 %v887, 1e-06
        %v890 = vrsqrt.pop %v888
        %v891 = vmul.f32 %v890, %v888
        %v892 = vmul.f32 %v891, %v890
        %v893 = vmul.f32 0.5, %v892
        %v894 = vsub.f32 1.5, %v893
        %v895 = vmul.f32 %v890, %v894
        %vm896 = vweird.f32 %v888
        %vm897 = vweird.f32 %v890
        %vm898 = vmor %vm896, %vm897
        %v899 = vsel %vm898, %v890, %v895
        %v900 = vrsqrt.pop %v889
        %v901 = vmul.f32 %v900, %v889
        %v902 = vmul.f32 %v901, %v900
        %v903 = vmul.f32 0.5, %v902
        %v904 = vsub.f32 1.5, %v903
        %v905 = vmul.f32 %v900, %v904
        %vm906 = vweird.f32 %v889
        %vm907 = vweird.f32 %v900
        %vm908 = vmor %vm906, %vm907
        %v909 = vsel %vm908, %v900, %v905
        %v910 = vmul.f32 %v871, %v899
        %v911 = vmul.f32 %v872, %v909
        %v913 = vperm.slane %v645, 0
        %v915 = vmul.f32 %v910, %v913
        %v916 = vmul.f32 %v911, %v913
        %v917 = vpack.c.bf16 %v916, %v915
        %v918 = vld [vmem:[#allocation9] sm:$0xf]
        %v919 = vld [vmem:[#allocation9 + $0x4] sm:$0xf]
        %v920 = vld [vmem:[#allocation9 + $0x8] sm:$0xf]
        %v921 = vld [vmem:[#allocation9 + $0xc] sm:$0xf]
        %v922 = vld [vmem:[#allocation9 + $0x10] sm:$0xf]
        %v923 = vld [vmem:[#allocation9 + $0x14] sm:$0xf]
        %v924 = vld [vmem:[#allocation9 + $0x18] sm:$0xf]
        %v925 = vld [vmem:[#allocation9 + $0x1c] sm:$0xf]
        %v926 = vld [vmem:[#allocation9 + $0x20] sm:$0xf]
        %v927 = vld [vmem:[#allocation9 + $0x24] sm:$0xf]
        %v928 = vld [vmem:[#allocation9 + $0x28] sm:$0xf]
        %v929 = vld [vmem:[#allocation9 + $0x2c] sm:$0xf]
        %v930 = vld [vmem:[#allocation9 + $0x30] sm:$0xf]
        %v931 = vld [vmem:[#allocation9 + $0x34] sm:$0xf]
        %v932 = vld [vmem:[#allocation9 + $0x38] sm:$0xf]
        %v933 = vld [vmem:[#allocation9 + $0x3c] sm:$0xf]
        %v934 = vld [vmem:[%s3] sm:$0x1]
        %v936 = vperm.slane %v934, 0
        %v954 = vunpack.c.l.b16 %v918
        %v955 = vunpack.c.l.b16 %v919
        %v956 = vunpack.c.l.b16 %v920
        %v957 = vunpack.c.l.b16 %v921
        %v958 = vunpack.c.l.b16 %v922
        %v959 = vunpack.c.l.b16 %v923
        %v960 = vunpack.c.l.b16 %v924
        %v961 = vunpack.c.l.b16 %v925
        %v962 = vunpack.c.l.b16 %v926
        %v963 = vunpack.c.l.b16 %v927
        %v964 = vunpack.c.l.b16 %v928
        %v965 = vunpack.c.l.b16 %v929
        %v966 = vunpack.c.l.b16 %v930
        %v967 = vunpack.c.l.b16 %v931
        %v968 = vunpack.c.l.b16 %v932
        %v969 = vunpack.c.l.b16 %v933
        %v970 = vpack.c.b16 %v955, %v954
        %v971 = vpack.c.b16 %v957, %v956
        %v972 = vpack.c.b16 %v959, %v958
        %v973 = vpack.c.b16 %v961, %v960
        %v974 = vpack.c.b16 %v963, %v962
        %v975 = vpack.c.b16 %v965, %v964
        %v976 = vpack.c.b16 %v967, %v966
        %v977 = vpack.c.b16 %v969, %v968
        %986 = vmatpush.bf16.msra.mxu0 %v977
        %987 = vmatpush.bf16.msra.mxu0 %v976
        %988 = vmatpush.bf16.msra.mxu0 %v975
        %989 = vmatpush.bf16.msra.mxu0 %v974
        %990 = vmatpush.bf16.msra.mxu0 %v973
        %991 = vmatpush.bf16.msra.mxu0 %v972
        %992 = vmatpush.bf16.msra.mxu0 %v971
        %993 = vmatpush.bf16.msra.mxu0 %v970
        %994 = vmatmul.bf16.gmra.mxu0 %v917
        %v995 = vpop.f32.mrf.mxu0
        %v996 = vadd.f32 %v936, %v995
        %v997 = vpop.f32.mrf.mxu0
        %v998 = vadd.f32 %v936, %v997
        %999 = vdwg.mxu0
        %v1000 = vmul.f32 %v996, 0.25
        %v1001 = vmul.f32 %v998, 0.25
        %v1002 = vpack.c.bf16 %v1000, %v1000
        %v1003 = vpack.c.bf16 %v1001, %v1001
        %1006 = vrot.lane.b32.xlu0 %v1002, 112
        %v1007 = vpop.permute.xlu0 %1006
        %1008 = vrot.lane.b32.xlu0 %v1003, 112
        %v1009 = vpop.permute.xlu0 %1008
        %1010 = vrot.lane.b32.xlu0 %v1002, 96
        %v1011 = vpop.permute.xlu0 %1010
        %1012 = vrot.lane.b32.xlu0 %v1003, 96
        %v1013 = vpop.permute.xlu0 %1012
        %1014 = vrot.lane.b32.xlu0 %v1002, 80
        %v1015 = vpop.permute.xlu0 %1014
        %1016 = vrot.lane.b32.xlu0 %v1003, 80
        %v1017 = vpop.permute.xlu0 %1016
        %1018 = vrot.lane.b32.xlu0 %v1002, 64
        %v1019 = vpop.permute.xlu0 %1018
        %1020 = vrot.lane.b32.xlu0 %v1003, 64
        %v1021 = vpop.permute.xlu0 %1020
        %1022 = vrot.lane.b32.xlu0 %v1002, 48
        %v1023 = vpop.permute.xlu0 %1022
        %1024 = vrot.lane.b32.xlu0 %v1003, 48
        %v1025 = vpop.permute.xlu0 %1024
        %1026 = vrot.lane.b32.xlu0 %v1002, 32
        %v1027 = vpop.permute.xlu0 %1026
        %1028 = vrot.lane.b32.xlu0 %v1003, 32
        %v1029 = vpop.permute.xlu0 %1028
        %1030 = vrot.lane.b32.xlu0 %v1002, 16
        %v1031 = vpop.permute.xlu0 %1030
        %1032 = vrot.lane.b32.xlu0 %v1003, 16
        %v1033 = vpop.permute.xlu0 %1032
        %v1034 = vld [vmem:[#allocation2] sm:$0xf]
        %v1035 = vld [vmem:[#allocation2 + $0x4] sm:$0xf]
        %1038 = vrot.lane.b32.xlu0 %v1034, 112
        %v1039 = vpop.permute.xlu0 %1038
        %1040 = vrot.lane.b32.xlu0 %v1035, 112
        %v1041 = vpop.permute.xlu0 %1040
        %1042 = vrot.lane.b32.xlu0 %v1034, 96
        %v1043 = vpop.permute.xlu0 %1042
        %1044 = vrot.lane.b32.xlu0 %v1035, 96
        %v1045 = vpop.permute.xlu0 %1044
        %1046 = vrot.lane.b32.xlu0 %v1034, 80
        %v1047 = vpop.permute.xlu0 %1046
        %1048 = vrot.lane.b32.xlu0 %v1035, 80
        %v1049 = vpop.permute.xlu0 %1048
        %1050 = vrot.lane.b32.xlu0 %v1034, 64
        %v1051 = vpop.permute.xlu0 %1050
        %1052 = vrot.lane.b32.xlu0 %v1035, 64
        %v1053 = vpop.permute.xlu0 %1052
        %1054 = vrot.lane.b32.xlu0 %v1034, 48
        %v1055 = vpop.permute.xlu0 %1054
        %1056 = vrot.lane.b32.xlu0 %v1035, 48
        %v1057 = vpop.permute.xlu0 %1056
        %1058 = vrot.lane.b32.xlu0 %v1034, 32
        %v1059 = vpop.permute.xlu0 %1058
        %1060 = vrot.lane.b32.xlu0 %v1035, 32
        %v1061 = vpop.permute.xlu0 %1060
        %1062 = vrot.lane.b32.xlu0 %v1034, 16
        %v1063 = vpop.permute.xlu0 %1062
        %1064 = vrot.lane.b32.xlu0 %v1035, 16
        %v1065 = vpop.permute.xlu0 %1064
        %v1066 = vld [vmem:[#allocation3] sm:$0xf]
        %v1067 = vld [vmem:[#allocation3 + $0x4] sm:$0xf]
        %1070 = vrot.lane.b32.xlu0 %v1066, 112
        %v1071 = vpop.permute.xlu0 %1070
        %1072 = vrot.lane.b32.xlu0 %v1067, 112
        %v1073 = vpop.permute.xlu0 %1072
        %1074 = vrot.lane.b32.xlu0 %v1066, 96
        %v1075 = vpop.permute.xlu0 %1074
        %1076 = vrot.lane.b32.xlu0 %v1067, 96
        %v1077 = vpop.permute.xlu0 %1076
        %1078 = vrot.lane.b32.xlu0 %v1066, 80
        %v1079 = vpop.permute.xlu0 %1078
        %1080 = vrot.lane.b32.xlu0 %v1067, 80
        %v1081 = vpop.permute.xlu0 %1080
        %1082 = vrot.lane.b32.xlu0 %v1066, 64
        %v1083 = vpop.permute.xlu0 %1082
        %1084 = vrot.lane.b32.xlu0 %v1067, 64
        %v1085 = vpop.permute.xlu0 %1084
        %1086 = vrot.lane.b32.xlu0 %v1066, 48
        %v1087 = vpop.permute.xlu0 %1086
        %1088 = vrot.lane.b32.xlu0 %v1067, 48
        %v1089 = vpop.permute.xlu0 %1088
        %1090 = vrot.lane.b32.xlu0 %v1066, 32
        %v1091 = vpop.permute.xlu0 %1090
        %1092 = vrot.lane.b32.xlu0 %v1067, 32
        %v1093 = vpop.permute.xlu0 %1092
        %1094 = vrot.lane.b32.xlu0 %v1066, 16
        %v1095 = vpop.permute.xlu0 %1094
        %1096 = vrot.lane.b32.xlu0 %v1067, 16
        %v1097 = vpop.permute.xlu0 %1096
        %v1098 = vunpack.c.l.b16 %v1034
        %v1099 = vunpack.c.l.b16 %v1035
        %v1100 = vunpack.c.l.b16 %v1039
        %v1101 = vunpack.c.l.b16 %v1041
        %v1102 = vunpack.c.l.b16 %v1043
        %v1103 = vunpack.c.l.b16 %v1045
        %v1104 = vunpack.c.l.b16 %v1047
        %v1105 = vunpack.c.l.b16 %v1049
        %v1106 = vunpack.c.l.b16 %v1051
        %v1107 = vunpack.c.l.b16 %v1053
        %v1108 = vunpack.c.l.b16 %v1055
        %v1109 = vunpack.c.l.b16 %v1057
        %v1110 = vunpack.c.l.b16 %v1059
        %v1111 = vunpack.c.l.b16 %v1061
        %v1112 = vunpack.c.l.b16 %v1063
        %v1113 = vunpack.c.l.b16 %v1065
        %v1114 = vpack.c.b16 %v1099, %v1098
        %v1115 = vpack.c.b16 %v1101, %v1100
        %v1116 = vpack.c.b16 %v1103, %v1102
        %v1117 = vpack.c.b16 %v1105, %v1104
        %v1118 = vpack.c.b16 %v1107, %v1106
        %v1119 = vpack.c.b16 %v1109, %v1108
        %v1120 = vpack.c.b16 %v1111, %v1110
        %v1121 = vpack.c.b16 %v1113, %v1112
        %1130 = vxpose.xlu0.c.b16.start [1/8] %v1114, 128
        %1131 = vxpose.xlu0.c.b16.cont [2/8] 0, 128
        %1132 = vxpose.xlu0.c.b16.cont [3/8] 0, 128
        %1133 = vxpose.xlu0.c.b16.cont [4/8] 0, 128
        %1134 = vxpose.xlu0.c.b16.cont [5/8] 0, 128
        %1135 = vxpose.xlu0.c.b16.cont [6/8] 0, 128
        %1136 = vxpose.xlu0.c.b16.cont [7/8] 0, 128
        %1137 = vxpose.xlu0.c.b16.end [8/8] 0, 128
        %v1138 = vpop.trf.xlu0
        %v1139 = vpop.trf.xlu0
        %v1140 = vpop.trf.xlu0
        %v1141 = vpop.trf.xlu0
        %v1142 = vpop.trf.xlu0
        %v1143 = vpop.trf.xlu0
        %v1144 = vpop.trf.xlu0
        %v1145 = vpop.trf.xlu0
        %1146 = vxpose.xlu0.c.b16.start [1/8] %v1115, 128
        %1147 = vxpose.xlu0.c.b16.cont [2/8] 0, 128
        %1148 = vxpose.xlu0.c.b16.cont [3/8] 0, 128
        %1149 = vxpose.xlu0.c.b16.cont [4/8] 0, 128
        %1150 = vxpose.xlu0.c.b16.cont [5/8] 0, 128
        %1151 = vxpose.xlu0.c.b16.cont [6/8] 0, 128
        %1152 = vxpose.xlu0.c.b16.cont [7/8] 0, 128
        %1153 = vxpose.xlu0.c.b16.end [8/8] 0, 128
        %v1154 = vpop.trf.xlu0
        %v1155 = vpop.trf.xlu0
        %v1156 = vpop.trf.xlu0
        %v1157 = vpop.trf.xlu0
        %v1158 = vpop.trf.xlu0
        %v1159 = vpop.trf.xlu0
        %v1160 = vpop.trf.xlu0
        %v1161 = vpop.trf.xlu0
        %1162 = vxpose.xlu0.c.b16.start [1/8] %v1116, 128
        %1163 = vxpose.xlu0.c.b16.cont [2/8] 0, 128
        %1164 = vxpose.xlu0.c.b16.cont [3/8] 0, 128
        %1165 = vxpose.xlu0.c.b16.cont [4/8] 0, 128
        %1166 = vxpose.xlu0.c.b16.cont [5/8] 0, 128
        %1167 = vxpose.xlu0.c.b16.cont [6/8] 0, 128
        %1168 = vxpose.xlu0.c.b16.cont [7/8] 0, 128
        %1169 = vxpose.xlu0.c.b16.end [8/8] 0, 128
        %v1170 = vpop.trf.xlu0
        %v1171 = vpop.trf.xlu0
        %v1172 = vpop.trf.xlu0
        %v1173 = vpop.trf.xlu0
        %v1174 = vpop.trf.xlu0
        %v1175 = vpop.trf.xlu0
        %v1176 = vpop.trf.xlu0
        %v1177 = vpop.trf.xlu0
        %1178 = vxpose.xlu0.c.b16.start [1/8] %v1117, 128
        %1179 = vxpose.xlu0.c.b16.cont [2/8] 0, 128
        %1180 = vxpose.xlu0.c.b16.cont [3/8] 0, 128
        %1181 = vxpose.xlu0.c.b16.cont [4/8] 0, 128
        %1182 = vxpose.xlu0.c.b16.cont [5/8] 0, 128
        %1183 = vxpose.xlu0.c.b16.cont [6/8] 0, 128
        %1184 = vxpose.xlu0.c.b16.cont [7/8] 0, 128
        %1185 = vxpose.xlu0.c.b16.end [8/8] 0, 128
        %v1186 = vpop.trf.xlu0
        %v1187 = vpop.trf.xlu0
        %v1188 = vpop.trf.xlu0
        %v1189 = vpop.trf.xlu0
        %v1190 = vpop.trf.xlu0
        %v1191 = vpop.trf.xlu0
        %v1192 = vpop.trf.xlu0
        %v1193 = vpop.trf.xlu0
        %1194 = vxpose.xlu0.c.b16.start [1/8] %v1118, 128
        %1195 = vxpose.xlu0.c.b16.cont [2/8] 0, 128
        %1196 = vxpose.xlu0.c.b16.cont [3/8] 0, 128
        %1197 = vxpose.xlu0.c.b16.cont [4/8] 0, 128
        %1198 = vxpose.xlu0.c.b16.cont [5/8] 0, 128
        %1199 = vxpose.xlu0.c.b16.cont [6/8] 0, 128
        %1200 = vxpose.xlu0.c.b16.cont [7/8] 0, 128
        %1201 = vxpose.xlu0.c.b16.end [8/8] 0, 128
        %v1202 = vpop.trf.xlu0
        %v1203 = vpop.trf.xlu0
        %v1204 = vpop.trf.xlu0
        %v1205 = vpop.trf.xlu0
        %v1206 = vpop.trf.xlu0
        %v1207 = vpop.trf.xlu0
        %v1208 = vpop.trf.xlu0
        %v1209 = vpop.trf.xlu0
        %1210 = vxpose.xlu0.c.b16.start [1/8] %v1119, 128
        %1211 = vxpose.xlu0.c.b16.cont [2/8] 0, 128
        %1212 = vxpose.xlu0.c.b16.cont [3/8] 0, 128
        %1213 = vxpose.xlu0.c.b16.cont [4/8] 0, 128
        %1214 = vxpose.xlu0.c.b16.cont [5/8] 0, 128
        %1215 = vxpose.xlu0.c.b16.cont [6/8] 0, 128
        %1216 = vxpose.xlu0.c.b16.cont [7/8] 0, 128
        %1217 = vxpose.xlu0.c.b16.end [8/8] 0, 128
        %v1218 = vpop.trf.xlu0
        %v1219 = vpop.trf.xlu0
        %v1220 = vpop.trf.xlu0
        %v1221 = vpop.trf.xlu0
        %v1222 = vpop.trf.xlu0
        %v1223 = vpop.trf.xlu0
        %v1224 = vpop.trf.xlu0
        %v1225 = vpop.trf.xlu0
        %1226 = vxpose.xlu0.c.b16.start [1/8] %v1120, 128
        %1227 = vxpose.xlu0.c.b16.cont [2/8] 0, 128
        %1228 = vxpose.xlu0.c.b16.cont [3/8] 0, 128
        %1229 = vxpose.xlu0.c.b16.cont [4/8] 0, 128
        %1230 = vxpose.xlu0.c.b16.cont [5/8] 0, 128
        %1231 = vxpose.xlu0.c.b16.cont [6/8] 0, 128
        %1232 = vxpose.xlu0.c.b16.cont [7/8] 0, 128
        %1233 = vxpose.xlu0.c.b16.end [8/8] 0, 128
        %v1234 = vpop.trf.xlu0
        %v1235 = vpop.trf.xlu0
        %v1236 = vpop.trf.xlu0
        %v1237 = vpop.trf.xlu0
        %v1238 = vpop.trf.xlu0
        %v1239 = vpop.trf.xlu0
        %v1240 = vpop.trf.xlu0
        %v1241 = vpop.trf.xlu0
        %1242 = vxpose.xlu0.c.b16.start [1/8] %v1121, 128
        %1243 = vxpose.xlu0.c.b16.cont [2/8] 0, 128
        %1244 = vxpose.xlu0.c.b16.cont [3/8] 0, 128
        %1245 = vxpose.xlu0.c.b16.cont [4/8] 0, 128
        %1246 = vxpose.xlu0.c.b16.cont [5/8] 0, 128
        %1247 = vxpose.xlu0.c.b16.cont [6/8] 0, 128
        %1248 = vxpose.xlu0.c.b16.cont [7/8] 0, 128
        %1249 = vxpose.xlu0.c.b16.end [8/8] 0, 128
        %v1250 = vpop.trf.xlu0
        %v1251 = vpop.trf.xlu0
        %v1252 = vpop.trf.xlu0
        %v1253 = vpop.trf.xlu0
        %v1254 = vpop.trf.xlu0
        %v1255 = vpop.trf.xlu0
        %v1256 = vpop.trf.xlu0
        %v1257 = vpop.trf.xlu0
        %v1258 = vunpack.c.l.b16 %v1002
        %v1259 = vunpack.c.l.b16 %v1003
        %v1260 = vpack.c.b16 %v1259, %v1258
        %vm1261 = vcmask 130048
        %v1263 = vsel %vm1261, %v1260, 0
        %1265 = vmatpush.bf16.msra.mxu0 0
        %1266 = vmatpush.bf16.msra.mxu0 0
        %1267 = vmatpush.bf16.msra.mxu0 0
        %1268 = vmatpush.bf16.msra.mxu0 0
        %1269 = vmatpush.bf16.msra.mxu0 0
        %1270 = vmatpush.bf16.msra.mxu0 0
        %1271 = vmatpush.bf16.msra.mxu0 0
        %1272 = vmatpush.bf16.msra.mxu0 %v1138
        %1273 = vmatmul.bf16.gmra.mxu0 %v1263
        %v1274 = vpop.f32.mrf.mxu0
        %v1275 = vadd.f32 0.0, %v1274
        %v1276 = vpop.f32.mrf.mxu0
        %v1277 = vadd.f32 0.0, %v1276
        %1278 = vdwg.mxu0
        %v1279 = vunpack.c.l.b16 %v1007
        %v1280 = vunpack.c.l.b16 %v1009
        %v1281 = vpack.c.b16 %v1280, %v1279
        %v1283 = vsel %vm1261, %v1281, 0
        %1285 = vmatpush.bf16.msra.mxu0 0
        %1286 = vmatpush.bf16.msra.mxu0 0
        %1287 = vmatpush.bf16.msra.mxu0 0
        %1288 = vmatpush.bf16.msra.mxu0 0
        %1289 = vmatpush.bf16.msra.mxu0 0
        %1290 = vmatpush.bf16.msra.mxu0 0
        %1291 = vmatpush.bf16.msra.mxu0 0
        %1292 = vmatpush.bf16.msra.mxu0 %v1154
        %1293 = vmatmul.bf16.gmra.mxu0 %v1283
        %v1294 = vpop.f32.mrf.mxu0
        %v1295 = vadd.f32 0.0, %v1294
        %v1296 = vpop.f32.mrf.mxu0
        %v1297 = vadd.f32 0.0, %v1296
        %1298 = vdwg.mxu0
        %v1299 = vunpack.c.l.b16 %v1011
        %v1300 = vunpack.c.l.b16 %v1013
        %v1301 = vpack.c.b16 %v1300, %v1299
        %v1303 = vsel %vm1261, %v1301, 0
        %1305 = vmatpush.bf16.msra.mxu0 0
        %1306 = vmatpush.bf16.msra.mxu0 0
        %1307 = vmatpush.bf16.msra.mxu0 0
        %1308 = vmatpush.bf16.msra.mxu0 0
        %1309 = vmatpush.bf16.msra.mxu0 0
        %1310 = vmatpush.bf16.msra.mxu0 0
        %1311 = vmatpush.bf16.msra.mxu0 0
        %1312 = vmatpush.bf16.msra.mxu0 %v1170
        %1313 = vmatmul.bf16.gmra.mxu0 %v1303
        %v1314 = vpop.f32.mrf.mxu0
        %v1315 = vadd.f32 0.0, %v1314
        %v1316 = vpop.f32.mrf.mxu0
        %v1317 = vadd.f32 0.0, %v1316
        %1318 = vdwg.mxu0
        %v1319 = vunpack.c.l.b16 %v1015
        %v1320 = vunpack.c.l.b16 %v1017
        %v1321 = vpack.c.b16 %v1320, %v1319
        %v1323 = vsel %vm1261, %v1321, 0
        %1325 = vmatpush.bf16.msra.mxu0 0
        %1326 = vmatpush.bf16.msra.mxu0 0
        %1327 = vmatpush.bf16.msra.mxu0 0
        %1328 = vmatpush.bf16.msra.mxu0 0
        %1329 = vmatpush.bf16.msra.mxu0 0
        %1330 = vmatpush.bf16.msra.mxu0 0
        %1331 = vmatpush.bf16.msra.mxu0 0
        %1332 = vmatpush.bf16.msra.mxu0 %v1186
        %1333 = vmatmul.bf16.gmra.mxu0 %v1323
        %v1334 = vpop.f32.mrf.mxu0
        %v1335 = vadd.f32 0.0, %v1334
        %v1336 = vpop.f32.mrf.mxu0
        %v1337 = vadd.f32 0.0, %v1336
        %1338 = vdwg.mxu0
        %v1339 = vunpack.c.l.b16 %v1019
        %v1340 = vunpack.c.l.b16 %v1021
        %v1341 = vpack.c.b16 %v1340, %v1339
        %v1343 = vsel %vm1261, %v1341, 0
        %1345 = vmatpush.bf16.msra.mxu0 0
        %1346 = vmatpush.bf16.msra.mxu0 0
        %1347 = vmatpush.bf16.msra.mxu0 0
        %1348 = vmatpush.bf16.msra.mxu0 0
        %1349 = vmatpush.bf16.msra.mxu0 0
        %1350 = vmatpush.bf16.msra.mxu0 0
        %1351 = vmatpush.bf16.msra.mxu0 0
        %1352 = vmatpush.bf16.msra.mxu0 %v1202
        %1353 = vmatmul.bf16.gmra.mxu0 %v1343
        %v1354 = vpop.f32.mrf.mxu0
        %v1355 = vadd.f32 0.0, %v1354
        %v1356 = vpop.f32.mrf.mxu0
        %v1357 = vadd.f32 0.0, %v1356
        %1358 = vdwg.mxu0
        %v1359 = vunpack.c.l.b16 %v1023
        %v1360 = vunpack.c.l.b16 %v1025
        %v1361 = vpack.c.b16 %v1360, %v1359
        %v1363 = vsel %vm1261, %v1361, 0
        %1365 = vmatpush.bf16.msra.mxu0 0
        %1366 = vmatpush.bf16.msra.mxu0 0
        %1367 = vmatpush.bf16.msra.mxu0 0
        %1368 = vmatpush.bf16.msra.mxu0 0
        %1369 = vmatpush.bf16.msra.mxu0 0
        %1370 = vmatpush.bf16.msra.mxu0 0
        %1371 = vmatpush.bf16.msra.mxu0 0
        %1372 = vmatpush.bf16.msra.mxu0 %v1218
        %1373 = vmatmul.bf16.gmra.mxu0 %v1363
        %v1374 = vpop.f32.mrf.mxu0
        %v1375 = vadd.f32 0.0, %v1374
        %v1376 = vpop.f32.mrf.mxu0
        %v1377 = vadd.f32 0.0, %v1376
        %1378 = vdwg.mxu0
        %v1379 = vunpack.c.l.b16 %v1027
        %v1380 = vunpack.c.l.b16 %v1029
        %v1381 = vpack.c.b16 %v1380, %v1379
        %v1383 = vsel %vm1261, %v1381, 0
        %1385 = vmatpush.bf16.msra.mxu0 0
        %1386 = vmatpush.bf16.msra.mxu0 0
        %1387 = vmatpush.bf16.msra.mxu0 0
        %1388 = vmatpush.bf16.msra.mxu0 0
        %1389 = vmatpush.bf16.msra.mxu0 0
        %1390 = vmatpush.bf16.msra.mxu0 0
        %1391 = vmatpush.bf16.msra.mxu0 0
        %1392 = vmatpush.bf16.msra.mxu0 %v1234
        %1393 = vmatmul.bf16.gmra.mxu0 %v1383
        %v1394 = vpop.f32.mrf.mxu0
        %v1395 = vadd.f32 0.0, %v1394
        %v1396 = vpop.f32.mrf.mxu0
        %v1397 = vadd.f32 0.0, %v1396
        %1398 = vdwg.mxu0
        %v1399 = vunpack.c.l.b16 %v1031
        %v1400 = vunpack.c.l.b16 %v1033
        %v1401 = vpack.c.b16 %v1400, %v1399
        %v1403 = vsel %vm1261, %v1401, 0
        %1405 = vmatpush.bf16.msra.mxu0 0
        %1406 = vmatpush.bf16.msra.mxu0 0
        %1407 = vmatpush.bf16.msra.mxu0 0
        %1408 = vmatpush.bf16.msra.mxu0 0
        %1409 = vmatpush.bf16.msra.mxu0 0
        %1410 = vmatpush.bf16.msra.mxu0 0
        %1411 = vmatpush.bf16.msra.mxu0 0
        %1412 = vmatpush.bf16.msra.mxu0 %v1250
        %1413 = vmatmul.bf16.gmra.mxu0 %v1403
        %v1414 = vpop.f32.mrf.mxu0
        %v1415 = vadd.f32 0.0, %v1414
        %v1416 = vpop.f32.mrf.mxu0
        %v1417 = vadd.f32 0.0, %v1416
        %1418 = vdwg.mxu0
        %v1419 = vsel %vm1261, %v1275, -inf
        %1420 = vmax.xlane.f32.xlu0 %v1419
        %v1421 = vpop.xlane.xlu0 %1420
        %v1422 = vsel %vm1261, %v1277, -inf
        %1423 = vmax.xlane.f32.xlu0 %v1422
        %v1424 = vpop.xlane.xlu0 %1423
        %v1425 = vsel %vm1261, %v1295, -inf
        %1426 = vmax.xlane.f32.xlu0 %v1425
        %v1427 = vpop.xlane.xlu0 %1426
        %v1428 = vsel %vm1261, %v1297, -inf
        %1429 = vmax.xlane.f32.xlu0 %v1428
        %v1430 = vpop.xlane.xlu0 %1429
        %v1431 = vsel %vm1261, %v1315, -inf
        %1432 = vmax.xlane.f32.xlu0 %v1431
        %v1433 = vpop.xlane.xlu0 %1432
        %v1434 = vsel %vm1261, %v1317, -inf
        %1435 = vmax.xlane.f32.xlu0 %v1434
        %v1436 = vpop.xlane.xlu0 %1435
        %v1437 = vsel %vm1261, %v1335, -inf
        %1438 = vmax.xlane.f32.xlu0 %v1437
        %v1439 = vpop.xlane.xlu0 %1438
        %v1440 = vsel %vm1261, %v1337, -inf
        %1441 = vmax.xlane.f32.xlu0 %v1440
        %v1442 = vpop.xlane.xlu0 %1441
        %v1443 = vsel %vm1261, %v1355, -inf
        %1444 = vmax.xlane.f32.xlu0 %v1443
        %v1445 = vpop.xlane.xlu0 %1444
        %v1446 = vsel %vm1261, %v1357, -inf
        %1447 = vmax.xlane.f32.xlu0 %v1446
        %v1448 = vpop.xlane.xlu0 %1447
        %v1449 = vsel %vm1261, %v1375, -inf
        %1450 = vmax.xlane.f32.xlu0 %v1449
        %v1451 = vpop.xlane.xlu0 %1450
        %v1452 = vsel %vm1261, %v1377, -inf
        %1453 = vmax.xlane.f32.xlu0 %v1452
        %v1454 = vpop.xlane.xlu0 %1453
        %v1455 = vsel %vm1261, %v1395, -inf
        %1456 = vmax.xlane.f32.xlu0 %v1455
        %v1457 = vpop.xlane.xlu0 %1456
        %v1458 = vsel %vm1261, %v1397, -inf
        %1459 = vmax.xlane.f32.xlu0 %v1458
        %v1460 = vpop.xlane.xlu0 %1459
        %v1461 = vsel %vm1261, %v1415, -inf
        %1462 = vmax.xlane.f32.xlu0 %v1461
        %v1463 = vpop.xlane.xlu0 %1462
        %v1464 = vsel %vm1261, %v1417, -inf
        %1465 = vmax.xlane.f32.xlu0 %v1464
        %v1466 = vpop.xlane.xlu0 %1465
        %v1467 = vsub.f32 %v1275, %v1421
        %v1468 = vsub.f32 %v1277, %v1424
        %v1469 = vsub.f32 %v1295, %v1427
        %v1470 = vsub.f32 %v1297, %v1430
        %v1471 = vsub.f32 %v1315, %v1433
        %v1472 = vsub.f32 %v1317, %v1436
        %v1473 = vsub.f32 %v1335, %v1439
        %v1474 = vsub.f32 %v1337, %v1442
        %v1475 = vsub.f32 %v1355, %v1445
        %v1476 = vsub.f32 %v1357, %v1448
        %v1477 = vsub.f32 %v1375, %v1451
        %v1478 = vsub.f32 %v1377, %v1454
        %v1479 = vsub.f32 %v1395, %v1457
        %v1480 = vsub.f32 %v1397, %v1460
        %v1481 = vsub.f32 %v1415, %v1463
        %v1482 = vsub.f32 %v1417, %v1466
        %v1483 = vmul.f32 %v1467, 1.442695
        %v1484 = vpow.pop %v1483
        %v1485 = vmul.f32 %v1468, 1.442695
        %v1486 = vpow.pop %v1485
        %v1487 = vmul.f32 %v1469, 1.442695
        %v1488 = vpow.pop %v1487
        %v1489 = vmul.f32 %v1470, 1.442695
        %v1490 = vpow.pop %v1489
        %v1491 = vmul.f32 %v1471, 1.442695
        %v1492 = vpow.pop %v1491
        %v1493 = vmul.f32 %v1472, 1.442695
        %v1494 = vpow.pop %v1493
        %v1495 = vmul.f32 %v1473, 1.442695
        %v1496 = vpow.pop %v1495
        %v1497 = vmul.f32 %v1474, 1.442695
        %v1498 = vpow.pop %v1497
        %v1499 = vmul.f32 %v1475, 1.442695
        %v1500 = vpow.pop %v1499
        %v1501 = vmul.f32 %v1476, 1.442695
        %v1502 = vpow.pop %v1501
        %v1503 = vmul.f32 %v1477, 1.442695
        %v1504 = vpow.pop %v1503
        %v1505 = vmul.f32 %v1478, 1.442695
        %v1506 = vpow.pop %v1505
        %v1507 = vmul.f32 %v1479, 1.442695
        %v1508 = vpow.pop %v1507
        %v1509 = vmul.f32 %v1480, 1.442695
        %v1510 = vpow.pop %v1509
        %v1511 = vmul.f32 %v1481, 1.442695
        %v1512 = vpow.pop %v1511
        %v1513 = vmul.f32 %v1482, 1.442695
        %v1514 = vpow.pop %v1513
        %v1515 = vsel %vm1261, %v1484, 0.0
        %1516 = vadd.xlane.f32.xlu0 %v1515
        %v1517 = vpop.xlane.xlu0 %1516
        %v1518 = vsel %vm1261, %v1486, 0.0
        %1519 = vadd.xlane.f32.xlu0 %v1518
        %v1520 = vpop.xlane.xlu0 %1519
        %v1521 = vsel %vm1261, %v1488, 0.0
        %1522 = vadd.xlane.f32.xlu0 %v1521
        %v1523 = vpop.xlane.xlu0 %1522
        %v1524 = vsel %vm1261, %v1490, 0.0
        %1525 = vadd.xlane.f32.xlu0 %v1524
        %v1526 = vpop.xlane.xlu0 %1525
        %v1527 = vsel %vm1261, %v1492, 0.0
        %1528 = vadd.xlane.f32.xlu0 %v1527
        %v1529 = vpop.xlane.xlu0 %1528
        %v1530 = vsel %vm1261, %v1494, 0.0
        %1531 = vadd.xlane.f32.xlu0 %v1530
        %v1532 = vpop.xlane.xlu0 %1531
        %v1533 = vsel %vm1261, %v1496, 0.0
        %1534 = vadd.xlane.f32.xlu0 %v1533
        %v1535 = vpop.xlane.xlu0 %1534
        %v1536 = vsel %vm1261, %v1498, 0.0
        %1537 = vadd.xlane.f32.xlu0 %v1536
        %v1538 = vpop.xlane.xlu0 %1537
        %v1539 = vsel %vm1261, %v1500, 0.0
        %1540 = vadd.xlane.f32.xlu0 %v1539
        %v1541 = vpop.xlane.xlu0 %1540
        %v1542 = vsel %vm1261, %v1502, 0.0
        %1543 = vadd.xlane.f32.xlu0 %v1542
        %v1544 = vpop.xlane.xlu0 %1543
        %v1545 = vsel %vm1261, %v1504, 0.0
        %1546 = vadd.xlane.f32.xlu0 %v1545
        %v1547 = vpop.xlane.xlu0 %1546
        %v1548 = vsel %vm1261, %v1506, 0.0
        %1549 = vadd.xlane.f32.xlu0 %v1548
        %v1550 = vpop.xlane.xlu0 %1549
        %v1551 = vsel %vm1261, %v1508, 0.0
        %1552 = vadd.xlane.f32.xlu0 %v1551
        %v1553 = vpop.xlane.xlu0 %1552
        %v1554 = vsel %vm1261, %v1510, 0.0
        %1555 = vadd.xlane.f32.xlu0 %v1554
        %v1556 = vpop.xlane.xlu0 %1555
        %v1557 = vsel %vm1261, %v1512, 0.0
        %1558 = vadd.xlane.f32.xlu0 %v1557
        %v1559 = vpop.xlane.xlu0 %1558
        %v1560 = vsel %vm1261, %v1514, 0.0
        %1561 = vadd.xlane.f32.xlu0 %v1560
        %v1562 = vpop.xlane.xlu0 %1561
        %v1563 = vrcp.pop %v1517
        %v1564 = vrcp.pop %v1520
        %v1565 = vrcp.pop %v1523
        %v1566 = vrcp.pop %v1526
        %v1567 = vrcp.pop %v1529
        %v1568 = vrcp.pop %v1532
        %v1569 = vrcp.pop %v1535
        %v1570 = vrcp.pop %v1538
        %v1571 = vrcp.pop %v1541
        %v1572 = vrcp.pop %v1544
        %v1573 = vrcp.pop %v1547
        %v1574 = vrcp.pop %v1550
        %v1575 = vrcp.pop %v1553
        %v1576 = vrcp.pop %v1556
        %v1577 = vrcp.pop %v1559
        %v1578 = vrcp.pop %v1562
        %v1579 = vmul.f32 %v1484, %v1563
        %v1580 = vmul.f32 %v1486, %v1564
        %v1581 = vmul.f32 %v1488, %v1565
        %v1582 = vmul.f32 %v1490, %v1566
        %v1583 = vmul.f32 %v1492, %v1567
        %v1584 = vmul.f32 %v1494, %v1568
        %v1585 = vmul.f32 %v1496, %v1569
        %v1586 = vmul.f32 %v1498, %v1570
        %v1587 = vmul.f32 %v1500, %v1571
        %v1588 = vmul.f32 %v1502, %v1572
        %v1589 = vmul.f32 %v1504, %v1573
        %v1590 = vmul.f32 %v1506, %v1574
        %v1591 = vmul.f32 %v1508, %v1575
        %v1592 = vmul.f32 %v1510, %v1576
        %v1593 = vmul.f32 %v1512, %v1577
        %v1594 = vmul.f32 %v1514, %v1578
        %v1595 = vpack.c.bf16 %v1579, %v1579
        %v1596 = vpack.c.bf16 %v1580, %v1580
        %v1597 = vpack.c.bf16 %v1581, %v1581
        %v1598 = vpack.c.bf16 %v1582, %v1582
        %v1599 = vpack.c.bf16 %v1583, %v1583
        %v1600 = vpack.c.bf16 %v1584, %v1584
        %v1601 = vpack.c.bf16 %v1585, %v1585
        %v1602 = vpack.c.bf16 %v1586, %v1586
        %v1603 = vpack.c.bf16 %v1587, %v1587
        %v1604 = vpack.c.bf16 %v1588, %v1588
        %v1605 = vpack.c.bf16 %v1589, %v1589
        %v1606 = vpack.c.bf16 %v1590, %v1590
        %v1607 = vpack.c.bf16 %v1591, %v1591
        %v1608 = vpack.c.bf16 %v1592, %v1592
        %v1609 = vpack.c.bf16 %v1593, %v1593
        %v1610 = vpack.c.bf16 %v1594, %v1594
        %v1613 = vunpack.c.l.b16 %v1595
        %v1614 = vunpack.c.l.b16 %v1596
        %v1615 = vpack.c.b16 %v1614, %v1613
        %v1616 = vunpack.c.l.b16 %v1066
        %v1617 = vunpack.c.l.b16 %v1067
        %v1618 = vpack.c.b16 %v1617, %v1616
        %v1621 = vsel %vm1261, %v1615, 0
        %1623 = vmatpush.bf16.msra.mxu0 0
        %1624 = vmatpush.bf16.msra.mxu0 0
        %1625 = vmatpush.bf16.msra.mxu0 0
        %1626 = vmatpush.bf16.msra.mxu0 0
        %1627 = vmatpush.bf16.msra.mxu0 0
        %1628 = vmatpush.bf16.msra.mxu0 0
        %1629 = vmatpush.bf16.msra.mxu0 0
        %1630 = vmatpush.bf16.msra.mxu0 %v1618
        %1631 = vmatmul.bf16.gmra.mxu0 %v1621
        %v1632 = vpop.f32.mrf.mxu0
        %v1633 = vadd.f32 0.0, %v1632
        %v1634 = vpop.f32.mrf.mxu0
        %v1635 = vadd.f32 0.0, %v1634
        %1636 = vdwg.mxu0
        %v1639 = vunpack.c.l.b16 %v1597
        %v1640 = vunpack.c.l.b16 %v1598
        %v1641 = vpack.c.b16 %v1640, %v1639
        %v1642 = vunpack.c.l.b16 %v1071
        %v1643 = vunpack.c.l.b16 %v1073
        %v1644 = vpack.c.b16 %v1643, %v1642
        %v1647 = vsel %vm1261, %v1641, 0
        %1649 = vmatpush.bf16.msra.mxu0 0
        %1650 = vmatpush.bf16.msra.mxu0 0
        %1651 = vmatpush.bf16.msra.mxu0 0
        %1652 = vmatpush.bf16.msra.mxu0 0
        %1653 = vmatpush.bf16.msra.mxu0 0
        %1654 = vmatpush.bf16.msra.mxu0 0
        %1655 = vmatpush.bf16.msra.mxu0 0
        %1656 = vmatpush.bf16.msra.mxu0 %v1644
        %1657 = vmatmul.bf16.gmra.mxu0 %v1647
        %v1658 = vpop.f32.mrf.mxu0
        %v1659 = vadd.f32 0.0, %v1658
        %v1660 = vpop.f32.mrf.mxu0
        %v1661 = vadd.f32 0.0, %v1660
        %1662 = vdwg.mxu0
        %v1665 = vunpack.c.l.b16 %v1599
        %v1666 = vunpack.c.l.b16 %v1600
        %v1667 = vpack.c.b16 %v1666, %v1665
        %v1668 = vunpack.c.l.b16 %v1075
        %v1669 = vunpack.c.l.b16 %v1077
        %v1670 = vpack.c.b16 %v1669, %v1668
        %v1673 = vsel %vm1261, %v1667, 0
        %1675 = vmatpush.bf16.msra.mxu0 0
        %1676 = vmatpush.bf16.msra.mxu0 0
        %1677 = vmatpush.bf16.msra.mxu0 0
        %1678 = vmatpush.bf16.msra.mxu0 0
        %1679 = vmatpush.bf16.msra.mxu0 0
        %1680 = vmatpush.bf16.msra.mxu0 0
        %1681 = vmatpush.bf16.msra.mxu0 0
        %1682 = vmatpush.bf16.msra.mxu0 %v1670
        %1683 = vmatmul.bf16.gmra.mxu0 %v1673
        %v1684 = vpop.f32.mrf.mxu0
        %v1685 = vadd.f32 0.0, %v1684
        %v1686 = vpop.f32.mrf.mxu0
        %v1687 = vadd.f32 0.0, %v1686
        %1688 = vdwg.mxu0
        %v1691 = vunpack.c.l.b16 %v1601
        %v1692 = vunpack.c.l.b16 %v1602
        %v1693 = vpack.c.b16 %v1692, %v1691
        %v1694 = vunpack.c.l.b16 %v1079
        %v1695 = vunpack.c.l.b16 %v1081
        %v1696 = vpack.c.b16 %v1695, %v1694
        %v1699 = vsel %vm1261, %v1693, 0
        %1701 = vmatpush.bf16.msra.mxu0 0
        %1702 = vmatpush.bf16.msra.mxu0 0
        %1703 = vmatpush.bf16.msra.mxu0 0
        %1704 = vmatpush.bf16.msra.mxu0 0
        %1705 = vmatpush.bf16.msra.mxu0 0
        %1706 = vmatpush.bf16.msra.mxu0 0
        %1707 = vmatpush.bf16.msra.mxu0 0
        %1708 = vmatpush.bf16.msra.mxu0 %v1696
        %1709 = vmatmul.bf16.gmra.mxu0 %v1699
        %v1710 = vpop.f32.mrf.mxu0
        %v1711 = vadd.f32 0.0, %v1710
        %v1712 = vpop.f32.mrf.mxu0
        %v1713 = vadd.f32 0.0, %v1712
        %1714 = vdwg.mxu0
        %v1717 = vunpack.c.l.b16 %v1603
        %v1718 = vunpack.c.l.b16 %v1604
        %v1719 = vpack.c.b16 %v1718, %v1717
        %v1720 = vunpack.c.l.b16 %v1083
        %v1721 = vunpack.c.l.b16 %v1085
        %v1722 = vpack.c.b16 %v1721, %v1720
        %v1725 = vsel %vm1261, %v1719, 0
        %1727 = vmatpush.bf16.msra.mxu0 0
        %1728 = vmatpush.bf16.msra.mxu0 0
        %1729 = vmatpush.bf16.msra.mxu0 0
        %1730 = vmatpush.bf16.msra.mxu0 0
        %1731 = vmatpush.bf16.msra.mxu0 0
        %1732 = vmatpush.bf16.msra.mxu0 0
        %1733 = vmatpush.bf16.msra.mxu0 0
        %1734 = vmatpush.bf16.msra.mxu0 %v1722
        %1735 = vmatmul.bf16.gmra.mxu0 %v1725
        %v1736 = vpop.f32.mrf.mxu0
        %v1737 = vadd.f32 0.0, %v1736
        %v1738 = vpop.f32.mrf.mxu0
        %v1739 = vadd.f32 0.0, %v1738
        %1740 = vdwg.mxu0
        %v1743 = vunpack.c.l.b16 %v1605
        %v1744 = vunpack.c.l.b16 %v1606
        %v1745 = vpack.c.b16 %v1744, %v1743
        %v1746 = vunpack.c.l.b16 %v1087
        %v1747 = vunpack.c.l.b16 %v1089
        %v1748 = vpack.c.b16 %v1747, %v1746
        %v1751 = vsel %vm1261, %v1745, 0
        %1753 = vmatpush.bf16.msra.mxu0 0
        %1754 = vmatpush.bf16.msra.mxu0 0
        %1755 = vmatpush.bf16.msra.mxu0 0
        %1756 = vmatpush.bf16.msra.mxu0 0
        %1757 = vmatpush.bf16.msra.mxu0 0
        %1758 = vmatpush.bf16.msra.mxu0 0
        %1759 = vmatpush.bf16.msra.mxu0 0
        %1760 = vmatpush.bf16.msra.mxu0 %v1748
        %1761 = vmatmul.bf16.gmra.mxu0 %v1751
        %v1762 = vpop.f32.mrf.mxu0
        %v1763 = vadd.f32 0.0, %v1762
        %v1764 = vpop.f32.mrf.mxu0
        %v1765 = vadd.f32 0.0, %v1764
        %1766 = vdwg.mxu0
        %v1769 = vunpack.c.l.b16 %v1607
        %v1770 = vunpack.c.l.b16 %v1608
        %v1771 = vpack.c.b16 %v1770, %v1769
        %v1772 = vunpack.c.l.b16 %v1091
        %v1773 = vunpack.c.l.b16 %v1093
        %v1774 = vpack.c.b16 %v1773, %v1772
        %v1777 = vsel %vm1261, %v1771, 0
        %1779 = vmatpush.bf16.msra.mxu0 0
        %1780 = vmatpush.bf16.msra.mxu0 0
        %1781 = vmatpush.bf16.msra.mxu0 0
        %1782 = vmatpush.bf16.msra.mxu0 0
        %1783 = vmatpush.bf16.msra.mxu0 0
        %1784 = vmatpush.bf16.msra.mxu0 0
        %1785 = vmatpush.bf16.msra.mxu0 0
        %1786 = vmatpush.bf16.msra.mxu0 %v1774
        %1787 = vmatmul.bf16.gmra.mxu0 %v1777
        %v1788 = vpop.f32.mrf.mxu0
        %v1789 = vadd.f32 0.0, %v1788
        %v1790 = vpop.f32.mrf.mxu0
        %v1791 = vadd.f32 0.0, %v1790
        %1792 = vdwg.mxu0
        %v1795 = vunpack.c.l.b16 %v1609
        %v1796 = vunpack.c.l.b16 %v1610
        %v1797 = vpack.c.b16 %v1796, %v1795
        %v1798 = vunpack.c.l.b16 %v1095
        %v1799 = vunpack.c.l.b16 %v1097
        %v1800 = vpack.c.b16 %v1799, %v1798
        %v1803 = vsel %vm1261, %v1797, 0
        %1805 = vmatpush.bf16.msra.mxu0 0
        %1806 = vmatpush.bf16.msra.mxu0 0
        %1807 = vmatpush.bf16.msra.mxu0 0
        %1808 = vmatpush.bf16.msra.mxu0 0
        %1809 = vmatpush.bf16.msra.mxu0 0
        %1810 = vmatpush.bf16.msra.mxu0 0
        %1811 = vmatpush.bf16.msra.mxu0 0
        %1812 = vmatpush.bf16.msra.mxu0 %v1800
        %1813 = vmatmul.bf16.gmra.mxu0 %v1803
        %v1814 = vpop.f32.mrf.mxu0
        %v1815 = vadd.f32 0.0, %v1814
        %v1816 = vpop.f32.mrf.mxu0
        %v1817 = vadd.f32 0.0, %v1816
        %1818 = vdwg.mxu0
        %v1819 = vrot.slane %v1685, 4
        %vm1820 = vcmask 1047556
        %v1821 = vsel %vm1820, %v1819, %v1633
        %v1822 = vrot.slane %v1633, 4
        %v1823 = vsel %vm1820, %v1685, %v1822
        %v1825 = vunpack.c.l.s4 1983009808
        %v1826 = vunpack.c.0.s8 %v1825
        %v1827 = vperm.slane %v1821, %v1826
        %v1829 = vunpack.c.l.s4 1983009808
        %v1830 = vunpack.c.0.s8 %v1829
        %v1831 = vperm.slane %v1823, %v1830
        %v1832 = vrot.slane %v1711, 4
        %v1833 = vsel %vm1820, %v1832, %v1659
        %v1834 = vrot.slane %v1659, 4
        %v1835 = vsel %vm1820, %v1711, %v1834
        %v1837 = vunpack.c.l.s4 1983009808
        %v1838 = vunpack.c.0.s8 %v1837
        %v1839 = vperm.slane %v1833, %v1838
        %v1841 = vunpack.c.l.s4 1983009808
        %v1842 = vunpack.c.0.s8 %v1841
        %v1843 = vperm.slane %v1835, %v1842
        %v1844 = vrot.slane %v1789, 4
        %v1845 = vsel %vm1820, %v1844, %v1737
        %v1846 = vrot.slane %v1737, 4
        %v1847 = vsel %vm1820, %v1789, %v1846
        %v1849 = vunpack.c.l.s4 1983009808
        %v1850 = vunpack.c.0.s8 %v1849
        %v1851 = vperm.slane %v1845, %v1850
        %v1853 = vunpack.c.l.s4 1983009808
        %v1854 = vunpack.c.0.s8 %v1853
        %v1855 = vperm.slane %v1847, %v1854
        %v1856 = vrot.slane %v1815, 4
        %v1857 = vsel %vm1820, %v1856, %v1763
        %v1858 = vrot.slane %v1763, 4
        %v1859 = vsel %vm1820, %v1815, %v1858
        %v1861 = vunpack.c.l.s4 1983009808
        %v1862 = vunpack.c.0.s8 %v1861
        %v1863 = vperm.slane %v1857, %v1862
        %v1865 = vunpack.c.l.s4 1983009808
        %v1866 = vunpack.c.0.s8 %v1865
        %v1867 = vperm.slane %v1859, %v1866
        %v1868 = vrot.slane %v1839, 4
        %v1869 = vsel %vm1820, %v1868, %v1827
        %v1870 = vrot.slane %v1827, 4
        %v1871 = vsel %vm1820, %v1839, %v1870
        %v1873 = vunpack.c.l.s4 1934713408
        %v1874 = vunpack.c.0.s8 %v1873
        %v1875 = vperm.slane %v1869, %v1874
        %v1877 = vunpack.c.l.s4 1934713408
        %v1878 = vunpack.c.0.s8 %v1877
        %v1879 = vperm.slane %v1871, %v1878
        %v1880 = vrot.slane %v1843, 4
        %v1881 = vsel %vm1820, %v1880, %v1831
        %v1882 = vrot.slane %v1831, 4
        %v1883 = vsel %vm1820, %v1843, %v1882
        %v1885 = vunpack.c.l.s4 1934713408
        %v1886 = vunpack.c.0.s8 %v1885
        %v1887 = vperm.slane %v1881, %v1886
        %v1889 = vunpack.c.l.s4 1934713408
        %v1890 = vunpack.c.0.s8 %v1889
        %v1891 = vperm.slane %v1883, %v1890
        %v1892 = vrot.slane %v1863, 4
        %v1893 = vsel %vm1820, %v1892, %v1851
        %v1894 = vrot.slane %v1851, 4
        %v1895 = vsel %vm1820, %v1863, %v1894
        %v1897 = vunpack.c.l.s4 1934713408
        %v1898 = vunpack.c.0.s8 %v1897
        %v1899 = vperm.slane %v1893, %v1898
        %v1901 = vunpack.c.l.s4 1934713408
        %v1902 = vunpack.c.0.s8 %v1901
        %v1903 = vperm.slane %v1895, %v1902
        %v1904 = vrot.slane %v1867, 4
        %v1905 = vsel %vm1820, %v1904, %v1855
        %v1906 = vrot.slane %v1855, 4
        %v1907 = vsel %vm1820, %v1867, %v1906
        %v1909 = vunpack.c.l.s4 1934713408
        %v1910 = vunpack.c.0.s8 %v1909
        %v1911 = vperm.slane %v1905, %v1910
        %v1913 = vunpack.c.l.s4 1934713408
        %v1914 = vunpack.c.0.s8 %v1913
        %v1915 = vperm.slane %v1907, %v1914
        %v1916 = vrot.slane %v1899, 4
        %v1917 = vsel %vm1820, %v1916, %v1875
        %v1918 = vrot.slane %v1875, 4
        %v1919 = vsel %vm1820, %v1899, %v1918
        %v1920 = vrot.slane %v1903, 4
        %v1921 = vsel %vm1820, %v1920, %v1879
        %v1922 = vrot.slane %v1879, 4
        %v1923 = vsel %vm1820, %v1903, %v1922
        %v1924 = vrot.slane %v1911, 4
        %v1925 = vsel %vm1820, %v1924, %v1887
        %v1926 = vrot.slane %v1887, 4
        %v1927 = vsel %vm1820, %v1911, %v1926
        %v1928 = vrot.slane %v1915, 4
        %v1929 = vsel %vm1820, %v1928, %v1891
        %v1930 = vrot.slane %v1891, 4
        %v1931 = vsel %vm1820, %v1915, %v1930
        %v1932 = vrot.slane %v1687, 4
        %v1933 = vsel %vm1820, %v1932, %v1635
        %v1934 = vrot.slane %v1635, 4
        %v1935 = vsel %vm1820, %v1687, %v1934
        %v1937 = vunpack.c.l.s4 1983009808
        %v1938 = vunpack.c.0.s8 %v1937
        %v1939 = vperm.slane %v1933, %v1938
        %v1941 = vunpack.c.l.s4 1983009808
        %v1942 = vunpack.c.0.s8 %v1941
        %v1943 = vperm.slane %v1935, %v1942
        %v1944 = vrot.slane %v1713, 4
        %v1945 = vsel %vm1820, %v1944, %v1661
        %v1946 = vrot.slane %v1661, 4
        %v1947 = vsel %vm1820, %v1713, %v1946
        %v1949 = vunpack.c.l.s4 1983009808
        %v1950 = vunpack.c.0.s8 %v1949
        %v1951 = vperm.slane %v1945, %v1950
        %v1953 = vunpack.c.l.s4 1983009808
        %v1954 = vunpack.c.0.s8 %v1953
        %v1955 = vperm.slane %v1947, %v1954
        %v1956 = vrot.slane %v1791, 4
        %v1957 = vsel %vm1820, %v1956, %v1739
        %v1958 = vrot.slane %v1739, 4
        %v1959 = vsel %vm1820, %v1791, %v1958
        %v1961 = vunpack.c.l.s4 1983009808
        %v1962 = vunpack.c.0.s8 %v1961
        %v1963 = vperm.slane %v1957, %v1962
        %v1965 = vunpack.c.l.s4 1983009808
        %v1966 = vunpack.c.0.s8 %v1965
        %v1967 = vperm.slane %v1959, %v1966
        %v1968 = vrot.slane %v1817, 4
        %v1969 = vsel %vm1820, %v1968, %v1765
        %v1970 = vrot.slane %v1765, 4
        %v1971 = vsel %vm1820, %v1817, %v1970
        %v1973 = vunpack.c.l.s4 1983009808
        %v1974 = vunpack.c.0.s8 %v1973
        %v1975 = vperm.slane %v1969, %v1974
        %v1977 = vunpack.c.l.s4 1983009808
        %v1978 = vunpack.c.0.s8 %v1977
        %v1979 = vperm.slane %v1971, %v1978
        %v1980 = vrot.slane %v1951, 4
        %v1981 = vsel %vm1820, %v1980, %v1939
        %v1982 = vrot.slane %v1939, 4
        %v1983 = vsel %vm1820, %v1951, %v1982
        %v1985 = vunpack.c.l.s4 1934713408
        %v1986 = vunpack.c.0.s8 %v1985
        %v1987 = vperm.slane %v1981, %v1986
        %v1989 = vunpack.c.l.s4 1934713408
        %v1990 = vunpack.c.0.s8 %v1989
        %v1991 = vperm.slane %v1983, %v1990
        %v1992 = vrot.slane %v1955, 4
        %v1993 = vsel %vm1820, %v1992, %v1943
        %v1994 = vrot.slane %v1943, 4
        %v1995 = vsel %vm1820, %v1955, %v1994
        %v1997 = vunpack.c.l.s4 1934713408
        %v1998 = vunpack.c.0.s8 %v1997
        %v1999 = vperm.slane %v1993, %v1998
        %v2001 = vunpack.c.l.s4 1934713408
        %v2002 = vunpack.c.0.s8 %v2001
        %v2003 = vperm.slane %v1995, %v2002
        %v2004 = vrot.slane %v1975, 4
        %v2005 = vsel %vm1820, %v2004, %v1963
        %v2006 = vrot.slane %v1963, 4
        %v2007 = vsel %vm1820, %v1975, %v2006
        %v2009 = vunpack.c.l.s4 1934713408
        %v2010 = vunpack.c.0.s8 %v2009
        %v2011 = vperm.slane %v2005, %v2010
        %v2013 = vunpack.c.l.s4 1934713408
        %v2014 = vunpack.c.0.s8 %v2013
        %v2015 = vperm.slane %v2007, %v2014
        %v2016 = vrot.slane %v1979, 4
        %v2017 = vsel %vm1820, %v2016, %v1967
        %v2018 = vrot.slane %v1967, 4
        %v2019 = vsel %vm1820, %v1979, %v2018
        %v2021 = vunpack.c.l.s4 1934713408
        %v2022 = vunpack.c.0.s8 %v2021
        %v2023 = vperm.slane %v2017, %v2022
        %v2025 = vunpack.c.l.s4 1934713408
        %v2026 = vunpack.c.0.s8 %v2025
        %v2027 = vperm.slane %v2019, %v2026
        %v2028 = vrot.slane %v2011, 4
        %v2029 = vsel %vm1820, %v2028, %v1987
        %v2030 = vrot.slane %v1987, 4
        %v2031 = vsel %vm1820, %v2011, %v2030
        %v2032 = vrot.slane %v2015, 4
        %v2033 = vsel %vm1820, %v2032, %v1991
        %v2034 = vrot.slane %v1991, 4
        %v2035 = vsel %vm1820, %v2015, %v2034
        %v2036 = vrot.slane %v2023, 4
        %v2037 = vsel %vm1820, %v2036, %v1999
        %v2038 = vrot.slane %v1999, 4
        %v2039 = vsel %vm1820, %v2023, %v2038
        %v2040 = vrot.slane %v2027, 4
        %v2041 = vsel %vm1820, %v2040, %v2003
        %v2042 = vrot.slane %v2003, 4
        %v2043 = vsel %vm1820, %v2027, %v2042
        %v2044 = vrot.slane %v1921, 4
        %v2045 = vsel %vm1820, %v2044, %v1917
        %v2046 = vrot.slane %v1917, 4
        %v2047 = vsel %vm1820, %v1921, %v2046
        %v2049 = vunpack.c.l.s4 1983009808
        %v2050 = vunpack.c.0.s8 %v2049
        %v2051 = vperm.slane %v2045, %v2050
        %v2053 = vunpack.c.l.s4 1983009808
        %v2054 = vunpack.c.0.s8 %v2053
        %v2055 = vperm.slane %v2047, %v2054
        %v2056 = vrot.slane %v1923, 4
        %v2057 = vsel %vm1820, %v2056, %v1919
        %v2058 = vrot.slane %v1919, 4
        %v2059 = vsel %vm1820, %v1923, %v2058
        %v2061 = vunpack.c.l.s4 1983009808
        %v2062 = vunpack.c.0.s8 %v2061
        %v2063 = vperm.slane %v2057, %v2062
        %v2065 = vunpack.c.l.s4 1983009808
        %v2066 = vunpack.c.0.s8 %v2065
        %v2067 = vperm.slane %v2059, %v2066
        %v2068 = vrot.slane %v1929, 4
        %v2069 = vsel %vm1820, %v2068, %v1925
        %v2070 = vrot.slane %v1925, 4
        %v2071 = vsel %vm1820, %v1929, %v2070
        %v2073 = vunpack.c.l.s4 1983009808
        %v2074 = vunpack.c.0.s8 %v2073
        %v2075 = vperm.slane %v2069, %v2074
        %v2077 = vunpack.c.l.s4 1983009808
        %v2078 = vunpack.c.0.s8 %v2077
        %v2079 = vperm.slane %v2071, %v2078
        %v2080 = vrot.slane %v1931, 4
        %v2081 = vsel %vm1820, %v2080, %v1927
        %v2082 = vrot.slane %v1927, 4
        %v2083 = vsel %vm1820, %v1931, %v2082
        %v2085 = vunpack.c.l.s4 1983009808
        %v2086 = vunpack.c.0.s8 %v2085
        %v2087 = vperm.slane %v2081, %v2086
        %v2089 = vunpack.c.l.s4 1983009808
        %v2090 = vunpack.c.0.s8 %v2089
        %v2091 = vperm.slane %v2083, %v2090
        %v2092 = vrot.slane %v2063, 4
        %v2093 = vsel %vm1820, %v2092, %v2051
        %v2094 = vrot.slane %v2051, 4
        %v2095 = vsel %vm1820, %v2063, %v2094
        %v2097 = vunpack.c.l.s4 1934713408
        %v2098 = vunpack.c.0.s8 %v2097
        %v2099 = vperm.slane %v2093, %v2098
        %v2101 = vunpack.c.l.s4 1934713408
        %v2102 = vunpack.c.0.s8 %v2101
        %v2103 = vperm.slane %v2095, %v2102
        %v2104 = vrot.slane %v2067, 4
        %v2105 = vsel %vm1820, %v2104, %v2055
        %v2106 = vrot.slane %v2055, 4
        %v2107 = vsel %vm1820, %v2067, %v2106
        %v2109 = vunpack.c.l.s4 1934713408
        %v2110 = vunpack.c.0.s8 %v2109
        %v2111 = vperm.slane %v2105, %v2110
        %v2113 = vunpack.c.l.s4 1934713408
        %v2114 = vunpack.c.0.s8 %v2113
        %v2115 = vperm.slane %v2107, %v2114
        %v2116 = vrot.slane %v2087, 4
        %v2117 = vsel %vm1820, %v2116, %v2075
        %v2118 = vrot.slane %v2075, 4
        %v2119 = vsel %vm1820, %v2087, %v2118
        %v2121 = vunpack.c.l.s4 1934713408
        %v2122 = vunpack.c.0.s8 %v2121
        %v2123 = vperm.slane %v2117, %v2122
        %v2125 = vunpack.c.l.s4 1934713408
        %v2126 = vunpack.c.0.s8 %v2125
        %v2127 = vperm.slane %v2119, %v2126
        %v2128 = vrot.slane %v2091, 4
        %v2129 = vsel %vm1820, %v2128, %v2079
        %v2130 = vrot.slane %v2079, 4
        %v2131 = vsel %vm1820, %v2091, %v2130
        %v2133 = vunpack.c.l.s4 1934713408
        %v2134 = vunpack.c.0.s8 %v2133
        %v2135 = vperm.slane %v2129, %v2134
        %v2137 = vunpack.c.l.s4 1934713408
        %v2138 = vunpack.c.0.s8 %v2137
        %v2139 = vperm.slane %v2131, %v2138
        %v2140 = vrot.slane %v2123, 4
        %v2141 = vsel %vm1820, %v2140, %v2099
        %v2142 = vrot.slane %v2099, 4
        %v2143 = vsel %vm1820, %v2123, %v2142
        %v2144 = vrot.slane %v2127, 4
        %v2145 = vsel %vm1820, %v2144, %v2103
        %v2146 = vrot.slane %v2103, 4
        %v2147 = vsel %vm1820, %v2127, %v2146
        %v2148 = vrot.slane %v2135, 4
        %v2149 = vsel %vm1820, %v2148, %v2111
        %v2150 = vrot.slane %v2111, 4
        %v2151 = vsel %vm1820, %v2135, %v2150
        %v2152 = vrot.slane %v2139, 4
        %v2153 = vsel %vm1820, %v2152, %v2115
        %v2154 = vrot.slane %v2115, 4
        %v2155 = vsel %vm1820, %v2139, %v2154
        %v2156 = vrot.slane %v2033, 4
        %v2157 = vsel %vm1820, %v2156, %v2029
        %v2158 = vrot.slane %v2029, 4
        %v2159 = vsel %vm1820, %v2033, %v2158
        %v2161 = vunpack.c.l.s4 1983009808
        %v2162 = vunpack.c.0.s8 %v2161
        %v2163 = vperm.slane %v2157, %v2162
        %v2165 = vunpack.c.l.s4 1983009808
        %v2166 = vunpack.c.0.s8 %v2165
        %v2167 = vperm.slane %v2159, %v2166
        %v2168 = vrot.slane %v2035, 4
        %v2169 = vsel %vm1820, %v2168, %v2031
        %v2170 = vrot.slane %v2031, 4
        %v2171 = vsel %vm1820, %v2035, %v2170
        %v2173 = vunpack.c.l.s4 1983009808
        %v2174 = vunpack.c.0.s8 %v2173
        %v2175 = vperm.slane %v2169, %v2174
        %v2177 = vunpack.c.l.s4 1983009808
        %v2178 = vunpack.c.0.s8 %v2177
        %v2179 = vperm.slane %v2171, %v2178
        %v2180 = vrot.slane %v2041, 4
        %v2181 = vsel %vm1820, %v2180, %v2037
        %v2182 = vrot.slane %v2037, 4
        %v2183 = vsel %vm1820, %v2041, %v2182
        %v2185 = vunpack.c.l.s4 1983009808
        %v2186 = vunpack.c.0.s8 %v2185
        %v2187 = vperm.slane %v2181, %v2186
        %v2189 = vunpack.c.l.s4 1983009808
        %v2190 = vunpack.c.0.s8 %v2189
        %v2191 = vperm.slane %v2183, %v2190
        %v2192 = vrot.slane %v2043, 4
        %v2193 = vsel %vm1820, %v2192, %v2039
        %v2194 = vrot.slane %v2039, 4
        %v2195 = vsel %vm1820, %v2043, %v2194
        %v2197 = vunpack.c.l.s4 1983009808
        %v2198 = vunpack.c.0.s8 %v2197
        %v2199 = vperm.slane %v2193, %v2198
        %v2201 = vunpack.c.l.s4 1983009808
        %v2202 = vunpack.c.0.s8 %v2201
        %v2203 = vperm.slane %v2195, %v2202
        %v2204 = vrot.slane %v2175, 4
        %v2205 = vsel %vm1820, %v2204, %v2163
        %v2206 = vrot.slane %v2163, 4
        %v2207 = vsel %vm1820, %v2175, %v2206
        %v2209 = vunpack.c.l.s4 1934713408
        %v2210 = vunpack.c.0.s8 %v2209
        %v2211 = vperm.slane %v2205, %v2210
        %v2213 = vunpack.c.l.s4 1934713408
        %v2214 = vunpack.c.0.s8 %v2213
        %v2215 = vperm.slane %v2207, %v2214
        %v2216 = vrot.slane %v2179, 4
        %v2217 = vsel %vm1820, %v2216, %v2167
        %v2218 = vrot.slane %v2167, 4
        %v2219 = vsel %vm1820, %v2179, %v2218
        %v2221 = vunpack.c.l.s4 1934713408
        %v2222 = vunpack.c.0.s8 %v2221
        %v2223 = vperm.slane %v2217, %v2222
        %v2225 = vunpack.c.l.s4 1934713408
        %v2226 = vunpack.c.0.s8 %v2225
        %v2227 = vperm.slane %v2219, %v2226
        %v2228 = vrot.slane %v2199, 4
        %v2229 = vsel %vm1820, %v2228, %v2187
        %v2230 = vrot.slane %v2187, 4
        %v2231 = vsel %vm1820, %v2199, %v2230
        %v2233 = vunpack.c.l.s4 1934713408
        %v2234 = vunpack.c.0.s8 %v2233
        %v2235 = vperm.slane %v2229, %v2234
        %v2237 = vunpack.c.l.s4 1934713408
        %v2238 = vunpack.c.0.s8 %v2237
        %v2239 = vperm.slane %v2231, %v2238
        %v2240 = vrot.slane %v2203, 4
        %v2241 = vsel %vm1820, %v2240, %v2191
        %v2242 = vrot.slane %v2191, 4
        %v2243 = vsel %vm1820, %v2203, %v2242
        %v2245 = vunpack.c.l.s4 1934713408
        %v2246 = vunpack.c.0.s8 %v2245
        %v2247 = vperm.slane %v2241, %v2246
        %v2249 = vunpack.c.l.s4 1934713408
        %v2250 = vunpack.c.0.s8 %v2249
        %v2251 = vperm.slane %v2243, %v2250
        %v2252 = vrot.slane %v2235, 4
        %v2253 = vsel %vm1820, %v2252, %v2211
        %v2254 = vrot.slane %v2211, 4
        %v2255 = vsel %vm1820, %v2235, %v2254
        %v2256 = vrot.slane %v2239, 4
        %v2257 = vsel %vm1820, %v2256, %v2215
        %v2258 = vrot.slane %v2215, 4
        %v2259 = vsel %vm1820, %v2239, %v2258
        %v2260 = vrot.slane %v2247, 4
        %v2261 = vsel %vm1820, %v2260, %v2223
        %v2262 = vrot.slane %v2223, 4
        %v2263 = vsel %vm1820, %v2247, %v2262
        %v2264 = vrot.slane %v2251, 4
        %v2265 = vsel %vm1820, %v2264, %v2227
        %v2266 = vrot.slane %v2227, 4
        %v2267 = vsel %vm1820, %v2251, %v2266
        %2270 = vrot.lane.b32.xlu0 %v2143, 16
        %v2271 = vpop.permute.xlu0 %2270
        %2272 = vrot.lane.b32.xlu0 %v2255, 16
        %v2273 = vpop.permute.xlu0 %2272
        %2278 = vrot.lane.b32.xlu0 %v2145, 32
        %v2279 = vpop.permute.xlu0 %2278
        %2280 = vrot.lane.b32.xlu0 %v2257, 32
        %v2281 = vpop.permute.xlu0 %2280
        %2286 = vrot.lane.b32.xlu0 %v2147, 48
        %v2287 = vpop.permute.xlu0 %2286
        %2288 = vrot.lane.b32.xlu0 %v2259, 48
        %v2289 = vpop.permute.xlu0 %2288
        %2294 = vrot.lane.b32.xlu0 %v2149, 64
        %v2295 = vpop.permute.xlu0 %2294
        %2296 = vrot.lane.b32.xlu0 %v2261, 64
        %v2297 = vpop.permute.xlu0 %2296
        %2302 = vrot.lane.b32.xlu0 %v2151, 80
        %v2303 = vpop.permute.xlu0 %2302
        %2304 = vrot.lane.b32.xlu0 %v2263, 80
        %v2305 = vpop.permute.xlu0 %2304
        %2310 = vrot.lane.b32.xlu0 %v2153, 96
        %v2311 = vpop.permute.xlu0 %2310
        %2312 = vrot.lane.b32.xlu0 %v2265, 96
        %v2313 = vpop.permute.xlu0 %2312
        %2318 = vrot.lane.b32.xlu0 %v2155, 112
        %v2319 = vpop.permute.xlu0 %2318
        %2320 = vrot.lane.b32.xlu0 %v2267, 112
        %v2321 = vpop.permute.xlu0 %2320
        %v2324 = vsel %vm1261, %v2141, %v2271
        %v2325 = vsel %vm1261, %v2253, %v2273
        %vm2326 = vcmask 261120
        %v2327 = vsel %vm2326, %v2324, %v2279
        %v2328 = vsel %vm2326, %v2325, %v2281
        %vm2329 = vcmask 392192
        %v2330 = vsel %vm2329, %v2327, %v2287
        %v2331 = vsel %vm2329, %v2328, %v2289
        %vm2332 = vcmask 523264
        %v2333 = vsel %vm2332, %v2330, %v2295
        %v2334 = vsel %vm2332, %v2331, %v2297
        %vm2335 = vcmask 654336
        %v2336 = vsel %vm2335, %v2333, %v2303
        %v2337 = vsel %vm2335, %v2334, %v2305
        %vm2338 = vcmask 785408
        %v2339 = vsel %vm2338, %v2336, %v2311
        %v2340 = vsel %vm2338, %v2337, %v2313
        %vm2341 = vcmask 916480
        %v2342 = vsel %vm2341, %v2339, %v2319
        %v2343 = vsel %vm2341, %v2340, %v2321
        %v2344 = vpack.c.bf16 %v2343, %v2342
        %v2345 = vld [vmem:[#allocation13] sm:$0xf]
        %v2346 = vld [vmem:[#allocation13 + $0x4] sm:$0xf]
        %v2347 = vld [vmem:[#allocation13 + $0x8] sm:$0xf]
        %v2348 = vld [vmem:[#allocation13 + $0xc] sm:$0xf]
        %v2349 = vld [vmem:[#allocation13 + $0x10] sm:$0xf]
        %v2350 = vld [vmem:[#allocation13 + $0x14] sm:$0xf]
        %v2351 = vld [vmem:[#allocation13 + $0x18] sm:$0xf]
        %v2352 = vld [vmem:[#allocation13 + $0x1c] sm:$0xf]
        %v2353 = vld [vmem:[#allocation13 + $0x20] sm:$0xf]
        %v2354 = vld [vmem:[#allocation13 + $0x24] sm:$0xf]
        %v2355 = vld [vmem:[#allocation13 + $0x28] sm:$0xf]
        %v2356 = vld [vmem:[#allocation13 + $0x2c] sm:$0xf]
        %v2357 = vld [vmem:[#allocation13 + $0x30] sm:$0xf]
        %v2358 = vld [vmem:[#allocation13 + $0x34] sm:$0xf]
        %v2359 = vld [vmem:[#allocation13 + $0x38] sm:$0xf]
        %v2360 = vld [vmem:[#allocation13 + $0x3c] sm:$0xf]
        %v2361 = vld [vmem:[%s9] sm:$0x1]
        %v2363 = vperm.slane %v2361, 0
        %v2381 = vunpack.c.l.b16 %v2345
        %v2382 = vunpack.c.l.b16 %v2346
        %v2383 = vunpack.c.l.b16 %v2347
        %v2384 = vunpack.c.l.b16 %v2348
        %v2385 = vunpack.c.l.b16 %v2349
        %v2386 = vunpack.c.l.b16 %v2350
        %v2387 = vunpack.c.l.b16 %v2351
        %v2388 = vunpack.c.l.b16 %v2352
        %v2389 = vunpack.c.l.b16 %v2353
        %v2390 = vunpack.c.l.b16 %v2354
        %v2391 = vunpack.c.l.b16 %v2355
        %v2392 = vunpack.c.l.b16 %v2356
        %v2393 = vunpack.c.l.b16 %v2357
        %v2394 = vunpack.c.l.b16 %v2358
        %v2395 = vunpack.c.l.b16 %v2359
        %v2396 = vunpack.c.l.b16 %v2360
        %v2397 = vpack.c.b16 %v2382, %v2381
        %v2398 = vpack.c.b16 %v2384, %v2383
        %v2399 = vpack.c.b16 %v2386, %v2385
        %v2400 = vpack.c.b16 %v2388, %v2387
        %v2401 = vpack.c.b16 %v2390, %v2389
        %v2402 = vpack.c.b16 %v2392, %v2391
        %v2403 = vpack.c.b16 %v2394, %v2393
        %v2404 = vpack.c.b16 %v2396, %v2395
        %2413 = vmatpush.bf16.msra.mxu0 %v2404
        %2414 = vmatpush.bf16.msra.mxu0 %v2403
        %2415 = vmatpush.bf16.msra.mxu0 %v2402
        %2416 = vmatpush.bf16.msra.mxu0 %v2401
        %2417 = vmatpush.bf16.msra.mxu0 %v2400
        %2418 = vmatpush.bf16.msra.mxu0 %v2399
        %2419 = vmatpush.bf16.msra.mxu0 %v2398
        %2420 = vmatpush.bf16.msra.mxu0 %v2397
        %2421 = vmatmul.bf16.gmra.mxu0 %v2344
        %v2422 = vpop.f32.mrf.mxu0
        %v2423 = vadd.f32 %v2363, %v2422
        %v2424 = vpop.f32.mrf.mxu0
        %v2425 = vadd.f32 %v2363, %v2424
        %2426 = vdwg.mxu0
        %v2427 = vadd.f32 %v871, %v2423
        %v2428 = vadd.f32 %v872, %v2425
        %v2429 = vld [vmem:[%s10] sm:$0x1]
        %v2430 = vmul.f32 %v2427, %v2427
        %v2431 = vmul.f32 %v2428, %v2428
        %2432 = vadd.xlane.f32.xlu0 %v2430
        %v2433 = vpop.xlane.xlu0 %2432
        %2434 = vadd.xlane.f32.xlu0 %v2431
        %v2435 = vpop.xlane.xlu0 %2434
        %v2436 = vmul.f32 %v2433, %v885
        %v2437 = vmul.f32 %v2435, %v885
        %v2438 = vadd.f32 %v2436, 1e-06
        %v2439 = vadd.f32 %v2437, 1e-06
        %v2440 = vrsqrt.pop %v2438
        %v2441 = vmul.f32 %v2440, %v2438
        %v2442 = vmul.f32 %v2441, %v2440
        %v2443 = vmul.f32 0.5, %v2442
        %v2444 = vsub.f32 1.5, %v2443
        %v2445 = vmul.f32 %v2440, %v2444
        %vm2446 = vweird.f32 %v2438
        %vm2447 = vweird.f32 %v2440
        %vm2448 = vmor %vm2446, %vm2447
        %v2449 = vsel %vm2448, %v2440, %v2445
        %v2450 = vrsqrt.pop %v2439
        %v2451 = vmul.f32 %v2450, %v2439
        %v2452 = vmul.f32 %v2451, %v2450
        %v2453 = vmul.f32 0.5, %v2452
        %v2454 = vsub.f32 1.5, %v2453
        %v2455 = vmul.f32 %v2450, %v2454
        %vm2456 = vweird.f32 %v2439
        %vm2457 = vweird.f32 %v2450
        %vm2458 = vmor %vm2456, %vm2457
        %v2459 = vsel %vm2458, %v2450, %v2455
        %v2460 = vmul.f32 %v2427, %v2449
        %v2461 = vmul.f32 %v2428, %v2459
        %v2463 = vperm.slane %v2429, 0
        %v2465 = vmul.f32 %v2460, %v2463
        %v2466 = vmul.f32 %v2461, %v2463
        %v2467 = vpack.c.bf16 %v2466, %v2465
        %v2468 = vld [vmem:[#allocation15] sm:$0xff]
        %v2469 = vld [vmem:[#allocation15 + $0x8] sm:$0xff]
        %v2470 = vld [vmem:[#allocation15 + $0x10] sm:$0xff]
        %v2471 = vld [vmem:[#allocation15 + $0x18] sm:$0xff]
        %v2472 = vld [vmem:[#allocation15 + $0x20] sm:$0xff]
        %v2473 = vld [vmem:[#allocation15 + $0x28] sm:$0xff]
        %v2474 = vld [vmem:[#allocation15 + $0x30] sm:$0xff]
        %v2475 = vld [vmem:[#allocation15 + $0x38] sm:$0xff]
        %v2476 = vld [vmem:[#allocation15 + $0x40] sm:$0xff]
        %v2477 = vld [vmem:[#allocation15 + $0x48] sm:$0xff]
        %v2478 = vld [vmem:[#allocation15 + $0x50] sm:$0xff]
        %v2479 = vld [vmem:[#allocation15 + $0x58] sm:$0xff]
        %v2480 = vld [vmem:[#allocation15 + $0x60] sm:$0xff]
        %v2481 = vld [vmem:[#allocation15 + $0x68] sm:$0xff]
        %v2482 = vld [vmem:[#allocation15 + $0x70] sm:$0xff]
        %v2483 = vld [vmem:[#allocation15 + $0x78] sm:$0xff]
        %v2484 = vld [vmem:[#allocation15 + $0x80] sm:$0xff]
        %v2485 = vld [vmem:[#allocation15 + $0x88] sm:$0xff]
        %v2486 = vld [vmem:[#allocation15 + $0x90] sm:$0xff]
        %v2487 = vld [vmem:[#allocation15 + $0x98] sm:$0xff]
        %v2488 = vld [vmem:[#allocation15 + $0xa0] sm:$0xff]
        %v2489 = vld [vmem:[#allocation15 + $0xa8] sm:$0xff]
        %v2490 = vld [vmem:[#allocation15 + $0xb0] sm:$0xff]
        %v2491 = vld [vmem:[#allocation15 + $0xb8] sm:$0xff]
        %v2492 = vld [vmem:[#allocation15 + $0xc0] sm:$0xff]
        %v2493 = vld [vmem:[#allocation15 + $0xc8] sm:$0xff]
        %v2494 = vld [vmem:[#allocation15 + $0xd0] sm:$0xff]
        %v2495 = vld [vmem:[#allocation15 + $0xd8] sm:$0xff]
        %v2496 = vld [vmem:[#allocation15 + $0xe0] sm:$0xff]
        %v2497 = vld [vmem:[#allocation15 + $0xe8] sm:$0xff]
        %v2498 = vld [vmem:[#allocation15 + $0xf0] sm:$0xff]
        %v2499 = vld [vmem:[#allocation15 + $0xf8] sm:$0xff]
        %v2500 = vld [vmem:[%s12] sm:$0xf]
        %v2502 = vperm.slane %v2500, 0
        %v2503 = vperm.slane %v2500, 1
        %v2504 = vperm.slane %v2500, 2
        %v2505 = vperm.slane %v2500, 3
        %v2542 = vunpack.c.l.b16 %v2468
        %v2543 = vunpack.c.h.b16 %v2468
        %v2544 = vunpack.c.l.b16 %v2469
        %v2545 = vunpack.c.h.b16 %v2469
        %v2546 = vunpack.c.l.b16 %v2470
        %v2547 = vunpack.c.h.b16 %v2470
        %v2548 = vunpack.c.l.b16 %v2471
        %v2549 = vunpack.c.h.b16 %v2471
        %v2550 = vunpack.c.l.b16 %v2472
        %v2551 = vunpack.c.h.b16 %v2472
        %v2552 = vunpack.c.l.b16 %v2473
        %v2553 = vunpack.c.h.b16 %v2473
        %v2554 = vunpack.c.l.b16 %v2474
        %v2555 = vunpack.c.h.b16 %v2474
        %v2556 = vunpack.c.l.b16 %v2475
        %v2557 = vunpack.c.h.b16 %v2475
        %v2558 = vunpack.c.l.b16 %v2476
        %v2559 = vunpack.c.h.b16 %v2476
        %v2560 = vunpack.c.l.b16 %v2477
        %v2561 = vunpack.c.h.b16 %v2477
        %v2562 = vunpack.c.l.b16 %v2478
        %v2563 = vunpack.c.h.b16 %v2478
        %v2564 = vunpack.c.l.b16 %v2479
        %v2565 = vunpack.c.h.b16 %v2479
        %v2566 = vunpack.c.l.b16 %v2480
        %v2567 = vunpack.c.h.b16 %v2480
        %v2568 = vunpack.c.l.b16 %v2481
        %v2569 = vunpack.c.h.b16 %v2481
        %v2570 = vunpack.c.l.b16 %v2482
        %v2571 = vunpack.c.h.b16 %v2482
        %v2572 = vunpack.c.l.b16 %v2483
        %v2573 = vunpack.c.h.b16 %v2483
        %v2574 = vunpack.c.l.b16 %v2484
        %v2575 = vunpack.c.h.b16 %v2484
        %v2576 = vunpack.c.l.b16 %v2485
        %v2577 = vunpack.c.h.b16 %v2485
        %v2578 = vunpack.c.l.b16 %v2486
        %v2579 = vunpack.c.h.b16 %v2486
        %v2580 = vunpack.c.l.b16 %v2487
        %v2581 = vunpack.c.h.b16 %v2487
        %v2582 = vunpack.c.l.b16 %v2488
        %v2583 = vunpack.c.h.b16 %v2488
        %v2584 = vunpack.c.l.b16 %v2489
        %v2585 = vunpack.c.h.b16 %v2489
        %v2586 = vunpack.c.l.b16 %v2490
        %v2587 = vunpack.c.h.b16 %v2490
        %v2588 = vunpack.c.l.b16 %v2491
        %v2589 = vunpack.c.h.b16 %v2491
        %v2590 = vunpack.c.l.b16 %v2492
        %v2591 = vunpack.c.h.b16 %v2492
        %v2592 = vunpack.c.l.b16 %v2493
        %v2593 = vunpack.c.h.b16 %v2493
        %v2594 = vunpack.c.l.b16 %v2494
        %v2595 = vunpack.c.h.b16 %v2494
        %v2596 = vunpack.c.l.b16 %v2495
        %v2597 = vunpack.c.h.b16 %v2495
        %v2598 = vunpack.c.l.b16 %v2496
        %v2599 = vunpack.c.h.b16 %v2496
        %v2600 = vunpack.c.l.b16 %v2497
        %v2601 = vunpack.c.h.b16 %v2497
        %v2602 = vunpack.c.l.b16 %v2498
        %v2603 = vunpack.c.h.b16 %v2498
        %v2604 = vunpack.c.l.b16 %v2499
        %v2605 = vunpack.c.h.b16 %v2499
        %v2606 = vpack.c.b16 %v2546, %v2542
        %v2607 = vpack.c.b16 %v2547, %v2543
        %v2608 = vpack.c.b16 %v2548, %v2544
        %v2609 = vpack.c.b16 %v2549, %v2545
        %v2610 = vpack.c.b16 %v2554, %v2550
        %v2611 = vpack.c.b16 %v2555, %v2551
        %v2612 = vpack.c.b16 %v2556, %v2552
        %v2613 = vpack.c.b16 %v2557, %v2553
        %v2614 = vpack.c.b16 %v2562, %v2558
        %v2615 = vpack.c.b16 %v2563, %v2559
        %v2616 = vpack.c.b16 %v2564, %v2560
        %v2617 = vpack.c.b16 %v2565, %v2561
        %v2618 = vpack.c.b16 %v2570, %v2566
        %v2619 = vpack.c.b16 %v2571, %v2567
        %v2620 = vpack.c.b16 %v2572, %v2568
        %v2621 = vpack.c.b16 %v2573, %v2569
        %v2622 = vpack.c.b16 %v2578, %v2574
        %v2623 = vpack.c.b16 %v2579, %v2575
        %v2624 = vpack.c.b16 %v2580, %v2576
        %v2625 = vpack.c.b16 %v2581, %v2577
        %v2626 = vpack.c.b16 %v2586, %v2582
        %v2627 = vpack.c.b16 %v2587, %v2583
        %v2628 = vpack.c.b16 %v2588, %v2584
        %v2629 = vpack.c.b16 %v2589, %v2585
        %v2630 = vpack.c.b16 %v2594, %v2590
        %v2631 = vpack.c.b16 %v2595, %v2591
        %v2632 = vpack.c.b16 %v2596, %v2592
        %v2633 = vpack.c.b16 %v2597, %v2593
        %v2634 = vpack.c.b16 %v2602, %v2598
        %v2635 = vpack.c.b16 %v2603, %v2599
        %v2636 = vpack.c.b16 %v2604, %v2600
        %v2637 = vpack.c.b16 %v2605, %v2601
        %2670 = vmatpush.bf16.msra.mxu0 %v2634
        %2671 = vmatpush.bf16.msra.mxu0 %v2630
        %2672 = vmatpush.bf16.msra.mxu0 %v2626
        %2673 = vmatpush.bf16.msra.mxu0 %v2622
        %2674 = vmatpush.bf16.msra.mxu0 %v2618
        %2675 = vmatpush.bf16.msra.mxu0 %v2614
        %2676 = vmatpush.bf16.msra.mxu0 %v2610
        %2677 = vmatpush.bf16.msra.mxu0 %v2606
        %2678 = vmatmul.bf16.gmra.mxu0 %v2467
        %v2679 = vpop.f32.mrf.mxu0
        %v2680 = vadd.f32 %v2502, %v2679
        %v2681 = vpop.f32.mrf.mxu0
        %v2682 = vadd.f32 %v2502, %v2681
        %2683 = vdwg.mxu0
        %2684 = vmatpush.bf16.msra.mxu0 %v2635
        %2685 = vmatpush.bf16.msra.mxu0 %v2631
        %2686 = vmatpush.bf16.msra.mxu0 %v2627
        %2687 = vmatpush.bf16.msra.mxu0 %v2623
        %2688 = vmatpush.bf16.msra.mxu0 %v2619
        %2689 = vmatpush.bf16.msra.mxu0 %v2615
        %2690 = vmatpush.bf16.msra.mxu0 %v2611
        %2691 = vmatpush.bf16.msra.mxu0 %v2607
        %2692 = vmatmul.bf16.gmra.mxu0 %v2467
        %v2693 = vpop.f32.mrf.mxu0
        %v2694 = vadd.f32 %v2503, %v2693
        %v2695 = vpop.f32.mrf.mxu0
        %v2696 = vadd.f32 %v2503, %v2695
        %2697 = vdwg.mxu0
        %2698 = vmatpush.bf16.msra.mxu0 %v2636
        %2699 = vmatpush.bf16.msra.mxu0 %v2632
        %2700 = vmatpush.bf16.msra.mxu0 %v2628
        %2701 = vmatpush.bf16.msra.mxu0 %v2624
        %2702 = vmatpush.bf16.msra.mxu0 %v2620
        %2703 = vmatpush.bf16.msra.mxu0 %v2616
        %2704 = vmatpush.bf16.msra.mxu0 %v2612
        %2705 = vmatpush.bf16.msra.mxu0 %v2608
        %2706 = vmatmul.bf16.gmra.mxu0 %v2467
        %v2707 = vpop.f32.mrf.mxu0
        %v2708 = vadd.f32 %v2504, %v2707
        %v2709 = vpop.f32.mrf.mxu0
        %v2710 = vadd.f32 %v2504, %v2709
        %2711 = vdwg.mxu0
        %2712 = vmatpush.bf16.msra.mxu0 %v2637
        %2713 = vmatpush.bf16.msra.mxu0 %v2633
        %2714 = vmatpush.bf16.msra.mxu0 %v2629
        %2715 = vmatpush.bf16.msra.mxu0 %v2625
        %2716 = vmatpush.bf16.msra.mxu0 %v2621
        %2717 = vmatpush.bf16.msra.mxu0 %v2617
        %2718 = vmatpush.bf16.msra.mxu0 %v2613
        %2719 = vmatpush.bf16.msra.mxu0 %v2609
        %2720 = vmatmul.bf16.gmra.mxu0 %v2467
        %v2721 = vpop.f32.mrf.mxu0
        %v2722 = vadd.f32 %v2505, %v2721
        %v2723 = vpop.f32.mrf.mxu0
        %v2724 = vadd.f32 %v2505, %v2723
        %2725 = vdwg.mxu0
        %v2726 = vxor.u32 %v2680, 2147483648
        %v2727 = vxor.u32 %v2694, 2147483648
        %v2728 = vxor.u32 %v2708, 2147483648
        %v2729 = vxor.u32 %v2722, 2147483648
        %v2730 = vxor.u32 %v2682, 2147483648
        %v2731 = vxor.u32 %v2696, 2147483648
        %v2732 = vxor.u32 %v2710, 2147483648
        %v2733 = vxor.u32 %v2724, 2147483648
        %v2734 = vmul.f32 %v2726, 1.442695
        %v2735 = vpow.pop %v2734
        %v2736 = vmul.f32 %v2727, 1.442695
        %v2737 = vpow.pop %v2736
        %v2738 = vmul.f32 %v2728, 1.442695
        %v2739 = vpow.pop %v2738
        %v2740 = vmul.f32 %v2729, 1.442695
        %v2741 = vpow.pop %v2740
        %v2742 = vmul.f32 %v2730, 1.442695
        %v2743 = vpow.pop %v2742
        %v2744 = vmul.f32 %v2731, 1.442695
        %v2745 = vpow.pop %v2744
        %v2746 = vmul.f32 %v2732, 1.442695
        %v2747 = vpow.pop %v2746
        %v2748 = vmul.f32 %v2733, 1.442695
        %v2749 = vpow.pop %v2748
        %v2750 = vadd.f32 %v2735, 1.0
        %v2751 = vadd.f32 %v2737, 1.0
        %v2752 = vadd.f32 %v2739, 1.0
        %v2753 = vadd.f32 %v2741, 1.0
        %v2754 = vadd.f32 %v2743, 1.0
        %v2755 = vadd.f32 %v2745, 1.0
        %v2756 = vadd.f32 %v2747, 1.0
        %v2757 = vadd.f32 %v2749, 1.0
        %v2758 = vrcp.pop %v2750
        %v2759 = vmul.f32 %v2750, %v2758
        %v2760 = vsub.f32 1.0, %v2759
        %v2761 = vmul.f32 %v2758, %v2760
        %v2762 = vadd.f32 %v2758, %v2761
        %vm2763 = vweird.f32 %v2750
        %vm2764 = vweird.f32 %v2758
        %vm2765 = vmor %vm2763, %vm2764
        %v2766 = vsel %vm2765, %v2758, %v2762
        %v2767 = vand.u32 2147483647, %v2750
        %vm2768 = vcmp.eq.f32.partialorder %v2767, 8.507059e+37
        %v2769 = vand.u32 %v2750, 2147483648
        %v2770 = vor.u32 1.1754944e-38, %v2769
        %v2771 = vsel %vm2768, %v2770, %v2766
        %v2772 = vmul.f32 1.0, %v2771
        %v2773 = vrcp.pop %v2751
        %v2774 = vmul.f32 %v2751, %v2773
        %v2775 = vsub.f32 1.0, %v2774
        %v2776 = vmul.f32 %v2773, %v2775
        %v2777 = vadd.f32 %v2773, %v2776
        %vm2778 = vweird.f32 %v2751
        %vm2779 = vweird.f32 %v2773
        %vm2780 = vmor %vm2778, %vm2779
        %v2781 = vsel %vm2780, %v2773, %v2777
        %v2782 = vand.u32 2147483647, %v2751
        %vm2783 = vcmp.eq.f32.partialorder %v2782, 8.507059e+37
        %v2784 = vand.u32 %v2751, 2147483648
        %v2785 = vor.u32 1.1754944e-38, %v2784
        %v2786 = vsel %vm2783, %v2785, %v2781
        %v2787 = vmul.f32 1.0, %v2786
        %v2788 = vrcp.pop %v2752
        %v2789 = vmul.f32 %v2752, %v2788
        %v2790 = vsub.f32 1.0, %v2789
        %v2791 = vmul.f32 %v2788, %v2790
        %v2792 = vadd.f32 %v2788, %v2791
        %vm2793 = vweird.f32 %v2752
        %vm2794 = vweird.f32 %v2788
        %vm2795 = vmor %vm2793, %vm2794
        %v2796 = vsel %vm2795, %v2788, %v2792
        %v2797 = vand.u32 2147483647, %v2752
        %vm2798 = vcmp.eq.f32.partialorder %v2797, 8.507059e+37
        %v2799 = vand.u32 %v2752, 2147483648
        %v2800 = vor.u32 1.1754944e-38, %v2799
        %v2801 = vsel %vm2798, %v2800, %v2796
        %v2802 = vmul.f32 1.0, %v2801
        %v2803 = vrcp.pop %v2753
        %v2804 = vmul.f32 %v2753, %v2803
        %v2805 = vsub.f32 1.0, %v2804
        %v2806 = vmul.f32 %v2803, %v2805
        %v2807 = vadd.f32 %v2803, %v2806
        %vm2808 = vweird.f32 %v2753
        %vm2809 = vweird.f32 %v2803
        %vm2810 = vmor %vm2808, %vm2809
        %v2811 = vsel %vm2810, %v2803, %v2807
        %v2812 = vand.u32 2147483647, %v2753
        %vm2813 = vcmp.eq.f32.partialorder %v2812, 8.507059e+37
        %v2814 = vand.u32 %v2753, 2147483648
        %v2815 = vor.u32 1.1754944e-38, %v2814
        %v2816 = vsel %vm2813, %v2815, %v2811
        %v2817 = vmul.f32 1.0, %v2816
        %v2818 = vrcp.pop %v2754
        %v2819 = vmul.f32 %v2754, %v2818
        %v2820 = vsub.f32 1.0, %v2819
        %v2821 = vmul.f32 %v2818, %v2820
        %v2822 = vadd.f32 %v2818, %v2821
        %vm2823 = vweird.f32 %v2754
        %vm2824 = vweird.f32 %v2818
        %vm2825 = vmor %vm2823, %vm2824
        %v2826 = vsel %vm2825, %v2818, %v2822
        %v2827 = vand.u32 2147483647, %v2754
        %vm2828 = vcmp.eq.f32.partialorder %v2827, 8.507059e+37
        %v2829 = vand.u32 %v2754, 2147483648
        %v2830 = vor.u32 1.1754944e-38, %v2829
        %v2831 = vsel %vm2828, %v2830, %v2826
        %v2832 = vmul.f32 1.0, %v2831
        %v2833 = vrcp.pop %v2755
        %v2834 = vmul.f32 %v2755, %v2833
        %v2835 = vsub.f32 1.0, %v2834
        %v2836 = vmul.f32 %v2833, %v2835
        %v2837 = vadd.f32 %v2833, %v2836
        %vm2838 = vweird.f32 %v2755
        %vm2839 = vweird.f32 %v2833
        %vm2840 = vmor %vm2838, %vm2839
        %v2841 = vsel %vm2840, %v2833, %v2837
        %v2842 = vand.u32 2147483647, %v2755
        %vm2843 = vcmp.eq.f32.partialorder %v2842, 8.507059e+37
        %v2844 = vand.u32 %v2755, 2147483648
        %v2845 = vor.u32 1.1754944e-38, %v2844
        %v2846 = vsel %vm2843, %v2845, %v2841
        %v2847 = vmul.f32 1.0, %v2846
        %v2848 = vrcp.pop %v2756
        %v2849 = vmul.f32 %v2756, %v2848
        %v2850 = vsub.f32 1.0, %v2849
        %v2851 = vmul.f32 %v2848, %v2850
        %v2852 = vadd.f32 %v2848, %v2851
        %vm2853 = vweird.f32 %v2756
        %vm2854 = vweird.f32 %v2848
        %vm2855 = vmor %vm2853, %vm2854
        %v2856 = vsel %vm2855, %v2848, %v2852
        %v2857 = vand.u32 2147483647, %v2756
        %vm2858 = vcmp.eq.f32.partialorder %v2857, 8.507059e+37
        %v2859 = vand.u32 %v2756, 2147483648
        %v2860 = vor.u32 1.1754944e-38, %v2859
        %v2861 = vsel %vm2858, %v2860, %v2856
        %v2862 = vmul.f32 1.0, %v2861
        %v2863 = vrcp.pop %v2757
        %v2864 = vmul.f32 %v2757, %v2863
        %v2865 = vsub.f32 1.0, %v2864
        %v2866 = vmul.f32 %v2863, %v2865
        %v2867 = vadd.f32 %v2863, %v2866
        %vm2868 = vweird.f32 %v2757
        %vm2869 = vweird.f32 %v2863
        %vm2870 = vmor %vm2868, %vm2869
        %v2871 = vsel %vm2870, %v2863, %v2867
        %v2872 = vand.u32 2147483647, %v2757
        %vm2873 = vcmp.eq.f32.partialorder %v2872, 8.507059e+37
        %v2874 = vand.u32 %v2757, 2147483648
        %v2875 = vor.u32 1.1754944e-38, %v2874
        %v2876 = vsel %vm2873, %v2875, %v2871
        %v2877 = vmul.f32 1.0, %v2876
        %v2878 = vmul.f32 %v2680, %v2772
        %v2879 = vmul.f32 %v2694, %v2787
        %v2880 = vmul.f32 %v2708, %v2802
        %v2881 = vmul.f32 %v2722, %v2817
        %v2882 = vmul.f32 %v2682, %v2832
        %v2883 = vmul.f32 %v2696, %v2847
        %v2884 = vmul.f32 %v2710, %v2862
        %v2885 = vmul.f32 %v2724, %v2877
        %v2886 = vpack.c.bf16 %v2882, %v2878
        %v2887 = vpack.c.bf16 %v2883, %v2879
        %v2888 = vpack.c.bf16 %v2884, %v2880
        %v2889 = vpack.c.bf16 %v2885, %v2881
        %v2890 = vld [vmem:[#allocation16] sm:$0xf]
        %v2891 = vld [vmem:[#allocation16 + $0x4] sm:$0xf]
        %v2892 = vld [vmem:[#allocation16 + $0x8] sm:$0xf]
        %v2893 = vld [vmem:[#allocation16 + $0xc] sm:$0xf]
        %v2894 = vld [vmem:[#allocation16 + $0x10] sm:$0xf]
        %v2895 = vld [vmem:[#allocation16 + $0x14] sm:$0xf]
        %v2896 = vld [vmem:[#allocation16 + $0x18] sm:$0xf]
        %v2897 = vld [vmem:[#allocation16 + $0x1c] sm:$0xf]
        %v2898 = vld [vmem:[#allocation16 + $0x20] sm:$0xf]
        %v2899 = vld [vmem:[#allocation16 + $0x24] sm:$0xf]
        %v2900 = vld [vmem:[#allocation16 + $0x28] sm:$0xf]
        %v2901 = vld [vmem:[#allocation16 + $0x2c] sm:$0xf]
        %v2902 = vld [vmem:[#allocation16 + $0x30] sm:$0xf]
        %v2903 = vld [vmem:[#allocation16 + $0x34] sm:$0xf]
        %v2904 = vld [vmem:[#allocation16 + $0x38] sm:$0xf]
        %v2905 = vld [vmem:[#allocation16 + $0x3c] sm:$0xf]
        %v2906 = vld [vmem:[#allocation16 + $0x40] sm:$0xf]
        %v2907 = vld [vmem:[#allocation16 + $0x44] sm:$0xf]
        %v2908 = vld [vmem:[#allocation16 + $0x48] sm:$0xf]
        %v2909 = vld [vmem:[#allocation16 + $0x4c] sm:$0xf]
        %v2910 = vld [vmem:[#allocation16 + $0x50] sm:$0xf]
        %v2911 = vld [vmem:[#allocation16 + $0x54] sm:$0xf]
        %v2912 = vld [vmem:[#allocation16 + $0x58] sm:$0xf]
        %v2913 = vld [vmem:[#allocation16 + $0x5c] sm:$0xf]
        %v2914 = vld [vmem:[#allocation16 + $0x60] sm:$0xf]
        %v2915 = vld [vmem:[#allocation16 + $0x64] sm:$0xf]
        %v2916 = vld [vmem:[#allocation16 + $0x68] sm:$0xf]
        %v2917 = vld [vmem:[#allocation16 + $0x6c] sm:$0xf]
        %v2918 = vld [vmem:[#allocation16 + $0x70] sm:$0xf]
        %v2919 = vld [vmem:[#allocation16 + $0x74] sm:$0xf]
        %v2920 = vld [vmem:[#allocation16 + $0x78] sm:$0xf]
        %v2921 = vld [vmem:[#allocation16 + $0x7c] sm:$0xf]
        %v2922 = vld [vmem:[#allocation16 + $0x80] sm:$0xf]
        %v2923 = vld [vmem:[#allocation16 + $0x84] sm:$0xf]
        %v2924 = vld [vmem:[#allocation16 + $0x88] sm:$0xf]
        %v2925 = vld [vmem:[#allocation16 + $0x8c] sm:$0xf]
        %v2926 = vld [vmem:[#allocation16 + $0x90] sm:$0xf]
        %v2927 = vld [vmem:[#allocation16 + $0x94] sm:$0xf]
        %v2928 = vld [vmem:[#allocation16 + $0x98] sm:$0xf]
        %v2929 = vld [vmem:[#allocation16 + $0x9c] sm:$0xf]
        %v2930 = vld [vmem:[#allocation16 + $0xa0] sm:$0xf]
        %v2931 = vld [vmem:[#allocation16 + $0xa4] sm:$0xf]
        %v2932 = vld [vmem:[#allocation16 + $0xa8] sm:$0xf]
        %v2933 = vld [vmem:[#allocation16 + $0xac] sm:$0xf]
        %v2934 = vld [vmem:[#allocation16 + $0xb0] sm:$0xf]
        %v2935 = vld [vmem:[#allocation16 + $0xb4] sm:$0xf]
        %v2936 = vld [vmem:[#allocation16 + $0xb8] sm:$0xf]
        %v2937 = vld [vmem:[#allocation16 + $0xbc] sm:$0xf]
        %v2938 = vld [vmem:[#allocation16 + $0xc0] sm:$0xf]
        %v2939 = vld [vmem:[#allocation16 + $0xc4] sm:$0xf]
        %v2940 = vld [vmem:[#allocation16 + $0xc8] sm:$0xf]
        %v2941 = vld [vmem:[#allocation16 + $0xcc] sm:$0xf]
        %v2942 = vld [vmem:[#allocation16 + $0xd0] sm:$0xf]
        %v2943 = vld [vmem:[#allocation16 + $0xd4] sm:$0xf]
        %v2944 = vld [vmem:[#allocation16 + $0xd8] sm:$0xf]
        %v2945 = vld [vmem:[#allocation16 + $0xdc] sm:$0xf]
        %v2946 = vld [vmem:[#allocation16 + $0xe0] sm:$0xf]
        %v2947 = vld [vmem:[#allocation16 + $0xe4] sm:$0xf]
        %v2948 = vld [vmem:[#allocation16 + $0xe8] sm:$0xf]
        %v2949 = vld [vmem:[#allocation16 + $0xec] sm:$0xf]
        %v2950 = vld [vmem:[#allocation16 + $0xf0] sm:$0xf]
        %v2951 = vld [vmem:[#allocation16 + $0xf4] sm:$0xf]
        %v2952 = vld [vmem:[#allocation16 + $0xf8] sm:$0xf]
        %v2953 = vld [vmem:[#allocation16 + $0xfc] sm:$0xf]
        %v2954 = vld [vmem:[%s14] sm:$0x1]
        %v2956 = vperm.slane %v2954, 0
        %v3022 = vunpack.c.l.b16 %v2890
        %v3023 = vunpack.c.l.b16 %v2891
        %v3024 = vunpack.c.l.b16 %v2892
        %v3025 = vunpack.c.l.b16 %v2893
        %v3026 = vunpack.c.l.b16 %v2894
        %v3027 = vunpack.c.l.b16 %v2895
        %v3028 = vunpack.c.l.b16 %v2896
        %v3029 = vunpack.c.l.b16 %v2897
        %v3030 = vunpack.c.l.b16 %v2898
        %v3031 = vunpack.c.l.b16 %v2899
        %v3032 = vunpack.c.l.b16 %v2900
        %v3033 = vunpack.c.l.b16 %v2901
        %v3034 = vunpack.c.l.b16 %v2902
        %v3035 = vunpack.c.l.b16 %v2903
        %v3036 = vunpack.c.l.b16 %v2904
        %v3037 = vunpack.c.l.b16 %v2905
        %v3038 = vunpack.c.l.b16 %v2906
        %v3039 = vunpack.c.l.b16 %v2907
        %v3040 = vunpack.c.l.b16 %v2908
        %v3041 = vunpack.c.l.b16 %v2909
        %v3042 = vunpack.c.l.b16 %v2910
        %v3043 = vunpack.c.l.b16 %v2911
        %v3044 = vunpack.c.l.b16 %v2912
        %v3045 = vunpack.c.l.b16 %v2913
        %v3046 = vunpack.c.l.b16 %v2914
        %v3047 = vunpack.c.l.b16 %v2915
        %v3048 = vunpack.c.l.b16 %v2916
        %v3049 = vunpack.c.l.b16 %v2917
        %v3050 = vunpack.c.l.b16 %v2918
        %v3051 = vunpack.c.l.b16 %v2919
        %v3052 = vunpack.c.l.b16 %v2920
        %v3053 = vunpack.c.l.b16 %v2921
        %v3054 = vunpack.c.l.b16 %v2922
        %v3055 = vunpack.c.l.b16 %v2923
        %v3056 = vunpack.c.l.b16 %v2924
        %v3057 = vunpack.c.l.b16 %v2925
        %v3058 = vunpack.c.l.b16 %v2926
        %v3059 = vunpack.c.l.b16 %v2927
        %v3060 = vunpack.c.l.b16 %v2928
        %v3061 = vunpack.c.l.b16 %v2929
        %v3062 = vunpack.c.l.b16 %v2930
        %v3063 = vunpack.c.l.b16 %v2931
        %v3064 = vunpack.c.l.b16 %v2932
        %v3065 = vunpack.c.l.b16 %v2933
        %v3066 = vunpack.c.l.b16 %v2934
        %v3067 = vunpack.c.l.b16 %v2935
        %v3068 = vunpack.c.l.b16 %v2936
        %v3069 = vunpack.c.l.b16 %v2937
        %v3070 = vunpack.c.l.b16 %v2938
        %v3071 = vunpack.c.l.b16 %v2939
        %v3072 = vunpack.c.l.b16 %v2940
        %v3073 = vunpack.c.l.b16 %v2941
        %v3074 = vunpack.c.l.b16 %v2942
        %v3075 = vunpack.c.l.b16 %v2943
        %v3076 = vunpack.c.l.b16 %v2944
        %v3077 = vunpack.c.l.b16 %v2945
        %v3078 = vunpack.c.l.b16 %v2946
        %v3079 = vunpack.c.l.b16 %v2947
        %v3080 = vunpack.c.l.b16 %v2948
        %v3081 = vunpack.c.l.b16 %v2949
        %v3082 = vunpack.c.l.b16 %v2950
        %v3083 = vunpack.c.l.b16 %v2951
        %v3084 = vunpack.c.l.b16 %v2952
        %v3085 = vunpack.c.l.b16 %v2953
        %v3086 = vpack.c.b16 %v3023, %v3022
        %v3087 = vpack.c.b16 %v3025, %v3024
        %v3088 = vpack.c.b16 %v3027, %v3026
        %v3089 = vpack.c.b16 %v3029, %v3028
        %v3090 = vpack.c.b16 %v3031, %v3030
        %v3091 = vpack.c.b16 %v3033, %v3032
        %v3092 = vpack.c.b16 %v3035, %v3034
        %v3093 = vpack.c.b16 %v3037, %v3036
        %v3094 = vpack.c.b16 %v3039, %v3038
        %v3095 = vpack.c.b16 %v3041, %v3040
        %v3096 = vpack.c.b16 %v3043, %v3042
        %v3097 = vpack.c.b16 %v3045, %v3044
        %v3098 = vpack.c.b16 %v3047, %v3046
        %v3099 = vpack.c.b16 %v3049, %v3048
        %v3100 = vpack.c.b16 %v3051, %v3050
        %v3101 = vpack.c.b16 %v3053, %v3052
        %v3102 = vpack.c.b16 %v3055, %v3054
        %v3103 = vpack.c.b16 %v3057, %v3056
        %v3104 = vpack.c.b16 %v3059, %v3058
        %v3105 = vpack.c.b16 %v3061, %v3060
        %v3106 = vpack.c.b16 %v3063, %v3062
        %v3107 = vpack.c.b16 %v3065, %v3064
        %v3108 = vpack.c.b16 %v3067, %v3066
        %v3109 = vpack.c.b16 %v3069, %v3068
        %v3110 = vpack.c.b16 %v3071, %v3070
        %v3111 = vpack.c.b16 %v3073, %v3072
        %v3112 = vpack.c.b16 %v3075, %v3074
        %v3113 = vpack.c.b16 %v3077, %v3076
        %v3114 = vpack.c.b16 %v3079, %v3078
        %v3115 = vpack.c.b16 %v3081, %v3080
        %v3116 = vpack.c.b16 %v3083, %v3082
        %v3117 = vpack.c.b16 %v3085, %v3084
        %3150 = vmatpush.bf16.msra.mxu0 %v3093
        %3151 = vmatpush.bf16.msra.mxu0 %v3092
        %3152 = vmatpush.bf16.msra.mxu0 %v3091
        %3153 = vmatpush.bf16.msra.mxu0 %v3090
        %3154 = vmatpush.bf16.msra.mxu0 %v3089
        %3155 = vmatpush.bf16.msra.mxu0 %v3088
        %3156 = vmatpush.bf16.msra.mxu0 %v3087
        %3157 = vmatpush.bf16.msra.mxu0 %v3086
        %3158 = vmatmul.bf16.gmra.mxu0 %v2886
        %v3159 = vpop.f32.mrf.mxu0
        %v3160 = vadd.f32 %v2956, %v3159
        %v3161 = vpop.f32.mrf.mxu0
        %v3162 = vadd.f32 %v2956, %v3161
        %3163 = vdwg.mxu0
        %3164 = vmatpush.bf16.msra.mxu0 %v3101
        %3165 = vmatpush.bf16.msra.mxu0 %v3100
        %3166 = vmatpush.bf16.msra.mxu0 %v3099
        %3167 = vmatpush.bf16.msra.mxu0 %v3098
        %3168 = vmatpush.bf16.msra.mxu0 %v3097
        %3169 = vmatpush.bf16.msra.mxu0 %v3096
        %3170 = vmatpush.bf16.msra.mxu0 %v3095
        %3171 = vmatpush.bf16.msra.mxu0 %v3094
        %3172 = vmatmul.bf16.gmra.mxu0 %v2887
        %v3173 = vpop.f32.mrf.mxu0
        %v3174 = vadd.f32 %v3160, %v3173
        %v3175 = vpop.f32.mrf.mxu0
        %v3176 = vadd.f32 %v3162, %v3175
        %3177 = vdwg.mxu0
        %3178 = vmatpush.bf16.msra.mxu0 %v3109
        %3179 = vmatpush.bf16.msra.mxu0 %v3108
        %3180 = vmatpush.bf16.msra.mxu0 %v3107
        %3181 = vmatpush.bf16.msra.mxu0 %v3106
        %3182 = vmatpush.bf16.msra.mxu0 %v3105
        %3183 = vmatpush.bf16.msra.mxu0 %v3104
        %3184 = vmatpush.bf16.msra.mxu0 %v3103
        %3185 = vmatpush.bf16.msra.mxu0 %v3102
        %3186 = vmatmul.bf16.gmra.mxu0 %v2888
        %v3187 = vpop.f32.mrf.mxu0
        %v3188 = vadd.f32 %v3174, %v3187
        %v3189 = vpop.f32.mrf.mxu0
        %v3190 = vadd.f32 %v3176, %v3189
        %3191 = vdwg.mxu0
        %3192 = vmatpush.bf16.msra.mxu0 %v3117
        %3193 = vmatpush.bf16.msra.mxu0 %v3116
        %3194 = vmatpush.bf16.msra.mxu0 %v3115
        %3195 = vmatpush.bf16.msra.mxu0 %v3114
        %3196 = vmatpush.bf16.msra.mxu0 %v3113
        %3197 = vmatpush.bf16.msra.mxu0 %v3112
        %3198 = vmatpush.bf16.msra.mxu0 %v3111
        %3199 = vmatpush.bf16.msra.mxu0 %v3110
        %3200 = vmatmul.bf16.gmra.mxu0 %v2889
        %v3201 = vpop.f32.mrf.mxu0
        %v3202 = vadd.f32 %v3188, %v3201
        %v3203 = vpop.f32.mrf.mxu0
        %v3204 = vadd.f32 %v3190, %v3203
        %3205 = vdwg.mxu0
        %v3206 = vadd.f32 %v2427, %v3202
        %v3207 = vadd.f32 %v2428, %v3204
        %3208 = vst [vmem:[%s642] sm:$0xff] %v3206
        %3209 = vst [vmem:[%s642 + $0x8] sm:$0xff] %v3207
        %s3210 = sand.u32 %s378, 1
        %s3211 = scalar_lea.sflag [#allocation6], %s3210
        %s3212 = sand.u32 %s378, 1
        %s3213 = smul.addr %s3212, 16
        %s3214 = scalar_lea.vmem [#allocation18], %s3213
        // Predicated region
        $region117: #{tpu_custom_call.1} parent=79 // pred_check
          %p3215 = pneg %p388
        $region118: #{tpu_custom_call.1} parent=79 // pred_check_branch
          %3217 = sbr.rel (%p3215) target = $region120
        $region119: #{tpu_custom_call.1} parent=79 // pred_region
          %s3218 = smul.u32 2, %s41
          %3220 = vsyncadd %s3211, 0
          %s3221 = smul.addr %s40, 2
          %s3222 = sadd.s32 %s3218, %s3221
          %s3223 = smul.addr %s3222, 8
          %s3224 = scalar_lea.hbm %s15, %s3223
          %s3225 = sshll.u32 %s3214, 4
          %s3226 = int_to_ptr.vmem [resolvable:$true] %s3225
          %s3227 = sshll.u32 %s3224, 4
          %s3228 = int_to_ptr.hbm [resolvable:$true] %s3227
          %3233 = dma.vmem_to_hbm [thread:$0]  %s3226, 256, %s3228, %s3211, 128, 128, 8
        $region120: #{tpu_custom_call.1} parent=79 // pred_fallthru
          _
      $region80: #{tpu_custom_call.1} parent=5 // pred_fallthru
        _
      %p3234 = scmp.le.s32.totalorder 2, %s31
      // Predicated region
      $region121: #{tpu_custom_call.1} parent=5 // pred_check
        %p3235 = pneg %p3234
      $region122: #{tpu_custom_call.1} parent=5 // pred_check_branch
        %3237 = sbr.rel (%p3235) target = $region124
      $region123: #{tpu_custom_call.1} parent=5 // pred_region
        %s3238 = ssub.s32 %s31, 2
        // Predicated region
        $region125: #{tpu_custom_call.1} parent=123 // pred_check
          %p3239 = pneg %p394
        $region126: #{tpu_custom_call.1} parent=123 // pred_check_branch
          %3241 = sbr.rel (%p3239) target = $region128
        $region127: #{tpu_custom_call.1} parent=123 // pred_region
          %s3242 = sand.u32 %s379, 1
          %s3243 = scalar_lea.sflag [#allocation6], %s3242
          %s3244 = sand.u32 %s379, 1
          %s3245 = smul.addr %s3244, 16
          %s3246 = scalar_lea.vmem [#allocation18], %s3245
          %3248 = dma.done %s3243, 256
        $region128: #{tpu_custom_call.1} parent=123 // pred_fallthru
          _
      $region124: #{tpu_custom_call.1} parent=5 // pred_fallthru
        _
    $region6: #{tpu_custom_call.1} parent=1 // loop_footer
      %s35 = sadd.s32 1, %s31
    $region7: #{tpu_custom_call.1} parent=1 // loop_footer_branch
      %30 = sbr.rel target = $region3
    $region8: #{tpu_custom_call.1} parent=1 // loop_exit
      _
    %3249 = vsyncpa [#allocation5], 1
    %s3250 = scalar_lea.sflag [#allocation5], 1
    %3251 = vsyncpa %s3250, 1
    %3252 = vsyncpa [#allocation8], 1
    %3253 = vsyncpa [#allocation11], 1
    %3254 = vsyncpa [#allocation14], 1
    %3255 = vsyncpa [#allocation17], 1
    %3256 = vsyncpa [#allocation6], 1
    %s3257 = scalar_lea.sflag [#allocation6], 1
    %3258 = vsyncpa %s3257, 1

// kernel: tpu_custom_call.1
$region0: #{tpu_custom_call.1}
  #allocation0 [shape = 'u32[]', space=smem, size = 0x4, offset = 0x4, fixed_abs, tag = 'smem constant byte address 0x4 - core index']
  #allocation1 [shape = 'u32[72,128]{1,0:T(1,128)}', space=vmem, size = 0x9000, scoped, tag = 'internal scratch']
  #allocation2 [shape = 'bf16[16,128]{1,0:T(8,128)(2,1)}', space=vmem, size = 0x1000, scoped, tag = 'scratch operand']
  #allocation3 [shape = 'bf16[16,128]{1,0:T(8,128)(2,1)}', space=vmem, size = 0x1000, scoped, tag = 'scratch operand']
  %s0 = inlined_call_operand.hbm [shape: f32[2,16,128], index: 0, kind: input, shape index: {}]
  %s1 = inlined_call_operand.hbm [shape: f32[1,128], index: 1, kind: input, shape index: {}]
  %s2 = inlined_call_operand.hbm [shape: bf16[128,128], index: 2, kind: input, shape index: {}]
  %s3 = inlined_call_operand.vmem [shape: f32[1,128], index: 3, kind: input, shape index: {}]
  %s4 = inlined_call_operand.hbm [shape: bf16[128,128], index: 4, kind: input, shape index: {}]
  %s5 = inlined_call_operand.vmem [shape: f32[1,128], index: 5, kind: input, shape index: {}]
  %s6 = inlined_call_operand.hbm [shape: bf16[128,128], index: 6, kind: input, shape index: {}]
  %s7 = inlined_call_operand.vmem [shape: f32[1,128], index: 7, kind: input, shape index: {}]
  %s8 = inlined_call_operand.hbm [shape: bf16[128,128], index: 8, kind: input, shape index: {}]
  %s9 = inlined_call_operand.vmem [shape: f32[1,128], index: 9, kind: input, shape index: {}]
  %s10 = inlined_call_operand.vmem [shape: f32[1,128], index: 10, kind: input, shape index: {}]
  %s11 = inlined_call_operand.hbm [shape: bf16[128,512], index: 11, kind: input, shape index: {}]
  %s12 = inlined_call_operand.vmem [shape: f32[1,512], index: 12, kind: input, shape index: {}]
  %s13 = inlined_call_operand.hbm [shape: bf16[512,128], index: 13, kind: input, shape index: {}]
  %s14 = inlined_call_operand.vmem [shape: f32[1,128], index: 14, kind: input, shape index: {}]
  %s15 = inlined_call_operand.hbm [shape: f32[2,16,128], index: 15, kind: output, shape index: {}]
  %s16 = sld [smem:[#allocation0]]
  $region129: #{tpu_custom_call.1} parent=0
    _
  %s18 = ssub.s32 1, %s16
  %s19 = scalar_select 0, %s18, %s16
  $region1: #{tpu_custom_call.1} parent=0
    #allocation4 [shape = 'u8[16384]{0}', space=vmem, size = 0x4000, scoped, tag = 'input window, operand 0']
    #allocation5 [shape = 's32[2]{0}', space=sflag, size = 0x8, scoped, tag = 'scoped memory for tpu_custom_call.1']
    #allocation6 [shape = 's32[2]{0}', space=sflag, size = 0x8, scoped, tag = 'scoped memory for tpu_custom_call.1']
    #allocation7 [shape = 'u8[512]{0}', space=vmem, size = 0x400, scoped, tag = 'input window, operand 1, single buffered']
    #allocation8 [shape = 's32[1]{0}', space=sflag, size = 0x4, scoped, tag = 'scoped memory for tpu_custom_call.1']
    #allocation9 [shape = 'u8[32768]{0}', space=vmem, size = 0x8000, scoped, tag = 'input window, operand 2, single buffered']
    #allocation10 [shape = 'u8[32768]{0}', space=vmem, size = 0x8000, scoped, tag = 'input window, operand 4, single buffered']
    #allocation11 [shape = 's32[1]{0}', space=sflag, size = 0x4, scoped, tag = 'scoped memory for tpu_custom_call.1']
    #allocation12 [shape = 'u8[32768]{0}', space=vmem, size = 0x8000, scoped, tag = 'input window, operand 6, single buffered']
    #allocation13 [shape = 'u8[32768]{0}', space=vmem, size = 0x8000, scoped, tag = 'input window, operand 8, single buffered']
    #allocation14 [shape = 's32[1]{0}', space=sflag, size = 0x4, scoped, tag = 'scoped memory for tpu_custom_call.1']
    #allocation15 [shape = 'u8[131072]{0}', space=vmem, size = 0x20000, scoped, tag = 'input window, operand 11, single buffered']
    #allocation16 [shape = 'u8[131072]{0}', space=vmem, size = 0x20000, scoped, tag = 'input window, operand 13, single buffered']
    #allocation17 [shape = 's32[1]{0}', space=sflag, size = 0x4, scoped, tag = 'scoped memory for tpu_custom_call.1']
    #allocation18 [shape = 'u8[16384]{0}', space=vmem, size = 0x4000, scoped, tag = 'output window, operand 0']
    %20 = vsyncpa [#allocation5], 0
    %s21 = scalar_lea.sflag [#allocation5], 1
    %22 = vsyncpa %s21, 0
    %23 = vsyncpa [#allocation8], 0
    %24 = vsyncpa [#allocation11], 0
    %25 = vsyncpa [#allocation14], 0
    %26 = vsyncpa [#allocation17], 0
    %27 = vsyncpa [#allocation6], 0
    %s28 = scalar_lea.sflag [#allocation6], 1
    %29 = vsyncpa %s28, 0
    loop: start=0, step=1, limit=4
    $region2: #{tpu_custom_call.1} parent=1 // loop_pre_header
      _
    $region3: #{tpu_custom_call.1} parent=1 // loop_header
      %s31 = sphi 0, %s35
      %p32 = scmp.ge.s32.totalorder %s31, 4
      %s38 = sphi 0, %s50
      %s39 = sphi 0, %s46
      %s40 = sphi 0, %s38
      %s41 = sphi 0, %s39
      %s42 = sphi 0, %s40
      %s43 = sphi 0, %s41
      %s53 = sphi 0, %s55
      %s56 = sphi 0, %s53
      %s57 = sphi 0, %s56
      %s73 = sphi 0, %s57
      %s77 = sphi 0, %s77
      %s79 = sphi 0, %s77
      %s80 = sphi 0, %s79
      %s94 = sphi 0, %s80
      %s98 = sphi 0, %s98
      %s100 = sphi 0, %s98
      %s101 = sphi 0, %s100
      %s115 = sphi 0, %s101
      %s119 = sphi 0, %s119
      %s121 = sphi 0, %s119
      %s122 = sphi 0, %s121
      %s136 = sphi 0, %s122
      %s140 = sphi 0, %s140
      %s142 = sphi 0, %s140
      %s143 = sphi 0, %s142
      %s157 = sphi 0, %s143
      %s161 = sphi 0, %s161
      %s163 = sphi 0, %s161
      %s164 = sphi 0, %s163
      %s178 = sphi 0, %s164
      %s182 = sphi 0, %s182
      %s184 = sphi 0, %s182
      %s185 = sphi 0, %s184
      %s199 = sphi 0, %s185
      %s203 = sphi 0, %s203
      %s205 = sphi 0, %s203
      %s206 = sphi 0, %s205
      %s220 = sphi 0, %s206
      %s224 = sphi 0, %s224
      %s226 = sphi 0, %s224
      %s227 = sphi 0, %s226
      %s241 = sphi 0, %s227
      %s245 = sphi 0, %s245
      %s247 = sphi 0, %s245
      %s248 = sphi 0, %s247
      %s262 = sphi 0, %s248
      %s266 = sphi 0, %s266
      %s268 = sphi 0, %s266
      %s269 = sphi 0, %s268
      %s283 = sphi 0, %s269
      %s287 = sphi 0, %s287
      %s289 = sphi 0, %s287
      %s290 = sphi 0, %s289
      %s304 = sphi 0, %s290
      %s308 = sphi 0, %s308
      %s310 = sphi 0, %s308
      %s311 = sphi 0, %s310
      %s325 = sphi 0, %s311
      %s329 = sphi 0, %s329
      %s331 = sphi 0, %s329
      %s332 = sphi 0, %s331
      %s346 = sphi 0, %s332
      %s350 = sphi 0, %s350
      %s352 = sphi 0, %s350
      %s353 = sphi 0, %s352
      %s367 = sphi 0, %s353
      %s375 = sphi 0, %s377
      %s378 = sphi 0, %s375
      %s379 = sphi 0, %s378
      %s395 = sphi 0, %s379
    $region4: #{tpu_custom_call.1} parent=1 // loop_header_branch
      %34 = sbr.rel (%p32) target = $region8
    $region5: #{tpu_custom_call.1} parent=1 // loop_body
      %s36 = ssub.s32 %s31, 1
      %s37 = ssub.s32 %s31, 2
      %s44 = sadd.s32 1, %s39
      %p45 = scmp.ge.s32.totalorder %s44, 1
      %s46 = scalar_select %p45, 0, %s44
      %s47 = sadd.s32 1, %s38
      %s48 = scalar_select %p45, %s47, %s38
      %p49 = scmp.ge.s32.totalorder %s48, 2
      %s50 = scalar_select %p49, 0, %s48
      %s51 = ssub.s32 %s38, %s50
      %p52 = scmp.eq.s32.totalorder %s51, 0
      %s54 = sadd.s32 %s53, 1
      %s55 = scalar_select %p52, %s53, %s54
      %p58 = pneg %p52
      %p59 = scmp.eq.s32.totalorder %s31, 1
      %p60 = por %p58, %p59
      %p61 = scmp.ne.s32.totalorder %s53, %s56
      %p62 = scmp.eq.s32.totalorder %s31, 0
      %p63 = por %p61, %p62
      %p64 = scmp.ne.s32.totalorder %s53, %s56
      %p65 = scmp.eq.s32.totalorder %s36, 1
      %p66 = por %p64, %p65
      %p67 = scmp.ne.s32.totalorder %s56, %s57
      %p68 = scmp.eq.s32.totalorder %s36, 0
      %p69 = por %p67, %p68
      %p70 = scmp.ne.s32.totalorder %s56, %s57
      %p71 = scmp.eq.s32.totalorder %s37, 1
      %p72 = por %p70, %p71
      %p74 = scmp.ne.s32.totalorder %s57, %s73
      %p75 = scmp.eq.s32.totalorder %s37, 0
      %p76 = por %p74, %p75
      %s78 = sadd.s32 %s77, 1
      %p81 = scmp.eq.s32.totalorder %s31, 1
      %p82 = scmp.ne.s32.totalorder %s77, %s79
      %p83 = scmp.eq.s32.totalorder %s31, 0
      %p84 = por %p82, %p83
      %p85 = scmp.ne.s32.totalorder %s77, %s79
      %p86 = scmp.eq.s32.totalorder %s36, 1
      %p87 = por %p85, %p86
      %p88 = scmp.ne.s32.totalorder %s79, %s80
      %p89 = scmp.eq.s32.totalorder %s36, 0
      %p90 = por %p88, %p89
      %p91 = scmp.ne.s32.totalorder %s79, %s80
      %p92 = scmp.eq.s32.totalorder %s37, 1
      %p93 = por %p91, %p92
      %p95 = scmp.ne.s32.totalorder %s80, %s94
      %p96 = scmp.eq.s32.totalorder %s37, 0
      %p97 = por %p95, %p96
      %s99 = sadd.s32 %s98, 1
      %p102 = scmp.eq.s32.totalorder %s31, 1
      %p103 = scmp.ne.s32.totalorder %s98, %s100
      %p104 = scmp.eq.s32.totalorder %s31, 0
      %p105 = por %p103, %p104
      %p106 = scmp.ne.s32.totalorder %s98, %s100
      %p107 = scmp.eq.s32.totalorder %s36, 1
      %p108 = por %p106, %p107
      %p109 = scmp.ne.s32.totalorder %s100, %s101
      %p110 = scmp.eq.s32.totalorder %s36, 0
      %p111 = por %p109, %p110
      %p112 = scmp.ne.s32.totalorder %s100, %s101
      %p113 = scmp.eq.s32.totalorder %s37, 1
      %p114 = por %p112, %p113
      %p116 = scmp.ne.s32.totalorder %s101, %s115
      %p117 = scmp.eq.s32.totalorder %s37, 0
      %p118 = por %p116, %p117
      %s120 = sadd.s32 %s119, 1
      %p123 = scmp.eq.s32.totalorder %s31, 1
      %p124 = scmp.ne.s32.totalorder %s119, %s121
      %p125 = scmp.eq.s32.totalorder %s31, 0
      %p126 = por %p124, %p125
      %p127 = scmp.ne.s32.totalorder %s119, %s121
      %p128 = scmp.eq.s32.totalorder %s36, 1
      %p129 = por %p127, %p128
      %p130 = scmp.ne.s32.totalorder %s121, %s122
      %p131 = scmp.eq.s32.totalorder %s36, 0
      %p132 = por %p130, %p131
      %p133 = scmp.ne.s32.totalorder %s121, %s122
      %p134 = scmp.eq.s32.totalorder %s37, 1
      %p135 = por %p133, %p134
      %p137 = scmp.ne.s32.totalorder %s122, %s136
      %p138 = scmp.eq.s32.totalorder %s37, 0
      %p139 = por %p137, %p138
      %s141 = sadd.s32 %s140, 1
      %p144 = scmp.eq.s32.totalorder %s31, 1
      %p145 = scmp.ne.s32.totalorder %s140, %s142
      %p146 = scmp.eq.s32.totalorder %s31, 0
      %p147 = por %p145, %p146
      %p148 = scmp.ne.s32.totalorder %s140, %s142
      %p149 = scmp.eq.s32.totalorder %s36, 1
      %p150 = por %p148, %p149
      %p151 = scmp.ne.s32.totalorder %s142, %s143
      %p152 = scmp.eq.s32.totalorder %s36, 0
      %p153 = por %p151, %p152
      %p154 = scmp.ne.s32.totalorder %s142, %s143
      %p155 = scmp.eq.s32.totalorder %s37, 1
      %p156 = por %p154, %p155
      %p158 = scmp.ne.s32.totalorder %s143, %s157
      %p159 = scmp.eq.s32.totalorder %s37, 0
      %p160 = por %p158, %p159
      %s162 = sadd.s32 %s161, 1
      %p165 = scmp.eq.s32.totalorder %s31, 1
      %p166 = scmp.ne.s32.totalorder %s161, %s163
      %p167 = scmp.eq.s32.totalorder %s31, 0
      %p168 = por %p166, %p167
      %p169 = scmp.ne.s32.totalorder %s161, %s163
      %p170 = scmp.eq.s32.totalorder %s36, 1
      %p171 = por %p169, %p170
      %p172 = scmp.ne.s32.totalorder %s163, %s164
      %p173 = scmp.eq.s32.totalorder %s36, 0
      %p174 = por %p172, %p173
      %p175 = scmp.ne.s32.totalorder %s163, %s164
      %p176 = scmp.eq.s32.totalorder %s37, 1
      %p177 = por %p175, %p176
      %p179 = scmp.ne.s32.totalorder %s164, %s178
      %p180 = scmp.eq.s32.totalorder %s37, 0
      %p181 = por %p179, %p180
      %s183 = sadd.s32 %s182, 1
      %p186 = scmp.eq.s32.totalorder %s31, 1
      %p187 = scmp.ne.s32.totalorder %s182, %s184
      %p188 = scmp.eq.s32.totalorder %s31, 0
      %p189 = por %p187, %p188
      %p190 = scmp.ne.s32.totalorder %s182, %s184
      %p191 = scmp.eq.s32.totalorder %s36, 1
      %p192 = por %p190, %p191
      %p193 = scmp.ne.s32.totalorder %s184, %s185
      %p194 = scmp.eq.s32.totalorder %s36, 0
      %p195 = por %p193, %p194
      %p196 = scmp.ne.s32.totalorder %s184, %s185
      %p197 = scmp.eq.s32.totalorder %s37, 1
      %p198 = por %p196, %p197
      %p200 = scmp.ne.s32.totalorder %s185, %s199
      %p201 = scmp.eq.s32.totalorder %s37, 0
      %p202 = por %p200, %p201
      %s204 = sadd.s32 %s203, 1
      %p207 = scmp.eq.s32.totalorder %s31, 1
      %p208 = scmp.ne.s32.totalorder %s203, %s205
      %p209 = scmp.eq.s32.totalorder %s31, 0
      %p210 = por %p208, %p209
      %p211 = scmp.ne.s32.totalorder %s203, %s205
      %p212 = scmp.eq.s32.totalorder %s36, 1
      %p213 = por %p211, %p212
      %p214 = scmp.ne.s32.totalorder %s205, %s206
      %p215 = scmp.eq.s32.totalorder %s36, 0
      %p216 = por %p214, %p215
      %p217 = scmp.ne.s32.totalorder %s205, %s206
      %p218 = scmp.eq.s32.totalorder %s37, 1
      %p219 = por %p217, %p218
      %p221 = scmp.ne.s32.totalorder %s206, %s220
      %p222 = scmp.eq.s32.totalorder %s37, 0
      %p223 = por %p221, %p222
      %s225 = sadd.s32 %s224, 1
      %p228 = scmp.eq.s32.totalorder %s31, 1
      %p229 = scmp.ne.s32.totalorder %s224, %s226
      %p230 = scmp.eq.s32.totalorder %s31, 0
      %p231 = por %p229, %p230
      %p232 = scmp.ne.s32.totalorder %s224, %s226
      %p233 = scmp.eq.s32.totalorder %s36, 1
      %p234 = por %p232, %p233
      %p235 = scmp.ne.s32.totalorder %s226, %s227
      %p236 = scmp.eq.s32.totalorder %s36, 0
      %p237 = por %p235, %p236
      %p238 = scmp.ne.s32.totalorder %s226, %s227
      %p239 = scmp.eq.s32.totalorder %s37, 1
      %p240 = por %p238, %p239
      %p242 = scmp.ne.s32.totalorder %s227, %s241
      %p243 = scmp.eq.s32.totalorder %s37, 0
      %p244 = por %p242, %p243
      %s246 = sadd.s32 %s245, 1
      %p249 = scmp.eq.s32.totalorder %s31, 1
      %p250 = scmp.ne.s32.totalorder %s245, %s247
      %p251 = scmp.eq.s32.totalorder %s31, 0
      %p252 = por %p250, %p251
      %p253 = scmp.ne.s32.totalorder %s245, %s247
      %p254 = scmp.eq.s32.totalorder %s36, 1
      %p255 = por %p253, %p254
      %p256 = scmp.ne.s32.totalorder %s247, %s248
      %p257 = scmp.eq.s32.totalorder %s36, 0
      %p258 = por %p256, %p257
      %p259 = scmp.ne.s32.totalorder %s247, %s248
      %p260 = scmp.eq.s32.totalorder %s37, 1
      %p261 = por %p259, %p260
      %p263 = scmp.ne.s32.totalorder %s248, %s262
      %p264 = scmp.eq.s32.totalorder %s37, 0
      %p265 = por %p263, %p264
      %s267 = sadd.s32 %s266, 1
      %p270 = scmp.eq.s32.totalorder %s31, 1
      %p271 = scmp.ne.s32.totalorder %s266, %s268
      %p272 = scmp.eq.s32.totalorder %s31, 0
      %p273 = por %p271, %p272
      %p274 = scmp.ne.s32.totalorder %s266, %s268
      %p275 = scmp.eq.s32.totalorder %s36, 1
      %p276 = por %p274, %p275
      %p277 = scmp.ne.s32.totalorder %s268, %s269
      %p278 = scmp.eq.s32.totalorder %s36, 0
      %p279 = por %p277, %p278
      %p280 = scmp.ne.s32.totalorder %s268, %s269
      %p281 = scmp.eq.s32.totalorder %s37, 1
      %p282 = por %p280, %p281
      %p284 = scmp.ne.s32.totalorder %s269, %s283
      %p285 = scmp.eq.s32.totalorder %s37, 0
      %p286 = por %p284, %p285
      %s288 = sadd.s32 %s287, 1
      %p291 = scmp.eq.s32.totalorder %s31, 1
      %p292 = scmp.ne.s32.totalorder %s287, %s289
      %p293 = scmp.eq.s32.totalorder %s31, 0
      %p294 = por %p292, %p293
      %p295 = scmp.ne.s32.totalorder %s287, %s289
      %p296 = scmp.eq.s32.totalorder %s36, 1
      %p297 = por %p295, %p296
      %p298 = scmp.ne.s32.totalorder %s289, %s290
      %p299 = scmp.eq.s32.totalorder %s36, 0
      %p300 = por %p298, %p299
      %p301 = scmp.ne.s32.totalorder %s289, %s290
      %p302 = scmp.eq.s32.totalorder %s37, 1
      %p303 = por %p301, %p302
      %p305 = scmp.ne.s32.totalorder %s290, %s304
      %p306 = scmp.eq.s32.totalorder %s37, 0
      %p307 = por %p305, %p306
      %s309 = sadd.s32 %s308, 1
      %p312 = scmp.eq.s32.totalorder %s31, 1
      %p313 = scmp.ne.s32.totalorder %s308, %s310
      %p314 = scmp.eq.s32.totalorder %s31, 0
      %p315 = por %p313, %p314
      %p316 = scmp.ne.s32.totalorder %s308, %s310
      %p317 = scmp.eq.s32.totalorder %s36, 1
      %p318 = por %p316, %p317
      %p319 = scmp.ne.s32.totalorder %s310, %s311
      %p320 = scmp.eq.s32.totalorder %s36, 0
      %p321 = por %p319, %p320
      %p322 = scmp.ne.s32.totalorder %s310, %s311
      %p323 = scmp.eq.s32.totalorder %s37, 1
      %p324 = por %p322, %p323
      %p326 = scmp.ne.s32.totalorder %s311, %s325
      %p327 = scmp.eq.s32.totalorder %s37, 0
      %p328 = por %p326, %p327
      %s330 = sadd.s32 %s329, 1
      %p333 = scmp.eq.s32.totalorder %s31, 1
      %p334 = scmp.ne.s32.totalorder %s329, %s331
      %p335 = scmp.eq.s32.totalorder %s31, 0
      %p336 = por %p334, %p335
      %p337 = scmp.ne.s32.totalorder %s329, %s331
      %p338 = scmp.eq.s32.totalorder %s36, 1
      %p339 = por %p337, %p338
      %p340 = scmp.ne.s32.totalorder %s331, %s332
      %p341 = scmp.eq.s32.totalorder %s36, 0
      %p342 = por %p340, %p341
      %p343 = scmp.ne.s32.totalorder %s331, %s332
      %p344 = scmp.eq.s32.totalorder %s37, 1
      %p345 = por %p343, %p344
      %p347 = scmp.ne.s32.totalorder %s332, %s346
      %p348 = scmp.eq.s32.totalorder %s37, 0
      %p349 = por %p347, %p348
      %s351 = sadd.s32 %s350, 1
      %p354 = scmp.eq.s32.totalorder %s31, 1
      %p355 = scmp.ne.s32.totalorder %s350, %s352
      %p356 = scmp.eq.s32.totalorder %s31, 0
      %p357 = por %p355, %p356
      %p358 = scmp.ne.s32.totalorder %s350, %s352
      %p359 = scmp.eq.s32.totalorder %s36, 1
      %p360 = por %p358, %p359
      %p361 = scmp.ne.s32.totalorder %s352, %s353
      %p362 = scmp.eq.s32.totalorder %s36, 0
      %p363 = por %p361, %p362
      %p364 = scmp.ne.s32.totalorder %s352, %s353
      %p365 = scmp.eq.s32.totalorder %s37, 1
      %p366 = por %p364, %p365
      %p368 = scmp.ne.s32.totalorder %s353, %s367
      %p369 = scmp.eq.s32.totalorder %s37, 0
      %p370 = por %p368, %p369
      %s371 = ssub.s32 %s38, %s50
      %s372 = ssub.s32 %s39, %s46
      %s373 = sor.u32 %s371, %s372
      %p374 = scmp.eq.s32.totalorder %s373, 0
      %s376 = sadd.s32 %s375, 1
      %s377 = scalar_select %p374, %s375, %s376
      %p380 = pneg %p374
      %p381 = scmp.eq.s32.totalorder %s31, 1
      %p382 = por %p380, %p381
      %p383 = scmp.ne.s32.totalorder %s375, %s378
      %p384 = scmp.eq.s32.totalorder %s31, 0
      %p385 = por %p383, %p384
      %p386 = scmp.ne.s32.totalorder %s375, %s378
      %p387 = scmp.eq.s32.totalorder %s36, 1
      %p388 = por %p386, %p387
      %p389 = scmp.ne.s32.totalorder %s378, %s379
      %p390 = scmp.eq.s32.totalorder %s36, 0
      %p391 = por %p389, %p390
      %p392 = scmp.ne.s32.totalorder %s378, %s379
      %p393 = scmp.eq.s32.totalorder %s37, 1
      %p394 = por %p392, %p393
      %p396 = scmp.ne.s32.totalorder %s379, %s395
      %p397 = scmp.eq.s32.totalorder %s37, 0
      %p398 = por %p396, %p397
      %p399 = scmp.le.s32.totalorder 1, %s31
      %p400 = scmp.lt.s32.totalorder %s31, 3
      %p401 = pnand %p399, %p400
      %p402 = pneg %p401
      // Predicated region
      $region9: #{tpu_custom_call.1} parent=5 // pred_check
        _
      $region10: #{tpu_custom_call.1} parent=5 // pred_check_branch
        %404 = sbr.rel (%p401) target = $region12
      $region11: #{tpu_custom_call.1} parent=5 // pred_region
        %s405 = ssub.s32 %s31, 1
        // Predicated region
        $region13: #{tpu_custom_call.1} parent=11 // pred_check
          %p406 = pneg %p90
        $region14: #{tpu_custom_call.1} parent=11 // pred_check_branch
          %408 = sbr.rel (%p406) target = $region16
        $region15: #{tpu_custom_call.1} parent=11 // pred_region
          %410 = vsyncadd [#allocation8], 0
          %s412 = sshll.u32 %s1, 4
          %s413 = int_to_ptr.hbm [resolvable:$true] %s412
          %s414 = sshll.u32 [#allocation7], 4
          %s415 = int_to_ptr.vmem [resolvable:$true] %s414
          %417 = dma.hbm_to_vmem [thread:$0]  %s413, 16, %s415, [#allocation8]
        $region16: #{tpu_custom_call.1} parent=11 // pred_fallthru
          _
        // Predicated region
        $region17: #{tpu_custom_call.1} parent=11 // pred_check
          %p418 = pneg %p111
        $region18: #{tpu_custom_call.1} parent=11 // pred_check_branch
          %420 = sbr.rel (%p418) target = $region20
        $region19: #{tpu_custom_call.1} parent=11 // pred_region
          %422 = vsyncadd [#allocation8], 0
          %s423 = sshll.u32 %s2, 4
          %s424 = int_to_ptr.hbm [resolvable:$true] %s423
          %s425 = sshll.u32 [#allocation9], 4
          %s426 = int_to_ptr.vmem [resolvable:$true] %s425
          %431 = dma.hbm_to_vmem [thread:$0]  %s424, 1024, %s426, [#allocation8], 64, 64, 4
        $region20: #{tpu_custom_call.1} parent=11 // pred_fallthru
          _
        // Predicated region
        $region21: #{tpu_custom_call.1} parent=11 // pred_check
          %p432 = pneg %p132
        $region22: #{tpu_custom_call.1} parent=11 // pred_check_branch
          %434 = sbr.rel (%p432) target = $region24
        $region23: #{tpu_custom_call.1} parent=11 // pred_region
          _
        $region24: #{tpu_custom_call.1} parent=11 // pred_fallthru
          _
        // Predicated region
        $region25: #{tpu_custom_call.1} parent=11 // pred_check
          %p435 = pneg %p153
        $region26: #{tpu_custom_call.1} parent=11 // pred_check_branch
          %437 = sbr.rel (%p435) target = $region28
        $region27: #{tpu_custom_call.1} parent=11 // pred_region
          %439 = vsyncadd [#allocation11], 0
          %s440 = sshll.u32 %s4, 4
          %s441 = int_to_ptr.hbm [resolvable:$true] %s440
          %s442 = sshll.u32 [#allocation10], 4
          %s443 = int_to_ptr.vmem [resolvable:$true] %s442
          %448 = dma.hbm_to_vmem [thread:$0]  %s441, 1024, %s443, [#allocation11], 64, 64, 4
        $region28: #{tpu_custom_call.1} parent=11 // pred_fallthru
          _
        // Predicated region
        $region29: #{tpu_custom_call.1} parent=11 // pred_check
          %p449 = pneg %p174
        $region30: #{tpu_custom_call.1} parent=11 // pred_check_branch
          %451 = sbr.rel (%p449) target = $region32
        $region31: #{tpu_custom_call.1} parent=11 // pred_region
          _
        $region32: #{tpu_custom_call.1} parent=11 // pred_fallthru
          _
        // Predicated region
        $region33: #{tpu_custom_call.1} parent=11 // pred_check
          %p452 = pneg %p195
        $region34: #{tpu_custom_call.1} parent=11 // pred_check_branch
          %454 = sbr.rel (%p452) target = $region36
        $region35: #{tpu_custom_call.1} parent=11 // pred_region
          %456 = vsyncadd [#allocation11], 0
          %s457 = sshll.u32 %s6, 4
          %s458 = int_to_ptr.hbm [resolvable:$true] %s457
          %s459 = sshll.u32 [#allocation12], 4
          %s460 = int_to_ptr.vmem [resolvable:$true] %s459
          %465 = dma.hbm_to_vmem [thread:$0]  %s458, 1024, %s460, [#allocation11], 64, 64, 4
        $region36: #{tpu_custom_call.1} parent=11 // pred_fallthru
          _
        // Predicated region
        $region37: #{tpu_custom_call.1} parent=11 // pred_check
          %p466 = pneg %p216
        $region38: #{tpu_custom_call.1} parent=11 // pred_check_branch
          %468 = sbr.rel (%p466) target = $region40
        $region39: #{tpu_custom_call.1} parent=11 // pred_region
          _
        $region40: #{tpu_custom_call.1} parent=11 // pred_fallthru
          _
        // Predicated region
        $region41: #{tpu_custom_call.1} parent=11 // pred_check
          %p469 = pneg %p237
        $region42: #{tpu_custom_call.1} parent=11 // pred_check_branch
          %471 = sbr.rel (%p469) target = $region44
        $region43: #{tpu_custom_call.1} parent=11 // pred_region
          %473 = vsyncadd [#allocation14], 0
          %s474 = sshll.u32 %s8, 4
          %s475 = int_to_ptr.hbm [resolvable:$true] %s474
          %s476 = sshll.u32 [#allocation13], 4
          %s477 = int_to_ptr.vmem [resolvable:$true] %s476
          %482 = dma.hbm_to_vmem [thread:$0]  %s475, 1024, %s477, [#allocation14], 64, 64, 4
        $region44: #{tpu_custom_call.1} parent=11 // pred_fallthru
          _
        // Predicated region
        $region45: #{tpu_custom_call.1} parent=11 // pred_check
          %p483 = pneg %p258
        $region46: #{tpu_custom_call.1} parent=11 // pred_check_branch
          %485 = sbr.rel (%p483) target = $region48
        $region47: #{tpu_custom_call.1} parent=11 // pred_region
          _
        $region48: #{tpu_custom_call.1} parent=11 // pred_fallthru
          _
        // Predicated region
        $region49: #{tpu_custom_call.1} parent=11 // pred_check
          %p486 = pneg %p279
        $region50: #{tpu_custom_call.1} parent=11 // pred_check_branch
          %488 = sbr.rel (%p486) target = $region52
        $region51: #{tpu_custom_call.1} parent=11 // pred_region
          _
        $region52: #{tpu_custom_call.1} parent=11 // pred_fallthru
          _
        // Predicated region
        $region53: #{tpu_custom_call.1} parent=11 // pred_check
          %p489 = pneg %p300
        $region54: #{tpu_custom_call.1} parent=11 // pred_check_branch
          %491 = sbr.rel (%p489) target = $region56
        $region55: #{tpu_custom_call.1} parent=11 // pred_region
          %493 = vsyncadd [#allocation14], 0
          %s494 = sshll.u32 %s11, 4
          %s495 = int_to_ptr.hbm [resolvable:$true] %s494
          %s496 = sshll.u32 [#allocation15], 4
          %s497 = int_to_ptr.vmem [resolvable:$true] %s496
          %502 = dma.hbm_to_vmem [thread:$0]  %s495, 4096, %s497, [#allocation14], 256, 256, 16
        $region56: #{tpu_custom_call.1} parent=11 // pred_fallthru
          _
        // Predicated region
        $region57: #{tpu_custom_call.1} parent=11 // pred_check
          %p503 = pneg %p321
        $region58: #{tpu_custom_call.1} parent=11 // pred_check_branch
          %505 = sbr.rel (%p503) target = $region60
        $region59: #{tpu_custom_call.1} parent=11 // pred_region
          _
        $region60: #{tpu_custom_call.1} parent=11 // pred_fallthru
          _
        // Predicated region
        $region61: #{tpu_custom_call.1} parent=11 // pred_check
          %p506 = pneg %p342
        $region62: #{tpu_custom_call.1} parent=11 // pred_check_branch
          %508 = sbr.rel (%p506) target = $region64
        $region63: #{tpu_custom_call.1} parent=11 // pred_region
          %510 = vsyncadd [#allocation17], 0
          %s511 = sshll.u32 %s13, 4
          %s512 = int_to_ptr.hbm [resolvable:$true] %s511
          %s513 = sshll.u32 [#allocation16], 4
          %s514 = int_to_ptr.vmem [resolvable:$true] %s513
          %519 = dma.hbm_to_vmem [thread:$0]  %s512, 4096, %s514, [#allocation17], 64, 64, 4
        $region64: #{tpu_custom_call.1} parent=11 // pred_fallthru
          _
        // Predicated region
        $region65: #{tpu_custom_call.1} parent=11 // pred_check
          %p520 = pneg %p363
        $region66: #{tpu_custom_call.1} parent=11 // pred_check_branch
          %522 = sbr.rel (%p520) target = $region68
        $region67: #{tpu_custom_call.1} parent=11 // pred_region
          _
        $region68: #{tpu_custom_call.1} parent=11 // pred_fallthru
          _
      $region12: #{tpu_custom_call.1} parent=5 // pred_fallthru
        _
      %p523 = scmp.lt.s32.totalorder %s31, 2
      // Predicated region
      $region69: #{tpu_custom_call.1} parent=5 // pred_check
        %p524 = pneg %p523
      $region70: #{tpu_custom_call.1} parent=5 // pred_check_branch
        %526 = sbr.rel (%p524) target = $region72
      $region71: #{tpu_custom_call.1} parent=5 // pred_region
        // Predicated region
        $region73: #{tpu_custom_call.1} parent=71 // pred_check
          %p527 = pneg %p63
        $region74: #{tpu_custom_call.1} parent=71 // pred_check_branch
          %529 = sbr.rel (%p527) target = $region76
        $region75: #{tpu_custom_call.1} parent=71 // pred_region
          %s530 = sand.u32 %s53, 1
          %s531 = scalar_lea.sflag [#allocation5], %s530
          %s532 = sand.u32 %s53, 1
          %s533 = smul.addr %s532, 16
          %s534 = scalar_lea.vmem [#allocation4], %s533
          %536 = vsyncadd %s531, 0
          %s537 = smul.addr %s38, 2
          %s538 = smul.addr %s537, 8
          %s539 = scalar_lea.hbm %s0, %s538
          %s540 = sshll.u32 %s539, 4
          %s541 = int_to_ptr.hbm [resolvable:$true] %s540
          %s542 = sshll.u32 %s534, 4
          %s543 = int_to_ptr.vmem [resolvable:$true] %s542
          %548 = dma.hbm_to_vmem [thread:$0]  %s541, 256, %s543, %s531, 128, 128, 8
        $region76: #{tpu_custom_call.1} parent=71 // pred_fallthru
          _
      $region72: #{tpu_custom_call.1} parent=5 // pred_fallthru
        _
      %p549 = scmp.le.s32.totalorder 1, %s31
      %p550 = scmp.lt.s32.totalorder %s31, 3
      %p551 = pnand %p549, %p550
      %p552 = pneg %p551
      // Predicated region
      $region77: #{tpu_custom_call.1} parent=5 // pred_check
        _
      $region78: #{tpu_custom_call.1} parent=5 // pred_check_branch
        %554 = sbr.rel (%p551) target = $region80
      $region79: #{tpu_custom_call.1} parent=5 // pred_region
        %s555 = ssub.s32 %s31, 1
        %s556 = sand.u32 %s56, 1
        %s557 = scalar_lea.sflag [#allocation5], %s556
        %s558 = sand.u32 %s56, 1
        %s559 = smul.addr %s558, 16
        %s560 = scalar_lea.vmem [#allocation4], %s559
        // Predicated region
        $region81: #{tpu_custom_call.1} parent=79 // pred_check
          %p561 = pneg %p69
        $region82: #{tpu_custom_call.1} parent=79 // pred_check_branch
          %563 = sbr.rel (%p561) target = $region84
        $region83: #{tpu_custom_call.1} parent=79 // pred_region
          %565 = dma.done %s557, 256
        $region84: #{tpu_custom_call.1} parent=79 // pred_fallthru
          _
        // Predicated region
        $region85: #{tpu_custom_call.1} parent=79 // pred_check
          %p566 = pneg %p90
        $region86: #{tpu_custom_call.1} parent=79 // pred_check_branch
          %568 = sbr.rel (%p566) target = $region88
        $region87: #{tpu_custom_call.1} parent=79 // pred_region
          %570 = dma.done [#allocation8], 16
        $region88: #{tpu_custom_call.1} parent=79 // pred_fallthru
          _
        // Predicated region
        $region89: #{tpu_custom_call.1} parent=79 // pred_check
          %p571 = pneg %p111
        $region90: #{tpu_custom_call.1} parent=79 // pred_check_branch
          %573 = sbr.rel (%p571) target = $region92
        $region91: #{tpu_custom_call.1} parent=79 // pred_region
          %575 = dma.done [#allocation8], 1024
        $region92: #{tpu_custom_call.1} parent=79 // pred_fallthru
          _
        // Predicated region
        $region93: #{tpu_custom_call.1} parent=79 // pred_check
          %p576 = pneg %p153
        $region94: #{tpu_custom_call.1} parent=79 // pred_check_branch
          %578 = sbr.rel (%p576) target = $region96
        $region95: #{tpu_custom_call.1} parent=79 // pred_region
          %580 = dma.done [#allocation11], 1024
        $region96: #{tpu_custom_call.1} parent=79 // pred_fallthru
          _
        // Predicated region
        $region97: #{tpu_custom_call.1} parent=79 // pred_check
          %p581 = pneg %p195
        $region98: #{tpu_custom_call.1} parent=79 // pred_check_branch
          %583 = sbr.rel (%p581) target = $region100
        $region99: #{tpu_custom_call.1} parent=79 // pred_region
          %585 = dma.done [#allocation11], 1024
        $region100: #{tpu_custom_call.1} parent=79 // pred_fallthru
          _
        // Predicated region
        $region101: #{tpu_custom_call.1} parent=79 // pred_check
          %p586 = pneg %p237
        $region102: #{tpu_custom_call.1} parent=79 // pred_check_branch
          %588 = sbr.rel (%p586) target = $region104
        $region103: #{tpu_custom_call.1} parent=79 // pred_region
          %590 = dma.done [#allocation14], 1024
        $region104: #{tpu_custom_call.1} parent=79 // pred_fallthru
          _
        // Predicated region
        $region105: #{tpu_custom_call.1} parent=79 // pred_check
          %p591 = pneg %p300
        $region106: #{tpu_custom_call.1} parent=79 // pred_check_branch
          %593 = sbr.rel (%p591) target = $region108
        $region107: #{tpu_custom_call.1} parent=79 // pred_region
          %595 = dma.done [#allocation14], 4096
        $region108: #{tpu_custom_call.1} parent=79 // pred_fallthru
          _
        // Predicated region
        $region109: #{tpu_custom_call.1} parent=79 // pred_check
          %p596 = pneg %p342
        $region110: #{tpu_custom_call.1} parent=79 // pred_check_branch
          %598 = sbr.rel (%p596) target = $region112
        $region111: #{tpu_custom_call.1} parent=79 // pred_region
          %600 = dma.done [#allocation17], 4096
        $region112: #{tpu_custom_call.1} parent=79 // pred_fallthru
          _
        %s601 = sand.u32 %s56, 1
        %s602 = scalar_lea.sflag [#allocation5], %s601
        %s603 = sand.u32 %s56, 1
        %s604 = smul.addr %s603, 16
        %s605 = scalar_lea.vmem [#allocation4], %s604
        %p606 = pneg %p69
        %p607 = pneg %p66
        %p608 = pneg %p90
        %p609 = pneg %p87
        %p610 = pneg %p111
        %p611 = pneg %p108
        %p612 = pneg %p132
        %p613 = pneg %p129
        %p614 = pneg %p153
        %p615 = pneg %p150
        %p616 = pneg %p174
        %p617 = pneg %p171
        %p618 = pneg %p195
        %p619 = pneg %p192
        %p620 = pneg %p216
        %p621 = pneg %p213
        %p622 = pneg %p237
        %p623 = pneg %p234
        %p624 = pneg %p258
        %p625 = pneg %p255
        %p626 = pneg %p279
        %p627 = pneg %p276
        %p628 = pneg %p300
        %p629 = pneg %p297
        %p630 = pneg %p321
        %p631 = pneg %p318
        %p632 = pneg %p342
        %p633 = pneg %p339
        %p634 = pneg %p363
        %p635 = pneg %p360
        %p636 = pneg %p391
        %p637 = pneg %p388
        %s638 = sand.u32 %s378, 1
        %s639 = scalar_lea.sflag [#allocation6], %s638
        %s640 = sand.u32 %s378, 1
        %s641 = smul.addr %s640, 16
        %s642 = scalar_lea.vmem [#allocation18], %s641
        %s643 = smul.u32 2, %s41
        %v645 = vld [vmem:[#allocation7] sm:$0x1]
        %p646 = scmp.eq.s32.totalorder %s41, 0
        // Predicated region
        $region113: #{tpu_custom_call.1} parent=79 // pred_check
          %p647 = pneg %p646
        $region114: #{tpu_custom_call.1} parent=79 // pred_check_branch
          %649 = sbr.rel (%p647) target = $region116
        $region115: #{tpu_custom_call.1} parent=79 // pred_region
          %v650 = vld [vmem:[%s560] sm:$0xff]
          %v651 = vld [vmem:[%s560 + $0x8] sm:$0xff]
          %v652 = vmul.f32 %v650, %v650
          %v653 = vmul.f32 %v651, %v651
          %654 = vadd.xlane.f32.xlu0 %v652
          %v655 = vpop.xlane.xlu0 %654
          %656 = vadd.xlane.f32.xlu0 %v653
          %v657 = vpop.xlane.xlu0 %656
          %v658 = vrcp.pop 128.0
          %v659 = vmul.f32 128.0, %v658
          %v660 = vsub.f32 1.0, %v659
          %v661 = vmul.f32 %v658, %v660
          %v662 = vadd.f32 %v658, %v661
          %vm663 = vweird.f32 %v658
          %v664 = vsel %vm663, %v658, %v662
          %v665 = vmul.f32 %v655, %v664
          %v666 = vmul.f32 %v657, %v664
          %v667 = vadd.f32 %v665, 1e-06
          %v668 = vadd.f32 %v666, 1e-06
          %v669 = vrsqrt.pop %v667
          %v670 = vmul.f32 %v669, %v667
          %v671 = vmul.f32 %v670, %v669
          %v672 = vmul.f32 0.5, %v671
          %v673 = vsub.f32 1.5, %v672
          %v674 = vmul.f32 %v669, %v673
          %vm675 = vweird.f32 %v667
          %vm676 = vweird.f32 %v669
          %vm677 = vmor %vm675, %vm676
          %v678 = vsel %vm677, %v669, %v674
          %v679 = vrsqrt.pop %v668
          %v680 = vmul.f32 %v679, %v668
          %v681 = vmul.f32 %v680, %v679
          %v682 = vmul.f32 0.5, %v681
          %v683 = vsub.f32 1.5, %v682
          %v684 = vmul.f32 %v679, %v683
          %vm685 = vweird.f32 %v668
          %vm686 = vweird.f32 %v679
          %vm687 = vmor %vm685, %vm686
          %v688 = vsel %vm687, %v679, %v684
          %v689 = vmul.f32 %v650, %v678
          %v690 = vmul.f32 %v651, %v688
          %v692 = vperm.slane %v645, 0
          %v694 = vmul.f32 %v689, %v692
          %v695 = vmul.f32 %v690, %v692
          %v696 = vpack.c.bf16 %v695, %v694
          %v697 = vld [vmem:[#allocation10] sm:$0xf]
          %v698 = vld [vmem:[#allocation10 + $0x4] sm:$0xf]
          %v699 = vld [vmem:[#allocation10 + $0x8] sm:$0xf]
          %v700 = vld [vmem:[#allocation10 + $0xc] sm:$0xf]
          %v701 = vld [vmem:[#allocation10 + $0x10] sm:$0xf]
          %v702 = vld [vmem:[#allocation10 + $0x14] sm:$0xf]
          %v703 = vld [vmem:[#allocation10 + $0x18] sm:$0xf]
          %v704 = vld [vmem:[#allocation10 + $0x1c] sm:$0xf]
          %v705 = vld [vmem:[#allocation10 + $0x20] sm:$0xf]
          %v706 = vld [vmem:[#allocation10 + $0x24] sm:$0xf]
          %v707 = vld [vmem:[#allocation10 + $0x28] sm:$0xf]
          %v708 = vld [vmem:[#allocation10 + $0x2c] sm:$0xf]
          %v709 = vld [vmem:[#allocation10 + $0x30] sm:$0xf]
          %v710 = vld [vmem:[#allocation10 + $0x34] sm:$0xf]
          %v711 = vld [vmem:[#allocation10 + $0x38] sm:$0xf]
          %v712 = vld [vmem:[#allocation10 + $0x3c] sm:$0xf]
          %v713 = vld [vmem:[%s5] sm:$0x1]
          %v715 = vperm.slane %v713, 0
          %v733 = vunpack.c.l.b16 %v697
          %v734 = vunpack.c.l.b16 %v698
          %v735 = vunpack.c.l.b16 %v699
          %v736 = vunpack.c.l.b16 %v700
          %v737 = vunpack.c.l.b16 %v701
          %v738 = vunpack.c.l.b16 %v702
          %v739 = vunpack.c.l.b16 %v703
          %v740 = vunpack.c.l.b16 %v704
          %v741 = vunpack.c.l.b16 %v705
          %v742 = vunpack.c.l.b16 %v706
          %v743 = vunpack.c.l.b16 %v707
          %v744 = vunpack.c.l.b16 %v708
          %v745 = vunpack.c.l.b16 %v709
          %v746 = vunpack.c.l.b16 %v710
          %v747 = vunpack.c.l.b16 %v711
          %v748 = vunpack.c.l.b16 %v712
          %v749 = vpack.c.b16 %v734, %v733
          %v750 = vpack.c.b16 %v736, %v735
          %v751 = vpack.c.b16 %v738, %v737
          %v752 = vpack.c.b16 %v740, %v739
          %v753 = vpack.c.b16 %v742, %v741
          %v754 = vpack.c.b16 %v744, %v743
          %v755 = vpack.c.b16 %v746, %v745
          %v756 = vpack.c.b16 %v748, %v747
          %765 = vmatpush.bf16.msra.mxu0 %v756
          %766 = vmatpush.bf16.msra.mxu0 %v755
          %767 = vmatpush.bf16.msra.mxu0 %v754
          %768 = vmatpush.bf16.msra.mxu0 %v753
          %769 = vmatpush.bf16.msra.mxu0 %v752
          %770 = vmatpush.bf16.msra.mxu0 %v751
          %771 = vmatpush.bf16.msra.mxu0 %v750
          %772 = vmatpush.bf16.msra.mxu0 %v749
          %773 = vmatmul.bf16.gmra.mxu0 %v696
          %v774 = vpop.f32.mrf.mxu0
          %v775 = vadd.f32 %v715, %v774
          %v776 = vpop.f32.mrf.mxu0
          %v777 = vadd.f32 %v715, %v776
          %778 = vdwg.mxu0
          %v779 = vld [vmem:[#allocation12] sm:$0xf]
          %v780 = vld [vmem:[#allocation12 + $0x4] sm:$0xf]
          %v781 = vld [vmem:[#allocation12 + $0x8] sm:$0xf]
          %v782 = vld [vmem:[#allocation12 + $0xc] sm:$0xf]
          %v783 = vld [vmem:[#allocation12 + $0x10] sm:$0xf]
          %v784 = vld [vmem:[#allocation12 + $0x14] sm:$0xf]
          %v785 = vld [vmem:[#allocation12 + $0x18] sm:$0xf]
          %v786 = vld [vmem:[#allocation12 + $0x1c] sm:$0xf]
          %v787 = vld [vmem:[#allocation12 + $0x20] sm:$0xf]
          %v788 = vld [vmem:[#allocation12 + $0x24] sm:$0xf]
          %v789 = vld [vmem:[#allocation12 + $0x28] sm:$0xf]
          %v790 = vld [vmem:[#allocation12 + $0x2c] sm:$0xf]
          %v791 = vld [vmem:[#allocation12 + $0x30] sm:$0xf]
          %v792 = vld [vmem:[#allocation12 + $0x34] sm:$0xf]
          %v793 = vld [vmem:[#allocation12 + $0x38] sm:$0xf]
          %v794 = vld [vmem:[#allocation12 + $0x3c] sm:$0xf]
          %v795 = vld [vmem:[%s7] sm:$0x1]
          %v797 = vperm.slane %v795, 0
          %v815 = vunpack.c.l.b16 %v779
          %v816 = vunpack.c.l.b16 %v780
          %v817 = vunpack.c.l.b16 %v781
          %v818 = vunpack.c.l.b16 %v782
          %v819 = vunpack.c.l.b16 %v783
          %v820 = vunpack.c.l.b16 %v784
          %v821 = vunpack.c.l.b16 %v785
          %v822 = vunpack.c.l.b16 %v786
          %v823 = vunpack.c.l.b16 %v787
          %v824 = vunpack.c.l.b16 %v788
          %v825 = vunpack.c.l.b16 %v789
          %v826 = vunpack.c.l.b16 %v790
          %v827 = vunpack.c.l.b16 %v791
          %v828 = vunpack.c.l.b16 %v792
          %v829 = vunpack.c.l.b16 %v793
          %v830 = vunpack.c.l.b16 %v794
          %v831 = vpack.c.b16 %v816, %v815
          %v832 = vpack.c.b16 %v818, %v817
          %v833 = vpack.c.b16 %v820, %v819
          %v834 = vpack.c.b16 %v822, %v821
          %v835 = vpack.c.b16 %v824, %v823
          %v836 = vpack.c.b16 %v826, %v825
          %v837 = vpack.c.b16 %v828, %v827
          %v838 = vpack.c.b16 %v830, %v829
          %847 = vmatpush.bf16.msra.mxu0 %v838
          %848 = vmatpush.bf16.msra.mxu0 %v837
          %849 = vmatpush.bf16.msra.mxu0 %v836
          %850 = vmatpush.bf16.msra.mxu0 %v835
          %851 = vmatpush.bf16.msra.mxu0 %v834
          %852 = vmatpush.bf16.msra.mxu0 %v833
          %853 = vmatpush.bf16.msra.mxu0 %v832
          %854 = vmatpush.bf16.msra.mxu0 %v831
          %855 = vmatmul.bf16.gmra.mxu0 %v696
          %v856 = vpop.f32.mrf.mxu0
          %v857 = vadd.f32 %v797, %v856
          %v858 = vpop.f32.mrf.mxu0
          %v859 = vadd.f32 %v797, %v858
          %860 = vdwg.mxu0
          %v861 = vpack.c.bf16 %v775, %v775
          %v862 = vpack.c.bf16 %v777, %v777
          %863 = vst [vmem:[#allocation2] sm:$0xf] %v861
          %864 = vst [vmem:[#allocation2 + $0x4] sm:$0xf] %v862
          %v865 = vpack.c.bf16 %v857, %v857
          %v866 = vpack.c.bf16 %v859, %v859
          %867 = vst [vmem:[#allocation3] sm:$0xf] %v865
          %868 = vst [vmem:[#allocation3 + $0x4] sm:$0xf] %v866
        $region116: #{tpu_custom_call.1} parent=79 // pred_fallthru
          _
        %s869 = smul.u32 %s41, 16
        %s870 = scalar_lea.vmem %s560, %s869 [#allocation4]
        %v871 = vld [vmem:[%s870] sm:$0xff]
        %v872 = vld [vmem:[%s870 + $0x8] sm:$0xff]
        %v873 = vmul.f32 %v871, %v871
        %v874 = vmul.f32 %v872, %v872
        %875 = vadd.xlane.f32.xlu0 %v873
        %v876 = vpop.xlane.xlu0 %875
        %877 = vadd.xlane.f32.xlu0 %v874
        %v878 = vpop.xlane.xlu0 %877
        %v879 = vrcp.pop 128.0
        %v880 = vmul.f32 128.0, %v879
        %v881 = vsub.f32 1.0, %v880
        %v882 = vmul.f32 %v879, %v881
        %v883 = vadd.f32 %v879, %v882
        %vm884 = vweird.f32 %v879
        %v885 = vsel %vm884, %v879, %v883
        %v886 = vmul.f32 %v876, %v885
        %v887 = vmul.f32 %v878, %v885
        %v888 = vadd.f32 %v886, 1e-06
        %v889 = vadd.f32 %v887, 1e-06
        %v890 = vrsqrt.pop %v888
        %v891 = vmul.f32 %v890, %v888
        %v892 = vmul.f32 %v891, %v890
        %v893 = vmul.f32 0.5, %v892
        %v894 = vsub.f32 1.5, %v893
        %v895 = vmul.f32 %v890, %v894
        %vm896 = vweird.f32 %v888
        %vm897 = vweird.f32 %v890
        %vm898 = vmor %vm896, %vm897
        %v899 = vsel %vm898, %v890, %v895
        %v900 = vrsqrt.pop %v889
        %v901 = vmul.f32 %v900, %v889
        %v902 = vmul.f32 %v901, %v900
        %v903 = vmul.f32 0.5, %v902
        %v904 = vsub.f32 1.5, %v903
        %v905 = vmul.f32 %v900, %v904
        %vm906 = vweird.f32 %v889
        %vm907 = vweird.f32 %v900
        %vm908 = vmor %vm906, %vm907
        %v909 = vsel %vm908, %v900, %v905
        %v910 = vmul.f32 %v871, %v899
        %v911 = vmul.f32 %v872, %v909
        %v913 = vperm.slane %v645, 0
        %v915 = vmul.f32 %v910, %v913
        %v916 = vmul.f32 %v911, %v913
        %v917 = vpack.c.bf16 %v916, %v915
        %v918 = vld [vmem:[#allocation9] sm:$0xf]
        %v919 = vld [vmem:[#allocation9 + $0x4] sm:$0xf]
        %v920 = vld [vmem:[#allocation9 + $0x8] sm:$0xf]
        %v921 = vld [vmem:[#allocation9 + $0xc] sm:$0xf]
        %v922 = vld [vmem:[#allocation9 + $0x10] sm:$0xf]
        %v923 = vld [vmem:[#allocation9 + $0x14] sm:$0xf]
        %v924 = vld [vmem:[#allocation9 + $0x18] sm:$0xf]
        %v925 = vld [vmem:[#allocation9 + $0x1c] sm:$0xf]
        %v926 = vld [vmem:[#allocation9 + $0x20] sm:$0xf]
        %v927 = vld [vmem:[#allocation9 + $0x24] sm:$0xf]
        %v928 = vld [vmem:[#allocation9 + $0x28] sm:$0xf]
        %v929 = vld [vmem:[#allocation9 + $0x2c] sm:$0xf]
        %v930 = vld [vmem:[#allocation9 + $0x30] sm:$0xf]
        %v931 = vld [vmem:[#allocation9 + $0x34] sm:$0xf]
        %v932 = vld [vmem:[#allocation9 + $0x38] sm:$0xf]
        %v933 = vld [vmem:[#allocation9 + $0x3c] sm:$0xf]
        %v934 = vld [vmem:[%s3] sm:$0x1]
        %v936 = vperm.slane %v934, 0
        %v954 = vunpack.c.l.b16 %v918
        %v955 = vunpack.c.l.b16 %v919
        %v956 = vunpack.c.l.b16 %v920
        %v957 = vunpack.c.l.b16 %v921
        %v958 = vunpack.c.l.b16 %v922
        %v959 = vunpack.c.l.b16 %v923
        %v960 = vunpack.c.l.b16 %v924
        %v961 = vunpack.c.l.b16 %v925
        %v962 = vunpack.c.l.b16 %v926
        %v963 = vunpack.c.l.b16 %v927
        %v964 = vunpack.c.l.b16 %v928
        %v965 = vunpack.c.l.b16 %v929
        %v966 = vunpack.c.l.b16 %v930
        %v967 = vunpack.c.l.b16 %v931
        %v968 = vunpack.c.l.b16 %v932
        %v969 = vunpack.c.l.b16 %v933
        %v970 = vpack.c.b16 %v955, %v954
        %v971 = vpack.c.b16 %v957, %v956
        %v972 = vpack.c.b16 %v959, %v958
        %v973 = vpack.c.b16 %v961, %v960
        %v974 = vpack.c.b16 %v963, %v962
        %v975 = vpack.c.b16 %v965, %v964
        %v976 = vpack.c.b16 %v967, %v966
        %v977 = vpack.c.b16 %v969, %v968
        %986 = vmatpush.bf16.msra.mxu0 %v977
        %987 = vmatpush.bf16.msra.mxu0 %v976
        %988 = vmatpush.bf16.msra.mxu0 %v975
        %989 = vmatpush.bf16.msra.mxu0 %v974
        %990 = vmatpush.bf16.msra.mxu0 %v973
        %991 = vmatpush.bf16.msra.mxu0 %v972
        %992 = vmatpush.bf16.msra.mxu0 %v971
        %993 = vmatpush.bf16.msra.mxu0 %v970
        %994 = vmatmul.bf16.gmra.mxu0 %v917
        %v995 = vpop.f32.mrf.mxu0
        %v996 = vadd.f32 %v936, %v995
        %v997 = vpop.f32.mrf.mxu0
        %v998 = vadd.f32 %v936, %v997
        %999 = vdwg.mxu0
        %v1000 = vmul.f32 %v996, 0.25
        %v1001 = vmul.f32 %v998, 0.25
        %v1002 = vpack.c.bf16 %v1000, %v1000
        %v1003 = vpack.c.bf16 %v1001, %v1001
        %1006 = vrot.lane.b32.xlu0 %v1002, 112
        %v1007 = vpop.permute.xlu0 %1006
        %1008 = vrot.lane.b32.xlu0 %v1003, 112
        %v1009 = vpop.permute.xlu0 %1008
        %1010 = vrot.lane.b32.xlu0 %v1002, 96
        %v1011 = vpop.permute.xlu0 %1010
        %1012 = vrot.lane.b32.xlu0 %v1003, 96
        %v1013 = vpop.permute.xlu0 %1012
        %1014 = vrot.lane.b32.xlu0 %v1002, 80
        %v1015 = vpop.permute.xlu0 %1014
        %1016 = vrot.lane.b32.xlu0 %v1003, 80
        %v1017 = vpop.permute.xlu0 %1016
        %1018 = vrot.lane.b32.xlu0 %v1002, 64
        %v1019 = vpop.permute.xlu0 %1018
        %1020 = vrot.lane.b32.xlu0 %v1003, 64
        %v1021 = vpop.permute.xlu0 %1020
        %1022 = vrot.lane.b32.xlu0 %v1002, 48
        %v1023 = vpop.permute.xlu0 %1022
        %1024 = vrot.lane.b32.xlu0 %v1003, 48
        %v1025 = vpop.permute.xlu0 %1024
        %1026 = vrot.lane.b32.xlu0 %v1002, 32
        %v1027 = vpop.permute.xlu0 %1026
        %1028 = vrot.lane.b32.xlu0 %v1003, 32
        %v1029 = vpop.permute.xlu0 %1028
        %1030 = vrot.lane.b32.xlu0 %v1002, 16
        %v1031 = vpop.permute.xlu0 %1030
        %1032 = vrot.lane.b32.xlu0 %v1003, 16
        %v1033 = vpop.permute.xlu0 %1032
        %v1034 = vld [vmem:[#allocation2] sm:$0xf]
        %v1035 = vld [vmem:[#allocation2 + $0x4] sm:$0xf]
        %1038 = vrot.lane.b32.xlu0 %v1034, 112
        %v1039 = vpop.permute.xlu0 %1038
        %1040 = vrot.lane.b32.xlu0 %v1035, 112
        %v1041 = vpop.permute.xlu0 %1040
        %1042 = vrot.lane.b32.xlu0 %v1034, 96
        %v1043 = vpop.permute.xlu0 %1042
        %1044 = vrot.lane.b32.xlu0 %v1035, 96
        %v1045 = vpop.permute.xlu0 %1044
        %1046 = vrot.lane.b32.xlu0 %v1034, 80
        %v1047 = vpop.permute.xlu0 %1046
        %1048 = vrot.lane.b32.xlu0 %v1035, 80
        %v1049 = vpop.permute.xlu0 %1048
        %1050 = vrot.lane.b32.xlu0 %v1034, 64
        %v1051 = vpop.permute.xlu0 %1050
        %1052 = vrot.lane.b32.xlu0 %v1035, 64
        %v1053 = vpop.permute.xlu0 %1052
        %1054 = vrot.lane.b32.xlu0 %v1034, 48
        %v1055 = vpop.permute.xlu0 %1054
        %1056 = vrot.lane.b32.xlu0 %v1035, 48
        %v1057 = vpop.permute.xlu0 %1056
        %1058 = vrot.lane.b32.xlu0 %v1034, 32
        %v1059 = vpop.permute.xlu0 %1058
        %1060 = vrot.lane.b32.xlu0 %v1035, 32
        %v1061 = vpop.permute.xlu0 %1060
        %1062 = vrot.lane.b32.xlu0 %v1034, 16
        %v1063 = vpop.permute.xlu0 %1062
        %1064 = vrot.lane.b32.xlu0 %v1035, 16
        %v1065 = vpop.permute.xlu0 %1064
        %v1066 = vld [vmem:[#allocation3] sm:$0xf]
        %v1067 = vld [vmem:[#allocation3 + $0x4] sm:$0xf]
        %1070 = vrot.lane.b32.xlu0 %v1066, 112
        %v1071 = vpop.permute.xlu0 %1070
        %1072 = vrot.lane.b32.xlu0 %v1067, 112
        %v1073 = vpop.permute.xlu0 %1072
        %1074 = vrot.lane.b32.xlu0 %v1066, 96
        %v1075 = vpop.permute.xlu0 %1074
        %1076 = vrot.lane.b32.xlu0 %v1067, 96
        %v1077 = vpop.permute.xlu0 %1076
        %1078 = vrot.lane.b32.xlu0 %v1066, 80
        %v1079 = vpop.permute.xlu0 %1078
        %1080 = vrot.lane.b32.xlu0 %v1067, 80
        %v1081 = vpop.permute.xlu0 %1080
        %1082 = vrot.lane.b32.xlu0 %v1066, 64
        %v1083 = vpop.permute.xlu0 %1082
        %1084 = vrot.lane.b32.xlu0 %v1067, 64
        %v1085 = vpop.permute.xlu0 %1084
        %1086 = vrot.lane.b32.xlu0 %v1066, 48
        %v1087 = vpop.permute.xlu0 %1086
        %1088 = vrot.lane.b32.xlu0 %v1067, 48
        %v1089 = vpop.permute.xlu0 %1088
        %1090 = vrot.lane.b32.xlu0 %v1066, 32
        %v1091 = vpop.permute.xlu0 %1090
        %1092 = vrot.lane.b32.xlu0 %v1067, 32
        %v1093 = vpop.permute.xlu0 %1092
        %1094 = vrot.lane.b32.xlu0 %v1066, 16
        %v1095 = vpop.permute.xlu0 %1094
        %1096 = vrot.lane.b32.xlu0 %v1067, 16
        %v1097 = vpop.permute.xlu0 %1096
        %v1098 = vunpack.c.l.b16 %v1034
        %v1099 = vunpack.c.l.b16 %v1035
        %v1100 = vunpack.c.l.b16 %v1039
        %v1101 = vunpack.c.l.b16 %v1041
        %v1102 = vunpack.c.l.b16 %v1043
        %v1103 = vunpack.c.l.b16 %v1045
        %v1104 = vunpack.c.l.b16 %v1047
        %v1105 = vunpack.c.l.b16 %v1049
        %v1106 = vunpack.c.l.b16 %v1051
        %v1107 = vunpack.c.l.b16 %v1053
        %v1108 = vunpack.c.l.b16 %v1055
        %v1109 = vunpack.c.l.b16 %v1057
        %v1110 = vunpack.c.l.b16 %v1059
        %v1111 = vunpack.c.l.b16 %v1061
        %v1112 = vunpack.c.l.b16 %v1063
        %v1113 = vunpack.c.l.b16 %v1065
        %v1114 = vpack.c.b16 %v1099, %v1098
        %v1115 = vpack.c.b16 %v1101, %v1100
        %v1116 = vpack.c.b16 %v1103, %v1102
        %v1117 = vpack.c.b16 %v1105, %v1104
        %v1118 = vpack.c.b16 %v1107, %v1106
        %v1119 = vpack.c.b16 %v1109, %v1108
        %v1120 = vpack.c.b16 %v1111, %v1110
        %v1121 = vpack.c.b16 %v1113, %v1112
        %1130 = vxpose.xlu0.c.b16.start [1/8] %v1114, 128
        %1131 = vxpose.xlu0.c.b16.cont [2/8] 0, 128
        %1132 = vxpose.xlu0.c.b16.cont [3/8] 0, 128
        %1133 = vxpose.xlu0.c.b16.cont [4/8] 0, 128
        %1134 = vxpose.xlu0.c.b16.cont [5/8] 0, 128
        %1135 = vxpose.xlu0.c.b16.cont [6/8] 0, 128
        %1136 = vxpose.xlu0.c.b16.cont [7/8] 0, 128
        %1137 = vxpose.xlu0.c.b16.end [8/8] 0, 128
        %v1138 = vpop.trf.xlu0
        %v1139 = vpop.trf.xlu0
        %v1140 = vpop.trf.xlu0
        %v1141 = vpop.trf.xlu0
        %v1142 = vpop.trf.xlu0
        %v1143 = vpop.trf.xlu0
        %v1144 = vpop.trf.xlu0
        %v1145 = vpop.trf.xlu0
        %1146 = vxpose.xlu0.c.b16.start [1/8] %v1115, 128
        %1147 = vxpose.xlu0.c.b16.cont [2/8] 0, 128
        %1148 = vxpose.xlu0.c.b16.cont [3/8] 0, 128
        %1149 = vxpose.xlu0.c.b16.cont [4/8] 0, 128
        %1150 = vxpose.xlu0.c.b16.cont [5/8] 0, 128
        %1151 = vxpose.xlu0.c.b16.cont [6/8] 0, 128
        %1152 = vxpose.xlu0.c.b16.cont [7/8] 0, 128
        %1153 = vxpose.xlu0.c.b16.end [8/8] 0, 128
        %v1154 = vpop.trf.xlu0
        %v1155 = vpop.trf.xlu0
        %v1156 = vpop.trf.xlu0
        %v1157 = vpop.trf.xlu0
        %v1158 = vpop.trf.xlu0
        %v1159 = vpop.trf.xlu0
        %v1160 = vpop.trf.xlu0
        %v1161 = vpop.trf.xlu0
        %1162 = vxpose.xlu0.c.b16.start [1/8] %v1116, 128
        %1163 = vxpose.xlu0.c.b16.cont [2/8] 0, 128
        %1164 = vxpose.xlu0.c.b16.cont [3/8] 0, 128
        %1165 = vxpose.xlu0.c.b16.cont [4/8] 0, 128
        %1166 = vxpose.xlu0.c.b16.cont [5/8] 0, 128
        %1167 = vxpose.xlu0.c.b16.cont [6/8] 0, 128
        %1168 = vxpose.xlu0.c.b16.cont [7/8] 0, 128
        %1169 = vxpose.xlu0.c.b16.end [8/8] 0, 128
        %v1170 = vpop.trf.xlu0
        %v1171 = vpop.trf.xlu0
        %v1172 = vpop.trf.xlu0
        %v1173 = vpop.trf.xlu0
        %v1174 = vpop.trf.xlu0
        %v1175 = vpop.trf.xlu0
        %v1176 = vpop.trf.xlu0
        %v1177 = vpop.trf.xlu0
        %1178 = vxpose.xlu0.c.b16.start [1/8] %v1117, 128
        %1179 = vxpose.xlu0.c.b16.cont [2/8] 0, 128
        %1180 = vxpose.xlu0.c.b16.cont [3/8] 0, 128
        %1181 = vxpose.xlu0.c.b16.cont [4/8] 0, 128
        %1182 = vxpose.xlu0.c.b16.cont [5/8] 0, 128
        %1183 = vxpose.xlu0.c.b16.cont [6/8] 0, 128
        %1184 = vxpose.xlu0.c.b16.cont [7/8] 0, 128
        %1185 = vxpose.xlu0.c.b16.end [8/8] 0, 128
        %v1186 = vpop.trf.xlu0
        %v1187 = vpop.trf.xlu0
        %v1188 = vpop.trf.xlu0
        %v1189 = vpop.trf.xlu0
        %v1190 = vpop.trf.xlu0
        %v1191 = vpop.trf.xlu0
        %v1192 = vpop.trf.xlu0
        %v1193 = vpop.trf.xlu0
        %1194 = vxpose.xlu0.c.b16.start [1/8] %v1118, 128
        %1195 = vxpose.xlu0.c.b16.cont [2/8] 0, 128
        %1196 = vxpose.xlu0.c.b16.cont [3/8] 0, 128
        %1197 = vxpose.xlu0.c.b16.cont [4/8] 0, 128
        %1198 = vxpose.xlu0.c.b16.cont [5/8] 0, 128
        %1199 = vxpose.xlu0.c.b16.cont [6/8] 0, 128
        %1200 = vxpose.xlu0.c.b16.cont [7/8] 0, 128
        %1201 = vxpose.xlu0.c.b16.end [8/8] 0, 128
        %v1202 = vpop.trf.xlu0
        %v1203 = vpop.trf.xlu0
        %v1204 = vpop.trf.xlu0
        %v1205 = vpop.trf.xlu0
        %v1206 = vpop.trf.xlu0
        %v1207 = vpop.trf.xlu0
        %v1208 = vpop.trf.xlu0
        %v1209 = vpop.trf.xlu0
        %1210 = vxpose.xlu0.c.b16.start [1/8] %v1119, 128
        %1211 = vxpose.xlu0.c.b16.cont [2/8] 0, 128
        %1212 = vxpose.xlu0.c.b16.cont [3/8] 0, 128
        %1213 = vxpose.xlu0.c.b16.cont [4/8] 0, 128
        %1214 = vxpose.xlu0.c.b16.cont [5/8] 0, 128
        %1215 = vxpose.xlu0.c.b16.cont [6/8] 0, 128
        %1216 = vxpose.xlu0.c.b16.cont [7/8] 0, 128
        %1217 = vxpose.xlu0.c.b16.end [8/8] 0, 128
        %v1218 = vpop.trf.xlu0
        %v1219 = vpop.trf.xlu0
        %v1220 = vpop.trf.xlu0
        %v1221 = vpop.trf.xlu0
        %v1222 = vpop.trf.xlu0
        %v1223 = vpop.trf.xlu0
        %v1224 = vpop.trf.xlu0
        %v1225 = vpop.trf.xlu0
        %1226 = vxpose.xlu0.c.b16.start [1/8] %v1120, 128
        %1227 = vxpose.xlu0.c.b16.cont [2/8] 0, 128
        %1228 = vxpose.xlu0.c.b16.cont [3/8] 0, 128
        %1229 = vxpose.xlu0.c.b16.cont [4/8] 0, 128
        %1230 = vxpose.xlu0.c.b16.cont [5/8] 0, 128
        %1231 = vxpose.xlu0.c.b16.cont [6/8] 0, 128
        %1232 = vxpose.xlu0.c.b16.cont [7/8] 0, 128
        %1233 = vxpose.xlu0.c.b16.end [8/8] 0, 128
        %v1234 = vpop.trf.xlu0
        %v1235 = vpop.trf.xlu0
        %v1236 = vpop.trf.xlu0
        %v1237 = vpop.trf.xlu0
        %v1238 = vpop.trf.xlu0
        %v1239 = vpop.trf.xlu0
        %v1240 = vpop.trf.xlu0
        %v1241 = vpop.trf.xlu0
        %1242 = vxpose.xlu0.c.b16.start [1/8] %v1121, 128
        %1243 = vxpose.xlu0.c.b16.cont [2/8] 0, 128
        %1244 = vxpose.xlu0.c.b16.cont [3/8] 0, 128
        %1245 = vxpose.xlu0.c.b16.cont [4/8] 0, 128
        %1246 = vxpose.xlu0.c.b16.cont [5/8] 0, 128
        %1247 = vxpose.xlu0.c.b16.cont [6/8] 0, 128
        %1248 = vxpose.xlu0.c.b16.cont [7/8] 0, 128
        %1249 = vxpose.xlu0.c.b16.end [8/8] 0, 128
        %v1250 = vpop.trf.xlu0
        %v1251 = vpop.trf.xlu0
        %v1252 = vpop.trf.xlu0
        %v1253 = vpop.trf.xlu0
        %v1254 = vpop.trf.xlu0
        %v1255 = vpop.trf.xlu0
        %v1256 = vpop.trf.xlu0
        %v1257 = vpop.trf.xlu0
        %v1258 = vunpack.c.l.b16 %v1002
        %v1259 = vunpack.c.l.b16 %v1003
        %v1260 = vpack.c.b16 %v1259, %v1258
        %vm1261 = vcmask 130048
        %v1263 = vsel %vm1261, %v1260, 0
        %1265 = vmatpush.bf16.msra.mxu0 0
        %1266 = vmatpush.bf16.msra.mxu0 0
        %1267 = vmatpush.bf16.msra.mxu0 0
        %1268 = vmatpush.bf16.msra.mxu0 0
        %1269 = vmatpush.bf16.msra.mxu0 0
        %1270 = vmatpush.bf16.msra.mxu0 0
        %1271 = vmatpush.bf16.msra.mxu0 0
        %1272 = vmatpush.bf16.msra.mxu0 %v1138
        %1273 = vmatmul.bf16.gmra.mxu0 %v1263
        %v1274 = vpop.f32.mrf.mxu0
        %v1275 = vadd.f32 0.0, %v1274
        %v1276 = vpop.f32.mrf.mxu0
        %v1277 = vadd.f32 0.0, %v1276
        %1278 = vdwg.mxu0
        %v1279 = vunpack.c.l.b16 %v1007
        %v1280 = vunpack.c.l.b16 %v1009
        %v1281 = vpack.c.b16 %v1280, %v1279
        %v1283 = vsel %vm1261, %v1281, 0
        %1285 = vmatpush.bf16.msra.mxu0 0
        %1286 = vmatpush.bf16.msra.mxu0 0
        %1287 = vmatpush.bf16.msra.mxu0 0
        %1288 = vmatpush.bf16.msra.mxu0 0
        %1289 = vmatpush.bf16.msra.mxu0 0
        %1290 = vmatpush.bf16.msra.mxu0 0
        %1291 = vmatpush.bf16.msra.mxu0 0
        %1292 = vmatpush.bf16.msra.mxu0 %v1154
        %1293 = vmatmul.bf16.gmra.mxu0 %v1283
        %v1294 = vpop.f32.mrf.mxu0
        %v1295 = vadd.f32 0.0, %v1294
        %v1296 = vpop.f32.mrf.mxu0
        %v1297 = vadd.f32 0.0, %v1296
        %1298 = vdwg.mxu0
        %v1299 = vunpack.c.l.b16 %v1011
        %v1300 = vunpack.c.l.b16 %v1013
        %v1301 = vpack.c.b16 %v1300, %v1299
        %v1303 = vsel %vm1261, %v1301, 0
        %1305 = vmatpush.bf16.msra.mxu0 0
        %1306 = vmatpush.bf16.msra.mxu0 0
        %1307 = vmatpush.bf16.msra.mxu0 0
        %1308 = vmatpush.bf16.msra.mxu0 0
        %1309 = vmatpush.bf16.msra.mxu0 0
        %1310 = vmatpush.bf16.msra.mxu0 0
        %1311 = vmatpush.bf16.msra.mxu0 0
        %1312 = vmatpush.bf16.msra.mxu0 %v1170
        %1313 = vmatmul.bf16.gmra.mxu0 %v1303
        %v1314 = vpop.f32.mrf.mxu0
        %v1315 = vadd.f32 0.0, %v1314
        %v1316 = vpop.f32.mrf.mxu0
        %v1317 = vadd.f32 0.0, %v1316
        %1318 = vdwg.mxu0
        %v1319 = vunpack.c.l.b16 %v1015
        %v1320 = vunpack.c.l.b16 %v1017
        %v1321 = vpack.c.b16 %v1320, %v1319
        %v1323 = vsel %vm1261, %v1321, 0
        %1325 = vmatpush.bf16.msra.mxu0 0
        %1326 = vmatpush.bf16.msra.mxu0 0
        %1327 = vmatpush.bf16.msra.mxu0 0
        %1328 = vmatpush.bf16.msra.mxu0 0
        %1329 = vmatpush.bf16.msra.mxu0 0
        %1330 = vmatpush.bf16.msra.mxu0 0
        %1331 = vmatpush.bf16.msra.mxu0 0
        %1332 = vmatpush.bf16.msra.mxu0 %v1186
        %1333 = vmatmul.bf16.gmra.mxu0 %v1323
        %v1334 = vpop.f32.mrf.mxu0
        %v1335 = vadd.f32 0.0, %v1334
        %v1336 = vpop.f32.mrf.mxu0
        %v1337 = vadd.f32 0.0, %v1336
        %1338 = vdwg.mxu0
        %v1339 = vunpack.c.l.b16 %v1019
        %v1340 = vunpack.c.l.b16 %v1021
        %v1341 = vpack.c.b16 %v1340, %v1339
        %v1343 = vsel %vm1261, %v1341, 0
        %1345 = vmatpush.bf16.msra.mxu0 0
        %1346 = vmatpush.bf16.msra.mxu0 0
        %1347 = vmatpush.bf16.msra.mxu0 0
        %1348 = vmatpush.bf16.msra.mxu0 0
        %1349 = vmatpush.bf16.msra.mxu0 0
        %1350 = vmatpush.bf16.msra.mxu0 0
        %1351 = vmatpush.bf16.msra.mxu0 0
        %1352 = vmatpush.bf16.msra.mxu0 %v1202
        %1353 = vmatmul.bf16.gmra.mxu0 %v1343
        %v1354 = vpop.f32.mrf.mxu0
        %v1355 = vadd.f32 0.0, %v1354
        %v1356 = vpop.f32.mrf.mxu0
        %v1357 = vadd.f32 0.0, %v1356
        %1358 = vdwg.mxu0
        %v1359 = vunpack.c.l.b16 %v1023
        %v1360 = vunpack.c.l.b16 %v1025
        %v1361 = vpack.c.b16 %v1360, %v1359
        %v1363 = vsel %vm1261, %v1361, 0
        %1365 = vmatpush.bf16.msra.mxu0 0
        %1366 = vmatpush.bf16.msra.mxu0 0
        %1367 = vmatpush.bf16.msra.mxu0 0
        %1368 = vmatpush.bf16.msra.mxu0 0
        %1369 = vmatpush.bf16.msra.mxu0 0
        %1370 = vmatpush.bf16.msra.mxu0 0
        %1371 = vmatpush.bf16.msra.mxu0 0
        %1372 = vmatpush.bf16.msra.mxu0 %v1218
        %1373 = vmatmul.bf16.gmra.mxu0 %v1363
        %v1374 = vpop.f32.mrf.mxu0
        %v1375 = vadd.f32 0.0, %v1374
        %v1376 = vpop.f32.mrf.mxu0
        %v1377 = vadd.f32 0.0, %v1376
        %1378 = vdwg.mxu0
        %v1379 = vunpack.c.l.b16 %v1027
        %v1380 = vunpack.c.l.b16 %v1029
        %v1381 = vpack.c.b16 %v1380, %v1379
        %v1383 = vsel %vm1261, %v1381, 0
        %1385 = vmatpush.bf16.msra.mxu0 0
        %1386 = vmatpush.bf16.msra.mxu0 0
        %1387 = vmatpush.bf16.msra.mxu0 0
        %1388 = vmatpush.bf16.msra.mxu0 0
        %1389 = vmatpush.bf16.msra.mxu0 0
        %1390 = vmatpush.bf16.msra.mxu0 0
        %1391 = vmatpush.bf16.msra.mxu0 0
        %1392 = vmatpush.bf16.msra.mxu0 %v1234
        %1393 = vmatmul.bf16.gmra.mxu0 %v1383
        %v1394 = vpop.f32.mrf.mxu0
        %v1395 = vadd.f32 0.0, %v1394
        %v1396 = vpop.f32.mrf.mxu0
        %v1397 = vadd.f32 0.0, %v1396
        %1398 = vdwg.mxu0
        %v1399 = vunpack.c.l.b16 %v1031
        %v1400 = vunpack.c.l.b16 %v1033
        %v1401 = vpack.c.b16 %v1400, %v1399
        %v1403 = vsel %vm1261, %v1401, 0
        %1405 = vmatpush.bf16.msra.mxu0 0
        %1406 = vmatpush.bf16.msra.mxu0 0
        %1407 = vmatpush.bf16.msra.mxu0 0
        %1408 = vmatpush.bf16.msra.mxu0 0
        %1409 = vmatpush.bf16.msra.mxu0 0
        %1410 = vmatpush.bf16.msra.mxu0 0
        %1411 = vmatpush.bf16.msra.mxu0 0
        %1412 = vmatpush.bf16.msra.mxu0 %v1250
        %1413 = vmatmul.bf16.gmra.mxu0 %v1403
        %v1414 = vpop.f32.mrf.mxu0
        %v1415 = vadd.f32 0.0, %v1414
        %v1416 = vpop.f32.mrf.mxu0
        %v1417 = vadd.f32 0.0, %v1416
        %1418 = vdwg.mxu0
        %v1419 = vsel %vm1261, %v1275, -inf
        %1420 = vmax.xlane.f32.xlu0 %v1419
        %v1421 = vpop.xlane.xlu0 %1420
        %v1422 = vsel %vm1261, %v1277, -inf
        %1423 = vmax.xlane.f32.xlu0 %v1422
        %v1424 = vpop.xlane.xlu0 %1423
        %v1425 = vsel %vm1261, %v1295, -inf
        %1426 = vmax.xlane.f32.xlu0 %v1425
        %v1427 = vpop.xlane.xlu0 %1426
        %v1428 = vsel %vm1261, %v1297, -inf
        %1429 = vmax.xlane.f32.xlu0 %v1428
        %v1430 = vpop.xlane.xlu0 %1429
        %v1431 = vsel %vm1261, %v1315, -inf
        %1432 = vmax.xlane.f32.xlu0 %v1431
        %v1433 = vpop.xlane.xlu0 %1432
        %v1434 = vsel %vm1261, %v1317, -inf
        %1435 = vmax.xlane.f32.xlu0 %v1434
        %v1436 = vpop.xlane.xlu0 %1435
        %v1437 = vsel %vm1261, %v1335, -inf
        %1438 = vmax.xlane.f32.xlu0 %v1437
        %v1439 = vpop.xlane.xlu0 %1438
        %v1440 = vsel %vm1261, %v1337, -inf
        %1441 = vmax.xlane.f32.xlu0 %v1440
        %v1442 = vpop.xlane.xlu0 %1441
        %v1443 = vsel %vm1261, %v1355, -inf
        %1444 = vmax.xlane.f32.xlu0 %v1443
        %v1445 = vpop.xlane.xlu0 %1444
        %v1446 = vsel %vm1261, %v1357, -inf
        %1447 = vmax.xlane.f32.xlu0 %v1446
        %v1448 = vpop.xlane.xlu0 %1447
        %v1449 = vsel %vm1261, %v1375, -inf
        %1450 = vmax.xlane.f32.xlu0 %v1449
        %v1451 = vpop.xlane.xlu0 %1450
        %v1452 = vsel %vm1261, %v1377, -inf
        %1453 = vmax.xlane.f32.xlu0 %v1452
        %v1454 = vpop.xlane.xlu0 %1453
        %v1455 = vsel %vm1261, %v1395, -inf
        %1456 = vmax.xlane.f32.xlu0 %v1455
        %v1457 = vpop.xlane.xlu0 %1456
        %v1458 = vsel %vm1261, %v1397, -inf
        %1459 = vmax.xlane.f32.xlu0 %v1458
        %v1460 = vpop.xlane.xlu0 %1459
        %v1461 = vsel %vm1261, %v1415, -inf
        %1462 = vmax.xlane.f32.xlu0 %v1461
        %v1463 = vpop.xlane.xlu0 %1462
        %v1464 = vsel %vm1261, %v1417, -inf
        %1465 = vmax.xlane.f32.xlu0 %v1464
        %v1466 = vpop.xlane.xlu0 %1465
        %v1467 = vsub.f32 %v1275, %v1421
        %v1468 = vsub.f32 %v1277, %v1424
        %v1469 = vsub.f32 %v1295, %v1427
        %v1470 = vsub.f32 %v1297, %v1430
        %v1471 = vsub.f32 %v1315, %v1433
        %v1472 = vsub.f32 %v1317, %v1436
        %v1473 = vsub.f32 %v1335, %v1439
        %v1474 = vsub.f32 %v1337, %v1442
        %v1475 = vsub.f32 %v1355, %v1445
        %v1476 = vsub.f32 %v1357, %v1448
        %v1477 = vsub.f32 %v1375, %v1451
        %v1478 = vsub.f32 %v1377, %v1454
        %v1479 = vsub.f32 %v1395, %v1457
        %v1480 = vsub.f32 %v1397, %v1460
        %v1481 = vsub.f32 %v1415, %v1463
        %v1482 = vsub.f32 %v1417, %v1466
        %v1483 = vmul.f32 %v1467, 1.442695
        %v1484 = vpow.pop %v1483
        %v1485 = vmul.f32 %v1468, 1.442695
        %v1486 = vpow.pop %v1485
        %v1487 = vmul.f32 %v1469, 1.442695
        %v1488 = vpow.pop %v1487
        %v1489 = vmul.f32 %v1470, 1.442695
        %v1490 = vpow.pop %v1489
        %v1491 = vmul.f32 %v1471, 1.442695
        %v1492 = vpow.pop %v1491
        %v1493 = vmul.f32 %v1472, 1.442695
        %v1494 = vpow.pop %v1493
        %v1495 = vmul.f32 %v1473, 1.442695
        %v1496 = vpow.pop %v1495
        %v1497 = vmul.f32 %v1474, 1.442695
        %v1498 = vpow.pop %v1497
        %v1499 = vmul.f32 %v1475, 1.442695
        %v1500 = vpow.pop %v1499
        %v1501 = vmul.f32 %v1476, 1.442695
        %v1502 = vpow.pop %v1501
        %v1503 = vmul.f32 %v1477, 1.442695
        %v1504 = vpow.pop %v1503
        %v1505 = vmul.f32 %v1478, 1.442695
        %v1506 = vpow.pop %v1505
        %v1507 = vmul.f32 %v1479, 1.442695
        %v1508 = vpow.pop %v1507
        %v1509 = vmul.f32 %v1480, 1.442695
        %v1510 = vpow.pop %v1509
        %v1511 = vmul.f32 %v1481, 1.442695
        %v1512 = vpow.pop %v1511
        %v1513 = vmul.f32 %v1482, 1.442695
        %v1514 = vpow.pop %v1513
        %v1515 = vsel %vm1261, %v1484, 0.0
        %1516 = vadd.xlane.f32.xlu0 %v1515
        %v1517 = vpop.xlane.xlu0 %1516
        %v1518 = vsel %vm1261, %v1486, 0.0
        %1519 = vadd.xlane.f32.xlu0 %v1518
        %v1520 = vpop.xlane.xlu0 %1519
        %v1521 = vsel %vm1261, %v1488, 0.0
        %1522 = vadd.xlane.f32.xlu0 %v1521
        %v1523 = vpop.xlane.xlu0 %1522
        %v1524 = vsel %vm1261, %v1490, 0.0
        %1525 = vadd.xlane.f32.xlu0 %v1524
        %v1526 = vpop.xlane.xlu0 %1525
        %v1527 = vsel %vm1261, %v1492, 0.0
        %1528 = vadd.xlane.f32.xlu0 %v1527
        %v1529 = vpop.xlane.xlu0 %1528
        %v1530 = vsel %vm1261, %v1494, 0.0
        %1531 = vadd.xlane.f32.xlu0 %v1530
        %v1532 = vpop.xlane.xlu0 %1531
        %v1533 = vsel %vm1261, %v1496, 0.0
        %1534 = vadd.xlane.f32.xlu0 %v1533
        %v1535 = vpop.xlane.xlu0 %1534
        %v1536 = vsel %vm1261, %v1498, 0.0
        %1537 = vadd.xlane.f32.xlu0 %v1536
        %v1538 = vpop.xlane.xlu0 %1537
        %v1539 = vsel %vm1261, %v1500, 0.0
        %1540 = vadd.xlane.f32.xlu0 %v1539
        %v1541 = vpop.xlane.xlu0 %1540
        %v1542 = vsel %vm1261, %v1502, 0.0
        %1543 = vadd.xlane.f32.xlu0 %v1542
        %v1544 = vpop.xlane.xlu0 %1543
        %v1545 = vsel %vm1261, %v1504, 0.0
        %1546 = vadd.xlane.f32.xlu0 %v1545
        %v1547 = vpop.xlane.xlu0 %1546
        %v1548 = vsel %vm1261, %v1506, 0.0
        %1549 = vadd.xlane.f32.xlu0 %v1548
        %v1550 = vpop.xlane.xlu0 %1549
        %v1551 = vsel %vm1261, %v1508, 0.0
        %1552 = vadd.xlane.f32.xlu0 %v1551
        %v1553 = vpop.xlane.xlu0 %1552
        %v1554 = vsel %vm1261, %v1510, 0.0
        %1555 = vadd.xlane.f32.xlu0 %v1554
        %v1556 = vpop.xlane.xlu0 %1555
        %v1557 = vsel %vm1261, %v1512, 0.0
        %1558 = vadd.xlane.f32.xlu0 %v1557
        %v1559 = vpop.xlane.xlu0 %1558
        %v1560 = vsel %vm1261, %v1514, 0.0
        %1561 = vadd.xlane.f32.xlu0 %v1560
        %v1562 = vpop.xlane.xlu0 %1561
        %v1563 = vrcp.pop %v1517
        %v1564 = vrcp.pop %v1520
        %v1565 = vrcp.pop %v1523
        %v1566 = vrcp.pop %v1526
        %v1567 = vrcp.pop %v1529
        %v1568 = vrcp.pop %v1532
        %v1569 = vrcp.pop %v1535
        %v1570 = vrcp.pop %v1538
        %v1571 = vrcp.pop %v1541
        %v1572 = vrcp.pop %v1544
        %v1573 = vrcp.pop %v1547
        %v1574 = vrcp.pop %v1550
        %v1575 = vrcp.pop %v1553
        %v1576 = vrcp.pop %v1556
        %v1577 = vrcp.pop %v1559
        %v1578 = vrcp.pop %v1562
        %v1579 = vmul.f32 %v1484, %v1563
        %v1580 = vmul.f32 %v1486, %v1564
        %v1581 = vmul.f32 %v1488, %v1565
        %v1582 = vmul.f32 %v1490, %v1566
        %v1583 = vmul.f32 %v1492, %v1567
        %v1584 = vmul.f32 %v1494, %v1568
        %v1585 = vmul.f32 %v1496, %v1569
        %v1586 = vmul.f32 %v1498, %v1570
        %v1587 = vmul.f32 %v1500, %v1571
        %v1588 = vmul.f32 %v1502, %v1572
        %v1589 = vmul.f32 %v1504, %v1573
        %v1590 = vmul.f32 %v1506, %v1574
        %v1591 = vmul.f32 %v1508, %v1575
        %v1592 = vmul.f32 %v1510, %v1576
        %v1593 = vmul.f32 %v1512, %v1577
        %v1594 = vmul.f32 %v1514, %v1578
        %v1595 = vpack.c.bf16 %v1579, %v1579
        %v1596 = vpack.c.bf16 %v1580, %v1580
        %v1597 = vpack.c.bf16 %v1581, %v1581
        %v1598 = vpack.c.bf16 %v1582, %v1582
        %v1599 = vpack.c.bf16 %v1583, %v1583
        %v1600 = vpack.c.bf16 %v1584, %v1584
        %v1601 = vpack.c.bf16 %v1585, %v1585
        %v1602 = vpack.c.bf16 %v1586, %v1586
        %v1603 = vpack.c.bf16 %v1587, %v1587
        %v1604 = vpack.c.bf16 %v1588, %v1588
        %v1605 = vpack.c.bf16 %v1589, %v1589
        %v1606 = vpack.c.bf16 %v1590, %v1590
        %v1607 = vpack.c.bf16 %v1591, %v1591
        %v1608 = vpack.c.bf16 %v1592, %v1592
        %v1609 = vpack.c.bf16 %v1593, %v1593
        %v1610 = vpack.c.bf16 %v1594, %v1594
        %v1613 = vunpack.c.l.b16 %v1595
        %v1614 = vunpack.c.l.b16 %v1596
        %v1615 = vpack.c.b16 %v1614, %v1613
        %v1616 = vunpack.c.l.b16 %v1066
        %v1617 = vunpack.c.l.b16 %v1067
        %v1618 = vpack.c.b16 %v1617, %v1616
        %v1621 = vsel %vm1261, %v1615, 0
        %1623 = vmatpush.bf16.msra.mxu0 0
        %1624 = vmatpush.bf16.msra.mxu0 0
        %1625 = vmatpush.bf16.msra.mxu0 0
        %1626 = vmatpush.bf16.msra.mxu0 0
        %1627 = vmatpush.bf16.msra.mxu0 0
        %1628 = vmatpush.bf16.msra.mxu0 0
        %1629 = vmatpush.bf16.msra.mxu0 0
        %1630 = vmatpush.bf16.msra.mxu0 %v1618
        %1631 = vmatmul.bf16.gmra.mxu0 %v1621
        %v1632 = vpop.f32.mrf.mxu0
        %v1633 = vadd.f32 0.0, %v1632
        %v1634 = vpop.f32.mrf.mxu0
        %v1635 = vadd.f32 0.0, %v1634
        %1636 = vdwg.mxu0
        %v1639 = vunpack.c.l.b16 %v1597
        %v1640 = vunpack.c.l.b16 %v1598
        %v1641 = vpack.c.b16 %v1640, %v1639
        %v1642 = vunpack.c.l.b16 %v1071
        %v1643 = vunpack.c.l.b16 %v1073
        %v1644 = vpack.c.b16 %v1643, %v1642
        %v1647 = vsel %vm1261, %v1641, 0
        %1649 = vmatpush.bf16.msra.mxu0 0
        %1650 = vmatpush.bf16.msra.mxu0 0
        %1651 = vmatpush.bf16.msra.mxu0 0
        %1652 = vmatpush.bf16.msra.mxu0 0
        %1653 = vmatpush.bf16.msra.mxu0 0
        %1654 = vmatpush.bf16.msra.mxu0 0
        %1655 = vmatpush.bf16.msra.mxu0 0
        %1656 = vmatpush.bf16.msra.mxu0 %v1644
        %1657 = vmatmul.bf16.gmra.mxu0 %v1647
        %v1658 = vpop.f32.mrf.mxu0
        %v1659 = vadd.f32 0.0, %v1658
        %v1660 = vpop.f32.mrf.mxu0
        %v1661 = vadd.f32 0.0, %v1660
        %1662 = vdwg.mxu0
        %v1665 = vunpack.c.l.b16 %v1599
        %v1666 = vunpack.c.l.b16 %v1600
        %v1667 = vpack.c.b16 %v1666, %v1665
        %v1668 = vunpack.c.l.b16 %v1075
        %v1669 = vunpack.c.l.b16 %v1077
        %v1670 = vpack.c.b16 %v1669, %v1668
        %v1673 = vsel %vm1261, %v1667, 0
        %1675 = vmatpush.bf16.msra.mxu0 0
        %1676 = vmatpush.bf16.msra.mxu0 0
        %1677 = vmatpush.bf16.msra.mxu0 0
        %1678 = vmatpush.bf16.msra.mxu0 0
        %1679 = vmatpush.bf16.msra.mxu0 0
        %1680 = vmatpush.bf16.msra.mxu0 0
        %1681 = vmatpush.bf16.msra.mxu0 0
        %1682 = vmatpush.bf16.msra.mxu0 %v1670
        %1683 = vmatmul.bf16.gmra.mxu0 %v1673
        %v1684 = vpop.f32.mrf.mxu0
        %v1685 = vadd.f32 0.0, %v1684
        %v1686 = vpop.f32.mrf.mxu0
        %v1687 = vadd.f32 0.0, %v1686
        %1688 = vdwg.mxu0
        %v1691 = vunpack.c.l.b16 %v1601
        %v1692 = vunpack.c.l.b16 %v1602
        %v1693 = vpack.c.b16 %v1692, %v1691
        %v1694 = vunpack.c.l.b16 %v1079
        %v1695 = vunpack.c.l.b16 %v1081
        %v1696 = vpack.c.b16 %v1695, %v1694
        %v1699 = vsel %vm1261, %v1693, 0
        %1701 = vmatpush.bf16.msra.mxu0 0
        %1702 = vmatpush.bf16.msra.mxu0 0
        %1703 = vmatpush.bf16.msra.mxu0 0
        %1704 = vmatpush.bf16.msra.mxu0 0
        %1705 = vmatpush.bf16.msra.mxu0 0
        %1706 = vmatpush.bf16.msra.mxu0 0
        %1707 = vmatpush.bf16.msra.mxu0 0
        %1708 = vmatpush.bf16.msra.mxu0 %v1696
        %1709 = vmatmul.bf16.gmra.mxu0 %v1699
        %v1710 = vpop.f32.mrf.mxu0
        %v1711 = vadd.f32 0.0, %v1710
        %v1712 = vpop.f32.mrf.mxu0
        %v1713 = vadd.f32 0.0, %v1712
        %1714 = vdwg.mxu0
        %v1717 = vunpack.c.l.b16 %v1603
        %v1718 = vunpack.c.l.b16 %v1604
        %v1719 = vpack.c.b16 %v1718, %v1717
        %v1720 = vunpack.c.l.b16 %v1083
        %v1721 = vunpack.c.l.b16 %v1085
        %v1722 = vpack.c.b16 %v1721, %v1720
        %v1725 = vsel %vm1261, %v1719, 0
        %1727 = vmatpush.bf16.msra.mxu0 0
        %1728 = vmatpush.bf16.msra.mxu0 0
        %1729 = vmatpush.bf16.msra.mxu0 0
        %1730 = vmatpush.bf16.msra.mxu0 0
        %1731 = vmatpush.bf16.msra.mxu0 0
        %1732 = vmatpush.bf16.msra.mxu0 0
        %1733 = vmatpush.bf16.msra.mxu0 0
        %1734 = vmatpush.bf16.msra.mxu0 %v1722
        %1735 = vmatmul.bf16.gmra.mxu0 %v1725
        %v1736 = vpop.f32.mrf.mxu0
        %v1737 = vadd.f32 0.0, %v1736
        %v1738 = vpop.f32.mrf.mxu0
        %v1739 = vadd.f32 0.0, %v1738
        %1740 = vdwg.mxu0
        %v1743 = vunpack.c.l.b16 %v1605
        %v1744 = vunpack.c.l.b16 %v1606
        %v1745 = vpack.c.b16 %v1744, %v1743
        %v1746 = vunpack.c.l.b16 %v1087
        %v1747 = vunpack.c.l.b16 %v1089
        %v1748 = vpack.c.b16 %v1747, %v1746
        %v1751 = vsel %vm1261, %v1745, 0
        %1753 = vmatpush.bf16.msra.mxu0 0
        %1754 = vmatpush.bf16.msra.mxu0 0
        %1755 = vmatpush.bf16.msra.mxu0 0
        %1756 = vmatpush.bf16.msra.mxu0 0
        %1757 = vmatpush.bf16.msra.mxu0 0
        %1758 = vmatpush.bf16.msra.mxu0 0
        %1759 = vmatpush.bf16.msra.mxu0 0
        %1760 = vmatpush.bf16.msra.mxu0 %v1748
        %1761 = vmatmul.bf16.gmra.mxu0 %v1751
        %v1762 = vpop.f32.mrf.mxu0
        %v1763 = vadd.f32 0.0, %v1762
        %v1764 = vpop.f32.mrf.mxu0
        %v1765 = vadd.f32 0.0, %v1764
        %1766 = vdwg.mxu0
        %v1769 = vunpack.c.l.b16 %v1607
        %v1770 = vunpack.c.l.b16 %v1608
        %v1771 = vpack.c.b16 %v1770, %v1769
        %v1772 = vunpack.c.l.b16 %v1091
        %v1773 = vunpack.c.l.b16 %v1093
        %v1774 = vpack.c.b16 %v1773, %v1772
        %v1777 = vsel %vm1261, %v1771, 0
        %1779 = vmatpush.bf16.msra.mxu0 0
        %1780 = vmatpush.bf16.msra.mxu0 0
        %1781 = vmatpush.bf16.msra.mxu0 0
        %1782 = vmatpush.bf16.msra.mxu0 0
        %1783 = vmatpush.bf16.msra.mxu0 0
        %1784 = vmatpush.bf16.msra.mxu0 0
        %1785 = vmatpush.bf16.msra.mxu0 0
        %1786 = vmatpush.bf16.msra.mxu0 %v1774
        %1787 = vmatmul.bf16.gmra.mxu0 %v1777
        %v1788 = vpop.f32.mrf.mxu0
        %v1789 = vadd.f32 0.0, %v1788
        %v1790 = vpop.f32.mrf.mxu0
        %v1791 = vadd.f32 0.0, %v1790
        %1792 = vdwg.mxu0
        %v1795 = vunpack.c.l.b16 %v1609
        %v1796 = vunpack.c.l.b16 %v1610
        %v1797 = vpack.c.b16 %v1796, %v1795
        %v1798 = vunpack.c.l.b16 %v1095
        %v1799 = vunpack.c.l.b16 %v1097
        %v1800 = vpack.c.b16 %v1799, %v1798
        %v1803 = vsel %vm1261, %v1797, 0
        %1805 = vmatpush.bf16.msra.mxu0 0
        %1806 = vmatpush.bf16.msra.mxu0 0
        %1807 = vmatpush.bf16.msra.mxu0 0
        %1808 = vmatpush.bf16.msra.mxu0 0
        %1809 = vmatpush.bf16.msra.mxu0 0
        %1810 = vmatpush.bf16.msra.mxu0 0
        %1811 = vmatpush.bf16.msra.mxu0 0
        %1812 = vmatpush.bf16.msra.mxu0 %v1800
        %1813 = vmatmul.bf16.gmra.mxu0 %v1803
        %v1814 = vpop.f32.mrf.mxu0
        %v1815 = vadd.f32 0.0, %v1814
        %v1816 = vpop.f32.mrf.mxu0
        %v1817 = vadd.f32 0.0, %v1816
        %1818 = vdwg.mxu0
        %v1819 = vrot.slane %v1685, 4
        %vm1820 = vcmask 1047556
        %v1821 = vsel %vm1820, %v1819, %v1633
        %v1822 = vrot.slane %v1633, 4
        %v1823 = vsel %vm1820, %v1685, %v1822
        %v1825 = vunpack.c.l.s4 1983009808
        %v1826 = vunpack.c.0.s8 %v1825
        %v1827 = vperm.slane %v1821, %v1826
        %v1829 = vunpack.c.l.s4 1983009808
        %v1830 = vunpack.c.0.s8 %v1829
        %v1831 = vperm.slane %v1823, %v1830
        %v1832 = vrot.slane %v1711, 4
        %v1833 = vsel %vm1820, %v1832, %v1659
        %v1834 = vrot.slane %v1659, 4
        %v1835 = vsel %vm1820, %v1711, %v1834
        %v1837 = vunpack.c.l.s4 1983009808
        %v1838 = vunpack.c.0.s8 %v1837
        %v1839 = vperm.slane %v1833, %v1838
        %v1841 = vunpack.c.l.s4 1983009808
        %v1842 = vunpack.c.0.s8 %v1841
        %v1843 = vperm.slane %v1835, %v1842
        %v1844 = vrot.slane %v1789, 4
        %v1845 = vsel %vm1820, %v1844, %v1737
        %v1846 = vrot.slane %v1737, 4
        %v1847 = vsel %vm1820, %v1789, %v1846
        %v1849 = vunpack.c.l.s4 1983009808
        %v1850 = vunpack.c.0.s8 %v1849
        %v1851 = vperm.slane %v1845, %v1850
        %v1853 = vunpack.c.l.s4 1983009808
        %v1854 = vunpack.c.0.s8 %v1853
        %v1855 = vperm.slane %v1847, %v1854
        %v1856 = vrot.slane %v1815, 4
        %v1857 = vsel %vm1820, %v1856, %v1763
        %v1858 = vrot.slane %v1763, 4
        %v1859 = vsel %vm1820, %v1815, %v1858
        %v1861 = vunpack.c.l.s4 1983009808
        %v1862 = vunpack.c.0.s8 %v1861
        %v1863 = vperm.slane %v1857, %v1862
        %v1865 = vunpack.c.l.s4 1983009808
        %v1866 = vunpack.c.0.s8 %v1865
        %v1867 = vperm.slane %v1859, %v1866
        %v1868 = vrot.slane %v1839, 4
        %v1869 = vsel %vm1820, %v1868, %v1827
        %v1870 = vrot.slane %v1827, 4
        %v1871 = vsel %vm1820, %v1839, %v1870
        %v1873 = vunpack.c.l.s4 1934713408
        %v1874 = vunpack.c.0.s8 %v1873
        %v1875 = vperm.slane %v1869, %v1874
        %v1877 = vunpack.c.l.s4 1934713408
        %v1878 = vunpack.c.0.s8 %v1877
        %v1879 = vperm.slane %v1871, %v1878
        %v1880 = vrot.slane %v1843, 4
        %v1881 = vsel %vm1820, %v1880, %v1831
        %v1882 = vrot.slane %v1831, 4
        %v1883 = vsel %vm1820, %v1843, %v1882
        %v1885 = vunpack.c.l.s4 1934713408
        %v1886 = vunpack.c.0.s8 %v1885
        %v1887 = vperm.slane %v1881, %v1886
        %v1889 = vunpack.c.l.s4 1934713408
        %v1890 = vunpack.c.0.s8 %v1889
        %v1891 = vperm.slane %v1883, %v1890
        %v1892 = vrot.slane %v1863, 4
        %v1893 = vsel %vm1820, %v1892, %v1851
        %v1894 = vrot.slane %v1851, 4
        %v1895 = vsel %vm1820, %v1863, %v1894
        %v1897 = vunpack.c.l.s4 1934713408
        %v1898 = vunpack.c.0.s8 %v1897
        %v1899 = vperm.slane %v1893, %v1898
        %v1901 = vunpack.c.l.s4 1934713408
        %v1902 = vunpack.c.0.s8 %v1901
        %v1903 = vperm.slane %v1895, %v1902
        %v1904 = vrot.slane %v1867, 4
        %v1905 = vsel %vm1820, %v1904, %v1855
        %v1906 = vrot.slane %v1855, 4
        %v1907 = vsel %vm1820, %v1867, %v1906
        %v1909 = vunpack.c.l.s4 1934713408
        %v1910 = vunpack.c.0.s8 %v1909
        %v1911 = vperm.slane %v1905, %v1910
        %v1913 = vunpack.c.l.s4 1934713408
        %v1914 = vunpack.c.0.s8 %v1913
        %v1915 = vperm.slane %v1907, %v1914
        %v1916 = vrot.slane %v1899, 4
        %v1917 = vsel %vm1820, %v1916, %v1875
        %v1918 = vrot.slane %v1875, 4
        %v1919 = vsel %vm1820, %v1899, %v1918
        %v1920 = vrot.slane %v1903, 4
        %v1921 = vsel %vm1820, %v1920, %v1879
        %v1922 = vrot.slane %v1879, 4
        %v1923 = vsel %vm1820, %v1903, %v1922
        %v1924 = vrot.slane %v1911, 4
        %v1925 = vsel %vm1820, %v1924, %v1887
        %v1926 = vrot.slane %v1887, 4
        %v1927 = vsel %vm1820, %v1911, %v1926
        %v1928 = vrot.slane %v1915, 4
        %v1929 = vsel %vm1820, %v1928, %v1891
        %v1930 = vrot.slane %v1891, 4
        %v1931 = vsel %vm1820, %v1915, %v1930
        %v1932 = vrot.slane %v1687, 4
        %v1933 = vsel %vm1820, %v1932, %v1635
        %v1934 = vrot.slane %v1635, 4
        %v1935 = vsel %vm1820, %v1687, %v1934
        %v1937 = vunpack.c.l.s4 1983009808
        %v1938 = vunpack.c.0.s8 %v1937
        %v1939 = vperm.slane %v1933, %v1938
        %v1941 = vunpack.c.l.s4 1983009808
        %v1942 = vunpack.c.0.s8 %v1941
        %v1943 = vperm.slane %v1935, %v1942
        %v1944 = vrot.slane %v1713, 4
        %v1945 = vsel %vm1820, %v1944, %v1661
        %v1946 = vrot.slane %v1661, 4
        %v1947 = vsel %vm1820, %v1713, %v1946
        %v1949 = vunpack.c.l.s4 1983009808
        %v1950 = vunpack.c.0.s8 %v1949
        %v1951 = vperm.slane %v1945, %v1950
        %v1953 = vunpack.c.l.s4 1983009808
        %v1954 = vunpack.c.0.s8 %v1953
        %v1955 = vperm.slane %v1947, %v1954
        %v1956 = vrot.slane %v1791, 4
        %v1957 = vsel %vm1820, %v1956, %v1739
        %v1958 = vrot.slane %v1739, 4
        %v1959 = vsel %vm1820, %v1791, %v1958
        %v1961 = vunpack.c.l.s4 1983009808
        %v1962 = vunpack.c.0.s8 %v1961
        %v1963 = vperm.slane %v1957, %v1962
        %v1965 = vunpack.c.l.s4 1983009808
        %v1966 = vunpack.c.0.s8 %v1965
        %v1967 = vperm.slane %v1959, %v1966
        %v1968 = vrot.slane %v1817, 4
        %v1969 = vsel %vm1820, %v1968, %v1765
        %v1970 = vrot.slane %v1765, 4
        %v1971 = vsel %vm1820, %v1817, %v1970
        %v1973 = vunpack.c.l.s4 1983009808
        %v1974 = vunpack.c.0.s8 %v1973
        %v1975 = vperm.slane %v1969, %v1974
        %v1977 = vunpack.c.l.s4 1983009808
        %v1978 = vunpack.c.0.s8 %v1977
        %v1979 = vperm.slane %v1971, %v1978
        %v1980 = vrot.slane %v1951, 4
        %v1981 = vsel %vm1820, %v1980, %v1939
        %v1982 = vrot.slane %v1939, 4
        %v1983 = vsel %vm1820, %v1951, %v1982
        %v1985 = vunpack.c.l.s4 1934713408
        %v1986 = vunpack.c.0.s8 %v1985
        %v1987 = vperm.slane %v1981, %v1986
        %v1989 = vunpack.c.l.s4 1934713408
        %v1990 = vunpack.c.0.s8 %v1989
        %v1991 = vperm.slane %v1983, %v1990
        %v1992 = vrot.slane %v1955, 4
        %v1993 = vsel %vm1820, %v1992, %v1943
        %v1994 = vrot.slane %v1943, 4
        %v1995 = vsel %vm1820, %v1955, %v1994
        %v1997 = vunpack.c.l.s4 1934713408
        %v1998 = vunpack.c.0.s8 %v1997
        %v1999 = vperm.slane %v1993, %v1998
        %v2001 = vunpack.c.l.s4 1934713408
        %v2002 = vunpack.c.0.s8 %v2001
        %v2003 = vperm.slane %v1995, %v2002
        %v2004 = vrot.slane %v1975, 4
        %v2005 = vsel %vm1820, %v2004, %v1963
        %v2006 = vrot.slane %v1963, 4
        %v2007 = vsel %vm1820, %v1975, %v2006
        %v2009 = vunpack.c.l.s4 1934713408
        %v2010 = vunpack.c.0.s8 %v2009
        %v2011 = vperm.slane %v2005, %v2010
        %v2013 = vunpack.c.l.s4 1934713408
        %v2014 = vunpack.c.0.s8 %v2013
        %v2015 = vperm.slane %v2007, %v2014
        %v2016 = vrot.slane %v1979, 4
        %v2017 = vsel %vm1820, %v2016, %v1967
        %v2018 = vrot.slane %v1967, 4
        %v2019 = vsel %vm1820, %v1979, %v2018
        %v2021 = vunpack.c.l.s4 1934713408
        %v2022 = vunpack.c.0.s8 %v2021
        %v2023 = vperm.slane %v2017, %v2022
        %v2025 = vunpack.c.l.s4 1934713408
        %v2026 = vunpack.c.0.s8 %v2025
        %v2027 = vperm.slane %v2019, %v2026
        %v2028 = vrot.slane %v2011, 4
        %v2029 = vsel %vm1820, %v2028, %v1987
        %v2030 = vrot.slane %v1987, 4
        %v2031 = vsel %vm1820, %v2011, %v2030
        %v2032 = vrot.slane %v2015, 4
        %v2033 = vsel %vm1820, %v2032, %v1991
        %v2034 = vrot.slane %v1991, 4
        %v2035 = vsel %vm1820, %v2015, %v2034
        %v2036 = vrot.slane %v2023, 4
        %v2037 = vsel %vm1820, %v2036, %v1999
        %v2038 = vrot.slane %v1999, 4
        %v2039 = vsel %vm1820, %v2023, %v2038
        %v2040 = vrot.slane %v2027, 4
        %v2041 = vsel %vm1820, %v2040, %v2003
        %v2042 = vrot.slane %v2003, 4
        %v2043 = vsel %vm1820, %v2027, %v2042
        %v2044 = vrot.slane %v1921, 4
        %v2045 = vsel %vm1820, %v2044, %v1917
        %v2046 = vrot.slane %v1917, 4
        %v2047 = vsel %vm1820, %v1921, %v2046
        %v2049 = vunpack.c.l.s4 1983009808
        %v2050 = vunpack.c.0.s8 %v2049
        %v2051 = vperm.slane %v2045, %v2050
        %v2053 = vunpack.c.l.s4 1983009808
        %v2054 = vunpack.c.0.s8 %v2053
        %v2055 = vperm.slane %v2047, %v2054
        %v2056 = vrot.slane %v1923, 4
        %v2057 = vsel %vm1820, %v2056, %v1919
        %v2058 = vrot.slane %v1919, 4
        %v2059 = vsel %vm1820, %v1923, %v2058
        %v2061 = vunpack.c.l.s4 1983009808
        %v2062 = vunpack.c.0.s8 %v2061
        %v2063 = vperm.slane %v2057, %v2062
        %v2065 = vunpack.c.l.s4 1983009808
        %v2066 = vunpack.c.0.s8 %v2065
        %v2067 = vperm.slane %v2059, %v2066
        %v2068 = vrot.slane %v1929, 4
        %v2069 = vsel %vm1820, %v2068, %v1925
        %v2070 = vrot.slane %v1925, 4
        %v2071 = vsel %vm1820, %v1929, %v2070
        %v2073 = vunpack.c.l.s4 1983009808
        %v2074 = vunpack.c.0.s8 %v2073
        %v2075 = vperm.slane %v2069, %v2074
        %v2077 = vunpack.c.l.s4 1983009808
        %v2078 = vunpack.c.0.s8 %v2077
        %v2079 = vperm.slane %v2071, %v2078
        %v2080 = vrot.slane %v1931, 4
        %v2081 = vsel %vm1820, %v2080, %v1927
        %v2082 = vrot.slane %v1927, 4
        %v2083 = vsel %vm1820, %v1931, %v2082
        %v2085 = vunpack.c.l.s4 1983009808
        %v2086 = vunpack.c.0.s8 %v2085
        %v2087 = vperm.slane %v2081, %v2086
        %v2089 = vunpack.c.l.s4 1983009808
        %v2090 = vunpack.c.0.s8 %v2089
        %v2091 = vperm.slane %v2083, %v2090
        %v2092 = vrot.slane %v2063, 4
        %v2093 = vsel %vm1820, %v2092, %v2051
        %v2094 = vrot.slane %v2051, 4
        %v2095 = vsel %vm1820, %v2063, %v2094
        %v2097 = vunpack.c.l.s4 1934713408
        %v2098 = vunpack.c.0.s8 %v2097
        %v2099 = vperm.slane %v2093, %v2098
        %v2101 = vunpack.c.l.s4 1934713408
        %v2102 = vunpack.c.0.s8 %v2101
        %v2103 = vperm.slane %v2095, %v2102
        %v2104 = vrot.slane %v2067, 4
        %v2105 = vsel %vm1820, %v2104, %v2055
        %v2106 = vrot.slane %v2055, 4
        %v2107 = vsel %vm1820, %v2067, %v2106
        %v2109 = vunpack.c.l.s4 1934713408
        %v2110 = vunpack.c.0.s8 %v2109
        %v2111 = vperm.slane %v2105, %v2110
        %v2113 = vunpack.c.l.s4 1934713408
        %v2114 = vunpack.c.0.s8 %v2113
        %v2115 = vperm.slane %v2107, %v2114
        %v2116 = vrot.slane %v2087, 4
        %v2117 = vsel %vm1820, %v2116, %v2075
        %v2118 = vrot.slane %v2075, 4
        %v2119 = vsel %vm1820, %v2087, %v2118
        %v2121 = vunpack.c.l.s4 1934713408
        %v2122 = vunpack.c.0.s8 %v2121
        %v2123 = vperm.slane %v2117, %v2122
        %v2125 = vunpack.c.l.s4 1934713408
        %v2126 = vunpack.c.0.s8 %v2125
        %v2127 = vperm.slane %v2119, %v2126
        %v2128 = vrot.slane %v2091, 4
        %v2129 = vsel %vm1820, %v2128, %v2079
        %v2130 = vrot.slane %v2079, 4
        %v2131 = vsel %vm1820, %v2091, %v2130
        %v2133 = vunpack.c.l.s4 1934713408
        %v2134 = vunpack.c.0.s8 %v2133
        %v2135 = vperm.slane %v2129, %v2134
        %v2137 = vunpack.c.l.s4 1934713408
        %v2138 = vunpack.c.0.s8 %v2137
        %v2139 = vperm.slane %v2131, %v2138
        %v2140 = vrot.slane %v2123, 4
        %v2141 = vsel %vm1820, %v2140, %v2099
        %v2142 = vrot.slane %v2099, 4
        %v2143 = vsel %vm1820, %v2123, %v2142
        %v2144 = vrot.slane %v2127, 4
        %v2145 = vsel %vm1820, %v2144, %v2103
        %v2146 = vrot.slane %v2103, 4
        %v2147 = vsel %vm1820, %v2127, %v2146
        %v2148 = vrot.slane %v2135, 4
        %v2149 = vsel %vm1820, %v2148, %v2111
        %v2150 = vrot.slane %v2111, 4
        %v2151 = vsel %vm1820, %v2135, %v2150
        %v2152 = vrot.slane %v2139, 4
        %v2153 = vsel %vm1820, %v2152, %v2115
        %v2154 = vrot.slane %v2115, 4
        %v2155 = vsel %vm1820, %v2139, %v2154
        %v2156 = vrot.slane %v2033, 4
        %v2157 = vsel %vm1820, %v2156, %v2029
        %v2158 = vrot.slane %v2029, 4
        %v2159 = vsel %vm1820, %v2033, %v2158
        %v2161 = vunpack.c.l.s4 1983009808
        %v2162 = vunpack.c.0.s8 %v2161
        %v2163 = vperm.slane %v2157, %v2162
        %v2165 = vunpack.c.l.s4 1983009808
        %v2166 = vunpack.c.0.s8 %v2165
        %v2167 = vperm.slane %v2159, %v2166
        %v2168 = vrot.slane %v2035, 4
        %v2169 = vsel %vm1820, %v2168, %v2031
        %v2170 = vrot.slane %v2031, 4
        %v2171 = vsel %vm1820, %v2035, %v2170
        %v2173 = vunpack.c.l.s4 1983009808
        %v2174 = vunpack.c.0.s8 %v2173
        %v2175 = vperm.slane %v2169, %v2174
        %v2177 = vunpack.c.l.s4 1983009808
        %v2178 = vunpack.c.0.s8 %v2177
        %v2179 = vperm.slane %v2171, %v2178
        %v2180 = vrot.slane %v2041, 4
        %v2181 = vsel %vm1820, %v2180, %v2037
        %v2182 = vrot.slane %v2037, 4
        %v2183 = vsel %vm1820, %v2041, %v2182
        %v2185 = vunpack.c.l.s4 1983009808
        %v2186 = vunpack.c.0.s8 %v2185
        %v2187 = vperm.slane %v2181, %v2186
        %v2189 = vunpack.c.l.s4 1983009808
        %v2190 = vunpack.c.0.s8 %v2189
        %v2191 = vperm.slane %v2183, %v2190
        %v2192 = vrot.slane %v2043, 4
        %v2193 = vsel %vm1820, %v2192, %v2039
        %v2194 = vrot.slane %v2039, 4
        %v2195 = vsel %vm1820, %v2043, %v2194
        %v2197 = vunpack.c.l.s4 1983009808
        %v2198 = vunpack.c.0.s8 %v2197
        %v2199 = vperm.slane %v2193, %v2198
        %v2201 = vunpack.c.l.s4 1983009808
        %v2202 = vunpack.c.0.s8 %v2201
        %v2203 = vperm.slane %v2195, %v2202
        %v2204 = vrot.slane %v2175, 4
        %v2205 = vsel %vm1820, %v2204, %v2163
        %v2206 = vrot.slane %v2163, 4
        %v2207 = vsel %vm1820, %v2175, %v2206
        %v2209 = vunpack.c.l.s4 1934713408
        %v2210 = vunpack.c.0.s8 %v2209
        %v2211 = vperm.slane %v2205, %v2210
        %v2213 = vunpack.c.l.s4 1934713408
        %v2214 = vunpack.c.0.s8 %v2213
        %v2215 = vperm.slane %v2207, %v2214
        %v2216 = vrot.slane %v2179, 4
        %v2217 = vsel %vm1820, %v2216, %v2167
        %v2218 = vrot.slane %v2167, 4
        %v2219 = vsel %vm1820, %v2179, %v2218
        %v2221 = vunpack.c.l.s4 1934713408
        %v2222 = vunpack.c.0.s8 %v2221
        %v2223 = vperm.slane %v2217, %v2222
        %v2225 = vunpack.c.l.s4 1934713408
        %v2226 = vunpack.c.0.s8 %v2225
        %v2227 = vperm.slane %v2219, %v2226
        %v2228 = vrot.slane %v2199, 4
        %v2229 = vsel %vm1820, %v2228, %v2187
        %v2230 = vrot.slane %v2187, 4
        %v2231 = vsel %vm1820, %v2199, %v2230
        %v2233 = vunpack.c.l.s4 1934713408
        %v2234 = vunpack.c.0.s8 %v2233
        %v2235 = vperm.slane %v2229, %v2234
        %v2237 = vunpack.c.l.s4 1934713408
        %v2238 = vunpack.c.0.s8 %v2237
        %v2239 = vperm.slane %v2231, %v2238
        %v2240 = vrot.slane %v2203, 4
        %v2241 = vsel %vm1820, %v2240, %v2191
        %v2242 = vrot.slane %v2191, 4
        %v2243 = vsel %vm1820, %v2203, %v2242
        %v2245 = vunpack.c.l.s4 1934713408
        %v2246 = vunpack.c.0.s8 %v2245
        %v2247 = vperm.slane %v2241, %v2246
        %v2249 = vunpack.c.l.s4 1934713408
        %v2250 = vunpack.c.0.s8 %v2249
        %v2251 = vperm.slane %v2243, %v2250
        %v2252 = vrot.slane %v2235, 4
        %v2253 = vsel %vm1820, %v2252, %v2211
        %v2254 = vrot.slane %v2211, 4
        %v2255 = vsel %vm1820, %v2235, %v2254
        %v2256 = vrot.slane %v2239, 4
        %v2257 = vsel %vm1820, %v2256, %v2215
        %v2258 = vrot.slane %v2215, 4
        %v2259 = vsel %vm1820, %v2239, %v2258
        %v2260 = vrot.slane %v2247, 4
        %v2261 = vsel %vm1820, %v2260, %v2223
        %v2262 = vrot.slane %v2223, 4
        %v2263 = vsel %vm1820, %v2247, %v2262
        %v2264 = vrot.slane %v2251, 4
        %v2265 = vsel %vm1820, %v2264, %v2227
        %v2266 = vrot.slane %v2227, 4
        %v2267 = vsel %vm1820, %v2251, %v2266
        %2270 = vrot.lane.b32.xlu0 %v2143, 16
        %v2271 = vpop.permute.xlu0 %2270
        %2272 = vrot.lane.b32.xlu0 %v2255, 16
        %v2273 = vpop.permute.xlu0 %2272
        %2278 = vrot.lane.b32.xlu0 %v2145, 32
        %v2279 = vpop.permute.xlu0 %2278
        %2280 = vrot.lane.b32.xlu0 %v2257, 32
        %v2281 = vpop.permute.xlu0 %2280
        %2286 = vrot.lane.b32.xlu0 %v2147, 48
        %v2287 = vpop.permute.xlu0 %2286
        %2288 = vrot.lane.b32.xlu0 %v2259, 48
        %v2289 = vpop.permute.xlu0 %2288
        %2294 = vrot.lane.b32.xlu0 %v2149, 64
        %v2295 = vpop.permute.xlu0 %2294
        %2296 = vrot.lane.b32.xlu0 %v2261, 64
        %v2297 = vpop.permute.xlu0 %2296
        %2302 = vrot.lane.b32.xlu0 %v2151, 80
        %v2303 = vpop.permute.xlu0 %2302
        %2304 = vrot.lane.b32.xlu0 %v2263, 80
        %v2305 = vpop.permute.xlu0 %2304
        %2310 = vrot.lane.b32.xlu0 %v2153, 96
        %v2311 = vpop.permute.xlu0 %2310
        %2312 = vrot.lane.b32.xlu0 %v2265, 96
        %v2313 = vpop.permute.xlu0 %2312
        %2318 = vrot.lane.b32.xlu0 %v2155, 112
        %v2319 = vpop.permute.xlu0 %2318
        %2320 = vrot.lane.b32.xlu0 %v2267, 112
        %v2321 = vpop.permute.xlu0 %2320
        %v2324 = vsel %vm1261, %v2141, %v2271
        %v2325 = vsel %vm1261, %v2253, %v2273
        %vm2326 = vcmask 261120
        %v2327 = vsel %vm2326, %v2324, %v2279
        %v2328 = vsel %vm2326, %v2325, %v2281
        %vm2329 = vcmask 392192
        %v2330 = vsel %vm2329, %v2327, %v2287
        %v2331 = vsel %vm2329, %v2328, %v2289
        %vm2332 = vcmask 523264
        %v2333 = vsel %vm2332, %v2330, %v2295
        %v2334 = vsel %vm2332, %v2331, %v2297
        %vm2335 = vcmask 654336
        %v2336 = vsel %vm2335, %v2333, %v2303
        %v2337 = vsel %vm2335, %v2334, %v2305
        %vm2338 = vcmask 785408
        %v2339 = vsel %vm2338, %v2336, %v2311
        %v2340 = vsel %vm2338, %v2337, %v2313
        %vm2341 = vcmask 916480
        %v2342 = vsel %vm2341, %v2339, %v2319
        %v2343 = vsel %vm2341, %v2340, %v2321
        %v2344 = vpack.c.bf16 %v2343, %v2342
        %v2345 = vld [vmem:[#allocation13] sm:$0xf]
        %v2346 = vld [vmem:[#allocation13 + $0x4] sm:$0xf]
        %v2347 = vld [vmem:[#allocation13 + $0x8] sm:$0xf]
        %v2348 = vld [vmem:[#allocation13 + $0xc] sm:$0xf]
        %v2349 = vld [vmem:[#allocation13 + $0x10] sm:$0xf]
        %v2350 = vld [vmem:[#allocation13 + $0x14] sm:$0xf]
        %v2351 = vld [vmem:[#allocation13 + $0x18] sm:$0xf]
        %v2352 = vld [vmem:[#allocation13 + $0x1c] sm:$0xf]
        %v2353 = vld [vmem:[#allocation13 + $0x20] sm:$0xf]
        %v2354 = vld [vmem:[#allocation13 + $0x24] sm:$0xf]
        %v2355 = vld [vmem:[#allocation13 + $0x28] sm:$0xf]
        %v2356 = vld [vmem:[#allocation13 + $0x2c] sm:$0xf]
        %v2357 = vld [vmem:[#allocation13 + $0x30] sm:$0xf]
        %v2358 = vld [vmem:[#allocation13 + $0x34] sm:$0xf]
        %v2359 = vld [vmem:[#allocation13 + $0x38] sm:$0xf]
        %v2360 = vld [vmem:[#allocation13 + $0x3c] sm:$0xf]
        %v2361 = vld [vmem:[%s9] sm:$0x1]
        %v2363 = vperm.slane %v2361, 0
        %v2381 = vunpack.c.l.b16 %v2345
        %v2382 = vunpack.c.l.b16 %v2346
        %v2383 = vunpack.c.l.b16 %v2347
        %v2384 = vunpack.c.l.b16 %v2348
        %v2385 = vunpack.c.l.b16 %v2349
        %v2386 = vunpack.c.l.b16 %v2350
        %v2387 = vunpack.c.l.b16 %v2351
        %v2388 = vunpack.c.l.b16 %v2352
        %v2389 = vunpack.c.l.b16 %v2353
        %v2390 = vunpack.c.l.b16 %v2354
        %v2391 = vunpack.c.l.b16 %v2355
        %v2392 = vunpack.c.l.b16 %v2356
        %v2393 = vunpack.c.l.b16 %v2357
        %v2394 = vunpack.c.l.b16 %v2358
        %v2395 = vunpack.c.l.b16 %v2359
        %v2396 = vunpack.c.l.b16 %v2360
        %v2397 = vpack.c.b16 %v2382, %v2381
        %v2398 = vpack.c.b16 %v2384, %v2383
        %v2399 = vpack.c.b16 %v2386, %v2385
        %v2400 = vpack.c.b16 %v2388, %v2387
        %v2401 = vpack.c.b16 %v2390, %v2389
        %v2402 = vpack.c.b16 %v2392, %v2391
        %v2403 = vpack.c.b16 %v2394, %v2393
        %v2404 = vpack.c.b16 %v2396, %v2395
        %2413 = vmatpush.bf16.msra.mxu0 %v2404
        %2414 = vmatpush.bf16.msra.mxu0 %v2403
        %2415 = vmatpush.bf16.msra.mxu0 %v2402
        %2416 = vmatpush.bf16.msra.mxu0 %v2401
        %2417 = vmatpush.bf16.msra.mxu0 %v2400
        %2418 = vmatpush.bf16.msra.mxu0 %v2399
        %2419 = vmatpush.bf16.msra.mxu0 %v2398
        %2420 = vmatpush.bf16.msra.mxu0 %v2397
        %2421 = vmatmul.bf16.gmra.mxu0 %v2344
        %v2422 = vpop.f32.mrf.mxu0
        %v2423 = vadd.f32 %v2363, %v2422
        %v2424 = vpop.f32.mrf.mxu0
        %v2425 = vadd.f32 %v2363, %v2424
        %2426 = vdwg.mxu0
        %v2427 = vadd.f32 %v871, %v2423
        %v2428 = vadd.f32 %v872, %v2425
        %v2429 = vld [vmem:[%s10] sm:$0x1]
        %v2430 = vmul.f32 %v2427, %v2427
        %v2431 = vmul.f32 %v2428, %v2428
        %2432 = vadd.xlane.f32.xlu0 %v2430
        %v2433 = vpop.xlane.xlu0 %2432
        %2434 = vadd.xlane.f32.xlu0 %v2431
        %v2435 = vpop.xlane.xlu0 %2434
        %v2436 = vmul.f32 %v2433, %v885
        %v2437 = vmul.f32 %v2435, %v885
        %v2438 = vadd.f32 %v2436, 1e-06
        %v2439 = vadd.f32 %v2437, 1e-06
        %v2440 = vrsqrt.pop %v2438
        %v2441 = vmul.f32 %v2440, %v2438
        %v2442 = vmul.f32 %v2441, %v2440
        %v2443 = vmul.f32 0.5, %v2442
        %v2444 = vsub.f32 1.5, %v2443
        %v2445 = vmul.f32 %v2440, %v2444
        %vm2446 = vweird.f32 %v2438
        %vm2447 = vweird.f32 %v2440
        %vm2448 = vmor %vm2446, %vm2447
        %v2449 = vsel %vm2448, %v2440, %v2445
        %v2450 = vrsqrt.pop %v2439
        %v2451 = vmul.f32 %v2450, %v2439
        %v2452 = vmul.f32 %v2451, %v2450
        %v2453 = vmul.f32 0.5, %v2452
        %v2454 = vsub.f32 1.5, %v2453
        %v2455 = vmul.f32 %v2450, %v2454
        %vm2456 = vweird.f32 %v2439
        %vm2457 = vweird.f32 %v2450
        %vm2458 = vmor %vm2456, %vm2457
        %v2459 = vsel %vm2458, %v2450, %v2455
        %v2460 = vmul.f32 %v2427, %v2449
        %v2461 = vmul.f32 %v2428, %v2459
        %v2463 = vperm.slane %v2429, 0
        %v2465 = vmul.f32 %v2460, %v2463
        %v2466 = vmul.f32 %v2461, %v2463
        %v2467 = vpack.c.bf16 %v2466, %v2465
        %v2468 = vld [vmem:[#allocation15] sm:$0xff]
        %v2469 = vld [vmem:[#allocation15 + $0x8] sm:$0xff]
        %v2470 = vld [vmem:[#allocation15 + $0x10] sm:$0xff]
        %v2471 = vld [vmem:[#allocation15 + $0x18] sm:$0xff]
        %v2472 = vld [vmem:[#allocation15 + $0x20] sm:$0xff]
        %v2473 = vld [vmem:[#allocation15 + $0x28] sm:$0xff]
        %v2474 = vld [vmem:[#allocation15 + $0x30] sm:$0xff]
        %v2475 = vld [vmem:[#allocation15 + $0x38] sm:$0xff]
        %v2476 = vld [vmem:[#allocation15 + $0x40] sm:$0xff]
        %v2477 = vld [vmem:[#allocation15 + $0x48] sm:$0xff]
        %v2478 = vld [vmem:[#allocation15 + $0x50] sm:$0xff]
        %v2479 = vld [vmem:[#allocation15 + $0x58] sm:$0xff]
        %v2480 = vld [vmem:[#allocation15 + $0x60] sm:$0xff]
        %v2481 = vld [vmem:[#allocation15 + $0x68] sm:$0xff]
        %v2482 = vld [vmem:[#allocation15 + $0x70] sm:$0xff]
        %v2483 = vld [vmem:[#allocation15 + $0x78] sm:$0xff]
        %v2484 = vld [vmem:[#allocation15 + $0x80] sm:$0xff]
        %v2485 = vld [vmem:[#allocation15 + $0x88] sm:$0xff]
        %v2486 = vld [vmem:[#allocation15 + $0x90] sm:$0xff]
        %v2487 = vld [vmem:[#allocation15 + $0x98] sm:$0xff]
        %v2488 = vld [vmem:[#allocation15 + $0xa0] sm:$0xff]
        %v2489 = vld [vmem:[#allocation15 + $0xa8] sm:$0xff]
        %v2490 = vld [vmem:[#allocation15 + $0xb0] sm:$0xff]
        %v2491 = vld [vmem:[#allocation15 + $0xb8] sm:$0xff]
        %v2492 = vld [vmem:[#allocation15 + $0xc0] sm:$0xff]
        %v2493 = vld [vmem:[#allocation15 + $0xc8] sm:$0xff]
        %v2494 = vld [vmem:[#allocation15 + $0xd0] sm:$0xff]
        %v2495 = vld [vmem:[#allocation15 + $0xd8] sm:$0xff]
        %v2496 = vld [vmem:[#allocation15 + $0xe0] sm:$0xff]
        %v2497 = vld [vmem:[#allocation15 + $0xe8] sm:$0xff]
        %v2498 = vld [vmem:[#allocation15 + $0xf0] sm:$0xff]
        %v2499 = vld [vmem:[#allocation15 + $0xf8] sm:$0xff]
        %v2500 = vld [vmem:[%s12] sm:$0xf]
        %v2502 = vperm.slane %v2500, 0
        %v2503 = vperm.slane %v2500, 1
        %v2504 = vperm.slane %v2500, 2
        %v2505 = vperm.slane %v2500, 3
        %v2542 = vunpack.c.l.b16 %v2468
        %v2543 = vunpack.c.h.b16 %v2468
        %v2544 = vunpack.c.l.b16 %v2469
        %v2545 = vunpack.c.h.b16 %v2469
        %v2546 = vunpack.c.l.b16 %v2470
        %v2547 = vunpack.c.h.b16 %v2470
        %v2548 = vunpack.c.l.b16 %v2471
        %v2549 = vunpack.c.h.b16 %v2471
        %v2550 = vunpack.c.l.b16 %v2472
        %v2551 = vunpack.c.h.b16 %v2472
        %v2552 = vunpack.c.l.b16 %v2473
        %v2553 = vunpack.c.h.b16 %v2473
        %v2554 = vunpack.c.l.b16 %v2474
        %v2555 = vunpack.c.h.b16 %v2474
        %v2556 = vunpack.c.l.b16 %v2475
        %v2557 = vunpack.c.h.b16 %v2475
        %v2558 = vunpack.c.l.b16 %v2476
        %v2559 = vunpack.c.h.b16 %v2476
        %v2560 = vunpack.c.l.b16 %v2477
        %v2561 = vunpack.c.h.b16 %v2477
        %v2562 = vunpack.c.l.b16 %v2478
        %v2563 = vunpack.c.h.b16 %v2478
        %v2564 = vunpack.c.l.b16 %v2479
        %v2565 = vunpack.c.h.b16 %v2479
        %v2566 = vunpack.c.l.b16 %v2480
        %v2567 = vunpack.c.h.b16 %v2480
        %v2568 = vunpack.c.l.b16 %v2481
        %v2569 = vunpack.c.h.b16 %v2481
        %v2570 = vunpack.c.l.b16 %v2482
        %v2571 = vunpack.c.h.b16 %v2482
        %v2572 = vunpack.c.l.b16 %v2483
        %v2573 = vunpack.c.h.b16 %v2483
        %v2574 = vunpack.c.l.b16 %v2484
        %v2575 = vunpack.c.h.b16 %v2484
        %v2576 = vunpack.c.l.b16 %v2485
        %v2577 = vunpack.c.h.b16 %v2485
        %v2578 = vunpack.c.l.b16 %v2486
        %v2579 = vunpack.c.h.b16 %v2486
        %v2580 = vunpack.c.l.b16 %v2487
        %v2581 = vunpack.c.h.b16 %v2487
        %v2582 = vunpack.c.l.b16 %v2488
        %v2583 = vunpack.c.h.b16 %v2488
        %v2584 = vunpack.c.l.b16 %v2489
        %v2585 = vunpack.c.h.b16 %v2489
        %v2586 = vunpack.c.l.b16 %v2490
        %v2587 = vunpack.c.h.b16 %v2490
        %v2588 = vunpack.c.l.b16 %v2491
        %v2589 = vunpack.c.h.b16 %v2491
        %v2590 = vunpack.c.l.b16 %v2492
        %v2591 = vunpack.c.h.b16 %v2492
        %v2592 = vunpack.c.l.b16 %v2493
        %v2593 = vunpack.c.h.b16 %v2493
        %v2594 = vunpack.c.l.b16 %v2494
        %v2595 = vunpack.c.h.b16 %v2494
        %v2596 = vunpack.c.l.b16 %v2495
        %v2597 = vunpack.c.h.b16 %v2495
        %v2598 = vunpack.c.l.b16 %v2496
        %v2599 = vunpack.c.h.b16 %v2496
        %v2600 = vunpack.c.l.b16 %v2497
        %v2601 = vunpack.c.h.b16 %v2497
        %v2602 = vunpack.c.l.b16 %v2498
        %v2603 = vunpack.c.h.b16 %v2498
        %v2604 = vunpack.c.l.b16 %v2499
        %v2605 = vunpack.c.h.b16 %v2499
        %v2606 = vpack.c.b16 %v2546, %v2542
        %v2607 = vpack.c.b16 %v2547, %v2543
        %v2608 = vpack.c.b16 %v2548, %v2544
        %v2609 = vpack.c.b16 %v2549, %v2545
        %v2610 = vpack.c.b16 %v2554, %v2550
        %v2611 = vpack.c.b16 %v2555, %v2551
        %v2612 = vpack.c.b16 %v2556, %v2552
        %v2613 = vpack.c.b16 %v2557, %v2553
        %v2614 = vpack.c.b16 %v2562, %v2558
        %v2615 = vpack.c.b16 %v2563, %v2559
        %v2616 = vpack.c.b16 %v2564, %v2560
        %v2617 = vpack.c.b16 %v2565, %v2561
        %v2618 = vpack.c.b16 %v2570, %v2566
        %v2619 = vpack.c.b16 %v2571, %v2567
        %v2620 = vpack.c.b16 %v2572, %v2568
        %v2621 = vpack.c.b16 %v2573, %v2569
        %v2622 = vpack.c.b16 %v2578, %v2574
        %v2623 = vpack.c.b16 %v2579, %v2575
        %v2624 = vpack.c.b16 %v2580, %v2576
        %v2625 = vpack.c.b16 %v2581, %v2577
        %v2626 = vpack.c.b16 %v2586, %v2582
        %v2627 = vpack.c.b16 %v2587, %v2583
        %v2628 = vpack.c.b16 %v2588, %v2584
        %v2629 = vpack.c.b16 %v2589, %v2585
        %v2630 = vpack.c.b16 %v2594, %v2590
        %v2631 = vpack.c.b16 %v2595, %v2591
        %v2632 = vpack.c.b16 %v2596, %v2592
        %v2633 = vpack.c.b16 %v2597, %v2593
        %v2634 = vpack.c.b16 %v2602, %v2598
        %v2635 = vpack.c.b16 %v2603, %v2599
        %v2636 = vpack.c.b16 %v2604, %v2600
        %v2637 = vpack.c.b16 %v2605, %v2601
        %2670 = vmatpush.bf16.msra.mxu0 %v2634
        %2671 = vmatpush.bf16.msra.mxu0 %v2630
        %2672 = vmatpush.bf16.msra.mxu0 %v2626
        %2673 = vmatpush.bf16.msra.mxu0 %v2622
        %2674 = vmatpush.bf16.msra.mxu0 %v2618
        %2675 = vmatpush.bf16.msra.mxu0 %v2614
        %2676 = vmatpush.bf16.msra.mxu0 %v2610
        %2677 = vmatpush.bf16.msra.mxu0 %v2606
        %2678 = vmatmul.bf16.gmra.mxu0 %v2467
        %v2679 = vpop.f32.mrf.mxu0
        %v2680 = vadd.f32 %v2502, %v2679
        %v2681 = vpop.f32.mrf.mxu0
        %v2682 = vadd.f32 %v2502, %v2681
        %2683 = vdwg.mxu0
        %2684 = vmatpush.bf16.msra.mxu0 %v2635
        %2685 = vmatpush.bf16.msra.mxu0 %v2631
        %2686 = vmatpush.bf16.msra.mxu0 %v2627
        %2687 = vmatpush.bf16.msra.mxu0 %v2623
        %2688 = vmatpush.bf16.msra.mxu0 %v2619
        %2689 = vmatpush.bf16.msra.mxu0 %v2615
        %2690 = vmatpush.bf16.msra.mxu0 %v2611
        %2691 = vmatpush.bf16.msra.mxu0 %v2607
        %2692 = vmatmul.bf16.gmra.mxu0 %v2467
        %v2693 = vpop.f32.mrf.mxu0
        %v2694 = vadd.f32 %v2503, %v2693
        %v2695 = vpop.f32.mrf.mxu0
        %v2696 = vadd.f32 %v2503, %v2695
        %2697 = vdwg.mxu0
        %2698 = vmatpush.bf16.msra.mxu0 %v2636
        %2699 = vmatpush.bf16.msra.mxu0 %v2632
        %2700 = vmatpush.bf16.msra.mxu0 %v2628
        %2701 = vmatpush.bf16.msra.mxu0 %v2624
        %2702 = vmatpush.bf16.msra.mxu0 %v2620
        %2703 = vmatpush.bf16.msra.mxu0 %v2616
        %2704 = vmatpush.bf16.msra.mxu0 %v2612
        %2705 = vmatpush.bf16.msra.mxu0 %v2608
        %2706 = vmatmul.bf16.gmra.mxu0 %v2467
        %v2707 = vpop.f32.mrf.mxu0
        %v2708 = vadd.f32 %v2504, %v2707
        %v2709 = vpop.f32.mrf.mxu0
        %v2710 = vadd.f32 %v2504, %v2709
        %2711 = vdwg.mxu0
        %2712 = vmatpush.bf16.msra.mxu0 %v2637
        %2713 = vmatpush.bf16.msra.mxu0 %v2633
        %2714 = vmatpush.bf16.msra.mxu0 %v2629
        %2715 = vmatpush.bf16.msra.mxu0 %v2625
        %2716 = vmatpush.bf16.msra.mxu0 %v2621
        %2717 = vmatpush.bf16.msra.mxu0 %v2617
        %2718 = vmatpush.bf16.msra.mxu0 %v2613
        %2719 = vmatpush.bf16.msra.mxu0 %v2609
        %2720 = vmatmul.bf16.gmra.mxu0 %v2467
        %v2721 = vpop.f32.mrf.mxu0
        %v2722 = vadd.f32 %v2505, %v2721
        %v2723 = vpop.f32.mrf.mxu0
        %v2724 = vadd.f32 %v2505, %v2723
        %2725 = vdwg.mxu0
        %v2726 = vxor.u32 %v2680, 2147483648
        %v2727 = vxor.u32 %v2694, 2147483648
        %v2728 = vxor.u32 %v2708, 2147483648
        %v2729 = vxor.u32 %v2722, 2147483648
        %v2730 = vxor.u32 %v2682, 2147483648
        %v2731 = vxor.u32 %v2696, 2147483648
        %v2732 = vxor.u32 %v2710, 2147483648
        %v2733 = vxor.u32 %v2724, 2147483648
        %v2734 = vmul.f32 %v2726, 1.442695
        %v2735 = vpow.pop %v2734
        %v2736 = vmul.f32 %v2727, 1.442695
        %v2737 = vpow.pop %v2736
        %v2738 = vmul.f32 %v2728, 1.442695
        %v2739 = vpow.pop %v2738
        %v2740 = vmul.f32 %v2729, 1.442695
        %v2741 = vpow.pop %v2740
        %v2742 = vmul.f32 %v2730, 1.442695
        %v2743 = vpow.pop %v2742
        %v2744 = vmul.f32 %v2731, 1.442695
        %v2745 = vpow.pop %v2744
        %v2746 = vmul.f32 %v2732, 1.442695
        %v2747 = vpow.pop %v2746
        %v2748 = vmul.f32 %v2733, 1.442695
        %v2749 = vpow.pop %v2748
        %v2750 = vadd.f32 %v2735, 1.0
        %v2751 = vadd.f32 %v2737, 1.0
        %v2752 = vadd.f32 %v2739, 1.0
        %v2753 = vadd.f32 %v2741, 1.0
        %v2754 = vadd.f32 %v2743, 1.0
        %v2755 = vadd.f32 %v2745, 1.0
        %v2756 = vadd.f32 %v2747, 1.0
        %v2757 = vadd.f32 %v2749, 1.0
        %v2758 = vrcp.pop %v2750
        %v2759 = vmul.f32 %v2750, %v2758
        %v2760 = vsub.f32 1.0, %v2759
        %v2761 = vmul.f32 %v2758, %v2760
        %v2762 = vadd.f32 %v2758, %v2761
        %vm2763 = vweird.f32 %v2750
        %vm2764 = vweird.f32 %v2758
        %vm2765 = vmor %vm2763, %vm2764
        %v2766 = vsel %vm2765, %v2758, %v2762
        %v2767 = vand.u32 2147483647, %v2750
        %vm2768 = vcmp.eq.f32.partialorder %v2767, 8.507059e+37
        %v2769 = vand.u32 %v2750, 2147483648
        %v2770 = vor.u32 1.1754944e-38, %v2769
        %v2771 = vsel %vm2768, %v2770, %v2766
        %v2772 = vmul.f32 1.0, %v2771
        %v2773 = vrcp.pop %v2751
        %v2774 = vmul.f32 %v2751, %v2773
        %v2775 = vsub.f32 1.0, %v2774
        %v2776 = vmul.f32 %v2773, %v2775
        %v2777 = vadd.f32 %v2773, %v2776
        %vm2778 = vweird.f32 %v2751
        %vm2779 = vweird.f32 %v2773
        %vm2780 = vmor %vm2778, %vm2779
        %v2781 = vsel %vm2780, %v2773, %v2777
        %v2782 = vand.u32 2147483647, %v2751
        %vm2783 = vcmp.eq.f32.partialorder %v2782, 8.507059e+37
        %v2784 = vand.u32 %v2751, 2147483648
        %v2785 = vor.u32 1.1754944e-38, %v2784
        %v2786 = vsel %vm2783, %v2785, %v2781
        %v2787 = vmul.f32 1.0, %v2786
        %v2788 = vrcp.pop %v2752
        %v2789 = vmul.f32 %v2752, %v2788
        %v2790 = vsub.f32 1.0, %v2789
        %v2791 = vmul.f32 %v2788, %v2790
        %v2792 = vadd.f32 %v2788, %v2791
        %vm2793 = vweird.f32 %v2752
        %vm2794 = vweird.f32 %v2788
        %vm2795 = vmor %vm2793, %vm2794
        %v2796 = vsel %vm2795, %v2788, %v2792
        %v2797 = vand.u32 2147483647, %v2752
        %vm2798 = vcmp.eq.f32.partialorder %v2797, 8.507059e+37
        %v2799 = vand.u32 %v2752, 2147483648
        %v2800 = vor.u32 1.1754944e-38, %v2799
        %v2801 = vsel %vm2798, %v2800, %v2796
        %v2802 = vmul.f32 1.0, %v2801
        %v2803 = vrcp.pop %v2753
        %v2804 = vmul.f32 %v2753, %v2803
        %v2805 = vsub.f32 1.0, %v2804
        %v2806 = vmul.f32 %v2803, %v2805
        %v2807 = vadd.f32 %v2803, %v2806
        %vm2808 = vweird.f32 %v2753
        %vm2809 = vweird.f32 %v2803
        %vm2810 = vmor %vm2808, %vm2809
        %v2811 = vsel %vm2810, %v2803, %v2807
        %v2812 = vand.u32 2147483647, %v2753
        %vm2813 = vcmp.eq.f32.partialorder %v2812, 8.507059e+37
        %v2814 = vand.u32 %v2753, 2147483648
        %v2815 = vor.u32 1.1754944e-38, %v2814
        %v2816 = vsel %vm2813, %v2815, %v2811
        %v2817 = vmul.f32 1.0, %v2816
        %v2818 = vrcp.pop %v2754
        %v2819 = vmul.f32 %v2754, %v2818
        %v2820 = vsub.f32 1.0, %v2819
        %v2821 = vmul.f32 %v2818, %v2820
        %v2822 = vadd.f32 %v2818, %v2821
        %vm2823 = vweird.f32 %v2754
        %vm2824 = vweird.f32 %v2818
        %vm2825 = vmor %vm2823, %vm2824
        %v2826 = vsel %vm2825, %v2818, %v2822
        %v2827 = vand.u32 2147483647, %v2754
        %vm2828 = vcmp.eq.f32.partialorder %v2827, 8.507059e+37
        %v2829 = vand.u32 %v2754, 2147483648
        %v2830 = vor.u32 1.1754944e-38, %v2829
        %v2831 = vsel %vm2828, %v2830, %v2826
        %v2832 = vmul.f32 1.0, %v2831
        %v2833 = vrcp.pop %v2755
        %v2834 = vmul.f32 %v2755, %v2833
        %v2835 = vsub.f32 1.0, %v2834
        %v2836 = vmul.f32 %v2833, %v2835
        %v2837 = vadd.f32 %v2833, %v2836
        %vm2838 = vweird.f32 %v2755
        %vm2839 = vweird.f32 %v2833
        %vm2840 = vmor %vm2838, %vm2839
        %v2841 = vsel %vm2840, %v2833, %v2837
        %v2842 = vand.u32 2147483647, %v2755
        %vm2843 = vcmp.eq.f32.partialorder %v2842, 8.507059e+37
        %v2844 = vand.u32 %v2755, 2147483648
        %v2845 = vor.u32 1.1754944e-38, %v2844
        %v2846 = vsel %vm2843, %v2845, %v2841
        %v2847 = vmul.f32 1.0, %v2846
        %v2848 = vrcp.pop %v2756
        %v2849 = vmul.f32 %v2756, %v2848
        %v2850 = vsub.f32 1.0, %v2849
        %v2851 = vmul.f32 %v2848, %v2850
        %v2852 = vadd.f32 %v2848, %v2851
        %vm2853 = vweird.f32 %v2756
        %vm2854 = vweird.f32 %v2848
        %vm2855 = vmor %vm2853, %vm2854
        %v2856 = vsel %vm2855, %v2848, %v2852
        %v2857 = vand.u32 2147483647, %v2756
        %vm2858 = vcmp.eq.f32.partialorder %v2857, 8.507059e+37
        %v2859 = vand.u32 %v2756, 2147483648
        %v2860 = vor.u32 1.1754944e-38, %v2859
        %v2861 = vsel %vm2858, %v2860, %v2856
        %v2862 = vmul.f32 1.0, %v2861
        %v2863 = vrcp.pop %v2757
        %v2864 = vmul.f32 %v2757, %v2863
        %v2865 = vsub.f32 1.0, %v2864
        %v2866 = vmul.f32 %v2863, %v2865
        %v2867 = vadd.f32 %v2863, %v2866
        %vm2868 = vweird.f32 %v2757
        %vm2869 = vweird.f32 %v2863
        %vm2870 = vmor %vm2868, %vm2869
        %v2871 = vsel %vm2870, %v2863, %v2867
        %v2872 = vand.u32 2147483647, %v2757
        %vm2873 = vcmp.eq.f32.partialorder %v2872, 8.507059e+37
        %v2874 = vand.u32 %v2757, 2147483648
        %v2875 = vor.u32 1.1754944e-38, %v2874
        %v2876 = vsel %vm2873, %v2875, %v2871
        %v2877 = vmul.f32 1.0, %v2876
        %v2878 = vmul.f32 %v2680, %v2772
        %v2879 = vmul.f32 %v2694, %v2787
        %v2880 = vmul.f32 %v2708, %v2802
        %v2881 = vmul.f32 %v2722, %v2817
        %v2882 = vmul.f32 %v2682, %v2832
        %v2883 = vmul.f32 %v2696, %v2847
        %v2884 = vmul.f32 %v2710, %v2862
        %v2885 = vmul.f32 %v2724, %v2877
        %v2886 = vpack.c.bf16 %v2882, %v2878
        %v2887 = vpack.c.bf16 %v2883, %v2879
        %v2888 = vpack.c.bf16 %v2884, %v2880
        %v2889 = vpack.c.bf16 %v2885, %v2881
        %v2890 = vld [vmem:[#allocation16] sm:$0xf]
        %v2891 = vld [vmem:[#allocation16 + $0x4] sm:$0xf]
        %v2892 = vld [vmem:[#allocation16 + $0x8] sm:$0xf]
        %v2893 = vld [vmem:[#allocation16 + $0xc] sm:$0xf]
        %v2894 = vld [vmem:[#allocation16 + $0x10] sm:$0xf]
        %v2895 = vld [vmem:[#allocation16 + $0x14] sm:$0xf]
        %v2896 = vld [vmem:[#allocation16 + $0x18] sm:$0xf]
        %v2897 = vld [vmem:[#allocation16 + $0x1c] sm:$0xf]
        %v2898 = vld [vmem:[#allocation16 + $0x20] sm:$0xf]
        %v2899 = vld [vmem:[#allocation16 + $0x24] sm:$0xf]
        %v2900 = vld [vmem:[#allocation16 + $0x28] sm:$0xf]
        %v2901 = vld [vmem:[#allocation16 + $0x2c] sm:$0xf]
        %v2902 = vld [vmem:[#allocation16 + $0x30] sm:$0xf]
        %v2903 = vld [vmem:[#allocation16 + $0x34] sm:$0xf]
        %v2904 = vld [vmem:[#allocation16 + $0x38] sm:$0xf]
        %v2905 = vld [vmem:[#allocation16 + $0x3c] sm:$0xf]
        %v2906 = vld [vmem:[#allocation16 + $0x40] sm:$0xf]
        %v2907 = vld [vmem:[#allocation16 + $0x44] sm:$0xf]
        %v2908 = vld [vmem:[#allocation16 + $0x48] sm:$0xf]
        %v2909 = vld [vmem:[#allocation16 + $0x4c] sm:$0xf]
        %v2910 = vld [vmem:[#allocation16 + $0x50] sm:$0xf]
        %v2911 = vld [vmem:[#allocation16 + $0x54] sm:$0xf]
        %v2912 = vld [vmem:[#allocation16 + $0x58] sm:$0xf]
        %v2913 = vld [vmem:[#allocation16 + $0x5c] sm:$0xf]
        %v2914 = vld [vmem:[#allocation16 + $0x60] sm:$0xf]
        %v2915 = vld [vmem:[#allocation16 + $0x64] sm:$0xf]
        %v2916 = vld [vmem:[#allocation16 + $0x68] sm:$0xf]
        %v2917 = vld [vmem:[#allocation16 + $0x6c] sm:$0xf]
        %v2918 = vld [vmem:[#allocation16 + $0x70] sm:$0xf]
        %v2919 = vld [vmem:[#allocation16 + $0x74] sm:$0xf]
        %v2920 = vld [vmem:[#allocation16 + $0x78] sm:$0xf]
        %v2921 = vld [vmem:[#allocation16 + $0x7c] sm:$0xf]
        %v2922 = vld [vmem:[#allocation16 + $0x80] sm:$0xf]
        %v2923 = vld [vmem:[#allocation16 + $0x84] sm:$0xf]
        %v2924 = vld [vmem:[#allocation16 + $0x88] sm:$0xf]
        %v2925 = vld [vmem:[#allocation16 + $0x8c] sm:$0xf]
        %v2926 = vld [vmem:[#allocation16 + $0x90] sm:$0xf]
        %v2927 = vld [vmem:[#allocation16 + $0x94] sm:$0xf]
        %v2928 = vld [vmem:[#allocation16 + $0x98] sm:$0xf]
        %v2929 = vld [vmem:[#allocation16 + $0x9c] sm:$0xf]
        %v2930 = vld [vmem:[#allocation16 + $0xa0] sm:$0xf]
        %v2931 = vld [vmem:[#allocation16 + $0xa4] sm:$0xf]
        %v2932 = vld [vmem:[#allocation16 + $0xa8] sm:$0xf]
        %v2933 = vld [vmem:[#allocation16 + $0xac] sm:$0xf]
        %v2934 = vld [vmem:[#allocation16 + $0xb0] sm:$0xf]
        %v2935 = vld [vmem:[#allocation16 + $0xb4] sm:$0xf]
        %v2936 = vld [vmem:[#allocation16 + $0xb8] sm:$0xf]
        %v2937 = vld [vmem:[#allocation16 + $0xbc] sm:$0xf]
        %v2938 = vld [vmem:[#allocation16 + $0xc0] sm:$0xf]
        %v2939 = vld [vmem:[#allocation16 + $0xc4] sm:$0xf]
        %v2940 = vld [vmem:[#allocation16 + $0xc8] sm:$0xf]
        %v2941 = vld [vmem:[#allocation16 + $0xcc] sm:$0xf]
        %v2942 = vld [vmem:[#allocation16 + $0xd0] sm:$0xf]
        %v2943 = vld [vmem:[#allocation16 + $0xd4] sm:$0xf]
        %v2944 = vld [vmem:[#allocation16 + $0xd8] sm:$0xf]
        %v2945 = vld [vmem:[#allocation16 + $0xdc] sm:$0xf]
        %v2946 = vld [vmem:[#allocation16 + $0xe0] sm:$0xf]
        %v2947 = vld [vmem:[#allocation16 + $0xe4] sm:$0xf]
        %v2948 = vld [vmem:[#allocation16 + $0xe8] sm:$0xf]
        %v2949 = vld [vmem:[#allocation16 + $0xec] sm:$0xf]
        %v2950 = vld [vmem:[#allocation16 + $0xf0] sm:$0xf]
        %v2951 = vld [vmem:[#allocation16 + $0xf4] sm:$0xf]
        %v2952 = vld [vmem:[#allocation16 + $0xf8] sm:$0xf]
        %v2953 = vld [vmem:[#allocation16 + $0xfc] sm:$0xf]
        %v2954 = vld [vmem:[%s14] sm:$0x1]
        %v2956 = vperm.slane %v2954, 0
        %v3022 = vunpack.c.l.b16 %v2890
        %v3023 = vunpack.c.l.b16 %v2891
        %v3024 = vunpack.c.l.b16 %v2892
        %v3025 = vunpack.c.l.b16 %v2893
        %v3026 = vunpack.c.l.b16 %v2894
        %v3027 = vunpack.c.l.b16 %v2895
        %v3028 = vunpack.c.l.b16 %v2896
        %v3029 = vunpack.c.l.b16 %v2897
        %v3030 = vunpack.c.l.b16 %v2898
        %v3031 = vunpack.c.l.b16 %v2899
        %v3032 = vunpack.c.l.b16 %v2900
        %v3033 = vunpack.c.l.b16 %v2901
        %v3034 = vunpack.c.l.b16 %v2902
        %v3035 = vunpack.c.l.b16 %v2903
        %v3036 = vunpack.c.l.b16 %v2904
        %v3037 = vunpack.c.l.b16 %v2905
        %v3038 = vunpack.c.l.b16 %v2906
        %v3039 = vunpack.c.l.b16 %v2907
        %v3040 = vunpack.c.l.b16 %v2908
        %v3041 = vunpack.c.l.b16 %v2909
        %v3042 = vunpack.c.l.b16 %v2910
        %v3043 = vunpack.c.l.b16 %v2911
        %v3044 = vunpack.c.l.b16 %v2912
        %v3045 = vunpack.c.l.b16 %v2913
        %v3046 = vunpack.c.l.b16 %v2914
        %v3047 = vunpack.c.l.b16 %v2915
        %v3048 = vunpack.c.l.b16 %v2916
        %v3049 = vunpack.c.l.b16 %v2917
        %v3050 = vunpack.c.l.b16 %v2918
        %v3051 = vunpack.c.l.b16 %v2919
        %v3052 = vunpack.c.l.b16 %v2920
        %v3053 = vunpack.c.l.b16 %v2921
        %v3054 = vunpack.c.l.b16 %v2922
        %v3055 = vunpack.c.l.b16 %v2923
        %v3056 = vunpack.c.l.b16 %v2924
        %v3057 = vunpack.c.l.b16 %v2925
        %v3058 = vunpack.c.l.b16 %v2926
        %v3059 = vunpack.c.l.b16 %v2927
        %v3060 = vunpack.c.l.b16 %v2928
        %v3061 = vunpack.c.l.b16 %v2929
        %v3062 = vunpack.c.l.b16 %v2930
        %v3063 = vunpack.c.l.b16 %v2931
        %v3064 = vunpack.c.l.b16 %v2932
        %v3065 = vunpack.c.l.b16 %v2933
        %v3066 = vunpack.c.l.b16 %v2934
        %v3067 = vunpack.c.l.b16 %v2935
        %v3068 = vunpack.c.l.b16 %v2936
        %v3069 = vunpack.c.l.b16 %v2937
        %v3070 = vunpack.c.l.b16 %v2938
        %v3071 = vunpack.c.l.b16 %v2939
        %v3072 = vunpack.c.l.b16 %v2940
        %v3073 = vunpack.c.l.b16 %v2941
        %v3074 = vunpack.c.l.b16 %v2942
        %v3075 = vunpack.c.l.b16 %v2943
        %v3076 = vunpack.c.l.b16 %v2944
        %v3077 = vunpack.c.l.b16 %v2945
        %v3078 = vunpack.c.l.b16 %v2946
        %v3079 = vunpack.c.l.b16 %v2947
        %v3080 = vunpack.c.l.b16 %v2948
        %v3081 = vunpack.c.l.b16 %v2949
        %v3082 = vunpack.c.l.b16 %v2950
        %v3083 = vunpack.c.l.b16 %v2951
        %v3084 = vunpack.c.l.b16 %v2952
        %v3085 = vunpack.c.l.b16 %v2953
        %v3086 = vpack.c.b16 %v3023, %v3022
        %v3087 = vpack.c.b16 %v3025, %v3024
        %v3088 = vpack.c.b16 %v3027, %v3026
        %v3089 = vpack.c.b16 %v3029, %v3028
        %v3090 = vpack.c.b16 %v3031, %v3030
        %v3091 = vpack.c.b16 %v3033, %v3032
        %v3092 = vpack.c.b16 %v3035, %v3034
        %v3093 = vpack.c.b16 %v3037, %v3036
        %v3094 = vpack.c.b16 %v3039, %v3038
        %v3095 = vpack.c.b16 %v3041, %v3040
        %v3096 = vpack.c.b16 %v3043, %v3042
        %v3097 = vpack.c.b16 %v3045, %v3044
        %v3098 = vpack.c.b16 %v3047, %v3046
        %v3099 = vpack.c.b16 %v3049, %v3048
        %v3100 = vpack.c.b16 %v3051, %v3050
        %v3101 = vpack.c.b16 %v3053, %v3052
        %v3102 = vpack.c.b16 %v3055, %v3054
        %v3103 = vpack.c.b16 %v3057, %v3056
        %v3104 = vpack.c.b16 %v3059, %v3058
        %v3105 = vpack.c.b16 %v3061, %v3060
        %v3106 = vpack.c.b16 %v3063, %v3062
        %v3107 = vpack.c.b16 %v3065, %v3064
        %v3108 = vpack.c.b16 %v3067, %v3066
        %v3109 = vpack.c.b16 %v3069, %v3068
        %v3110 = vpack.c.b16 %v3071, %v3070
        %v3111 = vpack.c.b16 %v3073, %v3072
        %v3112 = vpack.c.b16 %v3075, %v3074
        %v3113 = vpack.c.b16 %v3077, %v3076
        %v3114 = vpack.c.b16 %v3079, %v3078
        %v3115 = vpack.c.b16 %v3081, %v3080
        %v3116 = vpack.c.b16 %v3083, %v3082
        %v3117 = vpack.c.b16 %v3085, %v3084
        %3150 = vmatpush.bf16.msra.mxu0 %v3093
        %3151 = vmatpush.bf16.msra.mxu0 %v3092
        %3152 = vmatpush.bf16.msra.mxu0 %v3091
        %3153 = vmatpush.bf16.msra.mxu0 %v3090
        %3154 = vmatpush.bf16.msra.mxu0 %v3089
        %3155 = vmatpush.bf16.msra.mxu0 %v3088
        %3156 = vmatpush.bf16.msra.mxu0 %v3087
        %3157 = vmatpush.bf16.msra.mxu0 %v3086
        %3158 = vmatmul.bf16.gmra.mxu0 %v2886
        %v3159 = vpop.f32.mrf.mxu0
        %v3160 = vadd.f32 %v2956, %v3159
        %v3161 = vpop.f32.mrf.mxu0
        %v3162 = vadd.f32 %v2956, %v3161
        %3163 = vdwg.mxu0
        %3164 = vmatpush.bf16.msra.mxu0 %v3101
        %3165 = vmatpush.bf16.msra.mxu0 %v3100
        %3166 = vmatpush.bf16.msra.mxu0 %v3099
        %3167 = vmatpush.bf16.msra.mxu0 %v3098
        %3168 = vmatpush.bf16.msra.mxu0 %v3097
        %3169 = vmatpush.bf16.msra.mxu0 %v3096
        %3170 = vmatpush.bf16.msra.mxu0 %v3095
        %3171 = vmatpush.bf16.msra.mxu0 %v3094
        %3172 = vmatmul.bf16.gmra.mxu0 %v2887
        %v3173 = vpop.f32.mrf.mxu0
        %v3174 = vadd.f32 %v3160, %v3173
        %v3175 = vpop.f32.mrf.mxu0
        %v3176 = vadd.f32 %v3162, %v3175
        %3177 = vdwg.mxu0
        %3178 = vmatpush.bf16.msra.mxu0 %v3109
        %3179 = vmatpush.bf16.msra.mxu0 %v3108
        %3180 = vmatpush.bf16.msra.mxu0 %v3107
        %3181 = vmatpush.bf16.msra.mxu0 %v3106
        %3182 = vmatpush.bf16.msra.mxu0 %v3105
        %3183 = vmatpush.bf16.msra.mxu0 %v3104
        %3184 = vmatpush.bf16.msra.mxu0 %v3103
        %3185 = vmatpush.bf16.msra.mxu0 %v3102
        %3186 = vmatmul.bf16.gmra.mxu0 %v2888
        %v3187 = vpop.f32.mrf.mxu0
        %v3188 = vadd.f32 %v3174, %v3187
        %v3189 = vpop.f32.mrf.mxu0
        %v3190 = vadd.f32 %v3176, %v3189
        %3191 = vdwg.mxu0
        %3192 = vmatpush.bf16.msra.mxu0 %v3117
        %3193 = vmatpush.bf16.msra.mxu0 %v3116
        %3194 = vmatpush.bf16.msra.mxu0 %v3115
        %3195 = vmatpush.bf16.msra.mxu0 %v3114
        %3196 = vmatpush.bf16.msra.mxu0 %v3113
        %3197 = vmatpush.bf16.msra.mxu0 %v3112
        %3198 = vmatpush.bf16.msra.mxu0 %v3111
        %3199 = vmatpush.bf16.msra.mxu0 %v3110
        %3200 = vmatmul.bf16.gmra.mxu0 %v2889
        %v3201 = vpop.f32.mrf.mxu0
        %v3202 = vadd.f32 %v3188, %v3201
        %v3203 = vpop.f32.mrf.mxu0
        %v3204 = vadd.f32 %v3190, %v3203
        %3205 = vdwg.mxu0
        %v3206 = vadd.f32 %v2427, %v3202
        %v3207 = vadd.f32 %v2428, %v3204
        %3208 = vst [vmem:[%s642] sm:$0xff] %v3206
        %3209 = vst [vmem:[%s642 + $0x8] sm:$0xff] %v3207
        %s3210 = sand.u32 %s378, 1
        %s3211 = scalar_lea.sflag [#allocation6], %s3210
        %s3212 = sand.u32 %s378, 1
        %s3213 = smul.addr %s3212, 16
        %s3214 = scalar_lea.vmem [#allocation18], %s3213
        // Predicated region
        $region117: #{tpu_custom_call.1} parent=79 // pred_check
          %p3215 = pneg %p388
        $region118: #{tpu_custom_call.1} parent=79 // pred_check_branch
          %3217 = sbr.rel (%p3215) target = $region120
        $region119: #{tpu_custom_call.1} parent=79 // pred_region
          %s3218 = smul.u32 2, %s41
          %3220 = vsyncadd %s3211, 0
          %s3221 = smul.addr %s40, 2
          %s3222 = sadd.s32 %s3218, %s3221
          %s3223 = smul.addr %s3222, 8
          %s3224 = scalar_lea.hbm %s15, %s3223
          %s3225 = sshll.u32 %s3214, 4
          %s3226 = int_to_ptr.vmem [resolvable:$true] %s3225
          %s3227 = sshll.u32 %s3224, 4
          %s3228 = int_to_ptr.hbm [resolvable:$true] %s3227
          %3233 = dma.vmem_to_hbm [thread:$0]  %s3226, 256, %s3228, %s3211, 128, 128, 8
        $region120: #{tpu_custom_call.1} parent=79 // pred_fallthru
          _
      $region80: #{tpu_custom_call.1} parent=5 // pred_fallthru
        _
      %p3234 = scmp.le.s32.totalorder 2, %s31
      // Predicated region
      $region121: #{tpu_custom_call.1} parent=5 // pred_check
        %p3235 = pneg %p3234
      $region122: #{tpu_custom_call.1} parent=5 // pred_check_branch
        %3237 = sbr.rel (%p3235) target = $region124
      $region123: #{tpu_custom_call.1} parent=5 // pred_region
        %s3238 = ssub.s32 %s31, 2
        // Predicated region
        $region125: #{tpu_custom_call.1} parent=123 // pred_check
          %p3239 = pneg %p394
        $region126: #{tpu_custom_call.1} parent=123 // pred_check_branch
          %3241 = sbr.rel (%p3239) target = $region128
        $region127: #{tpu_custom_call.1} parent=123 // pred_region
          %s3242 = sand.u32 %s379, 1
          %s3243 = scalar_lea.sflag [#allocation6], %s3242
          %s3244 = sand.u32 %s379, 1
          %s3245 = smul.addr %s3244, 16
          %s3246 = scalar_lea.vmem [#allocation18], %s3245
          %3248 = dma.done %s3243, 256
        $region128: #{tpu_custom_call.1} parent=123 // pred_fallthru
          _
      $region124: #{tpu_custom_call.1} parent=5 // pred_fallthru
        _
    $region6: #{tpu_custom_call.1} parent=1 // loop_footer
      %s35 = sadd.s32 1, %s31
    $region7: #{tpu_custom_call.1} parent=1 // loop_footer_branch
      %30 = sbr.rel target = $region3
    $region8: #{tpu_custom_call.1} parent=1 // loop_exit
      _
    %3249 = vsyncpa [#allocation5], 1
    %s3250 = scalar_lea.sflag [#allocation5], 1
    %3251 = vsyncpa %s3250, 1
    %3252 = vsyncpa [#allocation8], 1
    %3253 = vsyncpa [#allocation11], 1
    %3254 = vsyncpa [#allocation14], 1
    %3255 = vsyncpa [#allocation17], 1
    %3256 = vsyncpa [#allocation6], 1
    %s3257 = scalar_lea.sflag [#allocation6], 1
    %3258 = vsyncpa %s3257, 1

// kernel: tpu_custom_call.1
$region0: #{tpu_custom_call.1}
  #allocation0 [shape = 'u32[]', space=smem, size = 0x4, offset = 0x4, fixed_abs, tag = 'smem constant byte address 0x4 - core index']
  #allocation1 [shape = 'u32[72,128]{1,0:T(1,128)}', space=vmem, size = 0x9000, scoped, tag = 'internal scratch']
  #allocation2 [shape = 'bf16[16,128]{1,0:T(8,128)(2,1)}', space=vmem, size = 0x1000, scoped, tag = 'scratch operand']
  #allocation3 [shape = 'bf16[16,128]{1,0:T(8,128)(2,1)}', space=vmem, size = 0x1000, scoped, tag = 'scratch operand']
  %s0 = inlined_call_operand.hbm [shape: f32[2,16,128], index: 0, kind: input, shape index: {}]
  %s1 = inlined_call_operand.hbm [shape: f32[1,128], index: 1, kind: input, shape index: {}]
  %s2 = inlined_call_operand.hbm [shape: bf16[128,128], index: 2, kind: input, shape index: {}]
  %s3 = inlined_call_operand.vmem [shape: f32[1,128], index: 3, kind: input, shape index: {}]
  %s4 = inlined_call_operand.hbm [shape: bf16[128,128], index: 4, kind: input, shape index: {}]
  %s5 = inlined_call_operand.vmem [shape: f32[1,128], index: 5, kind: input, shape index: {}]
  %s6 = inlined_call_operand.hbm [shape: bf16[128,128], index: 6, kind: input, shape index: {}]
  %s7 = inlined_call_operand.vmem [shape: f32[1,128], index: 7, kind: input, shape index: {}]
  %s8 = inlined_call_operand.hbm [shape: bf16[128,128], index: 8, kind: input, shape index: {}]
  %s9 = inlined_call_operand.vmem [shape: f32[1,128], index: 9, kind: input, shape index: {}]
  %s10 = inlined_call_operand.vmem [shape: f32[1,128], index: 10, kind: input, shape index: {}]
  %s11 = inlined_call_operand.hbm [shape: bf16[128,512], index: 11, kind: input, shape index: {}]
  %s12 = inlined_call_operand.vmem [shape: f32[1,512], index: 12, kind: input, shape index: {}]
  %s13 = inlined_call_operand.hbm [shape: bf16[512,128], index: 13, kind: input, shape index: {}]
  %s14 = inlined_call_operand.vmem [shape: f32[1,128], index: 14, kind: input, shape index: {}]
  %s15 = inlined_call_operand.hbm [shape: f32[2,16,128], index: 15, kind: output, shape index: {}]
  %s16 = sld [smem:[#allocation0]]
  $region129: #{tpu_custom_call.1} parent=0
    _
  %s18 = ssub.s32 1, %s16
  %s19 = scalar_select 0, %s18, %s16
  $region1: #{tpu_custom_call.1} parent=0
    #allocation4 [shape = 'u8[16384]{0}', space=vmem, size = 0x4000, scoped, tag = 'input window, operand 0']
    #allocation5 [shape = 's32[2]{0}', space=sflag, size = 0x8, scoped, tag = 'scoped memory for tpu_custom_call.1']
    #allocation6 [shape = 's32[2]{0}', space=sflag, size = 0x8, scoped, tag = 'scoped memory for tpu_custom_call.1']
    #allocation7 [shape = 'u8[512]{0}', space=vmem, size = 0x400, scoped, tag = 'input window, operand 1, single buffered']
    #allocation8 [shape = 's32[1]{0}', space=sflag, size = 0x4, scoped, tag = 'scoped memory for tpu_custom_call.1']
    #allocation9 [shape = 'u8[32768]{0}', space=vmem, size = 0x8000, scoped, tag = 'input window, operand 2, single buffered']
    #allocation10 [shape = 'u8[32768]{0}', space=vmem, size = 0x8000, scoped, tag = 'input window, operand 4, single buffered']
    #allocation11 [shape = 's32[1]{0}', space=sflag, size = 0x4, scoped, tag = 'scoped memory for tpu_custom_call.1']
    #allocation12 [shape = 'u8[32768]{0}', space=vmem, size = 0x8000, scoped, tag = 'input window, operand 6, single buffered']
    #allocation13 [shape = 'u8[32768]{0}', space=vmem, size = 0x8000, scoped, tag = 'input window, operand 8, single buffered']
    #allocation14 [shape = 's32[1]{0}', space=sflag, size = 0x4, scoped, tag = 'scoped memory for tpu_custom_call.1']
    #allocation15 [shape = 'u8[131072]{0}', space=vmem, size = 0x20000, scoped, tag = 'input window, operand 11, single buffered']
    #allocation16 [shape = 'u8[131072]{0}', space=vmem, size = 0x20000, scoped, tag = 'input window, operand 13, single buffered']
    #allocation17 [shape = 's32[1]{0}', space=sflag, size = 0x4, scoped, tag = 'scoped memory for tpu_custom_call.1']
    #allocation18 [shape = 'u8[16384]{0}', space=vmem, size = 0x4000, scoped, tag = 'output window, operand 0']
    %20 = vsyncpa [#allocation5], 0
    %s21 = scalar_lea.sflag [#allocation5], 1
    %22 = vsyncpa %s21, 0
    %23 = vsyncpa [#allocation8], 0
    %24 = vsyncpa [#allocation11], 0
    %25 = vsyncpa [#allocation14], 0
    %26 = vsyncpa [#allocation17], 0
    %27 = vsyncpa [#allocation6], 0
    %s28 = scalar_lea.sflag [#allocation6], 1
    %29 = vsyncpa %s28, 0
    loop: start=0, step=1, limit=4
    $region2: #{tpu_custom_call.1} parent=1 // loop_pre_header
      _
    $region3: #{tpu_custom_call.1} parent=1 // loop_header
      %s31 = sphi 0, %s35
      %p32 = scmp.ge.s32.totalorder %s31, 4
      %s38 = sphi 0, %s50
      %s39 = sphi 0, %s46
      %s40 = sphi 0, %s38
      %s41 = sphi 0, %s39
      %s42 = sphi 0, %s40
      %s43 = sphi 0, %s41
      %s53 = sphi 0, %s55
      %s56 = sphi 0, %s53
      %s57 = sphi 0, %s56
      %s73 = sphi 0, %s57
      %s77 = sphi 0, %s77
      %s79 = sphi 0, %s77
      %s80 = sphi 0, %s79
      %s94 = sphi 0, %s80
      %s98 = sphi 0, %s98
      %s100 = sphi 0, %s98
      %s101 = sphi 0, %s100
      %s115 = sphi 0, %s101
      %s119 = sphi 0, %s119
      %s121 = sphi 0, %s119
      %s122 = sphi 0, %s121
      %s136 = sphi 0, %s122
      %s140 = sphi 0, %s140
      %s142 = sphi 0, %s140
      %s143 = sphi 0, %s142
      %s157 = sphi 0, %s143
      %s161 = sphi 0, %s161
      %s163 = sphi 0, %s161
      %s164 = sphi 0, %s163
      %s178 = sphi 0, %s164
      %s182 = sphi 0, %s182
      %s184 = sphi 0, %s182
      %s185 = sphi 0, %s184
      %s199 = sphi 0, %s185
      %s203 = sphi 0, %s203
      %s205 = sphi 0, %s203
      %s206 = sphi 0, %s205
      %s220 = sphi 0, %s206
      %s224 = sphi 0, %s224
      %s226 = sphi 0, %s224
      %s227 = sphi 0, %s226
      %s241 = sphi 0, %s227
      %s245 = sphi 0, %s245
      %s247 = sphi 0, %s245
      %s248 = sphi 0, %s247
      %s262 = sphi 0, %s248
      %s266 = sphi 0, %s266
      %s268 = sphi 0, %s266
      %s269 = sphi 0, %s268
      %s283 = sphi 0, %s269
      %s287 = sphi 0, %s287
      %s289 = sphi 0, %s287
      %s290 = sphi 0, %s289
      %s304 = sphi 0, %s290
      %s308 = sphi 0, %s308
      %s310 = sphi 0, %s308
      %s311 = sphi 0, %s310
      %s325 = sphi 0, %s311
      %s329 = sphi 0, %s329
      %s331 = sphi 0, %s329
      %s332 = sphi 0, %s331
      %s346 = sphi 0, %s332
      %s350 = sphi 0, %s350
      %s352 = sphi 0, %s350
      %s353 = sphi 0, %s352
      %s367 = sphi 0, %s353
      %s375 = sphi 0, %s377
      %s378 = sphi 0, %s375
      %s379 = sphi 0, %s378
      %s395 = sphi 0, %s379
    $region4: #{tpu_custom_call.1} parent=1 // loop_header_branch
      %34 = sbr.rel (%p32) target = $region8
    $region5: #{tpu_custom_call.1} parent=1 // loop_body
      %s36 = ssub.s32 %s31, 1
      %s37 = ssub.s32 %s31, 2
      %s44 = sadd.s32 1, %s39
      %p45 = scmp.ge.s32.totalorder %s44, 1
      %s46 = scalar_select %p45, 0, %s44
      %s47 = sadd.s32 1, %s38
      %s48 = scalar_select %p45, %s47, %s38
      %p49 = scmp.ge.s32.totalorder %s48, 2
      %s50 = scalar_select %p49, 0, %s48
      %s51 = ssub.s32 %s38, %s50
      %p52 = scmp.eq.s32.totalorder %s51, 0
      %s54 = sadd.s32 %s53, 1
      %s55 = scalar_select %p52, %s53, %s54
      %p58 = pneg %p52
      %p59 = scmp.eq.s32.totalorder %s31, 1
      %p60 = por %p58, %p59
      %p61 = scmp.ne.s32.totalorder %s53, %s56
      %p62 = scmp.eq.s32.totalorder %s31, 0
      %p63 = por %p61, %p62
      %p64 = scmp.ne.s32.totalorder %s53, %s56
      %p65 = scmp.eq.s32.totalorder %s36, 1
      %p66 = por %p64, %p65
      %p67 = scmp.ne.s32.totalorder %s56, %s57
      %p68 = scmp.eq.s32.totalorder %s36, 0
      %p69 = por %p67, %p68
      %p70 = scmp.ne.s32.totalorder %s56, %s57
      %p71 = scmp.eq.s32.totalorder %s37, 1
      %p72 = por %p70, %p71
      %p74 = scmp.ne.s32.totalorder %s57, %s73
      %p75 = scmp.eq.s32.totalorder %s37, 0
      %p76 = por %p74, %p75
      %s78 = sadd.s32 %s77, 1
      %p81 = scmp.eq.s32.totalorder %s31, 1
      %p82 = scmp.ne.s32.totalorder %s77, %s79
      %p83 = scmp.eq.s32.totalorder %s31, 0
      %p84 = por %p82, %p83
      %p85 = scmp.ne.s32.totalorder %s77, %s79
      %p86 = scmp.eq.s32.totalorder %s36, 1
      %p87 = por %p85, %p86
      %p88 = scmp.ne.s32.totalorder %s79, %s80
      %p89 = scmp.eq.s32.totalorder %s36, 0
      %p90 = por %p88, %p89
      %p91 = scmp.ne.s32.totalorder %s79, %s80
      %p92 = scmp.eq.s32.totalorder %s37, 1
      %p93 = por %p91, %p92
      %p95 = scmp.ne.s32.totalorder %s80, %s94
      %p96 = scmp.eq.s32.totalorder %s37, 0
      %p97 = por %p95, %p96
      %s99 = sadd.s32 %s98, 1
      %p102 = scmp.eq.s32.totalorder %s31, 1
      %p103 = scmp.ne.s32.totalorder %s98, %s100
      %p104 = scmp.eq.s32.totalorder %s31, 0
      %p105 = por %p103, %p104
      %p106 = scmp.ne.s32.totalorder %s98, %s100
      %p107 = scmp.eq.s32.totalorder %s36, 1
      %p108 = por %p106, %p107
      %p109 = scmp.ne.s32.totalorder %s100, %s101
      %p110 = scmp.eq.s32.totalorder %s36, 0
      %p111 = por %p109, %p110
      %p112 = scmp.ne.s32.totalorder %s100, %s101
      %p113 = scmp.eq.s32.totalorder %s37, 1
      %p114 = por %p112, %p113
      %p116 = scmp.ne.s32.totalorder %s101, %s115
      %p117 = scmp.eq.s32.totalorder %s37, 0
      %p118 = por %p116, %p117
      %s120 = sadd.s32 %s119, 1
      %p123 = scmp.eq.s32.totalorder %s31, 1
      %p124 = scmp.ne.s32.totalorder %s119, %s121
      %p125 = scmp.eq.s32.totalorder %s31, 0
      %p126 = por %p124, %p125
      %p127 = scmp.ne.s32.totalorder %s119, %s121
      %p128 = scmp.eq.s32.totalorder %s36, 1
      %p129 = por %p127, %p128
      %p130 = scmp.ne.s32.totalorder %s121, %s122
      %p131 = scmp.eq.s32.totalorder %s36, 0
      %p132 = por %p130, %p131
      %p133 = scmp.ne.s32.totalorder %s121, %s122
      %p134 = scmp.eq.s32.totalorder %s37, 1
      %p135 = por %p133, %p134
      %p137 = scmp.ne.s32.totalorder %s122, %s136
      %p138 = scmp.eq.s32.totalorder %s37, 0
      %p139 = por %p137, %p138
      %s141 = sadd.s32 %s140, 1
      %p144 = scmp.eq.s32.totalorder %s31, 1
      %p145 = scmp.ne.s32.totalorder %s140, %s142
      %p146 = scmp.eq.s32.totalorder %s31, 0
      %p147 = por %p145, %p146
      %p148 = scmp.ne.s32.totalorder %s140, %s142
      %p149 = scmp.eq.s32.totalorder %s36, 1
      %p150 = por %p148, %p149
      %p151 = scmp.ne.s32.totalorder %s142, %s143
      %p152 = scmp.eq.s32.totalorder %s36, 0
      %p153 = por %p151, %p152
      %p154 = scmp.ne.s32.totalorder %s142, %s143
      %p155 = scmp.eq.s32.totalorder %s37, 1
      %p156 = por %p154, %p155
      %p158 = scmp.ne.s32.totalorder %s143, %s157
      %p159 = scmp.eq.s32.totalorder %s37, 0
      %p160 = por %p158, %p159
      %s162 = sadd.s32 %s161, 1
      %p165 = scmp.eq.s32.totalorder %s31, 1
      %p166 = scmp.ne.s32.totalorder %s161, %s163
      %p167 = scmp.eq.s32.totalorder %s31, 0
      %p168 = por %p166, %p167
      %p169 = scmp.ne.s32.totalorder %s161, %s163
      %p170 = scmp.eq.s32.totalorder %s36, 1
      %p171 = por %p169, %p170
      %p172 = scmp.ne.s32.totalorder %s163, %s164
      %p173 = scmp.eq.s32.totalorder %s36, 0
      %p174 = por %p172, %p173
      %p175 = scmp.ne.s32.totalorder %s163, %s164
      %p176 = scmp.eq.s32.totalorder %s37, 1
      %p177 = por %p175, %p176
      %p179 = scmp.ne.s32.totalorder %s164, %s178
      %p180 = scmp.eq.s32.totalorder %s37, 0
      %p181 = por %p179, %p180
      %s183 = sadd.s32 %s182, 1
      %p186 = scmp.eq.s32.totalorder %s31, 1
      %p187 = scmp.ne.s32.totalorder %s182, %s184
      %p188 = scmp.eq.s32.totalorder %s31, 0
      %p189 = por %p187, %p188
      %p190 = scmp.ne.s32.totalorder %s182, %s184
      %p191 = scmp.eq.s32.totalorder %s36, 1
      %p192 = por %p190, %p191
      %p193 = scmp.ne.s32.totalorder %s184, %s185
      %p194 = scmp.eq.s32.totalorder %s36, 0
      %p195 = por %p193, %p194
      %p196 = scmp.ne.s32.totalorder %s184, %s185
      %p197 = scmp.eq.s32.totalorder %s37, 1
      %p198 = por %p196, %p197
      %p200 = scmp.ne.s32.totalorder %s185, %s199
      %p201 = scmp.eq.s32.totalorder %s37, 0
      %p202 = por %p200, %p201
      %s204 = sadd.s32 %s203, 1
      %p207 = scmp.eq.s32.totalorder %s31, 1
      %p208 = scmp.ne.s32.totalorder %s203, %s205
      %p209 = scmp.eq.s32.totalorder %s31, 0
      %p210 = por %p208, %p209
      %p211 = scmp.ne.s32.totalorder %s203, %s205
      %p212 = scmp.eq.s32.totalorder %s36, 1
      %p213 = por %p211, %p212
      %p214 = scmp.ne.s32.totalorder %s205, %s206
      %p215 = scmp.eq.s32.totalorder %s36, 0
      %p216 = por %p214, %p215
      %p217 = scmp.ne.s32.totalorder %s205, %s206
      %p218 = scmp.eq.s32.totalorder %s37, 1
      %p219 = por %p217, %p218
      %p221 = scmp.ne.s32.totalorder %s206, %s220
      %p222 = scmp.eq.s32.totalorder %s37, 0
      %p223 = por %p221, %p222
      %s225 = sadd.s32 %s224, 1
      %p228 = scmp.eq.s32.totalorder %s31, 1
      %p229 = scmp.ne.s32.totalorder %s224, %s226
      %p230 = scmp.eq.s32.totalorder %s31, 0
      %p231 = por %p229, %p230
      %p232 = scmp.ne.s32.totalorder %s224, %s226
      %p233 = scmp.eq.s32.totalorder %s36, 1
      %p234 = por %p232, %p233
      %p235 = scmp.ne.s32.totalorder %s226, %s227
      %p236 = scmp.eq.s32.totalorder %s36, 0
      %p237 = por %p235, %p236
      %p238 = scmp.ne.s32.totalorder %s226, %s227
      %p239 = scmp.eq.s32.totalorder %s37, 1
      %p240 = por %p238, %p239
      %p242 = scmp.ne.s32.totalorder %s227, %s241
      %p243 = scmp.eq.s32.totalorder %s37, 0
      %p244 = por %p242, %p243
      %s246 = sadd.s32 %s245, 1
      %p249 = scmp.eq.s32.totalorder %s31, 1
      %p250 = scmp.ne.s32.totalorder %s245, %s247
      %p251 = scmp.eq.s32.totalorder %s31, 0
      %p252 = por %p250, %p251
      %p253 = scmp.ne.s32.totalorder %s245, %s247
      %p254 = scmp.eq.s32.totalorder %s36, 1
      %p255 = por %p253, %p254
      %p256 = scmp.ne.s32.totalorder %s247, %s248
      %p257 = scmp.eq.s32.totalorder %s36, 0
      %p258 = por %p256, %p257
      %p259 = scmp.ne.s32.totalorder %s247, %s248
      %p260 = scmp.eq.s32.totalorder %s37, 1
      %p261 = por %p259, %p260
      %p263 = scmp.ne.s32.totalorder %s248, %s262
      %p264 = scmp.eq.s32.totalorder %s37, 0
      %p265 = por %p263, %p264
      %s267 = sadd.s32 %s266, 1
      %p270 = scmp.eq.s32.totalorder %s31, 1
      %p271 = scmp.ne.s32.totalorder %s266, %s268
      %p272 = scmp.eq.s32.totalorder %s31, 0
      %p273 = por %p271, %p272
      %p274 = scmp.ne.s32.totalorder %s266, %s268
      %p275 = scmp.eq.s32.totalorder %s36, 1
      %p276 = por %p274, %p275
      %p277 = scmp.ne.s32.totalorder %s268, %s269
      %p278 = scmp.eq.s32.totalorder %s36, 0
      %p279 = por %p277, %p278
      %p280 = scmp.ne.s32.totalorder %s268, %s269
      %p281 = scmp.eq.s32.totalorder %s37, 1
      %p282 = por %p280, %p281
      %p284 = scmp.ne.s32.totalorder %s269, %s283
      %p285 = scmp.eq.s32.totalorder %s37, 0
      %p286 = por %p284, %p285
      %s288 = sadd.s32 %s287, 1
      %p291 = scmp.eq.s32.totalorder %s31, 1
      %p292 = scmp.ne.s32.totalorder %s287, %s289
      %p293 = scmp.eq.s32.totalorder %s31, 0
      %p294 = por %p292, %p293
      %p295 = scmp.ne.s32.totalorder %s287, %s289
      %p296 = scmp.eq.s32.totalorder %s36, 1
      %p297 = por %p295, %p296
      %p298 = scmp.ne.s32.totalorder %s289, %s290
      %p299 = scmp.eq.s32.totalorder %s36, 0
      %p300 = por %p298, %p299
      %p301 = scmp.ne.s32.totalorder %s289, %s290
      %p302 = scmp.eq.s32.totalorder %s37, 1
      %p303 = por %p301, %p302
      %p305 = scmp.ne.s32.totalorder %s290, %s304
      %p306 = scmp.eq.s32.totalorder %s37, 0
      %p307 = por %p305, %p306
      %s309 = sadd.s32 %s308, 1
      %p312 = scmp.eq.s32.totalorder %s31, 1
      %p313 = scmp.ne.s32.totalorder %s308, %s310
      %p314 = scmp.eq.s32.totalorder %s31, 0
      %p315 = por %p313, %p314
      %p316 = scmp.ne.s32.totalorder %s308, %s310
      %p317 = scmp.eq.s32.totalorder %s36, 1
      %p318 = por %p316, %p317
      %p319 = scmp.ne.s32.totalorder %s310, %s311
      %p320 = scmp.eq.s32.totalorder %s36, 0
      %p321 = por %p319, %p320
      %p322 = scmp.ne.s32.totalorder %s310, %s311
      %p323 = scmp.eq.s32.totalorder %s37, 1
      %p324 = por %p322, %p323
      %p326 = scmp.ne.s32.totalorder %s311, %s325
      %p327 = scmp.eq.s32.totalorder %s37, 0
      %p328 = por %p326, %p327
      %s330 = sadd.s32 %s329, 1
      %p333 = scmp.eq.s32.totalorder %s31, 1
      %p334 = scmp.ne.s32.totalorder %s329, %s331
      %p335 = scmp.eq.s32.totalorder %s31, 0
      %p336 = por %p334, %p335
      %p337 = scmp.ne.s32.totalorder %s329, %s331
      %p338 = scmp.eq.s32.totalorder %s36, 1
      %p339 = por %p337, %p338
      %p340 = scmp.ne.s32.totalorder %s331, %s332
      %p341 = scmp.eq.s32.totalorder %s36, 0
      %p342 = por %p340, %p341
      %p343 = scmp.ne.s32.totalorder %s331, %s332
      %p344 = scmp.eq.s32.totalorder %s37, 1
      %p345 = por %p343, %p344
      %p347 = scmp.ne.s32.totalorder %s332, %s346
      %p348 = scmp.eq.s32.totalorder %s37, 0
      %p349 = por %p347, %p348
      %s351 = sadd.s32 %s350, 1
      %p354 = scmp.eq.s32.totalorder %s31, 1
      %p355 = scmp.ne.s32.totalorder %s350, %s352
      %p356 = scmp.eq.s32.totalorder %s31, 0
      %p357 = por %p355, %p356
      %p358 = scmp.ne.s32.totalorder %s350, %s352
      %p359 = scmp.eq.s32.totalorder %s36, 1
      %p360 = por %p358, %p359
      %p361 = scmp.ne.s32.totalorder %s352, %s353
      %p362 = scmp.eq.s32.totalorder %s36, 0
      %p363 = por %p361, %p362
      %p364 = scmp.ne.s32.totalorder %s352, %s353
      %p365 = scmp.eq.s32.totalorder %s37, 1
      %p366 = por %p364, %p365
      %p368 = scmp.ne.s32.totalorder %s353, %s367
      %p369 = scmp.eq.s32.totalorder %s37, 0
      %p370 = por %p368, %p369
      %s371 = ssub.s32 %s38, %s50
      %s372 = ssub.s32 %s39, %s46
      %s373 = sor.u32 %s371, %s372
      %p374 = scmp.eq.s32.totalorder %s373, 0
      %s376 = sadd.s32 %s375, 1
      %s377 = scalar_select %p374, %s375, %s376
      %p380 = pneg %p374
      %p381 = scmp.eq.s32.totalorder %s31, 1
      %p382 = por %p380, %p381
      %p383 = scmp.ne.s32.totalorder %s375, %s378
      %p384 = scmp.eq.s32.totalorder %s31, 0
      %p385 = por %p383, %p384
      %p386 = scmp.ne.s32.totalorder %s375, %s378
      %p387 = scmp.eq.s32.totalorder %s36, 1
      %p388 = por %p386, %p387
      %p389 = scmp.ne.s32.totalorder %s378, %s379
      %p390 = scmp.eq.s32.totalorder %s36, 0
      %p391 = por %p389, %p390
      %p392 = scmp.ne.s32.totalorder %s378, %s379
      %p393 = scmp.eq.s32.totalorder %s37, 1
      %p394 = por %p392, %p393
      %p396 = scmp.ne.s32.totalorder %s379, %s395
      %p397 = scmp.eq.s32.totalorder %s37, 0
      %p398 = por %p396, %p397
      %p399 = scmp.le.s32.totalorder 1, %s31
      %p400 = scmp.lt.s32.totalorder %s31, 3
      %p401 = pnand %p399, %p400
      %p402 = pneg %p401
      // Predicated region
      $region9: #{tpu_custom_call.1} parent=5 // pred_check
        _
      $region10: #{tpu_custom_call.1} parent=5 // pred_check_branch
        %404 = sbr.rel (%p401) target = $region12
      $region11: #{tpu_custom_call.1} parent=5 // pred_region
        %s405 = ssub.s32 %s31, 1
        // Predicated region
        $region13: #{tpu_custom_call.1} parent=11 // pred_check
          %p406 = pneg %p90
        $region14: #{tpu_custom_call.1} parent=11 // pred_check_branch
          %408 = sbr.rel (%p406) target = $region16
        $region15: #{tpu_custom_call.1} parent=11 // pred_region
          %410 = vsyncadd [#allocation8], 0
          %s412 = sshll.u32 %s1, 4
          %s413 = int_to_ptr.hbm [resolvable:$true] %s412
          %s414 = sshll.u32 [#allocation7], 4
          %s415 = int_to_ptr.vmem [resolvable:$true] %s414
          %417 = dma.hbm_to_vmem [thread:$0]  %s413, 16, %s415, [#allocation8]
        $region16: #{tpu_custom_call.1} parent=11 // pred_fallthru
          _
        // Predicated region
        $region17: #{tpu_custom_call.1} parent=11 // pred_check
          %p418 = pneg %p111
        $region18: #{tpu_custom_call.1} parent=11 // pred_check_branch
          %420 = sbr.rel (%p418) target = $region20
        $region19: #{tpu_custom_call.1} parent=11 // pred_region
          %422 = vsyncadd [#allocation8], 0
          %s423 = sshll.u32 %s2, 4
          %s424 = int_to_ptr.hbm [resolvable:$true] %s423
          %s425 = sshll.u32 [#allocation9], 4
          %s426 = int_to_ptr.vmem [resolvable:$true] %s425
          %431 = dma.hbm_to_vmem [thread:$0]  %s424, 1024, %s426, [#allocation8], 64, 64, 4
        $region20: #{tpu_custom_call.1} parent=11 // pred_fallthru
          _
        // Predicated region
        $region21: #{tpu_custom_call.1} parent=11 // pred_check
          %p432 = pneg %p132
        $region22: #{tpu_custom_call.1} parent=11 // pred_check_branch
          %434 = sbr.rel (%p432) target = $region24
        $region23: #{tpu_custom_call.1} parent=11 // pred_region
          _
        $region24: #{tpu_custom_call.1} parent=11 // pred_fallthru
          _
        // Predicated region
        $region25: #{tpu_custom_call.1} parent=11 // pred_check
          %p435 = pneg %p153
        $region26: #{tpu_custom_call.1} parent=11 // pred_check_branch
          %437 = sbr.rel (%p435) target = $region28
        $region27: #{tpu_custom_call.1} parent=11 // pred_region
          %439 = vsyncadd [#allocation11], 0
          %s440 = sshll.u32 %s4, 4
          %s441 = int_to_ptr.hbm [resolvable:$true] %s440
          %s442 = sshll.u32 [#allocation10], 4
          %s443 = int_to_ptr.vmem [resolvable:$true] %s442
          %448 = dma.hbm_to_vmem [thread:$0]  %s441, 1024, %s443, [#allocation11], 64, 64, 4
        $region28: #{tpu_custom_call.1} parent=11 // pred_fallthru
          _
        // Predicated region
        $region29: #{tpu_custom_call.1} parent=11 // pred_check
          %p449 = pneg %p174
        $region30: #{tpu_custom_call.1} parent=11 // pred_check_branch
          %451 = sbr.rel (%p449) target = $region32
        $region31: #{tpu_custom_call.1} parent=11 // pred_region
          _
        $region32: #{tpu_custom_call.1} parent=11 // pred_fallthru
          _
        // Predicated region
        $region33: #{tpu_custom_call.1} parent=11 // pred_check
          %p452 = pneg %p195
        $region34: #{tpu_custom_call.1} parent=11 // pred_check_branch
          %454 = sbr.rel (%p452) target = $region36
        $region35: #{tpu_custom_call.1} parent=11 // pred_region
          %456 = vsyncadd [#allocation11], 0
          %s457 = sshll.u32 %s6, 4
          %s458 = int_to_ptr.hbm [resolvable:$true] %s457
          %s459 = sshll.u32 [#allocation12], 4
          %s460 = int_to_ptr.vmem [resolvable:$true] %s459
          %465 = dma.hbm_to_vmem [thread:$0]  %s458, 1024, %s460, [#allocation11], 64, 64, 4
        $region36: #{tpu_custom_call.1} parent=11 // pred_fallthru
          _
        // Predicated region
        $region37: #{tpu_custom_call.1} parent=11 // pred_check
          %p466 = pneg %p216
        $region38: #{tpu_custom_call.1} parent=11 // pred_check_branch
          %468 = sbr.rel (%p466) target = $region40
        $region39: #{tpu_custom_call.1} parent=11 // pred_region
          _
        $region40: #{tpu_custom_call.1} parent=11 // pred_fallthru
          _
        // Predicated region
        $region41: #{tpu_custom_call.1} parent=11 // pred_check
          %p469 = pneg %p237
        $region42: #{tpu_custom_call.1} parent=11 // pred_check_branch
          %471 = sbr.rel (%p469) target = $region44
        $region43: #{tpu_custom_call.1} parent=11 // pred_region
          %473 = vsyncadd [#allocation14], 0
          %s474 = sshll.u32 %s8, 4
          %s475 = int_to_ptr.hbm [resolvable:$true] %s474
          %s476 = sshll.u32 [#allocation13], 4
          %s477 = int_to_ptr.vmem [resolvable:$true] %s476
          %482 = dma.hbm_to_vmem [thread:$0]  %s475, 1024, %s477, [#allocation14], 64, 64, 4
        $region44: #{tpu_custom_call.1} parent=11 // pred_fallthru
          _
        // Predicated region
        $region45: #{tpu_custom_call.1} parent=11 // pred_check
          %p483 = pneg %p258
        $region46: #{tpu_custom_call.1} parent=11 // pred_check_branch
          %485 = sbr.rel (%p483) target = $region48
        $region47: #{tpu_custom_call.1} parent=11 // pred_region
          _
        $region48: #{tpu_custom_call.1} parent=11 // pred_fallthru
          _
        // Predicated region
        $region49: #{tpu_custom_call.1} parent=11 // pred_check
          %p486 = pneg %p279
        $region50: #{tpu_custom_call.1} parent=11 // pred_check_branch
          %488 = sbr.rel (%p486) target = $region52
        $region51: #{tpu_custom_call.1} parent=11 // pred_region
          _
        $region52: #{tpu_custom_call.1} parent=11 // pred_fallthru
          _
        // Predicated region
        $region53: #{tpu_custom_call.1} parent=11 // pred_check
          %p489 = pneg %p300
        $region54: #{tpu_custom_call.1} parent=11 // pred_check_branch
          %491 = sbr.rel (%p489) target = $region56
        $region55: #{tpu_custom_call.1} parent=11 // pred_region
          %493 = vsyncadd [#allocation14], 0
          %s494 = sshll.u32 %s11, 4
          %s495 = int_to_ptr.hbm [resolvable:$true] %s494
          %s496 = sshll.u32 [#allocation15], 4
          %s497 = int_to_ptr.vmem [resolvable:$true] %s496
          %502 = dma.hbm_to_vmem [thread:$0]  %s495, 4096, %s497, [#allocation14], 256, 256, 16
        $region56: #{tpu_custom_call.1} parent=11 // pred_fallthru
          _
        // Predicated region
        $region57: #{tpu_custom_call.1} parent=11 // pred_check
          %p503 = pneg %p321
        $region58: #{tpu_custom_call.1} parent=11 // pred_check_branch
          %505 = sbr.rel (%p503) target = $region60
        $region59: #{tpu_custom_call.1} parent=11 // pred_region
          _
        $region60: #{tpu_custom_call.1} parent=11 // pred_fallthru
          _
        // Predicated region
        $region61: #{tpu_custom_call.1} parent=11 // pred_check
          %p506 = pneg %p342
        $region62: #{tpu_custom_call.1} parent=11 // pred_check_branch
          %508 = sbr.rel (%p506) target = $region64
        $region63: #{tpu_custom_call.1} parent=11 // pred_region
          %510 = vsyncadd [#allocation17], 0
          %s511 = sshll.u32 %s13, 4
          %s512 = int_to_ptr.hbm [resolvable:$true] %s511
          %s513 = sshll.u32 [#allocation16], 4
          %s514 = int_to_ptr.vmem [resolvable:$true] %s513
          %519 = dma.hbm_to_vmem [thread:$0]  %s512, 4096, %s514, [#allocation17], 64, 64, 4
        $region64: #{tpu_custom_call.1} parent=11 // pred_fallthru
          _
        // Predicated region
        $region65: #{tpu_custom_call.1} parent=11 // pred_check
          %p520 = pneg %p363
        $region66: #{tpu_custom_call.1} parent=11 // pred_check_branch
          %522 = sbr.rel (%p520) target = $region68
        $region67: #{tpu_custom_call.1} parent=11 // pred_region
          _
        $region68: #{tpu_custom_call.1} parent=11 // pred_fallthru
          _
      $region12: #{tpu_custom_call.1} parent=5 // pred_fallthru
        _
      %p523 = scmp.lt.s32.totalorder %s31, 2
      // Predicated region
      $region69: #{tpu_custom_call.1} parent=5 // pred_check
        %p524 = pneg %p523
      $region70: #{tpu_custom_call.1} parent=5 // pred_check_branch
        %526 = sbr.rel (%p524) target = $region72
      $region71: #{tpu_custom_call.1} parent=5 // pred_region
        // Predicated region
        $region73: #{tpu_custom_call.1} parent=71 // pred_check
          %p527 = pneg %p63
        $region74: #{tpu_custom_call.1} parent=71 // pred_check_branch
          %529 = sbr.rel (%p527) target = $region76
        $region75: #{tpu_custom_call.1} parent=71 // pred_region
          %s530 = sand.u32 %s53, 1
          %s531 = scalar_lea.sflag [#allocation5], %s530
          %s532 = sand.u32 %s53, 1
          %s533 = smul.addr %s532, 16
          %s534 = scalar_lea.vmem [#allocation4], %s533
          %536 = vsyncadd %s531, 0
          %s537 = smul.addr %s38, 2
          %s538 = smul.addr %s537, 8
          %s539 = scalar_lea.hbm %s0, %s538
          %s540 = sshll.u32 %s539, 4
          %s541 = int_to_ptr.hbm [resolvable:$true] %s540
          %s542 = sshll.u32 %s534, 4
          %s543 = int_to_ptr.vmem [resolvable:$true] %s542
          %548 = dma.hbm_to_vmem [thread:$0]  %s541, 256, %s543, %s531, 128, 128, 8
        $region76: #{tpu_custom_call.1} parent=71 // pred_fallthru
          _
      $region72: #{tpu_custom_call.1} parent=5 // pred_fallthru
        _
      %p549 = scmp.le.s32.totalorder 1, %s31
      %p550 = scmp.lt.s32.totalorder %s31, 3
      %p551 = pnand %p549, %p550
      %p552 = pneg %p551
      // Predicated region
      $region77: #{tpu_custom_call.1} parent=5 // pred_check
        _
      $region78: #{tpu_custom_call.1} parent=5 // pred_check_branch
        %554 = sbr.rel (%p551) target = $region80
      $region79: #{tpu_custom_call.1} parent=5 // pred_region
        %s555 = ssub.s32 %s31, 1
        %s556 = sand.u32 %s56, 1
        %s557 = scalar_lea.sflag [#allocation5], %s556
        %s558 = sand.u32 %s56, 1
        %s559 = smul.addr %s558, 16
        %s560 = scalar_lea.vmem [#allocation4], %s559
        // Predicated region
        $region81: #{tpu_custom_call.1} parent=79 // pred_check
          %p561 = pneg %p69
        $region82: #{tpu_custom_call.1} parent=79 // pred_check_branch
          %563 = sbr.rel (%p561) target = $region84
        $region83: #{tpu_custom_call.1} parent=79 // pred_region
          %565 = dma.done %s557, 256
        $region84: #{tpu_custom_call.1} parent=79 // pred_fallthru
          _
        // Predicated region
        $region85: #{tpu_custom_call.1} parent=79 // pred_check
          %p566 = pneg %p90
        $region86: #{tpu_custom_call.1} parent=79 // pred_check_branch
          %568 = sbr.rel (%p566) target = $region88
        $region87: #{tpu_custom_call.1} parent=79 // pred_region
          %570 = dma.done [#allocation8], 16
        $region88: #{tpu_custom_call.1} parent=79 // pred_fallthru
          _
        // Predicated region
        $region89: #{tpu_custom_call.1} parent=79 // pred_check
          %p571 = pneg %p111
        $region90: #{tpu_custom_call.1} parent=79 // pred_check_branch
          %573 = sbr.rel (%p571) target = $region92
        $region91: #{tpu_custom_call.1} parent=79 // pred_region
          %575 = dma.done [#allocation8], 1024
        $region92: #{tpu_custom_call.1} parent=79 // pred_fallthru
          _
        // Predicated region
        $region93: #{tpu_custom_call.1} parent=79 // pred_check
          %p576 = pneg %p153
        $region94: #{tpu_custom_call.1} parent=79 // pred_check_branch
          %578 = sbr.rel (%p576) target = $region96
        $region95: #{tpu_custom_call.1} parent=79 // pred_region
          %580 = dma.done [#allocation11], 1024
        $region96: #{tpu_custom_call.1} parent=79 // pred_fallthru
          _
        // Predicated region
        $region97: #{tpu_custom_call.1} parent=79 // pred_check
          %p581 = pneg %p195
        $region98: #{tpu_custom_call.1} parent=79 // pred_check_branch
          %583 = sbr.rel (%p581) target = $region100
        $region99: #{tpu_custom_call.1} parent=79 // pred_region
          %585 = dma.done [#allocation11], 1024
        $region100: #{tpu_custom_call.1} parent=79 // pred_fallthru
          _
        // Predicated region
        $region101: #{tpu_custom_call.1} parent=79 // pred_check
          %p586 = pneg %p237
        $region102: #{tpu_custom_call.1} parent=79 // pred_check_branch
          %588 = sbr.rel (%p586) target = $region104
        $region103: #{tpu_custom_call.1} parent=79 // pred_region
          %590 = dma.done [#allocation14], 1024
        $region104: #{tpu_custom_call.1} parent=79 // pred_fallthru
          _
        // Predicated region
        $region105: #{tpu_custom_call.1} parent=79 // pred_check
          %p591 = pneg %p300
        $region106: #{tpu_custom_call.1} parent=79 // pred_check_branch
          %593 = sbr.rel (%p591) target = $region108
        $region107: #{tpu_custom_call.1} parent=79 // pred_region
          %595 = dma.done [#allocation14], 4096
        $region108: #{tpu_custom_call.1} parent=79 // pred_fallthru
          _
        // Predicated region
        $region109: #{tpu_custom_call.1} parent=79 // pred_check
          %p596 = pneg %p342
        $region110: #{tpu_custom_call.1} parent=79 // pred_check_branch
          %598 = sbr.rel (%p596) target = $region112
        $region111: #{tpu_custom_call.1} parent=79 // pred_region
          %600 = dma.done [#allocation17], 4096
        $region112: #{tpu_custom_call.1} parent=79 // pred_fallthru
          _
        %s601 = sand.u32 %s56, 1
        %s602 = scalar_lea.sflag [#allocation5], %s601
        %s603 = sand.u32 %s56, 1
        %s604 = smul.addr %s603, 16
        %s605 = scalar_lea.vmem [#allocation4], %s604
        %p606 = pneg %p69
        %p607 = pneg %p66
        %p608 = pneg %p90
        %p609 = pneg %p87
        %p610 = pneg %p111
        %p611 = pneg %p108
        %p612 = pneg %p132
        %p613 = pneg %p129
        %p614 = pneg %p153
        %p615 = pneg %p150
        %p616 = pneg %p174
        %p617 = pneg %p171
        %p618 = pneg %p195
        %p619 = pneg %p192
        %p620 = pneg %p216
        %p621 = pneg %p213
        %p622 = pneg %p237
        %p623 = pneg %p234
        %p624 = pneg %p258
        %p625 = pneg %p255
        %p626 = pneg %p279
        %p627 = pneg %p276
        %p628 = pneg %p300
        %p629 = pneg %p297
        %p630 = pneg %p321
        %p631 = pneg %p318
        %p632 = pneg %p342
        %p633 = pneg %p339
        %p634 = pneg %p363
        %p635 = pneg %p360
        %p636 = pneg %p391
        %p637 = pneg %p388
        %s638 = sand.u32 %s378, 1
        %s639 = scalar_lea.sflag [#allocation6], %s638
        %s640 = sand.u32 %s378, 1
        %s641 = smul.addr %s640, 16
        %s642 = scalar_lea.vmem [#allocation18], %s641
        %s643 = smul.u32 2, %s41
        %v645 = vld [vmem:[#allocation7] sm:$0x1]
        %p646 = scmp.eq.s32.totalorder %s41, 0
        // Predicated region
        $region113: #{tpu_custom_call.1} parent=79 // pred_check
          %p647 = pneg %p646
        $region114: #{tpu_custom_call.1} parent=79 // pred_check_branch
          %649 = sbr.rel (%p647) target = $region116
        $region115: #{tpu_custom_call.1} parent=79 // pred_region
          %v650 = vld [vmem:[%s560] sm:$0xff]
          %v651 = vld [vmem:[%s560 + $0x8] sm:$0xff]
          %v652 = vmul.f32 %v650, %v650
          %v653 = vmul.f32 %v651, %v651
          %654 = vadd.xlane.f32.xlu0 %v652
          %v655 = vpop.xlane.xlu0 %654
          %656 = vadd.xlane.f32.xlu0 %v653
          %v657 = vpop.xlane.xlu0 %656
          %v658 = vrcp.pop 128.0
          %v659 = vmul.f32 128.0, %v658
          %v660 = vsub.f32 1.0, %v659
          %v661 = vmul.f32 %v658, %v660
          %v662 = vadd.f32 %v658, %v661
          %vm663 = vweird.f32 %v658
          %v664 = vsel %vm663, %v658, %v662
          %v665 = vmul.f32 %v655, %v664
          %v666 = vmul.f32 %v657, %v664
          %v667 = vadd.f32 %v665, 1e-06
          %v668 = vadd.f32 %v666, 1e-06
          %v669 = vrsqrt.pop %v667
          %v670 = vmul.f32 %v669, %v667
          %v671 = vmul.f32 %v670, %v669
          %v672 = vmul.f32 0.5, %v671
          %v673 = vsub.f32 1.5, %v672
          %v674 = vmul.f32 %v669, %v673
          %vm675 = vweird.f32 %v667
          %vm676 = vweird.f32 %v669
          %vm677 = vmor %vm675, %vm676
          %v678 = vsel %vm677, %v669, %v674
          %v679 = vrsqrt.pop %v668
          %v680 = vmul.f32 %v679, %v668
          %v681 = vmul.f32 %v680, %v679
          %v682 = vmul.f32 0.5, %v681
          %v683 = vsub.f32 1.5, %v682
          %v684 = vmul.f32 %v679, %v683
          %vm685 = vweird.f32 %v668
          %vm686 = vweird.f32 %v679
          %vm687 = vmor %vm685, %vm686
          %v688 = vsel %vm687, %v679, %v684
          %v689 = vmul.f32 %v650, %v678
          %v690 = vmul.f32 %v651, %v688
          %v692 = vperm.slane %v645, 0
          %v694 = vmul.f32 %v689, %v692
          %v695 = vmul.f32 %v690, %v692
          %v696 = vpack.c.bf16 %v695, %v694
          %v697 = vld [vmem:[#allocation10] sm:$0xf]
          %v698 = vld [vmem:[#allocation10 + $0x4] sm:$0xf]
          %v699 = vld [vmem:[#allocation10 + $0x8] sm:$0xf]
          %v700 = vld [vmem:[#allocation10 + $0xc] sm:$0xf]
          %v701 = vld [vmem:[#allocation10 + $0x10] sm:$0xf]
          %v702 = vld [vmem:[#allocation10 + $0x14] sm:$0xf]
          %v703 = vld [vmem:[#allocation10 + $0x18] sm:$0xf]
          %v704 = vld [vmem:[#allocation10 + $0x1c] sm:$0xf]
          %v705 = vld [vmem:[#allocation10 + $0x20] sm:$0xf]
          %v706 = vld [vmem:[#allocation10 + $0x24] sm:$0xf]
          %v707 = vld [vmem:[#allocation10 + $0x28] sm:$0xf]
          %v708 = vld [vmem:[#allocation10 + $0x2c] sm:$0xf]
          %v709 = vld [vmem:[#allocation10 + $0x30] sm:$0xf]
          %v710 = vld [vmem:[#allocation10 + $0x34] sm:$0xf]
          %v711 = vld [vmem:[#allocation10 + $0x38] sm:$0xf]
          %v712 = vld [vmem:[#allocation10 + $0x3c] sm:$0xf]
          %v713 = vld [vmem:[%s5] sm:$0x1]
          %v715 = vperm.slane %v713, 0
          %v733 = vunpack.c.l.b16 %v697
          %v734 = vunpack.c.l.b16 %v698
          %v735 = vunpack.c.l.b16 %v699
          %v736 = vunpack.c.l.b16 %v700
          %v737 = vunpack.c.l.b16 %v701
          %v738 = vunpack.c.l.b16 %v702
          %v739 = vunpack.c.l.b16 %v703
          %v740 = vunpack.c.l.b16 %v704
          %v741 = vunpack.c.l.b16 %v705
          %v742 = vunpack.c.l.b16 %v706
          %v743 = vunpack.c.l.b16 %v707
          %v744 = vunpack.c.l.b16 %v708
          %v745 = vunpack.c.l.b16 %v709
          %v746 = vunpack.c.l.b16 %v710
          %v747 = vunpack.c.l.b16 %v711
          %v748 = vunpack.c.l.b16 %v712
          %v749 = vpack.c.b16 %v734, %v733
          %v750 = vpack.c.b16 %v736, %v735
          %v751 = vpack.c.b16 %v738, %v737
          %v752 = vpack.c.b16 %v740, %v739
          %v753 = vpack.c.b16 %v742, %v741
          %v754 = vpack.c.b16 %v744, %v743
          %v755 = vpack.c.b16 %v746, %v745
          %v756 = vpack.c.b16 %v748, %v747
          %765 = vmatpush.bf16.msra.mxu0 %v756
          %766 = vmatpush.bf16.msra.mxu0 %v755
          %767 = vmatpush.bf16.msra.mxu0 %v754
          %768 = vmatpush.bf16.msra.mxu0 %v753
          %769 = vmatpush.bf16.msra.mxu0 %v752
          %770 = vmatpush.bf16.msra.mxu0 %v751
          %771 = vmatpush.bf16.msra.mxu0 %v750
          %772 = vmatpush.bf16.msra.mxu0 %v749
          %773 = vmatmul.bf16.gmra.mxu0 %v696
          %v774 = vpop.f32.mrf.mxu0
          %v775 = vadd.f32 %v715, %v774
          %v776 = vpop.f32.mrf.mxu0
          %v777 = vadd.f32 %v715, %v776
          %778 = vdwg.mxu0
          %v779 = vld [vmem:[#allocation12] sm:$0xf]
          %v780 = vld [vmem:[#allocation12 + $0x4] sm:$0xf]
          %v781 = vld [vmem:[#allocation12 + $0x8] sm:$0xf]
          %v782 = vld [vmem:[#allocation12 + $0xc] sm:$0xf]
          %v783 = vld [vmem:[#allocation12 + $0x10] sm:$0xf]
          %v784 = vld [vmem:[#allocation12 + $0x14] sm:$0xf]
          %v785 = vld [vmem:[#allocation12 + $0x18] sm:$0xf]
          %v786 = vld [vmem:[#allocation12 + $0x1c] sm:$0xf]
          %v787 = vld [vmem:[#allocation12 + $0x20] sm:$0xf]
          %v788 = vld [vmem:[#allocation12 + $0x24] sm:$0xf]
          %v789 = vld [vmem:[#allocation12 + $0x28] sm:$0xf]
          %v790 = vld [vmem:[#allocation12 + $0x2c] sm:$0xf]
          %v791 = vld [vmem:[#allocation12 + $0x30] sm:$0xf]
          %v792 = vld [vmem:[#allocation12 + $0x34] sm:$0xf]
          %v793 = vld [vmem:[#allocation12 + $0x38] sm:$0xf]
          %v794 = vld [vmem:[#allocation12 + $0x3c] sm:$0xf]
          %v795 = vld [vmem:[%s7] sm:$0x1]
          %v797 = vperm.slane %v795, 0
          %v815 = vunpack.c.l.b16 %v779
          %v816 = vunpack.c.l.b16 %v780
          %v817 = vunpack.c.l.b16 %v781
          %v818 = vunpack.c.l.b16 %v782
          %v819 = vunpack.c.l.b16 %v783
          %v820 = vunpack.c.l.b16 %v784
          %v821 = vunpack.c.l.b16 %v785
          %v822 = vunpack.c.l.b16 %v786
          %v823 = vunpack.c.l.b16 %v787
          %v824 = vunpack.c.l.b16 %v788
          %v825 = vunpack.c.l.b16 %v789
          %v826 = vunpack.c.l.b16 %v790
          %v827 = vunpack.c.l.b16 %v791
          %v828 = vunpack.c.l.b16 %v792
          %v829 = vunpack.c.l.b16 %v793
          %v830 = vunpack.c.l.b16 %v794
          %v831 = vpack.c.b16 %v816, %v815
          %v832 = vpack.c.b16 %v818, %v817
          %v833 = vpack.c.b16 %v820, %v819
          %v834 = vpack.c.b16 %v822, %v821
          %v835 = vpack.c.b16 %v824, %v823
          %v836 = vpack.c.b16 %v826, %v825
          %v837 = vpack.c.b16 %v828, %v827
          %v838 = vpack.c.b16 %v830, %v829
          %847 = vmatpush.bf16.msra.mxu0 %v838
          %848 = vmatpush.bf16.msra.mxu0 %v837
          %849 = vmatpush.bf16.msra.mxu0 %v836
          %850 = vmatpush.bf16.msra.mxu0 %v835
          %851 = vmatpush.bf16.msra.mxu0 %v834
          %852 = vmatpush.bf16.msra.mxu0 %v833
          %853 = vmatpush.bf16.msra.mxu0 %v832
          %854 = vmatpush.bf16.msra.mxu0 %v831
          %855 = vmatmul.bf16.gmra.mxu0 %v696
          %v856 = vpop.f32.mrf.mxu0
          %v857 = vadd.f32 %v797, %v856
          %v858 = vpop.f32.mrf.mxu0
          %v859 = vadd.f32 %v797, %v858
          %860 = vdwg.mxu0
          %v861 = vpack.c.bf16 %v775, %v775
          %v862 = vpack.c.bf16 %v777, %v777
          %863 = vst [vmem:[#allocation2] sm:$0xf] %v861
          %864 = vst [vmem:[#allocation2 + $0x4] sm:$0xf] %v862
          %v865 = vpack.c.bf16 %v857, %v857
          %v866 = vpack.c.bf16 %v859, %v859
          %867 = vst [vmem:[#allocation3] sm:$0xf] %v865
          %868 = vst [vmem:[#allocation3 + $0x4] sm:$0xf] %v866
        $region116: #{tpu_custom_call.1} parent=79 // pred_fallthru
          _
        %s869 = smul.u32 %s41, 16
        %s870 = scalar_lea.vmem %s560, %s869 [#allocation4]
        %v871 = vld [vmem:[%s870] sm:$0xff]
        %v872 = vld [vmem:[%s870 + $0x8] sm:$0xff]
        %v873 = vmul.f32 %v871, %v871
        %v874 = vmul.f32 %v872, %v872
        %875 = vadd.xlane.f32.xlu0 %v873
        %v876 = vpop.xlane.xlu0 %875
        %877 = vadd.xlane.f32.xlu0 %v874
        %v878 = vpop.xlane.xlu0 %877
        %v879 = vrcp.pop 128.0
        %v880 = vmul.f32 128.0, %v879
        %v881 = vsub.f32 1.0, %v880
        %v882 = vmul.f32 %v879, %v881
        %v883 = vadd.f32 %v879, %v882
        %vm884 = vweird.f32 %v879
        %v885 = vsel %vm884, %v879, %v883
        %v886 = vmul.f32 %v876, %v885
        %v887 = vmul.f32 %v878, %v885
        %v888 = vadd.f32 %v886, 1e-06
        %v889 = vadd.f32 %v887, 1e-06
        %v890 = vrsqrt.pop %v888
        %v891 = vmul.f32 %v890, %v888
        %v892 = vmul.f32 %v891, %v890
        %v893 = vmul.f32 0.5, %v892
        %v894 = vsub.f32 1.5, %v893
        %v895 = vmul.f32 %v890, %v894
        %vm896 = vweird.f32 %v888
        %vm897 = vweird.f32 %v890
        %vm898 = vmor %vm896, %vm897
        %v899 = vsel %vm898, %v890, %v895
        %v900 = vrsqrt.pop %v889
        %v901 = vmul.f32 %v900, %v889
        %v902 = vmul.f32 %v901, %v900
        %v903 = vmul.f32 0.5, %v902
        %v904 = vsub.f32 1.5, %v903
        %v905 = vmul.f32 %v900, %v904
        %vm906 = vweird.f32 %v889
        %vm907 = vweird.f32 %v900
        %vm908 = vmor %vm906, %vm907
        %v909 = vsel %vm908, %v900, %v905
        %v910 = vmul.f32 %v871, %v899
        %v911 = vmul.f32 %v872, %v909
        %v913 = vperm.slane %v645, 0
        %v915 = vmul.f32 %v910, %v913
        %v916 = vmul.f32 %v911, %v913
        %v917 = vpack.c.bf16 %v916, %v915
        %v918 = vld [vmem:[#allocation9] sm:$0xf]
        %v919 = vld [vmem:[#allocation9 + $0x4] sm:$0xf]
        %v920 = vld [vmem:[#allocation9 + $0x8] sm:$0xf]
        %v921 = vld [vmem:[#allocation9 + $0xc] sm:$0xf]
        %v922 = vld [vmem:[#allocation9 + $0x10] sm:$0xf]
        %v923 = vld [vmem:[#allocation9 + $0x14] sm:$0xf]
        %v924 = vld [vmem:[#allocation9 + $0x18] sm:$0xf]
        %v925 = vld [vmem:[#allocation9 + $0x1c] sm:$0xf]
        %v926 = vld [vmem:[#allocation9 + $0x20] sm:$0xf]
        %v927 = vld [vmem:[#allocation9 + $0x24] sm:$0xf]
        %v928 = vld [vmem:[#allocation9 + $0x28] sm:$0xf]
        %v929 = vld [vmem:[#allocation9 + $0x2c] sm:$0xf]
        %v930 = vld [vmem:[#allocation9 + $0x30] sm:$0xf]
        %v931 = vld [vmem:[#allocation9 + $0x34] sm:$0xf]
        %v932 = vld [vmem:[#allocation9 + $0x38] sm:$0xf]
        %v933 = vld [vmem:[#allocation9 + $0x3c] sm:$0xf]
        %v934 = vld [vmem:[%s3] sm:$0x1]
        %v936 = vperm.slane %v934, 0
        %v954 = vunpack.c.l.b16 %v918
        %v955 = vunpack.c.l.b16 %v919
        %v956 = vunpack.c.l.b16 %v920
        %v957 = vunpack.c.l.b16 %v921
        %v958 = vunpack.c.l.b16 %v922
        %v959 = vunpack.c.l.b16 %v923
        %v960 = vunpack.c.l.b16 %v924
        %v961 = vunpack.c.l.b16 %v925
        %v962 = vunpack.c.l.b16 %v926
        %v963 = vunpack.c.l.b16 %v927
        %v964 = vunpack.c.l.b16 %v928
        %v965 = vunpack.c.l.b16 %v929
        %v966 = vunpack.c.l.b16 %v930
        %v967 = vunpack.c.l.b16 %v931
        %v968 = vunpack.c.l.b16 %v932
        %v969 = vunpack.c.l.b16 %v933
        %v970 = vpack.c.b16 %v955, %v954
        %v971 = vpack.c.b16 %v957, %v956
        %v972 = vpack.c.b16 %v959, %v958
        %v973 = vpack.c.b16 %v961, %v960
        %v974 = vpack.c.b16 %v963, %v962
        %v975 = vpack.c.b16 %v965, %v964
        %v976 = vpack.c.b16 %v967, %v966
        %v977 = vpack.c.b16 %v969, %v968
        %986 = vmatpush.bf16.msra.mxu0 %v977
        %987 = vmatpush.bf16.msra.mxu0 %v976
        %988 = vmatpush.bf16.msra.mxu0 %v975
        %989 = vmatpush.bf16.msra.mxu0 %v974
        %990 = vmatpush.bf16.msra.mxu0 %v973
        %991 = vmatpush.bf16.msra.mxu0 %v972
        %992 = vmatpush.bf16.msra.mxu0 %v971
        %993 = vmatpush.bf16.msra.mxu0 %v970
        %994 = vmatmul.bf16.gmra.mxu0 %v917
        %v995 = vpop.f32.mrf.mxu0
        %v996 = vadd.f32 %v936, %v995
        %v997 = vpop.f32.mrf.mxu0
        %v998 = vadd.f32 %v936, %v997
        %999 = vdwg.mxu0
        %v1000 = vmul.f32 %v996, 0.25
        %v1001 = vmul.f32 %v998, 0.25
        %v1002 = vpack.c.bf16 %v1000, %v1000
        %v1003 = vpack.c.bf16 %v1001, %v1001
        %v1004 = vld [vmem:[#allocation2] sm:$0xf]
        %v1005 = vld [vmem:[#allocation2 + $0x4] sm:$0xf]
        %v1006 = vld [vmem:[#allocation3] sm:$0xf]
        %v1007 = vld [vmem:[#allocation3 + $0x4] sm:$0xf]
        %v1010 = vunpack.c.l.b16 %v1002
        %v1011 = vunpack.c.l.b16 %v1003
        %v1012 = vpack.c.b16 %v1011, %v1010
        %v1015 = vunpack.c.l.b16 %v1004
        %v1016 = vunpack.c.l.b16 %v1005
        %v1017 = vpack.c.b16 %v1016, %v1015
        %vm1018 = vcmask 130048
        %v1020 = vsel %vm1018, %v1012, 0
        %v1023 = vsel %vm1018, %v1017, 0
        %1025 = vmatpush.bf16.xpose.msra.mxu0 0
        %1026 = vmatpush.bf16.xpose.msra.mxu0 0
        %1027 = vmatpush.bf16.xpose.msra.mxu0 0
        %1028 = vmatpush.bf16.xpose.msra.mxu0 0
        %1029 = vmatpush.bf16.xpose.msra.mxu0 0
        %1030 = vmatpush.bf16.xpose.msra.mxu0 0
        %1031 = vmatpush.bf16.xpose.msra.mxu0 0
        %1032 = vmatpush.bf16.xpose.msra.mxu0 %v1023
        %1033 = vmatmul.bf16.gmra.mxu0 %v1020
        %v1034 = vpop.f32.mrf.mxu0
        %v1035 = vadd.f32 0.0, %v1034
        %v1036 = vpop.f32.mrf.mxu0
        %v1037 = vadd.f32 0.0, %v1036
        %1038 = vdwg.mxu0
        %v1039 = vsel %vm1018, %v1035, -inf
        %1040 = vmax.xlane.f32.xlu0 %v1039
        %v1041 = vpop.xlane.xlu0 %1040
        %v1042 = vsel %vm1018, %v1037, -inf
        %1043 = vmax.xlane.f32.xlu0 %v1042
        %v1044 = vpop.xlane.xlu0 %1043
        %v1045 = vsub.f32 %v1035, %v1041
        %v1046 = vsub.f32 %v1037, %v1044
        %v1047 = vmul.f32 %v1045, 1.442695
        %v1048 = vpow.pop %v1047
        %v1049 = vmul.f32 %v1046, 1.442695
        %v1050 = vpow.pop %v1049
        %v1051 = vsel %vm1018, %v1048, 0.0
        %1052 = vadd.xlane.f32.xlu0 %v1051
        %v1053 = vpop.xlane.xlu0 %1052
        %v1054 = vsel %vm1018, %v1050, 0.0
        %1055 = vadd.xlane.f32.xlu0 %v1054
        %v1056 = vpop.xlane.xlu0 %1055
        %v1057 = vrcp.pop %v1053
        %v1058 = vrcp.pop %v1056
        %v1059 = vmul.f32 %v1048, %v1057
        %v1060 = vmul.f32 %v1050, %v1058
        %v1061 = vpack.c.bf16 %v1060, %v1059
        %v1064 = vunpack.c.l.b16 %v1006
        %v1065 = vunpack.c.l.b16 %v1007
        %v1066 = vpack.c.b16 %v1065, %v1064
        %v1069 = vsel %vm1018, %v1061, 0
        %1071 = vmatpush.bf16.msra.mxu0 0
        %1072 = vmatpush.bf16.msra.mxu0 0
        %1073 = vmatpush.bf16.msra.mxu0 0
        %1074 = vmatpush.bf16.msra.mxu0 0
        %1075 = vmatpush.bf16.msra.mxu0 0
        %1076 = vmatpush.bf16.msra.mxu0 0
        %1077 = vmatpush.bf16.msra.mxu0 0
        %1078 = vmatpush.bf16.msra.mxu0 %v1066
        %1079 = vmatmul.bf16.gmra.mxu0 %v1069
        %v1080 = vpop.f32.mrf.mxu0
        %v1081 = vadd.f32 0.0, %v1080
        %v1082 = vpop.f32.mrf.mxu0
        %v1083 = vadd.f32 0.0, %v1082
        %1084 = vdwg.mxu0
        %1085 = vrot.lane.b32.xlu0 %v1012, 112
        %v1086 = vpop.permute.xlu0 %1085
        %1087 = vrot.lane.b32.xlu0 %v1017, 112
        %v1088 = vpop.permute.xlu0 %1087
        %v1090 = vsel %vm1018, %v1086, 0
        %v1093 = vsel %vm1018, %v1088, 0
        %1095 = vmatpush.bf16.xpose.msra.mxu0 0
        %1096 = vmatpush.bf16.xpose.msra.mxu0 0
        %1097 = vmatpush.bf16.xpose.msra.mxu0 0
        %1098 = vmatpush.bf16.xpose.msra.mxu0 0
        %1099 = vmatpush.bf16.xpose.msra.mxu0 0
        %1100 = vmatpush.bf16.xpose.msra.mxu0 0
        %1101 = vmatpush.bf16.xpose.msra.mxu0 0
        %1102 = vmatpush.bf16.xpose.msra.mxu0 %v1093
        %1103 = vmatmul.bf16.gmra.mxu0 %v1090
        %v1104 = vpop.f32.mrf.mxu0
        %v1105 = vadd.f32 0.0, %v1104
        %v1106 = vpop.f32.mrf.mxu0
        %v1107 = vadd.f32 0.0, %v1106
        %1108 = vdwg.mxu0
        %v1109 = vsel %vm1018, %v1105, -inf
        %1110 = vmax.xlane.f32.xlu0 %v1109
        %v1111 = vpop.xlane.xlu0 %1110
        %v1112 = vsel %vm1018, %v1107, -inf
        %1113 = vmax.xlane.f32.xlu0 %v1112
        %v1114 = vpop.xlane.xlu0 %1113
        %v1115 = vsub.f32 %v1105, %v1111
        %v1116 = vsub.f32 %v1107, %v1114
        %v1117 = vmul.f32 %v1115, 1.442695
        %v1118 = vpow.pop %v1117
        %v1119 = vmul.f32 %v1116, 1.442695
        %v1120 = vpow.pop %v1119
        %v1121 = vsel %vm1018, %v1118, 0.0
        %1122 = vadd.xlane.f32.xlu0 %v1121
        %v1123 = vpop.xlane.xlu0 %1122
        %v1124 = vsel %vm1018, %v1120, 0.0
        %1125 = vadd.xlane.f32.xlu0 %v1124
        %v1126 = vpop.xlane.xlu0 %1125
        %v1127 = vrcp.pop %v1123
        %v1128 = vrcp.pop %v1126
        %v1129 = vmul.f32 %v1118, %v1127
        %v1130 = vmul.f32 %v1120, %v1128
        %v1131 = vpack.c.bf16 %v1130, %v1129
        %1132 = vrot.lane.b32.xlu0 %v1066, 112
        %v1133 = vpop.permute.xlu0 %1132
        %v1136 = vsel %vm1018, %v1131, 0
        %1138 = vmatpush.bf16.msra.mxu0 0
        %1139 = vmatpush.bf16.msra.mxu0 0
        %1140 = vmatpush.bf16.msra.mxu0 0
        %1141 = vmatpush.bf16.msra.mxu0 0
        %1142 = vmatpush.bf16.msra.mxu0 0
        %1143 = vmatpush.bf16.msra.mxu0 0
        %1144 = vmatpush.bf16.msra.mxu0 0
        %1145 = vmatpush.bf16.msra.mxu0 %v1133
        %1146 = vmatmul.bf16.gmra.mxu0 %v1136
        %v1147 = vpop.f32.mrf.mxu0
        %v1148 = vadd.f32 0.0, %v1147
        %v1149 = vpop.f32.mrf.mxu0
        %v1150 = vadd.f32 0.0, %v1149
        %1151 = vdwg.mxu0
        %1152 = vrot.lane.b32.xlu0 %v1012, 96
        %v1153 = vpop.permute.xlu0 %1152
        %1154 = vrot.lane.b32.xlu0 %v1017, 96
        %v1155 = vpop.permute.xlu0 %1154
        %v1157 = vsel %vm1018, %v1153, 0
        %v1160 = vsel %vm1018, %v1155, 0
        %1162 = vmatpush.bf16.xpose.msra.mxu0 0
        %1163 = vmatpush.bf16.xpose.msra.mxu0 0
        %1164 = vmatpush.bf16.xpose.msra.mxu0 0
        %1165 = vmatpush.bf16.xpose.msra.mxu0 0
        %1166 = vmatpush.bf16.xpose.msra.mxu0 0
        %1167 = vmatpush.bf16.xpose.msra.mxu0 0
        %1168 = vmatpush.bf16.xpose.msra.mxu0 0
        %1169 = vmatpush.bf16.xpose.msra.mxu0 %v1160
        %1170 = vmatmul.bf16.gmra.mxu0 %v1157
        %v1171 = vpop.f32.mrf.mxu0
        %v1172 = vadd.f32 0.0, %v1171
        %v1173 = vpop.f32.mrf.mxu0
        %v1174 = vadd.f32 0.0, %v1173
        %1175 = vdwg.mxu0
        %v1176 = vsel %vm1018, %v1172, -inf
        %1177 = vmax.xlane.f32.xlu0 %v1176
        %v1178 = vpop.xlane.xlu0 %1177
        %v1179 = vsel %vm1018, %v1174, -inf
        %1180 = vmax.xlane.f32.xlu0 %v1179
        %v1181 = vpop.xlane.xlu0 %1180
        %v1182 = vsub.f32 %v1172, %v1178
        %v1183 = vsub.f32 %v1174, %v1181
        %v1184 = vmul.f32 %v1182, 1.442695
        %v1185 = vpow.pop %v1184
        %v1186 = vmul.f32 %v1183, 1.442695
        %v1187 = vpow.pop %v1186
        %v1188 = vsel %vm1018, %v1185, 0.0
        %1189 = vadd.xlane.f32.xlu0 %v1188
        %v1190 = vpop.xlane.xlu0 %1189
        %v1191 = vsel %vm1018, %v1187, 0.0
        %1192 = vadd.xlane.f32.xlu0 %v1191
        %v1193 = vpop.xlane.xlu0 %1192
        %v1194 = vrcp.pop %v1190
        %v1195 = vrcp.pop %v1193
        %v1196 = vmul.f32 %v1185, %v1194
        %v1197 = vmul.f32 %v1187, %v1195
        %v1198 = vpack.c.bf16 %v1197, %v1196
        %1199 = vrot.lane.b32.xlu0 %v1066, 96
        %v1200 = vpop.permute.xlu0 %1199
        %v1203 = vsel %vm1018, %v1198, 0
        %1205 = vmatpush.bf16.msra.mxu0 0
        %1206 = vmatpush.bf16.msra.mxu0 0
        %1207 = vmatpush.bf16.msra.mxu0 0
        %1208 = vmatpush.bf16.msra.mxu0 0
        %1209 = vmatpush.bf16.msra.mxu0 0
        %1210 = vmatpush.bf16.msra.mxu0 0
        %1211 = vmatpush.bf16.msra.mxu0 0
        %1212 = vmatpush.bf16.msra.mxu0 %v1200
        %1213 = vmatmul.bf16.gmra.mxu0 %v1203
        %v1214 = vpop.f32.mrf.mxu0
        %v1215 = vadd.f32 0.0, %v1214
        %v1216 = vpop.f32.mrf.mxu0
        %v1217 = vadd.f32 0.0, %v1216
        %1218 = vdwg.mxu0
        %1219 = vrot.lane.b32.xlu0 %v1012, 80
        %v1220 = vpop.permute.xlu0 %1219
        %1221 = vrot.lane.b32.xlu0 %v1017, 80
        %v1222 = vpop.permute.xlu0 %1221
        %v1224 = vsel %vm1018, %v1220, 0
        %v1227 = vsel %vm1018, %v1222, 0
        %1229 = vmatpush.bf16.xpose.msra.mxu0 0
        %1230 = vmatpush.bf16.xpose.msra.mxu0 0
        %1231 = vmatpush.bf16.xpose.msra.mxu0 0
        %1232 = vmatpush.bf16.xpose.msra.mxu0 0
        %1233 = vmatpush.bf16.xpose.msra.mxu0 0
        %1234 = vmatpush.bf16.xpose.msra.mxu0 0
        %1235 = vmatpush.bf16.xpose.msra.mxu0 0
        %1236 = vmatpush.bf16.xpose.msra.mxu0 %v1227
        %1237 = vmatmul.bf16.gmra.mxu0 %v1224
        %v1238 = vpop.f32.mrf.mxu0
        %v1239 = vadd.f32 0.0, %v1238
        %v1240 = vpop.f32.mrf.mxu0
        %v1241 = vadd.f32 0.0, %v1240
        %1242 = vdwg.mxu0
        %v1243 = vsel %vm1018, %v1239, -inf
        %1244 = vmax.xlane.f32.xlu0 %v1243
        %v1245 = vpop.xlane.xlu0 %1244
        %v1246 = vsel %vm1018, %v1241, -inf
        %1247 = vmax.xlane.f32.xlu0 %v1246
        %v1248 = vpop.xlane.xlu0 %1247
        %v1249 = vsub.f32 %v1239, %v1245
        %v1250 = vsub.f32 %v1241, %v1248
        %v1251 = vmul.f32 %v1249, 1.442695
        %v1252 = vpow.pop %v1251
        %v1253 = vmul.f32 %v1250, 1.442695
        %v1254 = vpow.pop %v1253
        %v1255 = vsel %vm1018, %v1252, 0.0
        %1256 = vadd.xlane.f32.xlu0 %v1255
        %v1257 = vpop.xlane.xlu0 %1256
        %v1258 = vsel %vm1018, %v1254, 0.0
        %1259 = vadd.xlane.f32.xlu0 %v1258
        %v1260 = vpop.xlane.xlu0 %1259
        %v1261 = vrcp.pop %v1257
        %v1262 = vrcp.pop %v1260
        %v1263 = vmul.f32 %v1252, %v1261
        %v1264 = vmul.f32 %v1254, %v1262
        %v1265 = vpack.c.bf16 %v1264, %v1263
        %1266 = vrot.lane.b32.xlu0 %v1066, 80
        %v1267 = vpop.permute.xlu0 %1266
        %v1270 = vsel %vm1018, %v1265, 0
        %1272 = vmatpush.bf16.msra.mxu0 0
        %1273 = vmatpush.bf16.msra.mxu0 0
        %1274 = vmatpush.bf16.msra.mxu0 0
        %1275 = vmatpush.bf16.msra.mxu0 0
        %1276 = vmatpush.bf16.msra.mxu0 0
        %1277 = vmatpush.bf16.msra.mxu0 0
        %1278 = vmatpush.bf16.msra.mxu0 0
        %1279 = vmatpush.bf16.msra.mxu0 %v1267
        %1280 = vmatmul.bf16.gmra.mxu0 %v1270
        %v1281 = vpop.f32.mrf.mxu0
        %v1282 = vadd.f32 0.0, %v1281
        %v1283 = vpop.f32.mrf.mxu0
        %v1284 = vadd.f32 0.0, %v1283
        %1285 = vdwg.mxu0
        %1286 = vrot.lane.b32.xlu0 %v1012, 64
        %v1287 = vpop.permute.xlu0 %1286
        %1288 = vrot.lane.b32.xlu0 %v1017, 64
        %v1289 = vpop.permute.xlu0 %1288
        %v1291 = vsel %vm1018, %v1287, 0
        %v1294 = vsel %vm1018, %v1289, 0
        %1296 = vmatpush.bf16.xpose.msra.mxu0 0
        %1297 = vmatpush.bf16.xpose.msra.mxu0 0
        %1298 = vmatpush.bf16.xpose.msra.mxu0 0
        %1299 = vmatpush.bf16.xpose.msra.mxu0 0
        %1300 = vmatpush.bf16.xpose.msra.mxu0 0
        %1301 = vmatpush.bf16.xpose.msra.mxu0 0
        %1302 = vmatpush.bf16.xpose.msra.mxu0 0
        %1303 = vmatpush.bf16.xpose.msra.mxu0 %v1294
        %1304 = vmatmul.bf16.gmra.mxu0 %v1291
        %v1305 = vpop.f32.mrf.mxu0
        %v1306 = vadd.f32 0.0, %v1305
        %v1307 = vpop.f32.mrf.mxu0
        %v1308 = vadd.f32 0.0, %v1307
        %1309 = vdwg.mxu0
        %v1310 = vsel %vm1018, %v1306, -inf
        %1311 = vmax.xlane.f32.xlu0 %v1310
        %v1312 = vpop.xlane.xlu0 %1311
        %v1313 = vsel %vm1018, %v1308, -inf
        %1314 = vmax.xlane.f32.xlu0 %v1313
        %v1315 = vpop.xlane.xlu0 %1314
        %v1316 = vsub.f32 %v1306, %v1312
        %v1317 = vsub.f32 %v1308, %v1315
        %v1318 = vmul.f32 %v1316, 1.442695
        %v1319 = vpow.pop %v1318
        %v1320 = vmul.f32 %v1317, 1.442695
        %v1321 = vpow.pop %v1320
        %v1322 = vsel %vm1018, %v1319, 0.0
        %1323 = vadd.xlane.f32.xlu0 %v1322
        %v1324 = vpop.xlane.xlu0 %1323
        %v1325 = vsel %vm1018, %v1321, 0.0
        %1326 = vadd.xlane.f32.xlu0 %v1325
        %v1327 = vpop.xlane.xlu0 %1326
        %v1328 = vrcp.pop %v1324
        %v1329 = vrcp.pop %v1327
        %v1330 = vmul.f32 %v1319, %v1328
        %v1331 = vmul.f32 %v1321, %v1329
        %v1332 = vpack.c.bf16 %v1331, %v1330
        %1333 = vrot.lane.b32.xlu0 %v1066, 64
        %v1334 = vpop.permute.xlu0 %1333
        %v1337 = vsel %vm1018, %v1332, 0
        %1339 = vmatpush.bf16.msra.mxu0 0
        %1340 = vmatpush.bf16.msra.mxu0 0
        %1341 = vmatpush.bf16.msra.mxu0 0
        %1342 = vmatpush.bf16.msra.mxu0 0
        %1343 = vmatpush.bf16.msra.mxu0 0
        %1344 = vmatpush.bf16.msra.mxu0 0
        %1345 = vmatpush.bf16.msra.mxu0 0
        %1346 = vmatpush.bf16.msra.mxu0 %v1334
        %1347 = vmatmul.bf16.gmra.mxu0 %v1337
        %v1348 = vpop.f32.mrf.mxu0
        %v1349 = vadd.f32 0.0, %v1348
        %v1350 = vpop.f32.mrf.mxu0
        %v1351 = vadd.f32 0.0, %v1350
        %1352 = vdwg.mxu0
        %1353 = vrot.lane.b32.xlu0 %v1012, 48
        %v1354 = vpop.permute.xlu0 %1353
        %1355 = vrot.lane.b32.xlu0 %v1017, 48
        %v1356 = vpop.permute.xlu0 %1355
        %v1358 = vsel %vm1018, %v1354, 0
        %v1361 = vsel %vm1018, %v1356, 0
        %1363 = vmatpush.bf16.xpose.msra.mxu0 0
        %1364 = vmatpush.bf16.xpose.msra.mxu0 0
        %1365 = vmatpush.bf16.xpose.msra.mxu0 0
        %1366 = vmatpush.bf16.xpose.msra.mxu0 0
        %1367 = vmatpush.bf16.xpose.msra.mxu0 0
        %1368 = vmatpush.bf16.xpose.msra.mxu0 0
        %1369 = vmatpush.bf16.xpose.msra.mxu0 0
        %1370 = vmatpush.bf16.xpose.msra.mxu0 %v1361
        %1371 = vmatmul.bf16.gmra.mxu0 %v1358
        %v1372 = vpop.f32.mrf.mxu0
        %v1373 = vadd.f32 0.0, %v1372
        %v1374 = vpop.f32.mrf.mxu0
        %v1375 = vadd.f32 0.0, %v1374
        %1376 = vdwg.mxu0
        %v1377 = vsel %vm1018, %v1373, -inf
        %1378 = vmax.xlane.f32.xlu0 %v1377
        %v1379 = vpop.xlane.xlu0 %1378
        %v1380 = vsel %vm1018, %v1375, -inf
        %1381 = vmax.xlane.f32.xlu0 %v1380
        %v1382 = vpop.xlane.xlu0 %1381
        %v1383 = vsub.f32 %v1373, %v1379
        %v1384 = vsub.f32 %v1375, %v1382
        %v1385 = vmul.f32 %v1383, 1.442695
        %v1386 = vpow.pop %v1385
        %v1387 = vmul.f32 %v1384, 1.442695
        %v1388 = vpow.pop %v1387
        %v1389 = vsel %vm1018, %v1386, 0.0
        %1390 = vadd.xlane.f32.xlu0 %v1389
        %v1391 = vpop.xlane.xlu0 %1390
        %v1392 = vsel %vm1018, %v1388, 0.0
        %1393 = vadd.xlane.f32.xlu0 %v1392
        %v1394 = vpop.xlane.xlu0 %1393
        %v1395 = vrcp.pop %v1391
        %v1396 = vrcp.pop %v1394
        %v1397 = vmul.f32 %v1386, %v1395
        %v1398 = vmul.f32 %v1388, %v1396
        %v1399 = vpack.c.bf16 %v1398, %v1397
        %1400 = vrot.lane.b32.xlu0 %v1066, 48
        %v1401 = vpop.permute.xlu0 %1400
        %v1404 = vsel %vm1018, %v1399, 0
        %1406 = vmatpush.bf16.msra.mxu0 0
        %1407 = vmatpush.bf16.msra.mxu0 0
        %1408 = vmatpush.bf16.msra.mxu0 0
        %1409 = vmatpush.bf16.msra.mxu0 0
        %1410 = vmatpush.bf16.msra.mxu0 0
        %1411 = vmatpush.bf16.msra.mxu0 0
        %1412 = vmatpush.bf16.msra.mxu0 0
        %1413 = vmatpush.bf16.msra.mxu0 %v1401
        %1414 = vmatmul.bf16.gmra.mxu0 %v1404
        %v1415 = vpop.f32.mrf.mxu0
        %v1416 = vadd.f32 0.0, %v1415
        %v1417 = vpop.f32.mrf.mxu0
        %v1418 = vadd.f32 0.0, %v1417
        %1419 = vdwg.mxu0
        %1420 = vrot.lane.b32.xlu0 %v1012, 32
        %v1421 = vpop.permute.xlu0 %1420
        %1422 = vrot.lane.b32.xlu0 %v1017, 32
        %v1423 = vpop.permute.xlu0 %1422
        %v1425 = vsel %vm1018, %v1421, 0
        %v1428 = vsel %vm1018, %v1423, 0
        %1430 = vmatpush.bf16.xpose.msra.mxu0 0
        %1431 = vmatpush.bf16.xpose.msra.mxu0 0
        %1432 = vmatpush.bf16.xpose.msra.mxu0 0
        %1433 = vmatpush.bf16.xpose.msra.mxu0 0
        %1434 = vmatpush.bf16.xpose.msra.mxu0 0
        %1435 = vmatpush.bf16.xpose.msra.mxu0 0
        %1436 = vmatpush.bf16.xpose.msra.mxu0 0
        %1437 = vmatpush.bf16.xpose.msra.mxu0 %v1428
        %1438 = vmatmul.bf16.gmra.mxu0 %v1425
        %v1439 = vpop.f32.mrf.mxu0
        %v1440 = vadd.f32 0.0, %v1439
        %v1441 = vpop.f32.mrf.mxu0
        %v1442 = vadd.f32 0.0, %v1441
        %1443 = vdwg.mxu0
        %v1444 = vsel %vm1018, %v1440, -inf
        %1445 = vmax.xlane.f32.xlu0 %v1444
        %v1446 = vpop.xlane.xlu0 %1445
        %v1447 = vsel %vm1018, %v1442, -inf
        %1448 = vmax.xlane.f32.xlu0 %v1447
        %v1449 = vpop.xlane.xlu0 %1448
        %v1450 = vsub.f32 %v1440, %v1446
        %v1451 = vsub.f32 %v1442, %v1449
        %v1452 = vmul.f32 %v1450, 1.442695
        %v1453 = vpow.pop %v1452
        %v1454 = vmul.f32 %v1451, 1.442695
        %v1455 = vpow.pop %v1454
        %v1456 = vsel %vm1018, %v1453, 0.0
        %1457 = vadd.xlane.f32.xlu0 %v1456
        %v1458 = vpop.xlane.xlu0 %1457
        %v1459 = vsel %vm1018, %v1455, 0.0
        %1460 = vadd.xlane.f32.xlu0 %v1459
        %v1461 = vpop.xlane.xlu0 %1460
        %v1462 = vrcp.pop %v1458
        %v1463 = vrcp.pop %v1461
        %v1464 = vmul.f32 %v1453, %v1462
        %v1465 = vmul.f32 %v1455, %v1463
        %v1466 = vpack.c.bf16 %v1465, %v1464
        %1467 = vrot.lane.b32.xlu0 %v1066, 32
        %v1468 = vpop.permute.xlu0 %1467
        %v1471 = vsel %vm1018, %v1466, 0
        %1473 = vmatpush.bf16.msra.mxu0 0
        %1474 = vmatpush.bf16.msra.mxu0 0
        %1475 = vmatpush.bf16.msra.mxu0 0
        %1476 = vmatpush.bf16.msra.mxu0 0
        %1477 = vmatpush.bf16.msra.mxu0 0
        %1478 = vmatpush.bf16.msra.mxu0 0
        %1479 = vmatpush.bf16.msra.mxu0 0
        %1480 = vmatpush.bf16.msra.mxu0 %v1468
        %1481 = vmatmul.bf16.gmra.mxu0 %v1471
        %v1482 = vpop.f32.mrf.mxu0
        %v1483 = vadd.f32 0.0, %v1482
        %v1484 = vpop.f32.mrf.mxu0
        %v1485 = vadd.f32 0.0, %v1484
        %1486 = vdwg.mxu0
        %1487 = vrot.lane.b32.xlu0 %v1012, 16
        %v1488 = vpop.permute.xlu0 %1487
        %1489 = vrot.lane.b32.xlu0 %v1017, 16
        %v1490 = vpop.permute.xlu0 %1489
        %v1492 = vsel %vm1018, %v1488, 0
        %v1495 = vsel %vm1018, %v1490, 0
        %1497 = vmatpush.bf16.xpose.msra.mxu0 0
        %1498 = vmatpush.bf16.xpose.msra.mxu0 0
        %1499 = vmatpush.bf16.xpose.msra.mxu0 0
        %1500 = vmatpush.bf16.xpose.msra.mxu0 0
        %1501 = vmatpush.bf16.xpose.msra.mxu0 0
        %1502 = vmatpush.bf16.xpose.msra.mxu0 0
        %1503 = vmatpush.bf16.xpose.msra.mxu0 0
        %1504 = vmatpush.bf16.xpose.msra.mxu0 %v1495
        %1505 = vmatmul.bf16.gmra.mxu0 %v1492
        %v1506 = vpop.f32.mrf.mxu0
        %v1507 = vadd.f32 0.0, %v1506
        %v1508 = vpop.f32.mrf.mxu0
        %v1509 = vadd.f32 0.0, %v1508
        %1510 = vdwg.mxu0
        %v1511 = vsel %vm1018, %v1507, -inf
        %1512 = vmax.xlane.f32.xlu0 %v1511
        %v1513 = vpop.xlane.xlu0 %1512
        %v1514 = vsel %vm1018, %v1509, -inf
        %1515 = vmax.xlane.f32.xlu0 %v1514
        %v1516 = vpop.xlane.xlu0 %1515
        %v1517 = vsub.f32 %v1507, %v1513
        %v1518 = vsub.f32 %v1509, %v1516
        %v1519 = vmul.f32 %v1517, 1.442695
        %v1520 = vpow.pop %v1519
        %v1521 = vmul.f32 %v1518, 1.442695
        %v1522 = vpow.pop %v1521
        %v1523 = vsel %vm1018, %v1520, 0.0
        %1524 = vadd.xlane.f32.xlu0 %v1523
        %v1525 = vpop.xlane.xlu0 %1524
        %v1526 = vsel %vm1018, %v1522, 0.0
        %1527 = vadd.xlane.f32.xlu0 %v1526
        %v1528 = vpop.xlane.xlu0 %1527
        %v1529 = vrcp.pop %v1525
        %v1530 = vrcp.pop %v1528
        %v1531 = vmul.f32 %v1520, %v1529
        %v1532 = vmul.f32 %v1522, %v1530
        %v1533 = vpack.c.bf16 %v1532, %v1531
        %1534 = vrot.lane.b32.xlu0 %v1066, 16
        %v1535 = vpop.permute.xlu0 %1534
        %v1538 = vsel %vm1018, %v1533, 0
        %1540 = vmatpush.bf16.msra.mxu0 0
        %1541 = vmatpush.bf16.msra.mxu0 0
        %1542 = vmatpush.bf16.msra.mxu0 0
        %1543 = vmatpush.bf16.msra.mxu0 0
        %1544 = vmatpush.bf16.msra.mxu0 0
        %1545 = vmatpush.bf16.msra.mxu0 0
        %1546 = vmatpush.bf16.msra.mxu0 0
        %1547 = vmatpush.bf16.msra.mxu0 %v1535
        %1548 = vmatmul.bf16.gmra.mxu0 %v1538
        %v1549 = vpop.f32.mrf.mxu0
        %v1550 = vadd.f32 0.0, %v1549
        %v1551 = vpop.f32.mrf.mxu0
        %v1552 = vadd.f32 0.0, %v1551
        %1553 = vdwg.mxu0
        %1556 = vrot.lane.b32.xlu0 %v1148, 16
        %v1557 = vpop.permute.xlu0 %1556
        %1558 = vrot.lane.b32.xlu0 %v1150, 16
        %v1559 = vpop.permute.xlu0 %1558
        %1564 = vrot.lane.b32.xlu0 %v1215, 32
        %v1565 = vpop.permute.xlu0 %1564
        %1566 = vrot.lane.b32.xlu0 %v1217, 32
        %v1567 = vpop.permute.xlu0 %1566
        %1572 = vrot.lane.b32.xlu0 %v1282, 48
        %v1573 = vpop.permute.xlu0 %1572
        %1574 = vrot.lane.b32.xlu0 %v1284, 48
        %v1575 = vpop.permute.xlu0 %1574
        %1580 = vrot.lane.b32.xlu0 %v1349, 64
        %v1581 = vpop.permute.xlu0 %1580
        %1582 = vrot.lane.b32.xlu0 %v1351, 64
        %v1583 = vpop.permute.xlu0 %1582
        %1588 = vrot.lane.b32.xlu0 %v1416, 80
        %v1589 = vpop.permute.xlu0 %1588
        %1590 = vrot.lane.b32.xlu0 %v1418, 80
        %v1591 = vpop.permute.xlu0 %1590
        %1596 = vrot.lane.b32.xlu0 %v1483, 96
        %v1597 = vpop.permute.xlu0 %1596
        %1598 = vrot.lane.b32.xlu0 %v1485, 96
        %v1599 = vpop.permute.xlu0 %1598
        %1604 = vrot.lane.b32.xlu0 %v1550, 112
        %v1605 = vpop.permute.xlu0 %1604
        %1606 = vrot.lane.b32.xlu0 %v1552, 112
        %v1607 = vpop.permute.xlu0 %1606
        %v1610 = vsel %vm1018, %v1081, %v1557
        %v1611 = vsel %vm1018, %v1083, %v1559
        %vm1612 = vcmask 261120
        %v1613 = vsel %vm1612, %v1610, %v1565
        %v1614 = vsel %vm1612, %v1611, %v1567
        %vm1615 = vcmask 392192
        %v1616 = vsel %vm1615, %v1613, %v1573
        %v1617 = vsel %vm1615, %v1614, %v1575
        %vm1618 = vcmask 523264
        %v1619 = vsel %vm1618, %v1616, %v1581
        %v1620 = vsel %vm1618, %v1617, %v1583
        %vm1621 = vcmask 654336
        %v1622 = vsel %vm1621, %v1619, %v1589
        %v1623 = vsel %vm1621, %v1620, %v1591
        %vm1624 = vcmask 785408
        %v1625 = vsel %vm1624, %v1622, %v1597
        %v1626 = vsel %vm1624, %v1623, %v1599
        %vm1627 = vcmask 916480
        %v1628 = vsel %vm1627, %v1625, %v1605
        %v1629 = vsel %vm1627, %v1626, %v1607
        %v1630 = vpack.c.bf16 %v1629, %v1628
        %v1631 = vld [vmem:[#allocation13] sm:$0xf]
        %v1632 = vld [vmem:[#allocation13 + $0x4] sm:$0xf]
        %v1633 = vld [vmem:[#allocation13 + $0x8] sm:$0xf]
        %v1634 = vld [vmem:[#allocation13 + $0xc] sm:$0xf]
        %v1635 = vld [vmem:[#allocation13 + $0x10] sm:$0xf]
        %v1636 = vld [vmem:[#allocation13 + $0x14] sm:$0xf]
        %v1637 = vld [vmem:[#allocation13 + $0x18] sm:$0xf]
        %v1638 = vld [vmem:[#allocation13 + $0x1c] sm:$0xf]
        %v1639 = vld [vmem:[#allocation13 + $0x20] sm:$0xf]
        %v1640 = vld [vmem:[#allocation13 + $0x24] sm:$0xf]
        %v1641 = vld [vmem:[#allocation13 + $0x28] sm:$0xf]
        %v1642 = vld [vmem:[#allocation13 + $0x2c] sm:$0xf]
        %v1643 = vld [vmem:[#allocation13 + $0x30] sm:$0xf]
        %v1644 = vld [vmem:[#allocation13 + $0x34] sm:$0xf]
        %v1645 = vld [vmem:[#allocation13 + $0x38] sm:$0xf]
        %v1646 = vld [vmem:[#allocation13 + $0x3c] sm:$0xf]
        %v1647 = vld [vmem:[%s9] sm:$0x1]
        %v1649 = vperm.slane %v1647, 0
        %v1667 = vunpack.c.l.b16 %v1631
        %v1668 = vunpack.c.l.b16 %v1632
        %v1669 = vunpack.c.l.b16 %v1633
        %v1670 = vunpack.c.l.b16 %v1634
        %v1671 = vunpack.c.l.b16 %v1635
        %v1672 = vunpack.c.l.b16 %v1636
        %v1673 = vunpack.c.l.b16 %v1637
        %v1674 = vunpack.c.l.b16 %v1638
        %v1675 = vunpack.c.l.b16 %v1639
        %v1676 = vunpack.c.l.b16 %v1640
        %v1677 = vunpack.c.l.b16 %v1641
        %v1678 = vunpack.c.l.b16 %v1642
        %v1679 = vunpack.c.l.b16 %v1643
        %v1680 = vunpack.c.l.b16 %v1644
        %v1681 = vunpack.c.l.b16 %v1645
        %v1682 = vunpack.c.l.b16 %v1646
        %v1683 = vpack.c.b16 %v1668, %v1667
        %v1684 = vpack.c.b16 %v1670, %v1669
        %v1685 = vpack.c.b16 %v1672, %v1671
        %v1686 = vpack.c.b16 %v1674, %v1673
        %v1687 = vpack.c.b16 %v1676, %v1675
        %v1688 = vpack.c.b16 %v1678, %v1677
        %v1689 = vpack.c.b16 %v1680, %v1679
        %v1690 = vpack.c.b16 %v1682, %v1681
        %1699 = vmatpush.bf16.msra.mxu0 %v1690
        %1700 = vmatpush.bf16.msra.mxu0 %v1689
        %1701 = vmatpush.bf16.msra.mxu0 %v1688
        %1702 = vmatpush.bf16.msra.mxu0 %v1687
        %1703 = vmatpush.bf16.msra.mxu0 %v1686
        %1704 = vmatpush.bf16.msra.mxu0 %v1685
        %1705 = vmatpush.bf16.msra.mxu0 %v1684
        %1706 = vmatpush.bf16.msra.mxu0 %v1683
        %1707 = vmatmul.bf16.gmra.mxu0 %v1630
        %v1708 = vpop.f32.mrf.mxu0
        %v1709 = vadd.f32 %v1649, %v1708
        %v1710 = vpop.f32.mrf.mxu0
        %v1711 = vadd.f32 %v1649, %v1710
        %1712 = vdwg.mxu0
        %v1713 = vadd.f32 %v871, %v1709
        %v1714 = vadd.f32 %v872, %v1711
        %v1715 = vld [vmem:[%s10] sm:$0x1]
        %v1716 = vmul.f32 %v1713, %v1713
        %v1717 = vmul.f32 %v1714, %v1714
        %1718 = vadd.xlane.f32.xlu0 %v1716
        %v1719 = vpop.xlane.xlu0 %1718
        %1720 = vadd.xlane.f32.xlu0 %v1717
        %v1721 = vpop.xlane.xlu0 %1720
        %v1722 = vmul.f32 %v1719, %v885
        %v1723 = vmul.f32 %v1721, %v885
        %v1724 = vadd.f32 %v1722, 1e-06
        %v1725 = vadd.f32 %v1723, 1e-06
        %v1726 = vrsqrt.pop %v1724
        %v1727 = vmul.f32 %v1726, %v1724
        %v1728 = vmul.f32 %v1727, %v1726
        %v1729 = vmul.f32 0.5, %v1728
        %v1730 = vsub.f32 1.5, %v1729
        %v1731 = vmul.f32 %v1726, %v1730
        %vm1732 = vweird.f32 %v1724
        %vm1733 = vweird.f32 %v1726
        %vm1734 = vmor %vm1732, %vm1733
        %v1735 = vsel %vm1734, %v1726, %v1731
        %v1736 = vrsqrt.pop %v1725
        %v1737 = vmul.f32 %v1736, %v1725
        %v1738 = vmul.f32 %v1737, %v1736
        %v1739 = vmul.f32 0.5, %v1738
        %v1740 = vsub.f32 1.5, %v1739
        %v1741 = vmul.f32 %v1736, %v1740
        %vm1742 = vweird.f32 %v1725
        %vm1743 = vweird.f32 %v1736
        %vm1744 = vmor %vm1742, %vm1743
        %v1745 = vsel %vm1744, %v1736, %v1741
        %v1746 = vmul.f32 %v1713, %v1735
        %v1747 = vmul.f32 %v1714, %v1745
        %v1749 = vperm.slane %v1715, 0
        %v1751 = vmul.f32 %v1746, %v1749
        %v1752 = vmul.f32 %v1747, %v1749
        %v1753 = vpack.c.bf16 %v1752, %v1751
        %v1754 = vld [vmem:[#allocation15] sm:$0xff]
        %v1755 = vld [vmem:[#allocation15 + $0x8] sm:$0xff]
        %v1756 = vld [vmem:[#allocation15 + $0x10] sm:$0xff]
        %v1757 = vld [vmem:[#allocation15 + $0x18] sm:$0xff]
        %v1758 = vld [vmem:[#allocation15 + $0x20] sm:$0xff]
        %v1759 = vld [vmem:[#allocation15 + $0x28] sm:$0xff]
        %v1760 = vld [vmem:[#allocation15 + $0x30] sm:$0xff]
        %v1761 = vld [vmem:[#allocation15 + $0x38] sm:$0xff]
        %v1762 = vld [vmem:[#allocation15 + $0x40] sm:$0xff]
        %v1763 = vld [vmem:[#allocation15 + $0x48] sm:$0xff]
        %v1764 = vld [vmem:[#allocation15 + $0x50] sm:$0xff]
        %v1765 = vld [vmem:[#allocation15 + $0x58] sm:$0xff]
        %v1766 = vld [vmem:[#allocation15 + $0x60] sm:$0xff]
        %v1767 = vld [vmem:[#allocation15 + $0x68] sm:$0xff]
        %v1768 = vld [vmem:[#allocation15 + $0x70] sm:$0xff]
        %v1769 = vld [vmem:[#allocation15 + $0x78] sm:$0xff]
        %v1770 = vld [vmem:[#allocation15 + $0x80] sm:$0xff]
        %v1771 = vld [vmem:[#allocation15 + $0x88] sm:$0xff]
        %v1772 = vld [vmem:[#allocation15 + $0x90] sm:$0xff]
        %v1773 = vld [vmem:[#allocation15 + $0x98] sm:$0xff]
        %v1774 = vld [vmem:[#allocation15 + $0xa0] sm:$0xff]
        %v1775 = vld [vmem:[#allocation15 + $0xa8] sm:$0xff]
        %v1776 = vld [vmem:[#allocation15 + $0xb0] sm:$0xff]
        %v1777 = vld [vmem:[#allocation15 + $0xb8] sm:$0xff]
        %v1778 = vld [vmem:[#allocation15 + $0xc0] sm:$0xff]
        %v1779 = vld [vmem:[#allocation15 + $0xc8] sm:$0xff]
        %v1780 = vld [vmem:[#allocation15 + $0xd0] sm:$0xff]
        %v1781 = vld [vmem:[#allocation15 + $0xd8] sm:$0xff]
        %v1782 = vld [vmem:[#allocation15 + $0xe0] sm:$0xff]
        %v1783 = vld [vmem:[#allocation15 + $0xe8] sm:$0xff]
        %v1784 = vld [vmem:[#allocation15 + $0xf0] sm:$0xff]
        %v1785 = vld [vmem:[#allocation15 + $0xf8] sm:$0xff]
        %v1786 = vld [vmem:[%s12] sm:$0xf]
        %v1788 = vperm.slane %v1786, 0
        %v1789 = vperm.slane %v1786, 1
        %v1790 = vperm.slane %v1786, 2
        %v1791 = vperm.slane %v1786, 3
        %v1828 = vunpack.c.l.b16 %v1754
        %v1829 = vunpack.c.h.b16 %v1754
        %v1830 = vunpack.c.l.b16 %v1755
        %v1831 = vunpack.c.h.b16 %v1755
        %v1832 = vunpack.c.l.b16 %v1756
        %v1833 = vunpack.c.h.b16 %v1756
        %v1834 = vunpack.c.l.b16 %v1757
        %v1835 = vunpack.c.h.b16 %v1757
        %v1836 = vunpack.c.l.b16 %v1758
        %v1837 = vunpack.c.h.b16 %v1758
        %v1838 = vunpack.c.l.b16 %v1759
        %v1839 = vunpack.c.h.b16 %v1759
        %v1840 = vunpack.c.l.b16 %v1760
        %v1841 = vunpack.c.h.b16 %v1760
        %v1842 = vunpack.c.l.b16 %v1761
        %v1843 = vunpack.c.h.b16 %v1761
        %v1844 = vunpack.c.l.b16 %v1762
        %v1845 = vunpack.c.h.b16 %v1762
        %v1846 = vunpack.c.l.b16 %v1763
        %v1847 = vunpack.c.h.b16 %v1763
        %v1848 = vunpack.c.l.b16 %v1764
        %v1849 = vunpack.c.h.b16 %v1764
        %v1850 = vunpack.c.l.b16 %v1765
        %v1851 = vunpack.c.h.b16 %v1765
        %v1852 = vunpack.c.l.b16 %v1766
        %v1853 = vunpack.c.h.b16 %v1766
        %v1854 = vunpack.c.l.b16 %v1767
        %v1855 = vunpack.c.h.b16 %v1767
        %v1856 = vunpack.c.l.b16 %v1768
        %v1857 = vunpack.c.h.b16 %v1768
        %v1858 = vunpack.c.l.b16 %v1769
        %v1859 = vunpack.c.h.b16 %v1769
        %v1860 = vunpack.c.l.b16 %v1770
        %v1861 = vunpack.c.h.b16 %v1770
        %v1862 = vunpack.c.l.b16 %v1771
        %v1863 = vunpack.c.h.b16 %v1771
        %v1864 = vunpack.c.l.b16 %v1772
        %v1865 = vunpack.c.h.b16 %v1772
        %v1866 = vunpack.c.l.b16 %v1773
        %v1867 = vunpack.c.h.b16 %v1773
        %v1868 = vunpack.c.l.b16 %v1774
        %v1869 = vunpack.c.h.b16 %v1774
        %v1870 = vunpack.c.l.b16 %v1775
        %v1871 = vunpack.c.h.b16 %v1775
        %v1872 = vunpack.c.l.b16 %v1776
        %v1873 = vunpack.c.h.b16 %v1776
        %v1874 = vunpack.c.l.b16 %v1777
        %v1875 = vunpack.c.h.b16 %v1777
        %v1876 = vunpack.c.l.b16 %v1778
        %v1877 = vunpack.c.h.b16 %v1778
        %v1878 = vunpack.c.l.b16 %v1779
        %v1879 = vunpack.c.h.b16 %v1779
        %v1880 = vunpack.c.l.b16 %v1780
        %v1881 = vunpack.c.h.b16 %v1780
        %v1882 = vunpack.c.l.b16 %v1781
        %v1883 = vunpack.c.h.b16 %v1781
        %v1884 = vunpack.c.l.b16 %v1782
        %v1885 = vunpack.c.h.b16 %v1782
        %v1886 = vunpack.c.l.b16 %v1783
        %v1887 = vunpack.c.h.b16 %v1783
        %v1888 = vunpack.c.l.b16 %v1784
        %v1889 = vunpack.c.h.b16 %v1784
        %v1890 = vunpack.c.l.b16 %v1785
        %v1891 = vunpack.c.h.b16 %v1785
        %v1892 = vpack.c.b16 %v1832, %v1828
        %v1893 = vpack.c.b16 %v1833, %v1829
        %v1894 = vpack.c.b16 %v1834, %v1830
        %v1895 = vpack.c.b16 %v1835, %v1831
        %v1896 = vpack.c.b16 %v1840, %v1836
        %v1897 = vpack.c.b16 %v1841, %v1837
        %v1898 = vpack.c.b16 %v1842, %v1838
        %v1899 = vpack.c.b16 %v1843, %v1839
        %v1900 = vpack.c.b16 %v1848, %v1844
        %v1901 = vpack.c.b16 %v1849, %v1845
        %v1902 = vpack.c.b16 %v1850, %v1846
        %v1903 = vpack.c.b16 %v1851, %v1847
        %v1904 = vpack.c.b16 %v1856, %v1852
        %v1905 = vpack.c.b16 %v1857, %v1853
        %v1906 = vpack.c.b16 %v1858, %v1854
        %v1907 = vpack.c.b16 %v1859, %v1855
        %v1908 = vpack.c.b16 %v1864, %v1860
        %v1909 = vpack.c.b16 %v1865, %v1861
        %v1910 = vpack.c.b16 %v1866, %v1862
        %v1911 = vpack.c.b16 %v1867, %v1863
        %v1912 = vpack.c.b16 %v1872, %v1868
        %v1913 = vpack.c.b16 %v1873, %v1869
        %v1914 = vpack.c.b16 %v1874, %v1870
        %v1915 = vpack.c.b16 %v1875, %v1871
        %v1916 = vpack.c.b16 %v1880, %v1876
        %v1917 = vpack.c.b16 %v1881, %v1877
        %v1918 = vpack.c.b16 %v1882, %v1878
        %v1919 = vpack.c.b16 %v1883, %v1879
        %v1920 = vpack.c.b16 %v1888, %v1884
        %v1921 = vpack.c.b16 %v1889, %v1885
        %v1922 = vpack.c.b16 %v1890, %v1886
        %v1923 = vpack.c.b16 %v1891, %v1887
        %1956 = vmatpush.bf16.msra.mxu0 %v1920
        %1957 = vmatpush.bf16.msra.mxu0 %v1916
        %1958 = vmatpush.bf16.msra.mxu0 %v1912
        %1959 = vmatpush.bf16.msra.mxu0 %v1908
        %1960 = vmatpush.bf16.msra.mxu0 %v1904
        %1961 = vmatpush.bf16.msra.mxu0 %v1900
        %1962 = vmatpush.bf16.msra.mxu0 %v1896
        %1963 = vmatpush.bf16.msra.mxu0 %v1892
        %1964 = vmatmul.bf16.gmra.mxu0 %v1753
        %v1965 = vpop.f32.mrf.mxu0
        %v1966 = vadd.f32 %v1788, %v1965
        %v1967 = vpop.f32.mrf.mxu0
        %v1968 = vadd.f32 %v1788, %v1967
        %1969 = vdwg.mxu0
        %1970 = vmatpush.bf16.msra.mxu0 %v1921
        %1971 = vmatpush.bf16.msra.mxu0 %v1917
        %1972 = vmatpush.bf16.msra.mxu0 %v1913
        %1973 = vmatpush.bf16.msra.mxu0 %v1909
        %1974 = vmatpush.bf16.msra.mxu0 %v1905
        %1975 = vmatpush.bf16.msra.mxu0 %v1901
        %1976 = vmatpush.bf16.msra.mxu0 %v1897
        %1977 = vmatpush.bf16.msra.mxu0 %v1893
        %1978 = vmatmul.bf16.gmra.mxu0 %v1753
        %v1979 = vpop.f32.mrf.mxu0
        %v1980 = vadd.f32 %v1789, %v1979
        %v1981 = vpop.f32.mrf.mxu0
        %v1982 = vadd.f32 %v1789, %v1981
        %1983 = vdwg.mxu0
        %1984 = vmatpush.bf16.msra.mxu0 %v1922
        %1985 = vmatpush.bf16.msra.mxu0 %v1918
        %1986 = vmatpush.bf16.msra.mxu0 %v1914
        %1987 = vmatpush.bf16.msra.mxu0 %v1910
        %1988 = vmatpush.bf16.msra.mxu0 %v1906
        %1989 = vmatpush.bf16.msra.mxu0 %v1902
        %1990 = vmatpush.bf16.msra.mxu0 %v1898
        %1991 = vmatpush.bf16.msra.mxu0 %v1894
        %1992 = vmatmul.bf16.gmra.mxu0 %v1753
        %v1993 = vpop.f32.mrf.mxu0
        %v1994 = vadd.f32 %v1790, %v1993
        %v1995 = vpop.f32.mrf.mxu0
        %v1996 = vadd.f32 %v1790, %v1995
        %1997 = vdwg.mxu0
        %1998 = vmatpush.bf16.msra.mxu0 %v1923
        %1999 = vmatpush.bf16.msra.mxu0 %v1919
        %2000 = vmatpush.bf16.msra.mxu0 %v1915
        %2001 = vmatpush.bf16.msra.mxu0 %v1911
        %2002 = vmatpush.bf16.msra.mxu0 %v1907
        %2003 = vmatpush.bf16.msra.mxu0 %v1903
        %2004 = vmatpush.bf16.msra.mxu0 %v1899
        %2005 = vmatpush.bf16.msra.mxu0 %v1895
        %2006 = vmatmul.bf16.gmra.mxu0 %v1753
        %v2007 = vpop.f32.mrf.mxu0
        %v2008 = vadd.f32 %v1791, %v2007
        %v2009 = vpop.f32.mrf.mxu0
        %v2010 = vadd.f32 %v1791, %v2009
        %2011 = vdwg.mxu0
        %v2012 = vxor.u32 %v1966, 2147483648
        %v2013 = vxor.u32 %v1980, 2147483648
        %v2014 = vxor.u32 %v1994, 2147483648
        %v2015 = vxor.u32 %v2008, 2147483648
        %v2016 = vxor.u32 %v1968, 2147483648
        %v2017 = vxor.u32 %v1982, 2147483648
        %v2018 = vxor.u32 %v1996, 2147483648
        %v2019 = vxor.u32 %v2010, 2147483648
        %v2020 = vmul.f32 %v2012, 1.442695
        %v2021 = vpow.pop %v2020
        %v2022 = vmul.f32 %v2013, 1.442695
        %v2023 = vpow.pop %v2022
        %v2024 = vmul.f32 %v2014, 1.442695
        %v2025 = vpow.pop %v2024
        %v2026 = vmul.f32 %v2015, 1.442695
        %v2027 = vpow.pop %v2026
        %v2028 = vmul.f32 %v2016, 1.442695
        %v2029 = vpow.pop %v2028
        %v2030 = vmul.f32 %v2017, 1.442695
        %v2031 = vpow.pop %v2030
        %v2032 = vmul.f32 %v2018, 1.442695
        %v2033 = vpow.pop %v2032
        %v2034 = vmul.f32 %v2019, 1.442695
        %v2035 = vpow.pop %v2034
        %v2036 = vadd.f32 %v2021, 1.0
        %v2037 = vadd.f32 %v2023, 1.0
        %v2038 = vadd.f32 %v2025, 1.0
        %v2039 = vadd.f32 %v2027, 1.0
        %v2040 = vadd.f32 %v2029, 1.0
        %v2041 = vadd.f32 %v2031, 1.0
        %v2042 = vadd.f32 %v2033, 1.0
        %v2043 = vadd.f32 %v2035, 1.0
        %v2044 = vrcp.pop %v2036
        %v2045 = vmul.f32 %v2036, %v2044
        %v2046 = vsub.f32 1.0, %v2045
        %v2047 = vmul.f32 %v2044, %v2046
        %v2048 = vadd.f32 %v2044, %v2047
        %vm2049 = vweird.f32 %v2036
        %vm2050 = vweird.f32 %v2044
        %vm2051 = vmor %vm2049, %vm2050
        %v2052 = vsel %vm2051, %v2044, %v2048
        %v2053 = vand.u32 2147483647, %v2036
        %vm2054 = vcmp.eq.f32.partialorder %v2053, 8.507059e+37
        %v2055 = vand.u32 %v2036, 2147483648
        %v2056 = vor.u32 1.1754944e-38, %v2055
        %v2057 = vsel %vm2054, %v2056, %v2052
        %v2058 = vmul.f32 1.0, %v2057
        %v2059 = vrcp.pop %v2037
        %v2060 = vmul.f32 %v2037, %v2059
        %v2061 = vsub.f32 1.0, %v2060
        %v2062 = vmul.f32 %v2059, %v2061
        %v2063 = vadd.f32 %v2059, %v2062
        %vm2064 = vweird.f32 %v2037
        %vm2065 = vweird.f32 %v2059
        %vm2066 = vmor %vm2064, %vm2065
        %v2067 = vsel %vm2066, %v2059, %v2063
        %v2068 = vand.u32 2147483647, %v2037
        %vm2069 = vcmp.eq.f32.partialorder %v2068, 8.507059e+37
        %v2070 = vand.u32 %v2037, 2147483648
        %v2071 = vor.u32 1.1754944e-38, %v2070
        %v2072 = vsel %vm2069, %v2071, %v2067
        %v2073 = vmul.f32 1.0, %v2072
        %v2074 = vrcp.pop %v2038
        %v2075 = vmul.f32 %v2038, %v2074
        %v2076 = vsub.f32 1.0, %v2075
        %v2077 = vmul.f32 %v2074, %v2076
        %v2078 = vadd.f32 %v2074, %v2077
        %vm2079 = vweird.f32 %v2038
        %vm2080 = vweird.f32 %v2074
        %vm2081 = vmor %vm2079, %vm2080
        %v2082 = vsel %vm2081, %v2074, %v2078
        %v2083 = vand.u32 2147483647, %v2038
        %vm2084 = vcmp.eq.f32.partialorder %v2083, 8.507059e+37
        %v2085 = vand.u32 %v2038, 2147483648
        %v2086 = vor.u32 1.1754944e-38, %v2085
        %v2087 = vsel %vm2084, %v2086, %v2082
        %v2088 = vmul.f32 1.0, %v2087
        %v2089 = vrcp.pop %v2039
        %v2090 = vmul.f32 %v2039, %v2089
        %v2091 = vsub.f32 1.0, %v2090
        %v2092 = vmul.f32 %v2089, %v2091
        %v2093 = vadd.f32 %v2089, %v2092
        %vm2094 = vweird.f32 %v2039
        %vm2095 = vweird.f32 %v2089
        %vm2096 = vmor %vm2094, %vm2095
        %v2097 = vsel %vm2096, %v2089, %v2093
        %v2098 = vand.u32 2147483647, %v2039
        %vm2099 = vcmp.eq.f32.partialorder %v2098, 8.507059e+37
        %v2100 = vand.u32 %v2039, 2147483648
        %v2101 = vor.u32 1.1754944e-38, %v2100
        %v2102 = vsel %vm2099, %v2101, %v2097
        %v2103 = vmul.f32 1.0, %v2102
        %v2104 = vrcp.pop %v2040
        %v2105 = vmul.f32 %v2040, %v2104
        %v2106 = vsub.f32 1.0, %v2105
        %v2107 = vmul.f32 %v2104, %v2106
        %v2108 = vadd.f32 %v2104, %v2107
        %vm2109 = vweird.f32 %v2040
        %vm2110 = vweird.f32 %v2104
        %vm2111 = vmor %vm2109, %vm2110
        %v2112 = vsel %vm2111, %v2104, %v2108
        %v2113 = vand.u32 2147483647, %v2040
        %vm2114 = vcmp.eq.f32.partialorder %v2113, 8.507059e+37
        %v2115 = vand.u32 %v2040, 2147483648
        %v2116 = vor.u32 1.1754944e-38, %v2115
        %v2117 = vsel %vm2114, %v2116, %v2112
        %v2118 = vmul.f32 1.0, %v2117
        %v2119 = vrcp.pop %v2041
        %v2120 = vmul.f32 %v2041, %v2119
        %v2121 = vsub.f32 1.0, %v2120
        %v2122 = vmul.f32 %v2119, %v2121
        %v2123 = vadd.f32 %v2119, %v2122
        %vm2124 = vweird.f32 %v2041
        %vm2125 = vweird.f32 %v2119
        %vm2126 = vmor %vm2124, %vm2125
        %v2127 = vsel %vm2126, %v2119, %v2123
        %v2128 = vand.u32 2147483647, %v2041
        %vm2129 = vcmp.eq.f32.partialorder %v2128, 8.507059e+37
        %v2130 = vand.u32 %v2041, 2147483648
        %v2131 = vor.u32 1.1754944e-38, %v2130
        %v2132 = vsel %vm2129, %v2131, %v2127
        %v2133 = vmul.f32 1.0, %v2132
        %v2134 = vrcp.pop %v2042
        %v2135 = vmul.f32 %v2042, %v2134
        %v2136 = vsub.f32 1.0, %v2135
        %v2137 = vmul.f32 %v2134, %v2136
        %v2138 = vadd.f32 %v2134, %v2137
        %vm2139 = vweird.f32 %v2042
        %vm2140 = vweird.f32 %v2134
        %vm2141 = vmor %vm2139, %vm2140
        %v2142 = vsel %vm2141, %v2134, %v2138
        %v2143 = vand.u32 2147483647, %v2042
        %vm2144 = vcmp.eq.f32.partialorder %v2143, 8.507059e+37
        %v2145 = vand.u32 %v2042, 2147483648
        %v2146 = vor.u32 1.1754944e-38, %v2145
        %v2147 = vsel %vm2144, %v2146, %v2142
        %v2148 = vmul.f32 1.0, %v2147
        %v2149 = vrcp.pop %v2043
        %v2150 = vmul.f32 %v2043, %v2149
        %v2151 = vsub.f32 1.0, %v2150
        %v2152 = vmul.f32 %v2149, %v2151
        %v2153 = vadd.f32 %v2149, %v2152
        %vm2154 = vweird.f32 %v2043
        %vm2155 = vweird.f32 %v2149
        %vm2156 = vmor %vm2154, %vm2155
        %v2157 = vsel %vm2156, %v2149, %v2153
        %v2158 = vand.u32 2147483647, %v2043
        %vm2159 = vcmp.eq.f32.partialorder %v2158, 8.507059e+37
        %v2160 = vand.u32 %v2043, 2147483648
        %v2161 = vor.u32 1.1754944e-38, %v2160
        %v2162 = vsel %vm2159, %v2161, %v2157
        %v2163 = vmul.f32 1.0, %v2162
        %v2164 = vmul.f32 %v1966, %v2058
        %v2165 = vmul.f32 %v1980, %v2073
        %v2166 = vmul.f32 %v1994, %v2088
        %v2167 = vmul.f32 %v2008, %v2103
        %v2168 = vmul.f32 %v1968, %v2118
        %v2169 = vmul.f32 %v1982, %v2133
        %v2170 = vmul.f32 %v1996, %v2148
        %v2171 = vmul.f32 %v2010, %v2163
        %v2172 = vpack.c.bf16 %v2168, %v2164
        %v2173 = vpack.c.bf16 %v2169, %v2165
        %v2174 = vpack.c.bf16 %v2170, %v2166
        %v2175 = vpack.c.bf16 %v2171, %v2167
        %v2176 = vld [vmem:[#allocation16] sm:$0xf]
        %v2177 = vld [vmem:[#allocation16 + $0x4] sm:$0xf]
        %v2178 = vld [vmem:[#allocation16 + $0x8] sm:$0xf]
        %v2179 = vld [vmem:[#allocation16 + $0xc] sm:$0xf]
        %v2180 = vld [vmem:[#allocation16 + $0x10] sm:$0xf]
        %v2181 = vld [vmem:[#allocation16 + $0x14] sm:$0xf]
        %v2182 = vld [vmem:[#allocation16 + $0x18] sm:$0xf]
        %v2183 = vld [vmem:[#allocation16 + $0x1c] sm:$0xf]
        %v2184 = vld [vmem:[#allocation16 + $0x20] sm:$0xf]
        %v2185 = vld [vmem:[#allocation16 + $0x24] sm:$0xf]
        %v2186 = vld [vmem:[#allocation16 + $0x28] sm:$0xf]
        %v2187 = vld [vmem:[#allocation16 + $0x2c] sm:$0xf]
        %v2188 = vld [vmem:[#allocation16 + $0x30] sm:$0xf]
        %v2189 = vld [vmem:[#allocation16 + $0x34] sm:$0xf]
        %v2190 = vld [vmem:[#allocation16 + $0x38] sm:$0xf]
        %v2191 = vld [vmem:[#allocation16 + $0x3c] sm:$0xf]
        %v2192 = vld [vmem:[#allocation16 + $0x40] sm:$0xf]
        %v2193 = vld [vmem:[#allocation16 + $0x44] sm:$0xf]
        %v2194 = vld [vmem:[#allocation16 + $0x48] sm:$0xf]
        %v2195 = vld [vmem:[#allocation16 + $0x4c] sm:$0xf]
        %v2196 = vld [vmem:[#allocation16 + $0x50] sm:$0xf]
        %v2197 = vld [vmem:[#allocation16 + $0x54] sm:$0xf]
        %v2198 = vld [vmem:[#allocation16 + $0x58] sm:$0xf]
        %v2199 = vld [vmem:[#allocation16 + $0x5c] sm:$0xf]
        %v2200 = vld [vmem:[#allocation16 + $0x60] sm:$0xf]
        %v2201 = vld [vmem:[#allocation16 + $0x64] sm:$0xf]
        %v2202 = vld [vmem:[#allocation16 + $0x68] sm:$0xf]
        %v2203 = vld [vmem:[#allocation16 + $0x6c] sm:$0xf]
        %v2204 = vld [vmem:[#allocation16 + $0x70] sm:$0xf]
        %v2205 = vld [vmem:[#allocation16 + $0x74] sm:$0xf]
        %v2206 = vld [vmem:[#allocation16 + $0x78] sm:$0xf]
        %v2207 = vld [vmem:[#allocation16 + $0x7c] sm:$0xf]
        %v2208 = vld [vmem:[#allocation16 + $0x80] sm:$0xf]
        %v2209 = vld [vmem:[#allocation16 + $0x84] sm:$0xf]
        %v2210 = vld [vmem:[#allocation16 + $0x88] sm:$0xf]
        %v2211 = vld [vmem:[#allocation16 + $0x8c] sm:$0xf]
        %v2212 = vld [vmem:[#allocation16 + $0x90] sm:$0xf]
        %v2213 = vld [vmem:[#allocation16 + $0x94] sm:$0xf]
        %v2214 = vld [vmem:[#allocation16 + $0x98] sm:$0xf]
        %v2215 = vld [vmem:[#allocation16 + $0x9c] sm:$0xf]
        %v2216 = vld [vmem:[#allocation16 + $0xa0] sm:$0xf]
        %v2217 = vld [vmem:[#allocation16 + $0xa4] sm:$0xf]
        %v2218 = vld [vmem:[#allocation16 + $0xa8] sm:$0xf]
        %v2219 = vld [vmem:[#allocation16 + $0xac] sm:$0xf]
        %v2220 = vld [vmem:[#allocation16 + $0xb0] sm:$0xf]
        %v2221 = vld [vmem:[#allocation16 + $0xb4] sm:$0xf]
        %v2222 = vld [vmem:[#allocation16 + $0xb8] sm:$0xf]
        %v2223 = vld [vmem:[#allocation16 + $0xbc] sm:$0xf]
        %v2224 = vld [vmem:[#allocation16 + $0xc0] sm:$0xf]
        %v2225 = vld [vmem:[#allocation16 + $0xc4] sm:$0xf]
        %v2226 = vld [vmem:[#allocation16 + $0xc8] sm:$0xf]
        %v2227 = vld [vmem:[#allocation16 + $0xcc] sm:$0xf]
        %v2228 = vld [vmem:[#allocation16 + $0xd0] sm:$0xf]
        %v2229 = vld [vmem:[#allocation16 + $0xd4] sm:$0xf]
        %v2230 = vld [vmem:[#allocation16 + $0xd8] sm:$0xf]
        %v2231 = vld [vmem:[#allocation16 + $0xdc] sm:$0xf]
        %v2232 = vld [vmem:[#allocation16 + $0xe0] sm:$0xf]
        %v2233 = vld [vmem:[#allocation16 + $0xe4] sm:$0xf]
        %v2234 = vld [vmem:[#allocation16 + $0xe8] sm:$0xf]
        %v2235 = vld [vmem:[#allocation16 + $0xec] sm:$0xf]
        %v2236 = vld [vmem:[#allocation16 + $0xf0] sm:$0xf]
        %v2237 = vld [vmem:[#allocation16 + $0xf4] sm:$0xf]
        %v2238 = vld [vmem:[#allocation16 + $0xf8] sm:$0xf]
        %v2239 = vld [vmem:[#allocation16 + $0xfc] sm:$0xf]
        %v2240 = vld [vmem:[%s14] sm:$0x1]
        %v2242 = vperm.slane %v2240, 0
        %v2308 = vunpack.c.l.b16 %v2176
        %v2309 = vunpack.c.l.b16 %v2177
        %v2310 = vunpack.c.l.b16 %v2178
        %v2311 = vunpack.c.l.b16 %v2179
        %v2312 = vunpack.c.l.b16 %v2180
        %v2313 = vunpack.c.l.b16 %v2181
        %v2314 = vunpack.c.l.b16 %v2182
        %v2315 = vunpack.c.l.b16 %v2183
        %v2316 = vunpack.c.l.b16 %v2184
        %v2317 = vunpack.c.l.b16 %v2185
        %v2318 = vunpack.c.l.b16 %v2186
        %v2319 = vunpack.c.l.b16 %v2187
        %v2320 = vunpack.c.l.b16 %v2188
        %v2321 = vunpack.c.l.b16 %v2189
        %v2322 = vunpack.c.l.b16 %v2190
        %v2323 = vunpack.c.l.b16 %v2191
        %v2324 = vunpack.c.l.b16 %v2192
        %v2325 = vunpack.c.l.b16 %v2193
        %v2326 = vunpack.c.l.b16 %v2194
        %v2327 = vunpack.c.l.b16 %v2195
        %v2328 = vunpack.c.l.b16 %v2196
        %v2329 = vunpack.c.l.b16 %v2197
        %v2330 = vunpack.c.l.b16 %v2198
        %v2331 = vunpack.c.l.b16 %v2199
        %v2332 = vunpack.c.l.b16 %v2200
        %v2333 = vunpack.c.l.b16 %v2201
        %v2334 = vunpack.c.l.b16 %v2202
        %v2335 = vunpack.c.l.b16 %v2203
        %v2336 = vunpack.c.l.b16 %v2204
        %v2337 = vunpack.c.l.b16 %v2205
        %v2338 = vunpack.c.l.b16 %v2206
        %v2339 = vunpack.c.l.b16 %v2207
        %v2340 = vunpack.c.l.b16 %v2208
        %v2341 = vunpack.c.l.b16 %v2209
        %v2342 = vunpack.c.l.b16 %v2210
        %v2343 = vunpack.c.l.b16 %v2211
        %v2344 = vunpack.c.l.b16 %v2212
        %v2345 = vunpack.c.l.b16 %v2213
        %v2346 = vunpack.c.l.b16 %v2214
        %v2347 = vunpack.c.l.b16 %v2215
        %v2348 = vunpack.c.l.b16 %v2216
        %v2349 = vunpack.c.l.b16 %v2217
        %v2350 = vunpack.c.l.b16 %v2218
        %v2351 = vunpack.c.l.b16 %v2219
        %v2352 = vunpack.c.l.b16 %v2220
        %v2353 = vunpack.c.l.b16 %v2221
        %v2354 = vunpack.c.l.b16 %v2222
        %v2355 = vunpack.c.l.b16 %v2223
        %v2356 = vunpack.c.l.b16 %v2224
        %v2357 = vunpack.c.l.b16 %v2225
        %v2358 = vunpack.c.l.b16 %v2226
        %v2359 = vunpack.c.l.b16 %v2227
        %v2360 = vunpack.c.l.b16 %v2228
        %v2361 = vunpack.c.l.b16 %v2229
        %v2362 = vunpack.c.l.b16 %v2230
        %v2363 = vunpack.c.l.b16 %v2231
        %v2364 = vunpack.c.l.b16 %v2232
        %v2365 = vunpack.c.l.b16 %v2233
        %v2366 = vunpack.c.l.b16 %v2234
        %v2367 = vunpack.c.l.b16 %v2235
        %v2368 = vunpack.c.l.b16 %v2236
        %v2369 = vunpack.c.l.b16 %v2237
        %v2370 = vunpack.c.l.b16 %v2238
        %v2371 = vunpack.c.l.b16 %v2239
        %v2372 = vpack.c.b16 %v2309, %v2308
        %v2373 = vpack.c.b16 %v2311, %v2310
        %v2374 = vpack.c.b16 %v2313, %v2312
        %v2375 = vpack.c.b16 %v2315, %v2314
        %v2376 = vpack.c.b16 %v2317, %v2316
        %v2377 = vpack.c.b16 %v2319, %v2318
        %v2378 = vpack.c.b16 %v2321, %v2320
        %v2379 = vpack.c.b16 %v2323, %v2322
        %v2380 = vpack.c.b16 %v2325, %v2324
        %v2381 = vpack.c.b16 %v2327, %v2326
        %v2382 = vpack.c.b16 %v2329, %v2328
        %v2383 = vpack.c.b16 %v2331, %v2330
        %v2384 = vpack.c.b16 %v2333, %v2332
        %v2385 = vpack.c.b16 %v2335, %v2334
        %v2386 = vpack.c.b16 %v2337, %v2336
        %v2387 = vpack.c.b16 %v2339, %v2338
        %v2388 = vpack.c.b16 %v2341, %v2340
        %v2389 = vpack.c.b16 %v2343, %v2342
        %v2390 = vpack.c.b16 %v2345, %v2344
        %v2391 = vpack.c.b16 %v2347, %v2346
        %v2392 = vpack.c.b16 %v2349, %v2348
        %v2393 = vpack.c.b16 %v2351, %v2350
        %v2394 = vpack.c.b16 %v2353, %v2352
        %v2395 = vpack.c.b16 %v2355, %v2354
        %v2396 = vpack.c.b16 %v2357, %v2356
        %v2397 = vpack.c.b16 %v2359, %v2358
        %v2398 = vpack.c.b16 %v2361, %v2360
        %v2399 = vpack.c.b16 %v2363, %v2362
        %v2400 = vpack.c.b16 %v2365, %v2364
        %v2401 = vpack.c.b16 %v2367, %v2366
        %v2402 = vpack.c.b16 %v2369, %v2368
        %v2403 = vpack.c.b16 %v2371, %v2370
        %2436 = vmatpush.bf16.msra.mxu0 %v2379
        %2437 = vmatpush.bf16.msra.mxu0 %v2378
        %2438 = vmatpush.bf16.msra.mxu0 %v2377
        %2439 = vmatpush.bf16.msra.mxu0 %v2376
        %2440 = vmatpush.bf16.msra.mxu0 %v2375
        %2441 = vmatpush.bf16.msra.mxu0 %v2374
        %2442 = vmatpush.bf16.msra.mxu0 %v2373
        %2443 = vmatpush.bf16.msra.mxu0 %v2372
        %2444 = vmatmul.bf16.gmra.mxu0 %v2172
        %v2445 = vpop.f32.mrf.mxu0
        %v2446 = vadd.f32 %v2242, %v2445
        %v2447 = vpop.f32.mrf.mxu0
        %v2448 = vadd.f32 %v2242, %v2447
        %2449 = vdwg.mxu0
        %2450 = vmatpush.bf16.msra.mxu0 %v2387
        %2451 = vmatpush.bf16.msra.mxu0 %v2386
        %2452 = vmatpush.bf16.msra.mxu0 %v2385
        %2453 = vmatpush.bf16.msra.mxu0 %v2384
        %2454 = vmatpush.bf16.msra.mxu0 %v2383
        %2455 = vmatpush.bf16.msra.mxu0 %v2382
        %2456 = vmatpush.bf16.msra.mxu0 %v2381
        %2457 = vmatpush.bf16.msra.mxu0 %v2380
        %2458 = vmatmul.bf16.gmra.mxu0 %v2173
        %v2459 = vpop.f32.mrf.mxu0
        %v2460 = vadd.f32 %v2446, %v2459
        %v2461 = vpop.f32.mrf.mxu0
        %v2462 = vadd.f32 %v2448, %v2461
        %2463 = vdwg.mxu0
        %2464 = vmatpush.bf16.msra.mxu0 %v2395
        %2465 = vmatpush.bf16.msra.mxu0 %v2394
        %2466 = vmatpush.bf16.msra.mxu0 %v2393
        %2467 = vmatpush.bf16.msra.mxu0 %v2392
        %2468 = vmatpush.bf16.msra.mxu0 %v2391
        %2469 = vmatpush.bf16.msra.mxu0 %v2390
        %2470 = vmatpush.bf16.msra.mxu0 %v2389
        %2471 = vmatpush.bf16.msra.mxu0 %v2388
        %2472 = vmatmul.bf16.gmra.mxu0 %v2174
        %v2473 = vpop.f32.mrf.mxu0
        %v2474 = vadd.f32 %v2460, %v2473
        %v2475 = vpop.f32.mrf.mxu0
        %v2476 = vadd.f32 %v2462, %v2475
        %2477 = vdwg.mxu0
        %2478 = vmatpush.bf16.msra.mxu0 %v2403
        %2479 = vmatpush.bf16.msra.mxu0 %v2402
        %2480 = vmatpush.bf16.msra.mxu0 %v2401
        %2481 = vmatpush.bf16.msra.mxu0 %v2400
        %2482 = vmatpush.bf16.msra.mxu0 %v2399
        %2483 = vmatpush.bf16.msra.mxu0 %v2398
        %2484 = vmatpush.bf16.msra.mxu0 %v2397
        %2485 = vmatpush.bf16.msra.mxu0 %v2396
        %2486 = vmatmul.bf16.gmra.mxu0 %v2175
        %v2487 = vpop.f32.mrf.mxu0
        %v2488 = vadd.f32 %v2474, %v2487
        %v2489 = vpop.f32.mrf.mxu0
        %v2490 = vadd.f32 %v2476, %v2489
        %2491 = vdwg.mxu0
        %v2492 = vadd.f32 %v1713, %v2488
        %v2493 = vadd.f32 %v1714, %v2490
        %2494 = vst [vmem:[%s642] sm:$0xff] %v2492
        %2495 = vst [vmem:[%s642 + $0x8] sm:$0xff] %v2493
        %s2496 = sand.u32 %s378, 1
        %s2497 = scalar_lea.sflag [#allocation6], %s2496
        %s2498 = sand.u32 %s378, 1
        %s2499 = smul.addr %s2498, 16
        %s2500 = scalar_lea.vmem [#allocation18], %s2499
        // Predicated region
        $region117: #{tpu_custom_call.1} parent=79 // pred_check
          %p2501 = pneg %p388
        $region118: #{tpu_custom_call.1} parent=79 // pred_check_branch
          %2503 = sbr.rel (%p2501) target = $region120
        $region119: #{tpu_custom_call.1} parent=79 // pred_region
          %s2504 = smul.u32 2, %s41
          %2506 = vsyncadd %s2497, 0
          %s2507 = smul.addr %s40, 2
          %s2508 = sadd.s32 %s2504, %s2507
          %s2509 = smul.addr %s2508, 8
          %s2510 = scalar_lea.hbm %s15, %s2509
          %s2511 = sshll.u32 %s2500, 4
          %s2512 = int_to_ptr.vmem [resolvable:$true] %s2511
          %s2513 = sshll.u32 %s2510, 4
          %s2514 = int_to_ptr.hbm [resolvable:$true] %s2513
          %2519 = dma.vmem_to_hbm [thread:$0]  %s2512, 256, %s2514, %s2497, 128, 128, 8
        $region120: #{tpu_custom_call.1} parent=79 // pred_fallthru
          _
      $region80: #{tpu_custom_call.1} parent=5 // pred_fallthru
        _
      %p2520 = scmp.le.s32.totalorder 2, %s31
      // Predicated region
      $region121: #{tpu_custom_call.1} parent=5 // pred_check
        %p2521 = pneg %p2520
      $region122: #{tpu_custom_call.1} parent=5 // pred_check_branch
        %2523 = sbr.rel (%p2521) target = $region124
      $region123: #{tpu_custom_call.1} parent=5 // pred_region
        %s2524 = ssub.s32 %s31, 2
        // Predicated region
        $region125: #{tpu_custom_call.1} parent=123 // pred_check
          %p2525 = pneg %p394
        $region126: #{tpu_custom_call.1} parent=123 // pred_check_branch
          %2527 = sbr.rel (%p2525) target = $region128
        $region127: #{tpu_custom_call.1} parent=123 // pred_region
          %s2528 = sand.u32 %s379, 1
          %s2529 = scalar_lea.sflag [#allocation6], %s2528
          %s2530 = sand.u32 %s379, 1
          %s2531 = smul.addr %s2530, 16
          %s2532 = scalar_lea.vmem [#allocation18], %s2531
          %2534 = dma.done %s2529, 256
        $region128: #{tpu_custom_call.1} parent=123 // pred_fallthru
          _
      $region124: #{tpu_custom_call.1} parent=5 // pred_fallthru
        _
    $region6: #{tpu_custom_call.1} parent=1 // loop_footer
      %s35 = sadd.s32 1, %s31
    $region7: #{tpu_custom_call.1} parent=1 // loop_footer_branch
      %30 = sbr.rel target = $region3
    $region8: #{tpu_custom_call.1} parent=1 // loop_exit
      _
    %2535 = vsyncpa [#allocation5], 1
    %s2536 = scalar_lea.sflag [#allocation5], 1
    %2537 = vsyncpa %s2536, 1
    %2538 = vsyncpa [#allocation8], 1
    %2539 = vsyncpa [#allocation11], 1
    %2540 = vsyncpa [#allocation14], 1
    %2541 = vsyncpa [#allocation17], 1
    %2542 = vsyncpa [#allocation6], 1
    %s2543 = scalar_lea.sflag [#allocation6], 1
    %2544 = vsyncpa %s2543, 1

</llo_original>
